<compile_context>
chip_gen: v7x
topology: tpu7x:2x2x1
jax: 0.10.0
libtpu: 0.0.40
codegen_flags: <defaults>
</compile_context>

<pallas_src>
import functools

import jax
import jax.numpy as jnp
from jax import lax
from jax.experimental import pallas as pl
from jax.experimental.pallas import tpu as pltpu


# ----------------------------------------------------------------------------
# Generation-aware budgets.
# ----------------------------------------------------------------------------
def _query_vmem_capacity_bytes():
    """Physical VMEM per TensorCore (128 MiB on v5e/v6e, 64 MiB on v7x)."""
    try:
        return int(pltpu.get_tpu_info().vmem_capacity_bytes)
    except Exception:
        return 64 << 20  # be conservative (v7x) if the query is unavailable


_VMEM_CAP = _query_vmem_capacity_bytes()

# Resident (single-buffered) table budget for the Pallas fast path: half of
# physical VMEM minus headroom for output double-buffers, one-hot temporaries
# and Mosaic internal scratch.  -> ~24 MiB on v7x, ~56 MiB on v5e/v6e.
_MAX_VMEM_TABLE_BYTES = max(8 << 20, _VMEM_CAP // 2 - (8 << 20))

# Below this many ids a pallas_call launch is pure overhead vs XLA's gather.
_PALLAS_MIN_IDS = 256

# Tables up to this many rows use the one-hot MXU gather; beyond that the
# per-row matmul cost (2*num_rows*d flops/row) outgrows the vector-store path.
_ONE_HOT_MAX_ROWS = 1024


# ----------------------------------------------------------------------------
# Kernel 1: one-hot MXU gather (small tables).
# ----------------------------------------------------------------------------
def _gather_onehot_kernel(idx_ref, table_ref, out_ref):
    """Gather a block of rows via a one-hot matmul on the (otherwise idle) MXU.

    idx_ref   : VMEM int32 [block_rows, 1]   ids for this grid step
    table_ref : VMEM [num_rows, d]           constant block index -> loaded once
    out_ref   : VMEM [block_rows, d]
    """
    block_rows = out_ref.shape[0]
    num_rows = table_ref.shape[0]

    idx = idx_ref[...]                                             # (block_rows, 1)
    row_iota = lax.broadcasted_iota(jnp.int32, (block_rows, num_rows), 1)
    one_hot = (row_iota == idx).astype(table_ref.dtype)            # exact 0 / 1
    # HIGHEST precision keeps f32 table values bit-exact under 0/1 weights
    # (default TPU matmul precision would round operands to bf16).
    out_ref[...] = jnp.dot(
        one_hot,
        table_ref[...],
        preferred_element_type=jnp.float32,
        precision=lax.Precision.HIGHEST,
    ).astype(out_ref.dtype)


# ----------------------------------------------------------------------------
# Kernel 2: grouped row gather from a single-buffered VMEM-resident table.
# ----------------------------------------------------------------------------
def _gather_rows_kernel(idx_ref, table_hbm_ref, out_ref, table_vmem, sem):
    """Gather rows 8 at a time so every store is a full (8, d) vreg store.

    idx_ref       : SMEM int32 [n_pad]      (scalar prefetch)
    table_hbm_ref : HBM  [num_rows, d]      (memory_space=pl.ANY)
    out_ref       : VMEM [block_rows, d]
    table_vmem    : VMEM [num_rows, d]      single-buffered resident copy
    sem           : DMA semaphore
    """
    block_rows = out_ref.shape[0]

    # Single-buffer the table: one DMA for the whole grid.  Safe because the
    # grid runs sequentially on one core (dimension_semantics="arbitrary").
    @pl.when(pl.program_id(0) == 0)
    def _load_table():
        cp = pltpu.make_async_copy(table_hbm_ref, table_vmem, sem)
        cp.start()
        cp.wait()

    base = pl.program_id(0) * block_rows

    def body(g, carry):
        off = pl.multiple_of(g * 8, 8)
        rows = [table_vmem[pl.ds(idx_ref[base + off + j], 1), :] for j in range(8)]
        # One aligned, unmasked (8, d) store instead of 8 masked vst.msk.
        out_ref[pl.ds(off, 8), :] = jnp.concatenate(rows, axis=0)
        return carry

    lax.fori_loop(0, block_rows // 8, body, 0, unroll=4)


# ----------------------------------------------------------------------------
# Wrapper: table[ids] via Pallas.
# ----------------------------------------------------------------------------
@functools.partial(jax.jit, static_argnames=("block_rows",))
def embedding_gather(table, ids, *, block_rows=512):
    """table[ids] via a Pallas kernel.

    table: [num_rows, d]  (d on the lane axis)
    ids:   int [n]
    returns: [n, d]
    """
    assert block_rows % 8 == 0
    num_rows, d = table.shape
    itemsize = jnp.dtype(table.dtype).itemsize
    n = ids.shape[0]

    # Clamp so an out-of-range id can never drive an OOB VMEM read.
    # (nn.Embedding would raise on invalid ids; we clamp instead.)
    ids = jnp.clip(ids.astype(jnp.int32), 0, num_rows - 1)

    # Pad id count up to a multiple of the per-step block; slice off afterwards.
    n_blocks = pl.cdiv(n, block_rows)
    n_pad = n_blocks * block_rows
    if n_pad != n:
        ids = jnp.concatenate([ids, jnp.zeros((n_pad - n,), jnp.int32)])

    table_bytes = num_rows * d * itemsize
    out_block_bytes = block_rows * d * itemsize
    use_onehot = num_rows <= _ONE_HOT_MAX_ROWS

    if use_onehot:
        # Table goes through a constant-index BlockSpec (small, so the default
        # double-buffer is harmless); one-hot temporaries dominate extra VMEM.
        onehot_bytes = block_rows * num_rows * 4
        need = (2 * table_bytes + 2 * out_block_bytes
                + 2 * block_rows * 128 * 4      # (block_rows, 1) id blocks, lane-padded
                + 2 * onehot_bytes + (4 << 20))
    else:
        # Single-buffered resident table + double-buffered output blocks.
        need = table_bytes + 2 * out_block_bytes + (4 << 20)
    # Always pass an explicit limit (v5e's default scoped limit is only 16 MiB).
    vmem_limit = int(min(max(need, 16 << 20), int(_VMEM_CAP * 0.9)))

    if use_onehot:
        out = pl.pallas_call(
            _gather_onehot_kernel,
            out_shape=jax.ShapeDtypeStruct((n_pad, d), table.dtype),
            grid_spec=pltpu.PrefetchScalarGridSpec(
                num_scalar_prefetch=0,
                grid=(n_blocks,),
                in_specs=[
                    # Per-step id column: (block_rows, 1) keeps ids on sublanes
                    # so the one-hot compare is a natural lane broadcast.
                    pl.BlockSpec((block_rows, 1), lambda i: (i, 0)),
                    # Constant block index: DMA'd into VMEM once, revisited.
                    pl.BlockSpec((num_rows, d), lambda i: (0, 0)),
                ],
                out_specs=pl.BlockSpec((block_rows, d), lambda i: (i, 0)),
            ),
            compiler_params=pltpu.CompilerParams(
                # Disjoint output blocks, tiny table -> shard across TCs (v7x).
                dimension_semantics=("parallel",),
                vmem_limit_bytes=vmem_limit,
            ),
        )(ids.reshape(n_pad, 1), table)
    else:
        out = pl.pallas_call(
            _gather_rows_kernel,
            out_shape=jax.ShapeDtypeStruct((n_pad, d), table.dtype),
            grid_spec=pltpu.PrefetchScalarGridSpec(
                num_scalar_prefetch=1,          # ids land in SMEM before the grid
                grid=(n_blocks,),
                in_specs=[pl.BlockSpec(memory_space=pl.ANY)],
                out_specs=pl.BlockSpec((block_rows, d), lambda i, idx: (i, 0)),
                scratch_shapes=[
                    pltpu.VMEM((num_rows, d), table.dtype),
                    pltpu.SemaphoreType.DMA(()),
                ],
            ),
            compiler_params=pltpu.CompilerParams(
                # Must stay sequential on one core: the resident table scratch
                # is filled only on grid step 0, and per-core duplication on
                # v7x would double the dominant full-table DMA anyway.
                dimension_semantics=("arbitrary",),
                vmem_limit_bytes=vmem_limit,
            ),
        )(ids, table)

    return out[:n]


# ----------------------------------------------------------------------------
# Model wrapper (mirrors unKR Model.tri2emb semantics).
# ----------------------------------------------------------------------------
class PallasUKGModel:
    def __init__(self, num_ent, num_rel, emb_dim, key):
        k_ent, k_rel = jax.random.split(key)
        # Deterministic synthetic parameters (stand-in for nn.Embedding weights).
        # TODO(synk): optionally store the tables in bfloat16 (the gather is
        # pure data movement) if downstream score_func numerics allow it.
        self.ent_emb = jax.random.normal(k_ent, (num_ent, emb_dim), jnp.float32)
        self.rel_emb = jax.random.normal(k_rel, (num_rel, emb_dim), jnp.float32)
        self.emb_dim = emb_dim

    def _lookup(self, table, ids):
        """Gather preserving the leading shape of `ids` (like nn.Embedding)."""
        flat = ids.reshape(-1)
        n = int(flat.shape[0])
        num_rows, d = table.shape
        itemsize = jnp.dtype(table.dtype).itemsize
        table_bytes = num_rows * d * itemsize
        gathered_bytes = n * d * itemsize
        # Pallas fast path only when (a) there are enough ids to amortize the
        # launch, (b) the full-table DMA is not more HBM traffic than the
        # gathered output itself, and (c) the table fits the per-generation
        # VMEM budget.  Otherwise XLA's fused gather is strictly better.
        if (n >= _PALLAS_MIN_IDS
                and gathered_bytes >= table_bytes
                and table_bytes <= _MAX_VMEM_TABLE_BYTES):
            out = embedding_gather(table, flat)
        else:
            out = jnp.take(table, jnp.clip(flat, 0, num_rows - 1), axis=0)
        return out.reshape(ids.shape + (self.emb_dim,))

    def tri2emb(self, triples, negs=None, mode="single"):
        if mode == "single":
            n = triples.shape[0]
            # Fuse head + tail gathers over the same entity table: one launch.
            ht = self._lookup(self.ent_emb,
                              jnp.concatenate([triples[:, 0], triples[:, 2]]))
            head_emb = ht[:n][:, None, :]
            tail_emb = ht[n:][:, None, :]
            relation_emb = self._lookup(self.rel_emb, triples[:, 1])[:, None, :]
        elif mode in ("head-batch", "head_predict"):
            relation_emb = self._lookup(self.rel_emb, triples[:, 1])[:, None, :]
            if negs is None:
                head_emb = self.ent_emb[None, :, :]      # weight.data.unsqueeze(0)
                tail_emb = self._lookup(self.ent_emb, triples[:, 2])[:, None, :]
            else:
                negs_flat = negs.reshape(-1)
                # Fuse negs + tail gathers (same table) into one launch.
                fused = self._lookup(
                    self.ent_emb,
                    jnp.concatenate([negs_flat, triples[:, 2]]))
                head_emb = fused[:negs_flat.shape[0]].reshape(
                    negs.shape + (self.emb_dim,))
                tail_emb = fused[negs_flat.shape[0]:][:, None, :]
        elif mode in ("tail-batch", "tail_predict"):
            relation_emb = self._lookup(self.rel_emb, triples[:, 1])[:, None, :]
            if negs is None:
                head_emb = self._lookup(self.ent_emb, triples[:, 0])[:, None, :]
                tail_emb = self.ent_emb[None, :, :]
            else:
                negs_flat = negs.reshape(-1)
                fused = self._lookup(
                    self.ent_emb,
                    jnp.concatenate([negs_flat, triples[:, 0]]))
                tail_emb = fused[:negs_flat.shape[0]].reshape(
                    negs.shape + (self.emb_dim,))
                head_emb = fused[negs_flat.shape[0]:][:, None, :]
        else:
            raise ValueError(f"unknown mode {mode}")
        return head_emb, relation_emb, tail_emb

    # TODO(synk): init_emb / score_func / forward are abstract in the PyTorch
    # base class (raise NotImplementedError) and are intentionally not implemented.


# ----------------------------------------------------------------------------
# Driver
# ----------------------------------------------------------------------------
if __name__ == "__main__":
    # emb_dim=128 keeps every gather output tile lane-dense (full 128-lane stores).
    num_ent, num_rel, emb_dim = 512, 32, 128
    n_triples, num_neg = 16, 64

    key = jax.random.PRNGKey(0)
    k_model, k_tri, k_neg, k_big = jax.random.split(key, 4)

    model = PallasUKGModel(num_ent, num_rel, emb_dim, k_model)

    heads = jax.random.randint(k_tri, (n_triples, 1), 0, num_ent, jnp.int32)
    rels = jax.random.randint(jax.random.fold_in(k_tri, 1), (n_triples, 1), 0,
                              num_rel, jnp.int32)
    tails = jax.random.randint(jax.random.fold_in(k_tri, 2), (n_triples, 1), 0,
                               num_ent, jnp.int32)
    triples = jnp.concatenate([heads, rels, tails], axis=1)          # [N, 3]
    negs = jax.random.randint(k_neg, (n_triples, num_neg), 0, num_ent, jnp.int32)

    tol = dict(rtol=1e-6, atol=1e-6)

    # --- Direct check: one-hot MXU path (small table, non-multiple-of-block n).
    big_ids = jax.random.randint(k_big, (1000,), 0, num_ent, jnp.int32)
    got_a = embedding_gather(model.ent_emb, big_ids)
    ref_a = jnp.take(model.ent_emb, big_ids, axis=0)
    jax.block_until_ready(got_a)
    assert got_a.shape == (1000, emb_dim)
    assert jnp.allclose(got_a, ref_a, **tol)

    # --- Direct check: grouped-row path (table above the one-hot row cap). ---
    big_rows = 4096
    big_table = jax.random.normal(jax.random.fold_in(k_big, 7),
                                  (big_rows, emb_dim), jnp.float32)
    ids_b = jax.random.randint(jax.random.fold_in(k_big, 8), (3000,), 0,
                               big_rows, jnp.int32)
    got_b = embedding_gather(big_table, ids_b)
    ref_b = jnp.take(big_table, ids_b, axis=0)
    jax.block_until_ready(got_b)
    assert got_b.shape == (3000, emb_dim)
    assert jnp.allclose(got_b, ref_b, **tol)

    # --- tri2emb modes ------------------------------------------------------
    h, r, t = model.tri2emb(triples, mode="single")
    h_neg, r_nb, t_nb = model.tri2emb(triples, negs=negs, mode="head-batch")
    h_tb, r_tb, t_neg = model.tri2emb(triples, negs=negs, mode="tail-batch")
    h_tp, r_tp, t_tp = model.tri2emb(triples, negs=None, mode="tail_predict")

    jax.block_until_ready(
        (h, r, t, h_neg, r_nb, t_nb, h_tb, r_tb, t_neg, h_tp, r_tp, t_tp))

    # Correctness check vs. pure-JAX reference gathers.
    ref_h = jnp.take(model.ent_emb, triples[:, 0], axis=0)[:, None, :]
    ref_r = jnp.take(model.rel_emb, triples[:, 1], axis=0)[:, None, :]
    ref_t = jnp.take(model.ent_emb, triples[:, 2], axis=0)[:, None, :]
    ref_neg = jnp.take(model.ent_emb, negs.reshape(-1), axis=0).reshape(
        n_triples, num_neg, emb_dim)

    assert h.shape == (n_triples, 1, emb_dim)
    assert h_neg.shape == (n_triples, num_neg, emb_dim)
    assert t_neg.shape == (n_triples, num_neg, emb_dim)
    assert t_tp.shape == (1, num_ent, emb_dim)
    assert jnp.allclose(h, ref_h, **tol)
    assert jnp.allclose(r, ref_r, **tol)
    assert jnp.allclose(t, ref_t, **tol)
    assert jnp.allclose(h_neg, ref_neg, **tol)
    assert jnp.allclose(t_nb, ref_t, **tol)
    assert jnp.allclose(t_neg, ref_neg, **tol)
    assert jnp.allclose(h_tb, ref_h, **tol)
    assert jnp.allclose(t_tp, model.ent_emb[None, :, :], **tol)

    print("KERNEL_OK")
</pallas_src>

<mosaic_0001>
module attributes {stable_mosaic.version = 11 : i64} {
  func.func @_gather_onehot_kernel(%arg0: i32, %arg1: memref<512x1xi32, #tpu.memory_space<vmem>>, %arg2: memref<512x128xf32, #tpu.memory_space<vmem>>, %arg3: memref<512x128xf32, #tpu.memory_space<vmem>>) attributes {dimension_semantics = [#tpu.dimension_semantics<parallel>], iteration_bounds = array<i64: 2>, scalar_prefetch = 0 : i64, scratch_operands = 0 : i64, tpu.core_type = #tpu.core_type<tc>, window_params = [{transform_indices = @transform_0, window_bounds = array<i64: 512, 1>}, {pipeline_mode = #tpu.pipeline_mode<synchronous>, transform_indices = @transform_1, window_bounds = array<i64: 512, 128>}, {transform_indices = @transform_2, window_bounds = array<i64: 512, 128>}]} {
    %c0 = arith.constant 0 : index
    %c0_0 = arith.constant 0 : index
    %0 = vector.load %arg1[%c0, %c0_0] : memref<512x1xi32, #tpu.memory_space<vmem>>, vector<512x1xi32>
    %1 = tpu.iota {dimensions = array<i32: 1>} : vector<512x512xi32>
    %2 = vector.broadcast %0 : vector<512x1xi32> to vector<512x512xi32>
    %3 = arith.cmpi eq, %1, %2 : vector<512x512xi32>
    %4 = arith.extui %3 : vector<512x512xi1> to vector<512x512xi32>
    %5 = arith.sitofp %4 : vector<512x512xi32> to vector<512x512xf32>
    %c0_1 = arith.constant 0 : index
    %c0_2 = arith.constant 0 : index
    %6 = vector.load %arg2[%c0_1, %c0_2] : memref<512x128xf32, #tpu.memory_space<vmem>>, vector<512x128xf32>
    %cst = arith.constant dense<0.000000e+00> : vector<512x128xf32>
    %7 = tpu.matmul %5, %6, %cst {dimension_numbers = #tpu.dot_dimension_numbers<[1], [0], [0], [1], [0, 0, 1, 1], [], []>, precision = #tpu.contract_precision<fp32>} : vector<512x512xf32>, vector<512x128xf32>, vector<512x128xf32> -> vector<512x128xf32>
    %c0_3 = arith.constant 0 : index
    %c0_4 = arith.constant 0 : index
    %8 = vector.load %arg3[%c0_3, %c0_4] : memref<512x128xf32, #tpu.memory_space<vmem>>, vector<512x128xf32>
    tpu.vector_store %arg3[%c0_3, %c0_4], %7 {strides = array<i32>} : memref<512x128xf32, #tpu.memory_space<vmem>>, vector<512x128xf32>,
    return
  }
  func.func @transform_0(%arg0: i32) -> (i32, i32) {
    %c0_i32 = arith.constant 0 : i32
    %c0_i32_0 = arith.constant 0 : i32
    return %arg0, %c0_i32 : i32, i32
  }
  func.func @transform_1(%arg0: i32) -> (i32, i32) {
    %c0_i32 = arith.constant 0 : i32
    %c0_i32_0 = arith.constant 0 : i32
    %c0_i32_1 = arith.constant 0 : i32
    return %c0_i32, %c0_i32_0 : i32, i32
  }
  func.func @transform_2(%arg0: i32) -> (i32, i32) {
    %c0_i32 = arith.constant 0 : i32
    %c0_i32_0 = arith.constant 0 : i32
    return %arg0, %c0_i32 : i32, i32
  }
}

</mosaic_0001>

<llo_original>
// kernel: embedding_gather.1
$region0: #{embedding_gather.1}
  #allocation0 [shape = 'u32[]', space=smem, size = 0x4, offset = 0x4, fixed_abs, tag = 'smem constant byte address 0x4 - core index']
  #allocation1 [shape = 'u32[144,128]{1,0:T(1,128)}', space=vmem, size = 0x12000, scoped, tag = 'internal scratch']
  %s0 = inlined_call_operand.vmem [shape: s32[1024,1], index: 0, kind: input, shape index: {}]
  %s1 = inlined_call_operand.vmem [shape: f32[512,128], index: 1, kind: input, shape index: {}]
  %s2 = inlined_call_operand.vmem [shape: f32[1024,128], index: 2, kind: output, shape index: {}]
  %s3 = sld [smem:[#allocation0]]
  $region41: #{embedding_gather.1} parent=0
    _
  %s5 = ssub.s32 1, %s3
  %s6 = scalar_select 0, %s5, %s3
  loop: start=0, step=1, limit=4
  $region2: #{embedding_gather.1} parent=0 // loop_pre_header
    _
  $region3: #{embedding_gather.1} parent=0 // loop_header
    %s8 = sphi 0, %s12
    %p9 = scmp.ge.s32.totalorder %s8, 4
    %s18 = sphi 0, %s20
    %s21 = sphi 0, %s18
    %s22 = sphi 0, %s21
    %s38 = sphi 0, %s22
    %s42 = sphi 0, %s42
    %s44 = sphi 0, %s42
    %s45 = sphi 0, %s44
    %s59 = sphi 0, %s45
    %s65 = sphi 0, %s67
    %s68 = sphi 0, %s65
    %s69 = sphi 0, %s68
    %s85 = sphi 0, %s69
  $region4: #{embedding_gather.1} parent=0 // loop_header_branch
    %11 = sbr.rel (%p9) target = $region8
  $region5: #{embedding_gather.1} parent=0 // loop_body
    %s13 = ssub.s32 %s8, 1
    %s14 = ssub.s32 %s8, 2
    %s15 = sadd.s32 %s8, 1
    %s16 = ssub.s32 %s8, %s15
    %p17 = scmp.eq.s32.totalorder %s16, 0
    %s19 = sadd.s32 %s18, 1
    %s20 = scalar_select %p17, %s18, %s19
    %p23 = pneg %p17
    %p24 = scmp.eq.s32.totalorder %s8, 1
    %p25 = por %p23, %p24
    %p26 = scmp.ne.s32.totalorder %s18, %s21
    %p27 = scmp.eq.s32.totalorder %s8, 0
    %p28 = por %p26, %p27
    %p29 = scmp.ne.s32.totalorder %s18, %s21
    %p30 = scmp.eq.s32.totalorder %s13, 1
    %p31 = por %p29, %p30
    %p32 = scmp.ne.s32.totalorder %s21, %s22
    %p33 = scmp.eq.s32.totalorder %s13, 0
    %p34 = por %p32, %p33
    %p35 = scmp.ne.s32.totalorder %s21, %s22
    %p36 = scmp.eq.s32.totalorder %s14, 1
    %p37 = por %p35, %p36
    %p39 = scmp.ne.s32.totalorder %s22, %s38
    %p40 = scmp.eq.s32.totalorder %s14, 0
    %p41 = por %p39, %p40
    %s43 = sadd.s32 %s42, 1
    %p46 = scmp.eq.s32.totalorder %s8, 1
    %p47 = scmp.ne.s32.totalorder %s42, %s44
    %p48 = scmp.eq.s32.totalorder %s8, 0
    %p49 = por %p47, %p48
    %p50 = scmp.ne.s32.totalorder %s42, %s44
    %p51 = scmp.eq.s32.totalorder %s13, 1
    %p52 = por %p50, %p51
    %p53 = scmp.ne.s32.totalorder %s44, %s45
    %p54 = scmp.eq.s32.totalorder %s13, 0
    %p55 = por %p53, %p54
    %p56 = scmp.ne.s32.totalorder %s44, %s45
    %p57 = scmp.eq.s32.totalorder %s14, 1
    %p58 = por %p56, %p57
    %p60 = scmp.ne.s32.totalorder %s45, %s59
    %p61 = scmp.eq.s32.totalorder %s14, 0
    %p62 = por %p60, %p61
    %s63 = ssub.s32 %s8, %s15
    %p64 = scmp.eq.s32.totalorder %s63, 0
    %s66 = sadd.s32 %s65, 1
    %s67 = scalar_select %p64, %s65, %s66
    %p70 = pneg %p64
    %p71 = scmp.eq.s32.totalorder %s8, 1
    %p72 = por %p70, %p71
    %p73 = scmp.ne.s32.totalorder %s65, %s68
    %p74 = scmp.eq.s32.totalorder %s8, 0
    %p75 = por %p73, %p74
    %p76 = scmp.ne.s32.totalorder %s65, %s68
    %p77 = scmp.eq.s32.totalorder %s13, 1
    %p78 = por %p76, %p77
    %p79 = scmp.ne.s32.totalorder %s68, %s69
    %p80 = scmp.eq.s32.totalorder %s13, 0
    %p81 = por %p79, %p80
    %p82 = scmp.ne.s32.totalorder %s68, %s69
    %p83 = scmp.eq.s32.totalorder %s14, 1
    %p84 = por %p82, %p83
    %p86 = scmp.ne.s32.totalorder %s69, %s85
    %p87 = scmp.eq.s32.totalorder %s14, 0
    %p88 = por %p86, %p87
    %p89 = scmp.le.s32.totalorder 1, %s8
    %p90 = scmp.lt.s32.totalorder %s8, 3
    %p91 = pnand %p89, %p90
    %p92 = pneg %p91
    // Predicated region
    $region9: #{embedding_gather.1} parent=5 // pred_check
      _
    $region10: #{embedding_gather.1} parent=5 // pred_check_branch
      %94 = sbr.rel (%p91) target = $region12
    $region11: #{embedding_gather.1} parent=5 // pred_region
      %s95 = ssub.s32 %s8, 1
      // Predicated region
      $region13: #{embedding_gather.1} parent=11 // pred_check
        %p96 = pneg %p55
      $region14: #{embedding_gather.1} parent=11 // pred_check_branch
        %98 = sbr.rel (%p96) target = $region16
      $region15: #{embedding_gather.1} parent=11 // pred_region
        _
      $region16: #{embedding_gather.1} parent=11 // pred_fallthru
        _
    $region12: #{embedding_gather.1} parent=5 // pred_fallthru
      _
    %p99 = scmp.lt.s32.totalorder %s8, 2
    // Predicated region
    $region17: #{embedding_gather.1} parent=5 // pred_check
      %p100 = pneg %p99
    $region18: #{embedding_gather.1} parent=5 // pred_check_branch
      %102 = sbr.rel (%p100) target = $region20
    $region19: #{embedding_gather.1} parent=5 // pred_region
      // Predicated region
      $region21: #{embedding_gather.1} parent=19 // pred_check
        %p103 = pneg %p28
      $region22: #{embedding_gather.1} parent=19 // pred_check_branch
        %105 = sbr.rel (%p103) target = $region24
      $region23: #{embedding_gather.1} parent=19 // pred_region
        %s106 = smul.u32 64, %s8
        %p107 = scmp.lt.s32.totalorder %s106, 127
        %s108 = scalar_select %p107, %s106, 127
        %s109 = smul.addr %s108, 8
        %s110 = scalar_lea.vmem %s0, %s109
        %s111 = smul.u32 64, %s8
      $region24: #{embedding_gather.1} parent=19 // pred_fallthru
        _
    $region20: #{embedding_gather.1} parent=5 // pred_fallthru
      _
    %p112 = scmp.le.s32.totalorder 1, %s8
    %p113 = scmp.lt.s32.totalorder %s8, 3
    %p114 = pnand %p112, %p113
    %p115 = pneg %p114
    // Predicated region
    $region25: #{embedding_gather.1} parent=5 // pred_check
      _
    $region26: #{embedding_gather.1} parent=5 // pred_check_branch
      %117 = sbr.rel (%p114) target = $region28
    $region27: #{embedding_gather.1} parent=5 // pred_region
      %s118 = ssub.s32 %s8, 1
      %s119 = smul.u32 64, %s13
      %p120 = scmp.lt.s32.totalorder %s119, 127
      %s121 = scalar_select %p120, %s119, 127
      %s122 = smul.addr %s121, 8
      %s123 = scalar_lea.vmem %s0, %s122
      %p124 = pneg %p34
      %p125 = pneg %p31
      %p126 = pneg %p55
      %p127 = pneg %p52
      %p128 = pneg %p81
      %p129 = pneg %p78
      %s130 = smul.u32 64, %s13
      %p131 = scmp.lt.s32.totalorder %s130, 127
      %s132 = scalar_select %p131, %s130, 127
      %s133 = smul.addr %s132, 8
      %s134 = scalar_lea.vmem %s2, %s133
      %s135 = smul.u32 64, %s13
      %p136 = scmp.lt.s32.totalorder %s135, 127
      %s137 = scalar_select %p136, %s135, 127
      %s138 = smul.addr %s137, 8
      %s139 = scalar_lea.vmem %s0, %s138
      %s140 = smul.u32 64, %s13
      %s141 = smul.u32 64, %s13
      %p142 = scmp.lt.s32.totalorder %s141, 127
      %s143 = scalar_select %p142, %s141, 127
      %s144 = smul.addr %s143, 8
      %s145 = scalar_lea.vmem %s2, %s144
      %s146 = smul.u32 64, %s13
      %v147 = vld [vmem:[%s139] sm:$0xff]
      %v148 = vld [vmem:[%s139 + $0x8] sm:$0xff]
      %v149 = vld [vmem:[%s139 + $0x10] sm:$0xff]
      %v150 = vld [vmem:[%s139 + $0x18] sm:$0xff]
      %v151 = vld [vmem:[%s139 + $0x20] sm:$0xff]
      %v152 = vld [vmem:[%s139 + $0x28] sm:$0xff]
      %v153 = vld [vmem:[%s139 + $0x30] sm:$0xff]
      %v154 = vld [vmem:[%s139 + $0x38] sm:$0xff]
      %v155 = vld [vmem:[%s139 + $0x40] sm:$0xff]
      %v156 = vld [vmem:[%s139 + $0x48] sm:$0xff]
      %v157 = vld [vmem:[%s139 + $0x50] sm:$0xff]
      %v158 = vld [vmem:[%s139 + $0x58] sm:$0xff]
      %v159 = vld [vmem:[%s139 + $0x60] sm:$0xff]
      %v160 = vld [vmem:[%s139 + $0x68] sm:$0xff]
      %v161 = vld [vmem:[%s139 + $0x70] sm:$0xff]
      %v162 = vld [vmem:[%s139 + $0x78] sm:$0xff]
      %v163 = vld [vmem:[%s139 + $0x80] sm:$0xff]
      %v164 = vld [vmem:[%s139 + $0x88] sm:$0xff]
      %v165 = vld [vmem:[%s139 + $0x90] sm:$0xff]
      %v166 = vld [vmem:[%s139 + $0x98] sm:$0xff]
      %v167 = vld [vmem:[%s139 + $0xa0] sm:$0xff]
      %v168 = vld [vmem:[%s139 + $0xa8] sm:$0xff]
      %v169 = vld [vmem:[%s139 + $0xb0] sm:$0xff]
      %v170 = vld [vmem:[%s139 + $0xb8] sm:$0xff]
      %v171 = vld [vmem:[%s139 + $0xc0] sm:$0xff]
      %v172 = vld [vmem:[%s139 + $0xc8] sm:$0xff]
      %v173 = vld [vmem:[%s139 + $0xd0] sm:$0xff]
      %v174 = vld [vmem:[%s139 + $0xd8] sm:$0xff]
      %v175 = vld [vmem:[%s139 + $0xe0] sm:$0xff]
      %v176 = vld [vmem:[%s139 + $0xe8] sm:$0xff]
      %v177 = vld [vmem:[%s139 + $0xf0] sm:$0xff]
      %v178 = vld [vmem:[%s139 + $0xf8] sm:$0xff]
      %v179 = vld [vmem:[%s139 + $0x100] sm:$0xff]
      %v180 = vld [vmem:[%s139 + $0x108] sm:$0xff]
      %v181 = vld [vmem:[%s139 + $0x110] sm:$0xff]
      %v182 = vld [vmem:[%s139 + $0x118] sm:$0xff]
      %v183 = vld [vmem:[%s139 + $0x120] sm:$0xff]
      %v184 = vld [vmem:[%s139 + $0x128] sm:$0xff]
      %v185 = vld [vmem:[%s139 + $0x130] sm:$0xff]
      %v186 = vld [vmem:[%s139 + $0x138] sm:$0xff]
      %v187 = vld [vmem:[%s139 + $0x140] sm:$0xff]
      %v188 = vld [vmem:[%s139 + $0x148] sm:$0xff]
      %v189 = vld [vmem:[%s139 + $0x150] sm:$0xff]
      %v190 = vld [vmem:[%s139 + $0x158] sm:$0xff]
      %v191 = vld [vmem:[%s139 + $0x160] sm:$0xff]
      %v192 = vld [vmem:[%s139 + $0x168] sm:$0xff]
      %v193 = vld [vmem:[%s139 + $0x170] sm:$0xff]
      %v194 = vld [vmem:[%s139 + $0x178] sm:$0xff]
      %v195 = vld [vmem:[%s139 + $0x180] sm:$0xff]
      %v196 = vld [vmem:[%s139 + $0x188] sm:$0xff]
      %v197 = vld [vmem:[%s139 + $0x190] sm:$0xff]
      %v198 = vld [vmem:[%s139 + $0x198] sm:$0xff]
      %v199 = vld [vmem:[%s139 + $0x1a0] sm:$0xff]
      %v200 = vld [vmem:[%s139 + $0x1a8] sm:$0xff]
      %v201 = vld [vmem:[%s139 + $0x1b0] sm:$0xff]
      %v202 = vld [vmem:[%s139 + $0x1b8] sm:$0xff]
      %v203 = vld [vmem:[%s139 + $0x1c0] sm:$0xff]
      %v204 = vld [vmem:[%s139 + $0x1c8] sm:$0xff]
      %v205 = vld [vmem:[%s139 + $0x1d0] sm:$0xff]
      %v206 = vld [vmem:[%s139 + $0x1d8] sm:$0xff]
      %v207 = vld [vmem:[%s139 + $0x1e0] sm:$0xff]
      %v208 = vld [vmem:[%s139 + $0x1e8] sm:$0xff]
      %v209 = vld [vmem:[%s139 + $0x1f0] sm:$0xff]
      %v210 = vld [vmem:[%s139 + $0x1f8] sm:$0xff]
      %v211 = vlaneseq
      %v212 = vand.u32 %v211, 127
      %v213 = vadd.s32 %v212, 128
      %v214 = vadd.s32 %v212, 256
      %v215 = vadd.s32 %v212, 384
      %216 = vset.pattern.permute.xlu0 0
      %217 = vperm.xlu0 %216, %v147
      %v218 = vpop.permute.xlu0 %217
      %219 = vset.pattern.permute.xlu0 0
      %220 = vperm.xlu0 %219, %v148
      %v221 = vpop.permute.xlu0 %220
      %222 = vset.pattern.permute.xlu0 0
      %223 = vperm.xlu0 %222, %v149
      %v224 = vpop.permute.xlu0 %223
      %225 = vset.pattern.permute.xlu0 0
      %226 = vperm.xlu0 %225, %v150
      %v227 = vpop.permute.xlu0 %226
      %228 = vset.pattern.permute.xlu0 0
      %229 = vperm.xlu0 %228, %v151
      %v230 = vpop.permute.xlu0 %229
      %231 = vset.pattern.permute.xlu0 0
      %232 = vperm.xlu0 %231, %v152
      %v233 = vpop.permute.xlu0 %232
      %234 = vset.pattern.permute.xlu0 0
      %235 = vperm.xlu0 %234, %v153
      %v236 = vpop.permute.xlu0 %235
      %237 = vset.pattern.permute.xlu0 0
      %238 = vperm.xlu0 %237, %v154
      %v239 = vpop.permute.xlu0 %238
      %240 = vset.pattern.permute.xlu0 0
      %241 = vperm.xlu0 %240, %v155
      %v242 = vpop.permute.xlu0 %241
      %243 = vset.pattern.permute.xlu0 0
      %244 = vperm.xlu0 %243, %v156
      %v245 = vpop.permute.xlu0 %244
      %246 = vset.pattern.permute.xlu0 0
      %247 = vperm.xlu0 %246, %v157
      %v248 = vpop.permute.xlu0 %247
      %249 = vset.pattern.permute.xlu0 0
      %250 = vperm.xlu0 %249, %v158
      %v251 = vpop.permute.xlu0 %250
      %252 = vset.pattern.permute.xlu0 0
      %253 = vperm.xlu0 %252, %v159
      %v254 = vpop.permute.xlu0 %253
      %255 = vset.pattern.permute.xlu0 0
      %256 = vperm.xlu0 %255, %v160
      %v257 = vpop.permute.xlu0 %256
      %258 = vset.pattern.permute.xlu0 0
      %259 = vperm.xlu0 %258, %v161
      %v260 = vpop.permute.xlu0 %259
      %261 = vset.pattern.permute.xlu0 0
      %262 = vperm.xlu0 %261, %v162
      %v263 = vpop.permute.xlu0 %262
      %264 = vset.pattern.permute.xlu0 0
      %265 = vperm.xlu0 %264, %v163
      %v266 = vpop.permute.xlu0 %265
      %267 = vset.pattern.permute.xlu0 0
      %268 = vperm.xlu0 %267, %v164
      %v269 = vpop.permute.xlu0 %268
      %270 = vset.pattern.permute.xlu0 0
      %271 = vperm.xlu0 %270, %v165
      %v272 = vpop.permute.xlu0 %271
      %273 = vset.pattern.permute.xlu0 0
      %274 = vperm.xlu0 %273, %v166
      %v275 = vpop.permute.xlu0 %274
      %276 = vset.pattern.permute.xlu0 0
      %277 = vperm.xlu0 %276, %v167
      %v278 = vpop.permute.xlu0 %277
      %279 = vset.pattern.permute.xlu0 0
      %280 = vperm.xlu0 %279, %v168
      %v281 = vpop.permute.xlu0 %280
      %282 = vset.pattern.permute.xlu0 0
      %283 = vperm.xlu0 %282, %v169
      %v284 = vpop.permute.xlu0 %283
      %285 = vset.pattern.permute.xlu0 0
      %286 = vperm.xlu0 %285, %v170
      %v287 = vpop.permute.xlu0 %286
      %288 = vset.pattern.permute.xlu0 0
      %289 = vperm.xlu0 %288, %v171
      %v290 = vpop.permute.xlu0 %289
      %291 = vset.pattern.permute.xlu0 0
      %292 = vperm.xlu0 %291, %v172
      %v293 = vpop.permute.xlu0 %292
      %294 = vset.pattern.permute.xlu0 0
      %295 = vperm.xlu0 %294, %v173
      %v296 = vpop.permute.xlu0 %295
      %297 = vset.pattern.permute.xlu0 0
      %298 = vperm.xlu0 %297, %v174
      %v299 = vpop.permute.xlu0 %298
      %300 = vset.pattern.permute.xlu0 0
      %301 = vperm.xlu0 %300, %v175
      %v302 = vpop.permute.xlu0 %301
      %303 = vset.pattern.permute.xlu0 0
      %304 = vperm.xlu0 %303, %v176
      %v305 = vpop.permute.xlu0 %304
      %306 = vset.pattern.permute.xlu0 0
      %307 = vperm.xlu0 %306, %v177
      %v308 = vpop.permute.xlu0 %307
      %309 = vset.pattern.permute.xlu0 0
      %310 = vperm.xlu0 %309, %v178
      %v311 = vpop.permute.xlu0 %310
      %312 = vset.pattern.permute.xlu0 0
      %313 = vperm.xlu0 %312, %v179
      %v314 = vpop.permute.xlu0 %313
      %315 = vset.pattern.permute.xlu0 0
      %316 = vperm.xlu0 %315, %v180
      %v317 = vpop.permute.xlu0 %316
      %318 = vset.pattern.permute.xlu0 0
      %319 = vperm.xlu0 %318, %v181
      %v320 = vpop.permute.xlu0 %319
      %321 = vset.pattern.permute.xlu0 0
      %322 = vperm.xlu0 %321, %v182
      %v323 = vpop.permute.xlu0 %322
      %324 = vset.pattern.permute.xlu0 0
      %325 = vperm.xlu0 %324, %v183
      %v326 = vpop.permute.xlu0 %325
      %327 = vset.pattern.permute.xlu0 0
      %328 = vperm.xlu0 %327, %v184
      %v329 = vpop.permute.xlu0 %328
      %330 = vset.pattern.permute.xlu0 0
      %331 = vperm.xlu0 %330, %v185
      %v332 = vpop.permute.xlu0 %331
      %333 = vset.pattern.permute.xlu0 0
      %334 = vperm.xlu0 %333, %v186
      %v335 = vpop.permute.xlu0 %334
      %336 = vset.pattern.permute.xlu0 0
      %337 = vperm.xlu0 %336, %v187
      %v338 = vpop.permute.xlu0 %337
      %339 = vset.pattern.permute.xlu0 0
      %340 = vperm.xlu0 %339, %v188
      %v341 = vpop.permute.xlu0 %340
      %342 = vset.pattern.permute.xlu0 0
      %343 = vperm.xlu0 %342, %v189
      %v344 = vpop.permute.xlu0 %343
      %345 = vset.pattern.permute.xlu0 0
      %346 = vperm.xlu0 %345, %v190
      %v347 = vpop.permute.xlu0 %346
      %348 = vset.pattern.permute.xlu0 0
      %349 = vperm.xlu0 %348, %v191
      %v350 = vpop.permute.xlu0 %349
      %351 = vset.pattern.permute.xlu0 0
      %352 = vperm.xlu0 %351, %v192
      %v353 = vpop.permute.xlu0 %352
      %354 = vset.pattern.permute.xlu0 0
      %355 = vperm.xlu0 %354, %v193
      %v356 = vpop.permute.xlu0 %355
      %357 = vset.pattern.permute.xlu0 0
      %358 = vperm.xlu0 %357, %v194
      %v359 = vpop.permute.xlu0 %358
      %360 = vset.pattern.permute.xlu0 0
      %361 = vperm.xlu0 %360, %v195
      %v362 = vpop.permute.xlu0 %361
      %363 = vset.pattern.permute.xlu0 0
      %364 = vperm.xlu0 %363, %v196
      %v365 = vpop.permute.xlu0 %364
      %366 = vset.pattern.permute.xlu0 0
      %367 = vperm.xlu0 %366, %v197
      %v368 = vpop.permute.xlu0 %367
      %369 = vset.pattern.permute.xlu0 0
      %370 = vperm.xlu0 %369, %v198
      %v371 = vpop.permute.xlu0 %370
      %372 = vset.pattern.permute.xlu0 0
      %373 = vperm.xlu0 %372, %v199
      %v374 = vpop.permute.xlu0 %373
      %375 = vset.pattern.permute.xlu0 0
      %376 = vperm.xlu0 %375, %v200
      %v377 = vpop.permute.xlu0 %376
      %378 = vset.pattern.permute.xlu0 0
      %379 = vperm.xlu0 %378, %v201
      %v380 = vpop.permute.xlu0 %379
      %381 = vset.pattern.permute.xlu0 0
      %382 = vperm.xlu0 %381, %v202
      %v383 = vpop.permute.xlu0 %382
      %384 = vset.pattern.permute.xlu0 0
      %385 = vperm.xlu0 %384, %v203
      %v386 = vpop.permute.xlu0 %385
      %387 = vset.pattern.permute.xlu0 0
      %388 = vperm.xlu0 %387, %v204
      %v389 = vpop.permute.xlu0 %388
      %390 = vset.pattern.permute.xlu0 0
      %391 = vperm.xlu0 %390, %v205
      %v392 = vpop.permute.xlu0 %391
      %393 = vset.pattern.permute.xlu0 0
      %394 = vperm.xlu0 %393, %v206
      %v395 = vpop.permute.xlu0 %394
      %396 = vset.pattern.permute.xlu0 0
      %397 = vperm.xlu0 %396, %v207
      %v398 = vpop.permute.xlu0 %397
      %399 = vset.pattern.permute.xlu0 0
      %400 = vperm.xlu0 %399, %v208
      %v401 = vpop.permute.xlu0 %400
      %402 = vset.pattern.permute.xlu0 0
      %403 = vperm.xlu0 %402, %v209
      %v404 = vpop.permute.xlu0 %403
      %405 = vset.pattern.permute.xlu0 0
      %406 = vperm.xlu0 %405, %v210
      %v407 = vpop.permute.xlu0 %406
      %vm408 = vcmp.eq.s32.totalorder %v212, %v218
      %vm409 = vcmp.eq.s32.totalorder %v213, %v218
      %vm410 = vcmp.eq.s32.totalorder %v214, %v218
      %vm411 = vcmp.eq.s32.totalorder %v215, %v218
      %vm412 = vcmp.eq.s32.totalorder %v212, %v221
      %vm413 = vcmp.eq.s32.totalorder %v213, %v221
      %vm414 = vcmp.eq.s32.totalorder %v214, %v221
      %vm415 = vcmp.eq.s32.totalorder %v215, %v221
      %vm416 = vcmp.eq.s32.totalorder %v212, %v224
      %vm417 = vcmp.eq.s32.totalorder %v213, %v224
      %vm418 = vcmp.eq.s32.totalorder %v214, %v224
      %vm419 = vcmp.eq.s32.totalorder %v215, %v224
      %vm420 = vcmp.eq.s32.totalorder %v212, %v227
      %vm421 = vcmp.eq.s32.totalorder %v213, %v227
      %vm422 = vcmp.eq.s32.totalorder %v214, %v227
      %vm423 = vcmp.eq.s32.totalorder %v215, %v227
      %vm424 = vcmp.eq.s32.totalorder %v212, %v230
      %vm425 = vcmp.eq.s32.totalorder %v213, %v230
      %vm426 = vcmp.eq.s32.totalorder %v214, %v230
      %vm427 = vcmp.eq.s32.totalorder %v215, %v230
      %vm428 = vcmp.eq.s32.totalorder %v212, %v233
      %vm429 = vcmp.eq.s32.totalorder %v213, %v233
      %vm430 = vcmp.eq.s32.totalorder %v214, %v233
      %vm431 = vcmp.eq.s32.totalorder %v215, %v233
      %vm432 = vcmp.eq.s32.totalorder %v212, %v236
      %vm433 = vcmp.eq.s32.totalorder %v213, %v236
      %vm434 = vcmp.eq.s32.totalorder %v214, %v236
      %vm435 = vcmp.eq.s32.totalorder %v215, %v236
      %vm436 = vcmp.eq.s32.totalorder %v212, %v239
      %vm437 = vcmp.eq.s32.totalorder %v213, %v239
      %vm438 = vcmp.eq.s32.totalorder %v214, %v239
      %vm439 = vcmp.eq.s32.totalorder %v215, %v239
      %vm440 = vcmp.eq.s32.totalorder %v212, %v242
      %vm441 = vcmp.eq.s32.totalorder %v213, %v242
      %vm442 = vcmp.eq.s32.totalorder %v214, %v242
      %vm443 = vcmp.eq.s32.totalorder %v215, %v242
      %vm444 = vcmp.eq.s32.totalorder %v212, %v245
      %vm445 = vcmp.eq.s32.totalorder %v213, %v245
      %vm446 = vcmp.eq.s32.totalorder %v214, %v245
      %vm447 = vcmp.eq.s32.totalorder %v215, %v245
      %vm448 = vcmp.eq.s32.totalorder %v212, %v248
      %vm449 = vcmp.eq.s32.totalorder %v213, %v248
      %vm450 = vcmp.eq.s32.totalorder %v214, %v248
      %vm451 = vcmp.eq.s32.totalorder %v215, %v248
      %vm452 = vcmp.eq.s32.totalorder %v212, %v251
      %vm453 = vcmp.eq.s32.totalorder %v213, %v251
      %vm454 = vcmp.eq.s32.totalorder %v214, %v251
      %vm455 = vcmp.eq.s32.totalorder %v215, %v251
      %vm456 = vcmp.eq.s32.totalorder %v212, %v254
      %vm457 = vcmp.eq.s32.totalorder %v213, %v254
      %vm458 = vcmp.eq.s32.totalorder %v214, %v254
      %vm459 = vcmp.eq.s32.totalorder %v215, %v254
      %vm460 = vcmp.eq.s32.totalorder %v212, %v257
      %vm461 = vcmp.eq.s32.totalorder %v213, %v257
      %vm462 = vcmp.eq.s32.totalorder %v214, %v257
      %vm463 = vcmp.eq.s32.totalorder %v215, %v257
      %vm464 = vcmp.eq.s32.totalorder %v212, %v260
      %vm465 = vcmp.eq.s32.totalorder %v213, %v260
      %vm466 = vcmp.eq.s32.totalorder %v214, %v260
      %vm467 = vcmp.eq.s32.totalorder %v215, %v260
      %vm468 = vcmp.eq.s32.totalorder %v212, %v263
      %vm469 = vcmp.eq.s32.totalorder %v213, %v263
      %vm470 = vcmp.eq.s32.totalorder %v214, %v263
      %vm471 = vcmp.eq.s32.totalorder %v215, %v263
      %vm472 = vcmp.eq.s32.totalorder %v212, %v266
      %vm473 = vcmp.eq.s32.totalorder %v213, %v266
      %vm474 = vcmp.eq.s32.totalorder %v214, %v266
      %vm475 = vcmp.eq.s32.totalorder %v215, %v266
      %vm476 = vcmp.eq.s32.totalorder %v212, %v269
      %vm477 = vcmp.eq.s32.totalorder %v213, %v269
      %vm478 = vcmp.eq.s32.totalorder %v214, %v269
      %vm479 = vcmp.eq.s32.totalorder %v215, %v269
      %vm480 = vcmp.eq.s32.totalorder %v212, %v272
      %vm481 = vcmp.eq.s32.totalorder %v213, %v272
      %vm482 = vcmp.eq.s32.totalorder %v214, %v272
      %vm483 = vcmp.eq.s32.totalorder %v215, %v272
      %vm484 = vcmp.eq.s32.totalorder %v212, %v275
      %vm485 = vcmp.eq.s32.totalorder %v213, %v275
      %vm486 = vcmp.eq.s32.totalorder %v214, %v275
      %vm487 = vcmp.eq.s32.totalorder %v215, %v275
      %vm488 = vcmp.eq.s32.totalorder %v212, %v278
      %vm489 = vcmp.eq.s32.totalorder %v213, %v278
      %vm490 = vcmp.eq.s32.totalorder %v214, %v278
      %vm491 = vcmp.eq.s32.totalorder %v215, %v278
      %vm492 = vcmp.eq.s32.totalorder %v212, %v281
      %vm493 = vcmp.eq.s32.totalorder %v213, %v281
      %vm494 = vcmp.eq.s32.totalorder %v214, %v281
      %vm495 = vcmp.eq.s32.totalorder %v215, %v281
      %vm496 = vcmp.eq.s32.totalorder %v212, %v284
      %vm497 = vcmp.eq.s32.totalorder %v213, %v284
      %vm498 = vcmp.eq.s32.totalorder %v214, %v284
      %vm499 = vcmp.eq.s32.totalorder %v215, %v284
      %vm500 = vcmp.eq.s32.totalorder %v212, %v287
      %vm501 = vcmp.eq.s32.totalorder %v213, %v287
      %vm502 = vcmp.eq.s32.totalorder %v214, %v287
      %vm503 = vcmp.eq.s32.totalorder %v215, %v287
      %vm504 = vcmp.eq.s32.totalorder %v212, %v290
      %vm505 = vcmp.eq.s32.totalorder %v213, %v290
      %vm506 = vcmp.eq.s32.totalorder %v214, %v290
      %vm507 = vcmp.eq.s32.totalorder %v215, %v290
      %vm508 = vcmp.eq.s32.totalorder %v212, %v293
      %vm509 = vcmp.eq.s32.totalorder %v213, %v293
      %vm510 = vcmp.eq.s32.totalorder %v214, %v293
      %vm511 = vcmp.eq.s32.totalorder %v215, %v293
      %vm512 = vcmp.eq.s32.totalorder %v212, %v296
      %vm513 = vcmp.eq.s32.totalorder %v213, %v296
      %vm514 = vcmp.eq.s32.totalorder %v214, %v296
      %vm515 = vcmp.eq.s32.totalorder %v215, %v296
      %vm516 = vcmp.eq.s32.totalorder %v212, %v299
      %vm517 = vcmp.eq.s32.totalorder %v213, %v299
      %vm518 = vcmp.eq.s32.totalorder %v214, %v299
      %vm519 = vcmp.eq.s32.totalorder %v215, %v299
      %vm520 = vcmp.eq.s32.totalorder %v212, %v302
      %vm521 = vcmp.eq.s32.totalorder %v213, %v302
      %vm522 = vcmp.eq.s32.totalorder %v214, %v302
      %vm523 = vcmp.eq.s32.totalorder %v215, %v302
      %vm524 = vcmp.eq.s32.totalorder %v212, %v305
      %vm525 = vcmp.eq.s32.totalorder %v213, %v305
      %vm526 = vcmp.eq.s32.totalorder %v214, %v305
      %vm527 = vcmp.eq.s32.totalorder %v215, %v305
      %vm528 = vcmp.eq.s32.totalorder %v212, %v308
      %vm529 = vcmp.eq.s32.totalorder %v213, %v308
      %vm530 = vcmp.eq.s32.totalorder %v214, %v308
      %vm531 = vcmp.eq.s32.totalorder %v215, %v308
      %vm532 = vcmp.eq.s32.totalorder %v212, %v311
      %vm533 = vcmp.eq.s32.totalorder %v213, %v311
      %vm534 = vcmp.eq.s32.totalorder %v214, %v311
      %vm535 = vcmp.eq.s32.totalorder %v215, %v311
      %vm536 = vcmp.eq.s32.totalorder %v212, %v314
      %vm537 = vcmp.eq.s32.totalorder %v213, %v314
      %vm538 = vcmp.eq.s32.totalorder %v214, %v314
      %vm539 = vcmp.eq.s32.totalorder %v215, %v314
      %vm540 = vcmp.eq.s32.totalorder %v212, %v317
      %vm541 = vcmp.eq.s32.totalorder %v213, %v317
      %vm542 = vcmp.eq.s32.totalorder %v214, %v317
      %vm543 = vcmp.eq.s32.totalorder %v215, %v317
      %vm544 = vcmp.eq.s32.totalorder %v212, %v320
      %vm545 = vcmp.eq.s32.totalorder %v213, %v320
      %vm546 = vcmp.eq.s32.totalorder %v214, %v320
      %vm547 = vcmp.eq.s32.totalorder %v215, %v320
      %vm548 = vcmp.eq.s32.totalorder %v212, %v323
      %vm549 = vcmp.eq.s32.totalorder %v213, %v323
      %vm550 = vcmp.eq.s32.totalorder %v214, %v323
      %vm551 = vcmp.eq.s32.totalorder %v215, %v323
      %vm552 = vcmp.eq.s32.totalorder %v212, %v326
      %vm553 = vcmp.eq.s32.totalorder %v213, %v326
      %vm554 = vcmp.eq.s32.totalorder %v214, %v326
      %vm555 = vcmp.eq.s32.totalorder %v215, %v326
      %vm556 = vcmp.eq.s32.totalorder %v212, %v329
      %vm557 = vcmp.eq.s32.totalorder %v213, %v329
      %vm558 = vcmp.eq.s32.totalorder %v214, %v329
      %vm559 = vcmp.eq.s32.totalorder %v215, %v329
      %vm560 = vcmp.eq.s32.totalorder %v212, %v332
      %vm561 = vcmp.eq.s32.totalorder %v213, %v332
      %vm562 = vcmp.eq.s32.totalorder %v214, %v332
      %vm563 = vcmp.eq.s32.totalorder %v215, %v332
      %vm564 = vcmp.eq.s32.totalorder %v212, %v335
      %vm565 = vcmp.eq.s32.totalorder %v213, %v335
      %vm566 = vcmp.eq.s32.totalorder %v214, %v335
      %vm567 = vcmp.eq.s32.totalorder %v215, %v335
      %vm568 = vcmp.eq.s32.totalorder %v212, %v338
      %vm569 = vcmp.eq.s32.totalorder %v213, %v338
      %vm570 = vcmp.eq.s32.totalorder %v214, %v338
      %vm571 = vcmp.eq.s32.totalorder %v215, %v338
      %vm572 = vcmp.eq.s32.totalorder %v212, %v341
      %vm573 = vcmp.eq.s32.totalorder %v213, %v341
      %vm574 = vcmp.eq.s32.totalorder %v214, %v341
      %vm575 = vcmp.eq.s32.totalorder %v215, %v341
      %vm576 = vcmp.eq.s32.totalorder %v212, %v344
      %vm577 = vcmp.eq.s32.totalorder %v213, %v344
      %vm578 = vcmp.eq.s32.totalorder %v214, %v344
      %vm579 = vcmp.eq.s32.totalorder %v215, %v344
      %vm580 = vcmp.eq.s32.totalorder %v212, %v347
      %vm581 = vcmp.eq.s32.totalorder %v213, %v347
      %vm582 = vcmp.eq.s32.totalorder %v214, %v347
      %vm583 = vcmp.eq.s32.totalorder %v215, %v347
      %vm584 = vcmp.eq.s32.totalorder %v212, %v350
      %vm585 = vcmp.eq.s32.totalorder %v213, %v350
      %vm586 = vcmp.eq.s32.totalorder %v214, %v350
      %vm587 = vcmp.eq.s32.totalorder %v215, %v350
      %vm588 = vcmp.eq.s32.totalorder %v212, %v353
      %vm589 = vcmp.eq.s32.totalorder %v213, %v353
      %vm590 = vcmp.eq.s32.totalorder %v214, %v353
      %vm591 = vcmp.eq.s32.totalorder %v215, %v353
      %vm592 = vcmp.eq.s32.totalorder %v212, %v356
      %vm593 = vcmp.eq.s32.totalorder %v213, %v356
      %vm594 = vcmp.eq.s32.totalorder %v214, %v356
      %vm595 = vcmp.eq.s32.totalorder %v215, %v356
      %vm596 = vcmp.eq.s32.totalorder %v212, %v359
      %vm597 = vcmp.eq.s32.totalorder %v213, %v359
      %vm598 = vcmp.eq.s32.totalorder %v214, %v359
      %vm599 = vcmp.eq.s32.totalorder %v215, %v359
      %vm600 = vcmp.eq.s32.totalorder %v212, %v362
      %vm601 = vcmp.eq.s32.totalorder %v213, %v362
      %vm602 = vcmp.eq.s32.totalorder %v214, %v362
      %vm603 = vcmp.eq.s32.totalorder %v215, %v362
      %vm604 = vcmp.eq.s32.totalorder %v212, %v365
      %vm605 = vcmp.eq.s32.totalorder %v213, %v365
      %vm606 = vcmp.eq.s32.totalorder %v214, %v365
      %vm607 = vcmp.eq.s32.totalorder %v215, %v365
      %vm608 = vcmp.eq.s32.totalorder %v212, %v368
      %vm609 = vcmp.eq.s32.totalorder %v213, %v368
      %vm610 = vcmp.eq.s32.totalorder %v214, %v368
      %vm611 = vcmp.eq.s32.totalorder %v215, %v368
      %vm612 = vcmp.eq.s32.totalorder %v212, %v371
      %vm613 = vcmp.eq.s32.totalorder %v213, %v371
      %vm614 = vcmp.eq.s32.totalorder %v214, %v371
      %vm615 = vcmp.eq.s32.totalorder %v215, %v371
      %vm616 = vcmp.eq.s32.totalorder %v212, %v374
      %vm617 = vcmp.eq.s32.totalorder %v213, %v374
      %vm618 = vcmp.eq.s32.totalorder %v214, %v374
      %vm619 = vcmp.eq.s32.totalorder %v215, %v374
      %vm620 = vcmp.eq.s32.totalorder %v212, %v377
      %vm621 = vcmp.eq.s32.totalorder %v213, %v377
      %vm622 = vcmp.eq.s32.totalorder %v214, %v377
      %vm623 = vcmp.eq.s32.totalorder %v215, %v377
      %vm624 = vcmp.eq.s32.totalorder %v212, %v380
      %vm625 = vcmp.eq.s32.totalorder %v213, %v380
      %vm626 = vcmp.eq.s32.totalorder %v214, %v380
      %vm627 = vcmp.eq.s32.totalorder %v215, %v380
      %vm628 = vcmp.eq.s32.totalorder %v212, %v383
      %vm629 = vcmp.eq.s32.totalorder %v213, %v383
      %vm630 = vcmp.eq.s32.totalorder %v214, %v383
      %vm631 = vcmp.eq.s32.totalorder %v215, %v383
      %vm632 = vcmp.eq.s32.totalorder %v212, %v386
      %vm633 = vcmp.eq.s32.totalorder %v213, %v386
      %vm634 = vcmp.eq.s32.totalorder %v214, %v386
      %vm635 = vcmp.eq.s32.totalorder %v215, %v386
      %vm636 = vcmp.eq.s32.totalorder %v212, %v389
      %vm637 = vcmp.eq.s32.totalorder %v213, %v389
      %vm638 = vcmp.eq.s32.totalorder %v214, %v389
      %vm639 = vcmp.eq.s32.totalorder %v215, %v389
      %vm640 = vcmp.eq.s32.totalorder %v212, %v392
      %vm641 = vcmp.eq.s32.totalorder %v213, %v392
      %vm642 = vcmp.eq.s32.totalorder %v214, %v392
      %vm643 = vcmp.eq.s32.totalorder %v215, %v392
      %vm644 = vcmp.eq.s32.totalorder %v212, %v395
      %vm645 = vcmp.eq.s32.totalorder %v213, %v395
      %vm646 = vcmp.eq.s32.totalorder %v214, %v395
      %vm647 = vcmp.eq.s32.totalorder %v215, %v395
      %vm648 = vcmp.eq.s32.totalorder %v212, %v398
      %vm649 = vcmp.eq.s32.totalorder %v213, %v398
      %vm650 = vcmp.eq.s32.totalorder %v214, %v398
      %vm651 = vcmp.eq.s32.totalorder %v215, %v398
      %vm652 = vcmp.eq.s32.totalorder %v212, %v401
      %vm653 = vcmp.eq.s32.totalorder %v213, %v401
      %vm654 = vcmp.eq.s32.totalorder %v214, %v401
      %vm655 = vcmp.eq.s32.totalorder %v215, %v401
      %vm656 = vcmp.eq.s32.totalorder %v212, %v404
      %vm657 = vcmp.eq.s32.totalorder %v213, %v404
      %vm658 = vcmp.eq.s32.totalorder %v214, %v404
      %vm659 = vcmp.eq.s32.totalorder %v215, %v404
      %vm660 = vcmp.eq.s32.totalorder %v212, %v407
      %vm661 = vcmp.eq.s32.totalorder %v213, %v407
      %vm662 = vcmp.eq.s32.totalorder %v214, %v407
      %vm663 = vcmp.eq.s32.totalorder %v215, %v407
      %v664 = vsel %vm408, 1, 0
      %v665 = vsel %vm409, 1, 0
      %v666 = vsel %vm410, 1, 0
      %v667 = vsel %vm411, 1, 0
      %v668 = vsel %vm412, 1, 0
      %v669 = vsel %vm413, 1, 0
      %v670 = vsel %vm414, 1, 0
      %v671 = vsel %vm415, 1, 0
      %v672 = vsel %vm416, 1, 0
      %v673 = vsel %vm417, 1, 0
      %v674 = vsel %vm418, 1, 0
      %v675 = vsel %vm419, 1, 0
      %v676 = vsel %vm420, 1, 0
      %v677 = vsel %vm421, 1, 0
      %v678 = vsel %vm422, 1, 0
      %v679 = vsel %vm423, 1, 0
      %v680 = vsel %vm424, 1, 0
      %v681 = vsel %vm425, 1, 0
      %v682 = vsel %vm426, 1, 0
      %v683 = vsel %vm427, 1, 0
      %v684 = vsel %vm428, 1, 0
      %v685 = vsel %vm429, 1, 0
      %v686 = vsel %vm430, 1, 0
      %v687 = vsel %vm431, 1, 0
      %v688 = vsel %vm432, 1, 0
      %v689 = vsel %vm433, 1, 0
      %v690 = vsel %vm434, 1, 0
      %v691 = vsel %vm435, 1, 0
      %v692 = vsel %vm436, 1, 0
      %v693 = vsel %vm437, 1, 0
      %v694 = vsel %vm438, 1, 0
      %v695 = vsel %vm439, 1, 0
      %v696 = vsel %vm440, 1, 0
      %v697 = vsel %vm441, 1, 0
      %v698 = vsel %vm442, 1, 0
      %v699 = vsel %vm443, 1, 0
      %v700 = vsel %vm444, 1, 0
      %v701 = vsel %vm445, 1, 0
      %v702 = vsel %vm446, 1, 0
      %v703 = vsel %vm447, 1, 0
      %v704 = vsel %vm448, 1, 0
      %v705 = vsel %vm449, 1, 0
      %v706 = vsel %vm450, 1, 0
      %v707 = vsel %vm451, 1, 0
      %v708 = vsel %vm452, 1, 0
      %v709 = vsel %vm453, 1, 0
      %v710 = vsel %vm454, 1, 0
      %v711 = vsel %vm455, 1, 0
      %v712 = vsel %vm456, 1, 0
      %v713 = vsel %vm457, 1, 0
      %v714 = vsel %vm458, 1, 0
      %v715 = vsel %vm459, 1, 0
      %v716 = vsel %vm460, 1, 0
      %v717 = vsel %vm461, 1, 0
      %v718 = vsel %vm462, 1, 0
      %v719 = vsel %vm463, 1, 0
      %v720 = vsel %vm464, 1, 0
      %v721 = vsel %vm465, 1, 0
      %v722 = vsel %vm466, 1, 0
      %v723 = vsel %vm467, 1, 0
      %v724 = vsel %vm468, 1, 0
      %v725 = vsel %vm469, 1, 0
      %v726 = vsel %vm470, 1, 0
      %v727 = vsel %vm471, 1, 0
      %v728 = vsel %vm472, 1, 0
      %v729 = vsel %vm473, 1, 0
      %v730 = vsel %vm474, 1, 0
      %v731 = vsel %vm475, 1, 0
      %v732 = vsel %vm476, 1, 0
      %v733 = vsel %vm477, 1, 0
      %v734 = vsel %vm478, 1, 0
      %v735 = vsel %vm479, 1, 0
      %v736 = vsel %vm480, 1, 0
      %v737 = vsel %vm481, 1, 0
      %v738 = vsel %vm482, 1, 0
      %v739 = vsel %vm483, 1, 0
      %v740 = vsel %vm484, 1, 0
      %v741 = vsel %vm485, 1, 0
      %v742 = vsel %vm486, 1, 0
      %v743 = vsel %vm487, 1, 0
      %v744 = vsel %vm488, 1, 0
      %v745 = vsel %vm489, 1, 0
      %v746 = vsel %vm490, 1, 0
      %v747 = vsel %vm491, 1, 0
      %v748 = vsel %vm492, 1, 0
      %v749 = vsel %vm493, 1, 0
      %v750 = vsel %vm494, 1, 0
      %v751 = vsel %vm495, 1, 0
      %v752 = vsel %vm496, 1, 0
      %v753 = vsel %vm497, 1, 0
      %v754 = vsel %vm498, 1, 0
      %v755 = vsel %vm499, 1, 0
      %v756 = vsel %vm500, 1, 0
      %v757 = vsel %vm501, 1, 0
      %v758 = vsel %vm502, 1, 0
      %v759 = vsel %vm503, 1, 0
      %v760 = vsel %vm504, 1, 0
      %v761 = vsel %vm505, 1, 0
      %v762 = vsel %vm506, 1, 0
      %v763 = vsel %vm507, 1, 0
      %v764 = vsel %vm508, 1, 0
      %v765 = vsel %vm509, 1, 0
      %v766 = vsel %vm510, 1, 0
      %v767 = vsel %vm511, 1, 0
      %v768 = vsel %vm512, 1, 0
      %v769 = vsel %vm513, 1, 0
      %v770 = vsel %vm514, 1, 0
      %v771 = vsel %vm515, 1, 0
      %v772 = vsel %vm516, 1, 0
      %v773 = vsel %vm517, 1, 0
      %v774 = vsel %vm518, 1, 0
      %v775 = vsel %vm519, 1, 0
      %v776 = vsel %vm520, 1, 0
      %v777 = vsel %vm521, 1, 0
      %v778 = vsel %vm522, 1, 0
      %v779 = vsel %vm523, 1, 0
      %v780 = vsel %vm524, 1, 0
      %v781 = vsel %vm525, 1, 0
      %v782 = vsel %vm526, 1, 0
      %v783 = vsel %vm527, 1, 0
      %v784 = vsel %vm528, 1, 0
      %v785 = vsel %vm529, 1, 0
      %v786 = vsel %vm530, 1, 0
      %v787 = vsel %vm531, 1, 0
      %v788 = vsel %vm532, 1, 0
      %v789 = vsel %vm533, 1, 0
      %v790 = vsel %vm534, 1, 0
      %v791 = vsel %vm535, 1, 0
      %v792 = vsel %vm536, 1, 0
      %v793 = vsel %vm537, 1, 0
      %v794 = vsel %vm538, 1, 0
      %v795 = vsel %vm539, 1, 0
      %v796 = vsel %vm540, 1, 0
      %v797 = vsel %vm541, 1, 0
      %v798 = vsel %vm542, 1, 0
      %v799 = vsel %vm543, 1, 0
      %v800 = vsel %vm544, 1, 0
      %v801 = vsel %vm545, 1, 0
      %v802 = vsel %vm546, 1, 0
      %v803 = vsel %vm547, 1, 0
      %v804 = vsel %vm548, 1, 0
      %v805 = vsel %vm549, 1, 0
      %v806 = vsel %vm550, 1, 0
      %v807 = vsel %vm551, 1, 0
      %v808 = vsel %vm552, 1, 0
      %v809 = vsel %vm553, 1, 0
      %v810 = vsel %vm554, 1, 0
      %v811 = vsel %vm555, 1, 0
      %v812 = vsel %vm556, 1, 0
      %v813 = vsel %vm557, 1, 0
      %v814 = vsel %vm558, 1, 0
      %v815 = vsel %vm559, 1, 0
      %v816 = vsel %vm560, 1, 0
      %v817 = vsel %vm561, 1, 0
      %v818 = vsel %vm562, 1, 0
      %v819 = vsel %vm563, 1, 0
      %v820 = vsel %vm564, 1, 0
      %v821 = vsel %vm565, 1, 0
      %v822 = vsel %vm566, 1, 0
      %v823 = vsel %vm567, 1, 0
      %v824 = vsel %vm568, 1, 0
      %v825 = vsel %vm569, 1, 0
      %v826 = vsel %vm570, 1, 0
      %v827 = vsel %vm571, 1, 0
      %v828 = vsel %vm572, 1, 0
      %v829 = vsel %vm573, 1, 0
      %v830 = vsel %vm574, 1, 0
      %v831 = vsel %vm575, 1, 0
      %v832 = vsel %vm576, 1, 0
      %v833 = vsel %vm577, 1, 0
      %v834 = vsel %vm578, 1, 0
      %v835 = vsel %vm579, 1, 0
      %v836 = vsel %vm580, 1, 0
      %v837 = vsel %vm581, 1, 0
      %v838 = vsel %vm582, 1, 0
      %v839 = vsel %vm583, 1, 0
      %v840 = vsel %vm584, 1, 0
      %v841 = vsel %vm585, 1, 0
      %v842 = vsel %vm586, 1, 0
      %v843 = vsel %vm587, 1, 0
      %v844 = vsel %vm588, 1, 0
      %v845 = vsel %vm589, 1, 0
      %v846 = vsel %vm590, 1, 0
      %v847 = vsel %vm591, 1, 0
      %v848 = vsel %vm592, 1, 0
      %v849 = vsel %vm593, 1, 0
      %v850 = vsel %vm594, 1, 0
      %v851 = vsel %vm595, 1, 0
      %v852 = vsel %vm596, 1, 0
      %v853 = vsel %vm597, 1, 0
      %v854 = vsel %vm598, 1, 0
      %v855 = vsel %vm599, 1, 0
      %v856 = vsel %vm600, 1, 0
      %v857 = vsel %vm601, 1, 0
      %v858 = vsel %vm602, 1, 0
      %v859 = vsel %vm603, 1, 0
      %v860 = vsel %vm604, 1, 0
      %v861 = vsel %vm605, 1, 0
      %v862 = vsel %vm606, 1, 0
      %v863 = vsel %vm607, 1, 0
      %v864 = vsel %vm608, 1, 0
      %v865 = vsel %vm609, 1, 0
      %v866 = vsel %vm610, 1, 0
      %v867 = vsel %vm611, 1, 0
      %v868 = vsel %vm612, 1, 0
      %v869 = vsel %vm613, 1, 0
      %v870 = vsel %vm614, 1, 0
      %v871 = vsel %vm615, 1, 0
      %v872 = vsel %vm616, 1, 0
      %v873 = vsel %vm617, 1, 0
      %v874 = vsel %vm618, 1, 0
      %v875 = vsel %vm619, 1, 0
      %v876 = vsel %vm620, 1, 0
      %v877 = vsel %vm621, 1, 0
      %v878 = vsel %vm622, 1, 0
      %v879 = vsel %vm623, 1, 0
      %v880 = vsel %vm624, 1, 0
      %v881 = vsel %vm625, 1, 0
      %v882 = vsel %vm626, 1, 0
      %v883 = vsel %vm627, 1, 0
      %v884 = vsel %vm628, 1, 0
      %v885 = vsel %vm629, 1, 0
      %v886 = vsel %vm630, 1, 0
      %v887 = vsel %vm631, 1, 0
      %v888 = vsel %vm632, 1, 0
      %v889 = vsel %vm633, 1, 0
      %v890 = vsel %vm634, 1, 0
      %v891 = vsel %vm635, 1, 0
      %v892 = vsel %vm636, 1, 0
      %v893 = vsel %vm637, 1, 0
      %v894 = vsel %vm638, 1, 0
      %v895 = vsel %vm639, 1, 0
      %v896 = vsel %vm640, 1, 0
      %v897 = vsel %vm641, 1, 0
      %v898 = vsel %vm642, 1, 0
      %v899 = vsel %vm643, 1, 0
      %v900 = vsel %vm644, 1, 0
      %v901 = vsel %vm645, 1, 0
      %v902 = vsel %vm646, 1, 0
      %v903 = vsel %vm647, 1, 0
      %v904 = vsel %vm648, 1, 0
      %v905 = vsel %vm649, 1, 0
      %v906 = vsel %vm650, 1, 0
      %v907 = vsel %vm651, 1, 0
      %v908 = vsel %vm652, 1, 0
      %v909 = vsel %vm653, 1, 0
      %v910 = vsel %vm654, 1, 0
      %v911 = vsel %vm655, 1, 0
      %v912 = vsel %vm656, 1, 0
      %v913 = vsel %vm657, 1, 0
      %v914 = vsel %vm658, 1, 0
      %v915 = vsel %vm659, 1, 0
      %v916 = vsel %vm660, 1, 0
      %v917 = vsel %vm661, 1, 0
      %v918 = vsel %vm662, 1, 0
      %v919 = vsel %vm663, 1, 0
      %v920 = vcvt.s32.f32 %v664
      %v921 = vcvt.s32.f32 %v665
      %v922 = vcvt.s32.f32 %v666
      %v923 = vcvt.s32.f32 %v667
      %v924 = vcvt.s32.f32 %v668
      %v925 = vcvt.s32.f32 %v669
      %v926 = vcvt.s32.f32 %v670
      %v927 = vcvt.s32.f32 %v671
      %v928 = vcvt.s32.f32 %v672
      %v929 = vcvt.s32.f32 %v673
      %v930 = vcvt.s32.f32 %v674
      %v931 = vcvt.s32.f32 %v675
      %v932 = vcvt.s32.f32 %v676
      %v933 = vcvt.s32.f32 %v677
      %v934 = vcvt.s32.f32 %v678
      %v935 = vcvt.s32.f32 %v679
      %v936 = vcvt.s32.f32 %v680
      %v937 = vcvt.s32.f32 %v681
      %v938 = vcvt.s32.f32 %v682
      %v939 = vcvt.s32.f32 %v683
      %v940 = vcvt.s32.f32 %v684
      %v941 = vcvt.s32.f32 %v685
      %v942 = vcvt.s32.f32 %v686
      %v943 = vcvt.s32.f32 %v687
      %v944 = vcvt.s32.f32 %v688
      %v945 = vcvt.s32.f32 %v689
      %v946 = vcvt.s32.f32 %v690
      %v947 = vcvt.s32.f32 %v691
      %v948 = vcvt.s32.f32 %v692
      %v949 = vcvt.s32.f32 %v693
      %v950 = vcvt.s32.f32 %v694
      %v951 = vcvt.s32.f32 %v695
      %v952 = vcvt.s32.f32 %v696
      %v953 = vcvt.s32.f32 %v697
      %v954 = vcvt.s32.f32 %v698
      %v955 = vcvt.s32.f32 %v699
      %v956 = vcvt.s32.f32 %v700
      %v957 = vcvt.s32.f32 %v701
      %v958 = vcvt.s32.f32 %v702
      %v959 = vcvt.s32.f32 %v703
      %v960 = vcvt.s32.f32 %v704
      %v961 = vcvt.s32.f32 %v705
      %v962 = vcvt.s32.f32 %v706
      %v963 = vcvt.s32.f32 %v707
      %v964 = vcvt.s32.f32 %v708
      %v965 = vcvt.s32.f32 %v709
      %v966 = vcvt.s32.f32 %v710
      %v967 = vcvt.s32.f32 %v711
      %v968 = vcvt.s32.f32 %v712
      %v969 = vcvt.s32.f32 %v713
      %v970 = vcvt.s32.f32 %v714
      %v971 = vcvt.s32.f32 %v715
      %v972 = vcvt.s32.f32 %v716
      %v973 = vcvt.s32.f32 %v717
      %v974 = vcvt.s32.f32 %v718
      %v975 = vcvt.s32.f32 %v719
      %v976 = vcvt.s32.f32 %v720
      %v977 = vcvt.s32.f32 %v721
      %v978 = vcvt.s32.f32 %v722
      %v979 = vcvt.s32.f32 %v723
      %v980 = vcvt.s32.f32 %v724
      %v981 = vcvt.s32.f32 %v725
      %v982 = vcvt.s32.f32 %v726
      %v983 = vcvt.s32.f32 %v727
      %v984 = vcvt.s32.f32 %v728
      %v985 = vcvt.s32.f32 %v729
      %v986 = vcvt.s32.f32 %v730
      %v987 = vcvt.s32.f32 %v731
      %v988 = vcvt.s32.f32 %v732
      %v989 = vcvt.s32.f32 %v733
      %v990 = vcvt.s32.f32 %v734
      %v991 = vcvt.s32.f32 %v735
      %v992 = vcvt.s32.f32 %v736
      %v993 = vcvt.s32.f32 %v737
      %v994 = vcvt.s32.f32 %v738
      %v995 = vcvt.s32.f32 %v739
      %v996 = vcvt.s32.f32 %v740
      %v997 = vcvt.s32.f32 %v741
      %v998 = vcvt.s32.f32 %v742
      %v999 = vcvt.s32.f32 %v743
      %v1000 = vcvt.s32.f32 %v744
      %v1001 = vcvt.s32.f32 %v745
      %v1002 = vcvt.s32.f32 %v746
      %v1003 = vcvt.s32.f32 %v747
      %v1004 = vcvt.s32.f32 %v748
      %v1005 = vcvt.s32.f32 %v749
      %v1006 = vcvt.s32.f32 %v750
      %v1007 = vcvt.s32.f32 %v751
      %v1008 = vcvt.s32.f32 %v752
      %v1009 = vcvt.s32.f32 %v753
      %v1010 = vcvt.s32.f32 %v754
      %v1011 = vcvt.s32.f32 %v755
      %v1012 = vcvt.s32.f32 %v756
      %v1013 = vcvt.s32.f32 %v757
      %v1014 = vcvt.s32.f32 %v758
      %v1015 = vcvt.s32.f32 %v759
      %v1016 = vcvt.s32.f32 %v760
      %v1017 = vcvt.s32.f32 %v761
      %v1018 = vcvt.s32.f32 %v762
      %v1019 = vcvt.s32.f32 %v763
      %v1020 = vcvt.s32.f32 %v764
      %v1021 = vcvt.s32.f32 %v765
      %v1022 = vcvt.s32.f32 %v766
      %v1023 = vcvt.s32.f32 %v767
      %v1024 = vcvt.s32.f32 %v768
      %v1025 = vcvt.s32.f32 %v769
      %v1026 = vcvt.s32.f32 %v770
      %v1027 = vcvt.s32.f32 %v771
      %v1028 = vcvt.s32.f32 %v772
      %v1029 = vcvt.s32.f32 %v773
      %v1030 = vcvt.s32.f32 %v774
      %v1031 = vcvt.s32.f32 %v775
      %v1032 = vcvt.s32.f32 %v776
      %v1033 = vcvt.s32.f32 %v777
      %v1034 = vcvt.s32.f32 %v778
      %v1035 = vcvt.s32.f32 %v779
      %v1036 = vcvt.s32.f32 %v780
      %v1037 = vcvt.s32.f32 %v781
      %v1038 = vcvt.s32.f32 %v782
      %v1039 = vcvt.s32.f32 %v783
      %v1040 = vcvt.s32.f32 %v784
      %v1041 = vcvt.s32.f32 %v785
      %v1042 = vcvt.s32.f32 %v786
      %v1043 = vcvt.s32.f32 %v787
      %v1044 = vcvt.s32.f32 %v788
      %v1045 = vcvt.s32.f32 %v789
      %v1046 = vcvt.s32.f32 %v790
      %v1047 = vcvt.s32.f32 %v791
      %v1048 = vcvt.s32.f32 %v792
      %v1049 = vcvt.s32.f32 %v793
      %v1050 = vcvt.s32.f32 %v794
      %v1051 = vcvt.s32.f32 %v795
      %v1052 = vcvt.s32.f32 %v796
      %v1053 = vcvt.s32.f32 %v797
      %v1054 = vcvt.s32.f32 %v798
      %v1055 = vcvt.s32.f32 %v799
      %v1056 = vcvt.s32.f32 %v800
      %v1057 = vcvt.s32.f32 %v801
      %v1058 = vcvt.s32.f32 %v802
      %v1059 = vcvt.s32.f32 %v803
      %v1060 = vcvt.s32.f32 %v804
      %v1061 = vcvt.s32.f32 %v805
      %v1062 = vcvt.s32.f32 %v806
      %v1063 = vcvt.s32.f32 %v807
      %v1064 = vcvt.s32.f32 %v808
      %v1065 = vcvt.s32.f32 %v809
      %v1066 = vcvt.s32.f32 %v810
      %v1067 = vcvt.s32.f32 %v811
      %v1068 = vcvt.s32.f32 %v812
      %v1069 = vcvt.s32.f32 %v813
      %v1070 = vcvt.s32.f32 %v814
      %v1071 = vcvt.s32.f32 %v815
      %v1072 = vcvt.s32.f32 %v816
      %v1073 = vcvt.s32.f32 %v817
      %v1074 = vcvt.s32.f32 %v818
      %v1075 = vcvt.s32.f32 %v819
      %v1076 = vcvt.s32.f32 %v820
      %v1077 = vcvt.s32.f32 %v821
      %v1078 = vcvt.s32.f32 %v822
      %v1079 = vcvt.s32.f32 %v823
      %v1080 = vcvt.s32.f32 %v824
      %v1081 = vcvt.s32.f32 %v825
      %v1082 = vcvt.s32.f32 %v826
      %v1083 = vcvt.s32.f32 %v827
      %v1084 = vcvt.s32.f32 %v828
      %v1085 = vcvt.s32.f32 %v829
      %v1086 = vcvt.s32.f32 %v830
      %v1087 = vcvt.s32.f32 %v831
      %v1088 = vcvt.s32.f32 %v832
      %v1089 = vcvt.s32.f32 %v833
      %v1090 = vcvt.s32.f32 %v834
      %v1091 = vcvt.s32.f32 %v835
      %v1092 = vcvt.s32.f32 %v836
      %v1093 = vcvt.s32.f32 %v837
      %v1094 = vcvt.s32.f32 %v838
      %v1095 = vcvt.s32.f32 %v839
      %v1096 = vcvt.s32.f32 %v840
      %v1097 = vcvt.s32.f32 %v841
      %v1098 = vcvt.s32.f32 %v842
      %v1099 = vcvt.s32.f32 %v843
      %v1100 = vcvt.s32.f32 %v844
      %v1101 = vcvt.s32.f32 %v845
      %v1102 = vcvt.s32.f32 %v846
      %v1103 = vcvt.s32.f32 %v847
      %v1104 = vcvt.s32.f32 %v848
      %v1105 = vcvt.s32.f32 %v849
      %v1106 = vcvt.s32.f32 %v850
      %v1107 = vcvt.s32.f32 %v851
      %v1108 = vcvt.s32.f32 %v852
      %v1109 = vcvt.s32.f32 %v853
      %v1110 = vcvt.s32.f32 %v854
      %v1111 = vcvt.s32.f32 %v855
      %v1112 = vcvt.s32.f32 %v856
      %v1113 = vcvt.s32.f32 %v857
      %v1114 = vcvt.s32.f32 %v858
      %v1115 = vcvt.s32.f32 %v859
      %v1116 = vcvt.s32.f32 %v860
      %v1117 = vcvt.s32.f32 %v861
      %v1118 = vcvt.s32.f32 %v862
      %v1119 = vcvt.s32.f32 %v863
      %v1120 = vcvt.s32.f32 %v864
      %v1121 = vcvt.s32.f32 %v865
      %v1122 = vcvt.s32.f32 %v866
      %v1123 = vcvt.s32.f32 %v867
      %v1124 = vcvt.s32.f32 %v868
      %v1125 = vcvt.s32.f32 %v869
      %v1126 = vcvt.s32.f32 %v870
      %v1127 = vcvt.s32.f32 %v871
      %v1128 = vcvt.s32.f32 %v872
      %v1129 = vcvt.s32.f32 %v873
      %v1130 = vcvt.s32.f32 %v874
      %v1131 = vcvt.s32.f32 %v875
      %v1132 = vcvt.s32.f32 %v876
      %v1133 = vcvt.s32.f32 %v877
      %v1134 = vcvt.s32.f32 %v878
      %v1135 = vcvt.s32.f32 %v879
      %v1136 = vcvt.s32.f32 %v880
      %v1137 = vcvt.s32.f32 %v881
      %v1138 = vcvt.s32.f32 %v882
      %v1139 = vcvt.s32.f32 %v883
      %v1140 = vcvt.s32.f32 %v884
      %v1141 = vcvt.s32.f32 %v885
      %v1142 = vcvt.s32.f32 %v886
      %v1143 = vcvt.s32.f32 %v887
      %v1144 = vcvt.s32.f32 %v888
      %v1145 = vcvt.s32.f32 %v889
      %v1146 = vcvt.s32.f32 %v890
      %v1147 = vcvt.s32.f32 %v891
      %v1148 = vcvt.s32.f32 %v892
      %v1149 = vcvt.s32.f32 %v893
      %v1150 = vcvt.s32.f32 %v894
      %v1151 = vcvt.s32.f32 %v895
      %v1152 = vcvt.s32.f32 %v896
      %v1153 = vcvt.s32.f32 %v897
      %v1154 = vcvt.s32.f32 %v898
      %v1155 = vcvt.s32.f32 %v899
      %v1156 = vcvt.s32.f32 %v900
      %v1157 = vcvt.s32.f32 %v901
      %v1158 = vcvt.s32.f32 %v902
      %v1159 = vcvt.s32.f32 %v903
      %v1160 = vcvt.s32.f32 %v904
      %v1161 = vcvt.s32.f32 %v905
      %v1162 = vcvt.s32.f32 %v906
      %v1163 = vcvt.s32.f32 %v907
      %v1164 = vcvt.s32.f32 %v908
      %v1165 = vcvt.s32.f32 %v909
      %v1166 = vcvt.s32.f32 %v910
      %v1167 = vcvt.s32.f32 %v911
      %v1168 = vcvt.s32.f32 %v912
      %v1169 = vcvt.s32.f32 %v913
      %v1170 = vcvt.s32.f32 %v914
      %v1171 = vcvt.s32.f32 %v915
      %v1172 = vcvt.s32.f32 %v916
      %v1173 = vcvt.s32.f32 %v917
      %v1174 = vcvt.s32.f32 %v918
      %v1175 = vcvt.s32.f32 %v919
      %v1176 = vld [vmem:[%s1] sm:$0xff]
      %v1177 = vld [vmem:[%s1 + $0x8] sm:$0xff]
      %v1178 = vld [vmem:[%s1 + $0x10] sm:$0xff]
      %v1179 = vld [vmem:[%s1 + $0x18] sm:$0xff]
      %v1180 = vld [vmem:[%s1 + $0x20] sm:$0xff]
      %v1181 = vld [vmem:[%s1 + $0x28] sm:$0xff]
      %v1182 = vld [vmem:[%s1 + $0x30] sm:$0xff]
      %v1183 = vld [vmem:[%s1 + $0x38] sm:$0xff]
      %v1184 = vld [vmem:[%s1 + $0x40] sm:$0xff]
      %v1185 = vld [vmem:[%s1 + $0x48] sm:$0xff]
      %v1186 = vld [vmem:[%s1 + $0x50] sm:$0xff]
      %v1187 = vld [vmem:[%s1 + $0x58] sm:$0xff]
      %v1188 = vld [vmem:[%s1 + $0x60] sm:$0xff]
      %v1189 = vld [vmem:[%s1 + $0x68] sm:$0xff]
      %v1190 = vld [vmem:[%s1 + $0x70] sm:$0xff]
      %v1191 = vld [vmem:[%s1 + $0x78] sm:$0xff]
      %v1192 = vld [vmem:[%s1 + $0x80] sm:$0xff]
      %v1193 = vld [vmem:[%s1 + $0x88] sm:$0xff]
      %v1194 = vld [vmem:[%s1 + $0x90] sm:$0xff]
      %v1195 = vld [vmem:[%s1 + $0x98] sm:$0xff]
      %v1196 = vld [vmem:[%s1 + $0xa0] sm:$0xff]
      %v1197 = vld [vmem:[%s1 + $0xa8] sm:$0xff]
      %v1198 = vld [vmem:[%s1 + $0xb0] sm:$0xff]
      %v1199 = vld [vmem:[%s1 + $0xb8] sm:$0xff]
      %v1200 = vld [vmem:[%s1 + $0xc0] sm:$0xff]
      %v1201 = vld [vmem:[%s1 + $0xc8] sm:$0xff]
      %v1202 = vld [vmem:[%s1 + $0xd0] sm:$0xff]
      %v1203 = vld [vmem:[%s1 + $0xd8] sm:$0xff]
      %v1204 = vld [vmem:[%s1 + $0xe0] sm:$0xff]
      %v1205 = vld [vmem:[%s1 + $0xe8] sm:$0xff]
      %v1206 = vld [vmem:[%s1 + $0xf0] sm:$0xff]
      %v1207 = vld [vmem:[%s1 + $0xf8] sm:$0xff]
      %v1208 = vld [vmem:[%s1 + $0x100] sm:$0xff]
      %v1209 = vld [vmem:[%s1 + $0x108] sm:$0xff]
      %v1210 = vld [vmem:[%s1 + $0x110] sm:$0xff]
      %v1211 = vld [vmem:[%s1 + $0x118] sm:$0xff]
      %v1212 = vld [vmem:[%s1 + $0x120] sm:$0xff]
      %v1213 = vld [vmem:[%s1 + $0x128] sm:$0xff]
      %v1214 = vld [vmem:[%s1 + $0x130] sm:$0xff]
      %v1215 = vld [vmem:[%s1 + $0x138] sm:$0xff]
      %v1216 = vld [vmem:[%s1 + $0x140] sm:$0xff]
      %v1217 = vld [vmem:[%s1 + $0x148] sm:$0xff]
      %v1218 = vld [vmem:[%s1 + $0x150] sm:$0xff]
      %v1219 = vld [vmem:[%s1 + $0x158] sm:$0xff]
      %v1220 = vld [vmem:[%s1 + $0x160] sm:$0xff]
      %v1221 = vld [vmem:[%s1 + $0x168] sm:$0xff]
      %v1222 = vld [vmem:[%s1 + $0x170] sm:$0xff]
      %v1223 = vld [vmem:[%s1 + $0x178] sm:$0xff]
      %v1224 = vld [vmem:[%s1 + $0x180] sm:$0xff]
      %v1225 = vld [vmem:[%s1 + $0x188] sm:$0xff]
      %v1226 = vld [vmem:[%s1 + $0x190] sm:$0xff]
      %v1227 = vld [vmem:[%s1 + $0x198] sm:$0xff]
      %v1228 = vld [vmem:[%s1 + $0x1a0] sm:$0xff]
      %v1229 = vld [vmem:[%s1 + $0x1a8] sm:$0xff]
      %v1230 = vld [vmem:[%s1 + $0x1b0] sm:$0xff]
      %v1231 = vld [vmem:[%s1 + $0x1b8] sm:$0xff]
      %v1232 = vld [vmem:[%s1 + $0x1c0] sm:$0xff]
      %v1233 = vld [vmem:[%s1 + $0x1c8] sm:$0xff]
      %v1234 = vld [vmem:[%s1 + $0x1d0] sm:$0xff]
      %v1235 = vld [vmem:[%s1 + $0x1d8] sm:$0xff]
      %v1236 = vld [vmem:[%s1 + $0x1e0] sm:$0xff]
      %v1237 = vld [vmem:[%s1 + $0x1e8] sm:$0xff]
      %v1238 = vld [vmem:[%s1 + $0x1f0] sm:$0xff]
      %v1239 = vld [vmem:[%s1 + $0x1f8] sm:$0xff]
      %1240 = vmatprep.subr.mxu0 0.0
      %v1241 = vand.u32 %v1176, 4294901760
      %1242 = vmatpush1.msra.mxu0 %v1241
      %1243 = vmatprep.subr.mxu0 0.0
      %v1244 = vand.u32 %v1177, 4294901760
      %1245 = vmatpush1.msra.mxu0 %v1244
      %1246 = vmatprep.subr.mxu0 0.0
      %v1247 = vand.u32 %v1178, 4294901760
      %1248 = vmatpush1.msra.mxu0 %v1247
      %1249 = vmatprep.subr.mxu0 0.0
      %v1250 = vand.u32 %v1179, 4294901760
      %1251 = vmatpush1.msra.mxu0 %v1250
      %1252 = vmatprep.subr.mxu0 0.0
      %v1253 = vand.u32 %v1180, 4294901760
      %1254 = vmatpush1.msra.mxu0 %v1253
      %1255 = vmatprep.subr.mxu0 0.0
      %v1256 = vand.u32 %v1181, 4294901760
      %1257 = vmatpush1.msra.mxu0 %v1256
      %1258 = vmatprep.subr.mxu0 0.0
      %v1259 = vand.u32 %v1182, 4294901760
      %1260 = vmatpush1.msra.mxu0 %v1259
      %1261 = vmatprep.subr.mxu0 0.0
      %v1262 = vand.u32 %v1183, 4294901760
      %1263 = vmatpush1.msra.mxu0 %v1262
      %1264 = vmatprep.subr.mxu0 0.0
      %v1265 = vand.u32 %v1184, 4294901760
      %1266 = vmatpush1.msra.mxu0 %v1265
      %1267 = vmatprep.subr.mxu0 0.0
      %v1268 = vand.u32 %v1185, 4294901760
      %1269 = vmatpush1.msra.mxu0 %v1268
      %1270 = vmatprep.subr.mxu0 0.0
      %v1271 = vand.u32 %v1186, 4294901760
      %1272 = vmatpush1.msra.mxu0 %v1271
      %1273 = vmatprep.subr.mxu0 0.0
      %v1274 = vand.u32 %v1187, 4294901760
      %1275 = vmatpush1.msra.mxu0 %v1274
      %1276 = vmatprep.subr.mxu0 0.0
      %v1277 = vand.u32 %v1188, 4294901760
      %1278 = vmatpush1.msra.mxu0 %v1277
      %1279 = vmatprep.subr.mxu0 0.0
      %v1280 = vand.u32 %v1189, 4294901760
      %1281 = vmatpush1.msra.mxu0 %v1280
      %1282 = vmatprep.subr.mxu0 0.0
      %v1283 = vand.u32 %v1190, 4294901760
      %1284 = vmatpush1.msra.mxu0 %v1283
      %1285 = vmatprep.subr.mxu0 0.0
      %v1286 = vand.u32 %v1191, 4294901760
      %1287 = vmatpush1.msra.mxu0 %v1286
      %1288 = vmatprep.subr.mxu0 0.0
      %v1289 = vand.u32 %v1192, 4294901760
      %1290 = vmatpush1.msra.mxu0 %v1289
      %1291 = vmatprep.subr.mxu0 0.0
      %v1292 = vand.u32 %v1193, 4294901760
      %1293 = vmatpush1.msra.mxu0 %v1292
      %1294 = vmatprep.subr.mxu0 0.0
      %v1295 = vand.u32 %v1194, 4294901760
      %1296 = vmatpush1.msra.mxu0 %v1295
      %1297 = vmatprep.subr.mxu0 0.0
      %v1298 = vand.u32 %v1195, 4294901760
      %1299 = vmatpush1.msra.mxu0 %v1298
      %1300 = vmatprep.subr.mxu0 0.0
      %v1301 = vand.u32 %v1196, 4294901760
      %1302 = vmatpush1.msra.mxu0 %v1301
      %1303 = vmatprep.subr.mxu0 0.0
      %v1304 = vand.u32 %v1197, 4294901760
      %1305 = vmatpush1.msra.mxu0 %v1304
      %1306 = vmatprep.subr.mxu0 0.0
      %v1307 = vand.u32 %v1198, 4294901760
      %1308 = vmatpush1.msra.mxu0 %v1307
      %1309 = vmatprep.subr.mxu0 0.0
      %v1310 = vand.u32 %v1199, 4294901760
      %1311 = vmatpush1.msra.mxu0 %v1310
      %1312 = vmatprep.subr.mxu0 0.0
      %v1313 = vand.u32 %v1200, 4294901760
      %1314 = vmatpush1.msra.mxu0 %v1313
      %1315 = vmatprep.subr.mxu0 0.0
      %v1316 = vand.u32 %v1201, 4294901760
      %1317 = vmatpush1.msra.mxu0 %v1316
      %1318 = vmatprep.subr.mxu0 0.0
      %v1319 = vand.u32 %v1202, 4294901760
      %1320 = vmatpush1.msra.mxu0 %v1319
      %1321 = vmatprep.subr.mxu0 0.0
      %v1322 = vand.u32 %v1203, 4294901760
      %1323 = vmatpush1.msra.mxu0 %v1322
      %1324 = vmatprep.subr.mxu0 0.0
      %v1325 = vand.u32 %v1204, 4294901760
      %1326 = vmatpush1.msra.mxu0 %v1325
      %1327 = vmatprep.subr.mxu0 0.0
      %v1328 = vand.u32 %v1205, 4294901760
      %1329 = vmatpush1.msra.mxu0 %v1328
      %1330 = vmatprep.subr.mxu0 0.0
      %v1331 = vand.u32 %v1206, 4294901760
      %1332 = vmatpush1.msra.mxu0 %v1331
      %1333 = vmatprep.subr.mxu0 0.0
      %v1334 = vand.u32 %v1207, 4294901760
      %1335 = vmatpush1.msra.mxu0 %v1334
      %v1336 = vand.u32 %v921, 4294901760
      %v1337 = vsub.f32 %v921, %v1336
      %v1338 = vand.u32 %v1337, 4294901760
      %v1339 = vsub.f32 %v1337, %v1338
      %v1340 = vand.u32 %v1339, 4294901760
      %1341 = vmatprep.mubr.f32.mxu0 %v1340
      %v1342 = vand.u32 %v920, 4294901760
      %v1343 = vsub.f32 %v920, %v1342
      %v1344 = vand.u32 %v1343, 4294901760
      %v1345 = vsub.f32 %v1343, %v1344
      %v1346 = vand.u32 %v1345, 4294901760
      %1347 = vmatmul.mubr.f32.gmra.mrb[0].mxu0 %v1346
      %v1348 = vpop.f32.mrb[0].mxu0
      %v1349 = vadd.f32 0.0, %v1348
      %v1350 = vpop.f32.mrb[0].mxu0
      %v1351 = vand.u32 %v925, 4294901760
      %v1352 = vsub.f32 %v925, %v1351
      %v1353 = vand.u32 %v1352, 4294901760
      %v1354 = vsub.f32 %v1352, %v1353
      %v1355 = vand.u32 %v1354, 4294901760
      %1356 = vmatprep.mubr.f32.mxu0 %v1355
      %v1357 = vand.u32 %v924, 4294901760
      %v1358 = vsub.f32 %v924, %v1357
      %v1359 = vand.u32 %v1358, 4294901760
      %v1360 = vsub.f32 %v1358, %v1359
      %v1361 = vand.u32 %v1360, 4294901760
      %1362 = vmatmul.mubr.f32.gmra.mrb[0].mxu0 %v1361
      %v1363 = vpop.f32.mrb[0].mxu0
      %v1364 = vadd.f32 0.0, %v1363
      %v1365 = vpop.f32.mrb[0].mxu0
      %v1366 = vand.u32 %v929, 4294901760
      %v1367 = vsub.f32 %v929, %v1366
      %v1368 = vand.u32 %v1367, 4294901760
      %v1369 = vsub.f32 %v1367, %v1368
      %v1370 = vand.u32 %v1369, 4294901760
      %1371 = vmatprep.mubr.f32.mxu0 %v1370
      %v1372 = vand.u32 %v928, 4294901760
      %v1373 = vsub.f32 %v928, %v1372
      %v1374 = vand.u32 %v1373, 4294901760
      %v1375 = vsub.f32 %v1373, %v1374
      %v1376 = vand.u32 %v1375, 4294901760
      %1377 = vmatmul.mubr.f32.gmra.mrb[0].mxu0 %v1376
      %v1378 = vpop.f32.mrb[0].mxu0
      %v1379 = vadd.f32 0.0, %v1378
      %v1380 = vpop.f32.mrb[0].mxu0
      %v1381 = vand.u32 %v933, 4294901760
      %v1382 = vsub.f32 %v933, %v1381
      %v1383 = vand.u32 %v1382, 4294901760
      %v1384 = vsub.f32 %v1382, %v1383
      %v1385 = vand.u32 %v1384, 4294901760
      %1386 = vmatprep.mubr.f32.mxu0 %v1385
      %v1387 = vand.u32 %v932, 4294901760
      %v1388 = vsub.f32 %v932, %v1387
      %v1389 = vand.u32 %v1388, 4294901760
      %v1390 = vsub.f32 %v1388, %v1389
      %v1391 = vand.u32 %v1390, 4294901760
      %1392 = vmatmul.mubr.f32.gmra.mrb[0].mxu0 %v1391
      %v1393 = vpop.f32.mrb[0].mxu0
      %v1394 = vadd.f32 0.0, %v1393
      %v1395 = vpop.f32.mrb[0].mxu0
      %v1396 = vand.u32 %v937, 4294901760
      %v1397 = vsub.f32 %v937, %v1396
      %v1398 = vand.u32 %v1397, 4294901760
      %v1399 = vsub.f32 %v1397, %v1398
      %v1400 = vand.u32 %v1399, 4294901760
      %1401 = vmatprep.mubr.f32.mxu0 %v1400
      %v1402 = vand.u32 %v936, 4294901760
      %v1403 = vsub.f32 %v936, %v1402
      %v1404 = vand.u32 %v1403, 4294901760
      %v1405 = vsub.f32 %v1403, %v1404
      %v1406 = vand.u32 %v1405, 4294901760
      %1407 = vmatmul.mubr.f32.gmra.mrb[0].mxu0 %v1406
      %v1408 = vpop.f32.mrb[0].mxu0
      %v1409 = vadd.f32 0.0, %v1408
      %v1410 = vpop.f32.mrb[0].mxu0
      %v1411 = vand.u32 %v941, 4294901760
      %v1412 = vsub.f32 %v941, %v1411
      %v1413 = vand.u32 %v1412, 4294901760
      %v1414 = vsub.f32 %v1412, %v1413
      %v1415 = vand.u32 %v1414, 4294901760
      %1416 = vmatprep.mubr.f32.mxu0 %v1415
      %v1417 = vand.u32 %v940, 4294901760
      %v1418 = vsub.f32 %v940, %v1417
      %v1419 = vand.u32 %v1418, 4294901760
      %v1420 = vsub.f32 %v1418, %v1419
      %v1421 = vand.u32 %v1420, 4294901760
      %1422 = vmatmul.mubr.f32.gmra.mrb[0].mxu0 %v1421
      %v1423 = vpop.f32.mrb[0].mxu0
      %v1424 = vadd.f32 0.0, %v1423
      %v1425 = vpop.f32.mrb[0].mxu0
      %v1426 = vand.u32 %v945, 4294901760
      %v1427 = vsub.f32 %v945, %v1426
      %v1428 = vand.u32 %v1427, 4294901760
      %v1429 = vsub.f32 %v1427, %v1428
      %v1430 = vand.u32 %v1429, 4294901760
      %1431 = vmatprep.mubr.f32.mxu0 %v1430
      %v1432 = vand.u32 %v944, 4294901760
      %v1433 = vsub.f32 %v944, %v1432
      %v1434 = vand.u32 %v1433, 4294901760
      %v1435 = vsub.f32 %v1433, %v1434
      %v1436 = vand.u32 %v1435, 4294901760
      %1437 = vmatmul.mubr.f32.gmra.mrb[0].mxu0 %v1436
      %v1438 = vpop.f32.mrb[0].mxu0
      %v1439 = vadd.f32 0.0, %v1438
      %v1440 = vpop.f32.mrb[0].mxu0
      %v1441 = vand.u32 %v949, 4294901760
      %v1442 = vsub.f32 %v949, %v1441
      %v1443 = vand.u32 %v1442, 4294901760
      %v1444 = vsub.f32 %v1442, %v1443
      %v1445 = vand.u32 %v1444, 4294901760
      %1446 = vmatprep.mubr.f32.mxu0 %v1445
      %v1447 = vand.u32 %v948, 4294901760
      %v1448 = vsub.f32 %v948, %v1447
      %v1449 = vand.u32 %v1448, 4294901760
      %v1450 = vsub.f32 %v1448, %v1449
      %v1451 = vand.u32 %v1450, 4294901760
      %1452 = vmatmul.mubr.f32.gmra.mrb[0].mxu0 %v1451
      %v1453 = vpop.f32.mrb[0].mxu0
      %v1454 = vadd.f32 0.0, %v1453
      %v1455 = vpop.f32.mrb[0].mxu0
      %v1456 = vand.u32 %v953, 4294901760
      %v1457 = vsub.f32 %v953, %v1456
      %v1458 = vand.u32 %v1457, 4294901760
      %v1459 = vsub.f32 %v1457, %v1458
      %v1460 = vand.u32 %v1459, 4294901760
      %1461 = vmatprep.mubr.f32.mxu0 %v1460
      %v1462 = vand.u32 %v952, 4294901760
      %v1463 = vsub.f32 %v952, %v1462
      %v1464 = vand.u32 %v1463, 4294901760
      %v1465 = vsub.f32 %v1463, %v1464
      %v1466 = vand.u32 %v1465, 4294901760
      %1467 = vmatmul.mubr.f32.gmra.mrb[0].mxu0 %v1466
      %v1468 = vpop.f32.mrb[0].mxu0
      %v1469 = vadd.f32 0.0, %v1468
      %v1470 = vpop.f32.mrb[0].mxu0
      %v1471 = vand.u32 %v957, 4294901760
      %v1472 = vsub.f32 %v957, %v1471
      %v1473 = vand.u32 %v1472, 4294901760
      %v1474 = vsub.f32 %v1472, %v1473
      %v1475 = vand.u32 %v1474, 4294901760
      %1476 = vmatprep.mubr.f32.mxu0 %v1475
      %v1477 = vand.u32 %v956, 4294901760
      %v1478 = vsub.f32 %v956, %v1477
      %v1479 = vand.u32 %v1478, 4294901760
      %v1480 = vsub.f32 %v1478, %v1479
      %v1481 = vand.u32 %v1480, 4294901760
      %1482 = vmatmul.mubr.f32.gmra.mrb[0].mxu0 %v1481
      %v1483 = vpop.f32.mrb[0].mxu0
      %v1484 = vadd.f32 0.0, %v1483
      %v1485 = vpop.f32.mrb[0].mxu0
      %v1486 = vand.u32 %v961, 4294901760
      %v1487 = vsub.f32 %v961, %v1486
      %v1488 = vand.u32 %v1487, 4294901760
      %v1489 = vsub.f32 %v1487, %v1488
      %v1490 = vand.u32 %v1489, 4294901760
      %1491 = vmatprep.mubr.f32.mxu0 %v1490
      %v1492 = vand.u32 %v960, 4294901760
      %v1493 = vsub.f32 %v960, %v1492
      %v1494 = vand.u32 %v1493, 4294901760
      %v1495 = vsub.f32 %v1493, %v1494
      %v1496 = vand.u32 %v1495, 4294901760
      %1497 = vmatmul.mubr.f32.gmra.mrb[0].mxu0 %v1496
      %v1498 = vpop.f32.mrb[0].mxu0
      %v1499 = vadd.f32 0.0, %v1498
      %v1500 = vpop.f32.mrb[0].mxu0
      %v1501 = vand.u32 %v965, 4294901760
      %v1502 = vsub.f32 %v965, %v1501
      %v1503 = vand.u32 %v1502, 4294901760
      %v1504 = vsub.f32 %v1502, %v1503
      %v1505 = vand.u32 %v1504, 4294901760
      %1506 = vmatprep.mubr.f32.mxu0 %v1505
      %v1507 = vand.u32 %v964, 4294901760
      %v1508 = vsub.f32 %v964, %v1507
      %v1509 = vand.u32 %v1508, 4294901760
      %v1510 = vsub.f32 %v1508, %v1509
      %v1511 = vand.u32 %v1510, 4294901760
      %1512 = vmatmul.mubr.f32.gmra.mrb[0].mxu0 %v1511
      %v1513 = vpop.f32.mrb[0].mxu0
      %v1514 = vadd.f32 0.0, %v1513
      %v1515 = vpop.f32.mrb[0].mxu0
      %v1516 = vand.u32 %v969, 4294901760
      %v1517 = vsub.f32 %v969, %v1516
      %v1518 = vand.u32 %v1517, 4294901760
      %v1519 = vsub.f32 %v1517, %v1518
      %v1520 = vand.u32 %v1519, 4294901760
      %1521 = vmatprep.mubr.f32.mxu0 %v1520
      %v1522 = vand.u32 %v968, 4294901760
      %v1523 = vsub.f32 %v968, %v1522
      %v1524 = vand.u32 %v1523, 4294901760
      %v1525 = vsub.f32 %v1523, %v1524
      %v1526 = vand.u32 %v1525, 4294901760
      %1527 = vmatmul.mubr.f32.gmra.mrb[0].mxu0 %v1526
      %v1528 = vpop.f32.mrb[0].mxu0
      %v1529 = vadd.f32 0.0, %v1528
      %v1530 = vpop.f32.mrb[0].mxu0
      %v1531 = vand.u32 %v973, 4294901760
      %v1532 = vsub.f32 %v973, %v1531
      %v1533 = vand.u32 %v1532, 4294901760
      %v1534 = vsub.f32 %v1532, %v1533
      %v1535 = vand.u32 %v1534, 4294901760
      %1536 = vmatprep.mubr.f32.mxu0 %v1535
      %v1537 = vand.u32 %v972, 4294901760
      %v1538 = vsub.f32 %v972, %v1537
      %v1539 = vand.u32 %v1538, 4294901760
      %v1540 = vsub.f32 %v1538, %v1539
      %v1541 = vand.u32 %v1540, 4294901760
      %1542 = vmatmul.mubr.f32.gmra.mrb[0].mxu0 %v1541
      %v1543 = vpop.f32.mrb[0].mxu0
      %v1544 = vadd.f32 0.0, %v1543
      %v1545 = vpop.f32.mrb[0].mxu0
      %v1546 = vand.u32 %v977, 4294901760
      %v1547 = vsub.f32 %v977, %v1546
      %v1548 = vand.u32 %v1547, 4294901760
      %v1549 = vsub.f32 %v1547, %v1548
      %v1550 = vand.u32 %v1549, 4294901760
      %1551 = vmatprep.mubr.f32.mxu0 %v1550
      %v1552 = vand.u32 %v976, 4294901760
      %v1553 = vsub.f32 %v976, %v1552
      %v1554 = vand.u32 %v1553, 4294901760
      %v1555 = vsub.f32 %v1553, %v1554
      %v1556 = vand.u32 %v1555, 4294901760
      %1557 = vmatmul.mubr.f32.gmra.mrb[0].mxu0 %v1556
      %v1558 = vpop.f32.mrb[0].mxu0
      %v1559 = vadd.f32 0.0, %v1558
      %v1560 = vpop.f32.mrb[0].mxu0
      %v1561 = vand.u32 %v981, 4294901760
      %v1562 = vsub.f32 %v981, %v1561
      %v1563 = vand.u32 %v1562, 4294901760
      %v1564 = vsub.f32 %v1562, %v1563
      %v1565 = vand.u32 %v1564, 4294901760
      %1566 = vmatprep.mubr.f32.mxu0 %v1565
      %v1567 = vand.u32 %v980, 4294901760
      %v1568 = vsub.f32 %v980, %v1567
      %v1569 = vand.u32 %v1568, 4294901760
      %v1570 = vsub.f32 %v1568, %v1569
      %v1571 = vand.u32 %v1570, 4294901760
      %1572 = vmatmul.mubr.f32.gmra.mrb[0].mxu0 %v1571
      %v1573 = vpop.f32.mrb[0].mxu0
      %v1574 = vadd.f32 0.0, %v1573
      %v1575 = vpop.f32.mrb[0].mxu0
      %v1576 = vand.u32 %v985, 4294901760
      %v1577 = vsub.f32 %v985, %v1576
      %v1578 = vand.u32 %v1577, 4294901760
      %v1579 = vsub.f32 %v1577, %v1578
      %v1580 = vand.u32 %v1579, 4294901760
      %1581 = vmatprep.mubr.f32.mxu0 %v1580
      %v1582 = vand.u32 %v984, 4294901760
      %v1583 = vsub.f32 %v984, %v1582
      %v1584 = vand.u32 %v1583, 4294901760
      %v1585 = vsub.f32 %v1583, %v1584
      %v1586 = vand.u32 %v1585, 4294901760
      %1587 = vmatmul.mubr.f32.gmra.mrb[0].mxu0 %v1586
      %v1588 = vpop.f32.mrb[0].mxu0
      %v1589 = vadd.f32 0.0, %v1588
      %v1590 = vpop.f32.mrb[0].mxu0
      %v1591 = vand.u32 %v989, 4294901760
      %v1592 = vsub.f32 %v989, %v1591
      %v1593 = vand.u32 %v1592, 4294901760
      %v1594 = vsub.f32 %v1592, %v1593
      %v1595 = vand.u32 %v1594, 4294901760
      %1596 = vmatprep.mubr.f32.mxu0 %v1595
      %v1597 = vand.u32 %v988, 4294901760
      %v1598 = vsub.f32 %v988, %v1597
      %v1599 = vand.u32 %v1598, 4294901760
      %v1600 = vsub.f32 %v1598, %v1599
      %v1601 = vand.u32 %v1600, 4294901760
      %1602 = vmatmul.mubr.f32.gmra.mrb[0].mxu0 %v1601
      %v1603 = vpop.f32.mrb[0].mxu0
      %v1604 = vadd.f32 0.0, %v1603
      %v1605 = vpop.f32.mrb[0].mxu0
      %v1606 = vand.u32 %v993, 4294901760
      %v1607 = vsub.f32 %v993, %v1606
      %v1608 = vand.u32 %v1607, 4294901760
      %v1609 = vsub.f32 %v1607, %v1608
      %v1610 = vand.u32 %v1609, 4294901760
      %1611 = vmatprep.mubr.f32.mxu0 %v1610
      %v1612 = vand.u32 %v992, 4294901760
      %v1613 = vsub.f32 %v992, %v1612
      %v1614 = vand.u32 %v1613, 4294901760
      %v1615 = vsub.f32 %v1613, %v1614
      %v1616 = vand.u32 %v1615, 4294901760
      %1617 = vmatmul.mubr.f32.gmra.mrb[0].mxu0 %v1616
      %v1618 = vpop.f32.mrb[0].mxu0
      %v1619 = vadd.f32 0.0, %v1618
      %v1620 = vpop.f32.mrb[0].mxu0
      %v1621 = vand.u32 %v997, 4294901760
      %v1622 = vsub.f32 %v997, %v1621
      %v1623 = vand.u32 %v1622, 4294901760
      %v1624 = vsub.f32 %v1622, %v1623
      %v1625 = vand.u32 %v1624, 4294901760
      %1626 = vmatprep.mubr.f32.mxu0 %v1625
      %v1627 = vand.u32 %v996, 4294901760
      %v1628 = vsub.f32 %v996, %v1627
      %v1629 = vand.u32 %v1628, 4294901760
      %v1630 = vsub.f32 %v1628, %v1629
      %v1631 = vand.u32 %v1630, 4294901760
      %1632 = vmatmul.mubr.f32.gmra.mrb[0].mxu0 %v1631
      %v1633 = vpop.f32.mrb[0].mxu0
      %v1634 = vadd.f32 0.0, %v1633
      %v1635 = vpop.f32.mrb[0].mxu0
      %v1636 = vand.u32 %v1001, 4294901760
      %v1637 = vsub.f32 %v1001, %v1636
      %v1638 = vand.u32 %v1637, 4294901760
      %v1639 = vsub.f32 %v1637, %v1638
      %v1640 = vand.u32 %v1639, 4294901760
      %1641 = vmatprep.mubr.f32.mxu0 %v1640
      %v1642 = vand.u32 %v1000, 4294901760
      %v1643 = vsub.f32 %v1000, %v1642
      %v1644 = vand.u32 %v1643, 4294901760
      %v1645 = vsub.f32 %v1643, %v1644
      %v1646 = vand.u32 %v1645, 4294901760
      %1647 = vmatmul.mubr.f32.gmra.mrb[0].mxu0 %v1646
      %v1648 = vpop.f32.mrb[0].mxu0
      %v1649 = vadd.f32 0.0, %v1648
      %v1650 = vpop.f32.mrb[0].mxu0
      %v1651 = vand.u32 %v1005, 4294901760
      %v1652 = vsub.f32 %v1005, %v1651
      %v1653 = vand.u32 %v1652, 4294901760
      %v1654 = vsub.f32 %v1652, %v1653
      %v1655 = vand.u32 %v1654, 4294901760
      %1656 = vmatprep.mubr.f32.mxu0 %v1655
      %v1657 = vand.u32 %v1004, 4294901760
      %v1658 = vsub.f32 %v1004, %v1657
      %v1659 = vand.u32 %v1658, 4294901760
      %v1660 = vsub.f32 %v1658, %v1659
      %v1661 = vand.u32 %v1660, 4294901760
      %1662 = vmatmul.mubr.f32.gmra.mrb[0].mxu0 %v1661
      %v1663 = vpop.f32.mrb[0].mxu0
      %v1664 = vadd.f32 0.0, %v1663
      %v1665 = vpop.f32.mrb[0].mxu0
      %v1666 = vand.u32 %v1009, 4294901760
      %v1667 = vsub.f32 %v1009, %v1666
      %v1668 = vand.u32 %v1667, 4294901760
      %v1669 = vsub.f32 %v1667, %v1668
      %v1670 = vand.u32 %v1669, 4294901760
      %1671 = vmatprep.mubr.f32.mxu0 %v1670
      %v1672 = vand.u32 %v1008, 4294901760
      %v1673 = vsub.f32 %v1008, %v1672
      %v1674 = vand.u32 %v1673, 4294901760
      %v1675 = vsub.f32 %v1673, %v1674
      %v1676 = vand.u32 %v1675, 4294901760
      %1677 = vmatmul.mubr.f32.gmra.mrb[0].mxu0 %v1676
      %v1678 = vpop.f32.mrb[0].mxu0
      %v1679 = vadd.f32 0.0, %v1678
      %v1680 = vpop.f32.mrb[0].mxu0
      %v1681 = vand.u32 %v1013, 4294901760
      %v1682 = vsub.f32 %v1013, %v1681
      %v1683 = vand.u32 %v1682, 4294901760
      %v1684 = vsub.f32 %v1682, %v1683
      %v1685 = vand.u32 %v1684, 4294901760
      %1686 = vmatprep.mubr.f32.mxu0 %v1685
      %v1687 = vand.u32 %v1012, 4294901760
      %v1688 = vsub.f32 %v1012, %v1687
      %v1689 = vand.u32 %v1688, 4294901760
      %v1690 = vsub.f32 %v1688, %v1689
      %v1691 = vand.u32 %v1690, 4294901760
      %1692 = vmatmul.mubr.f32.gmra.mrb[0].mxu0 %v1691
      %v1693 = vpop.f32.mrb[0].mxu0
      %v1694 = vadd.f32 0.0, %v1693
      %v1695 = vpop.f32.mrb[0].mxu0
      %v1696 = vand.u32 %v1017, 4294901760
      %v1697 = vsub.f32 %v1017, %v1696
      %v1698 = vand.u32 %v1697, 4294901760
      %v1699 = vsub.f32 %v1697, %v1698
      %v1700 = vand.u32 %v1699, 4294901760
      %1701 = vmatprep.mubr.f32.mxu0 %v1700
      %v1702 = vand.u32 %v1016, 4294901760
      %v1703 = vsub.f32 %v1016, %v1702
      %v1704 = vand.u32 %v1703, 4294901760
      %v1705 = vsub.f32 %v1703, %v1704
      %v1706 = vand.u32 %v1705, 4294901760
      %1707 = vmatmul.mubr.f32.gmra.mrb[0].mxu0 %v1706
      %v1708 = vpop.f32.mrb[0].mxu0
      %v1709 = vadd.f32 0.0, %v1708
      %v1710 = vpop.f32.mrb[0].mxu0
      %v1711 = vand.u32 %v1021, 4294901760
      %v1712 = vsub.f32 %v1021, %v1711
      %v1713 = vand.u32 %v1712, 4294901760
      %v1714 = vsub.f32 %v1712, %v1713
      %v1715 = vand.u32 %v1714, 4294901760
      %1716 = vmatprep.mubr.f32.mxu0 %v1715
      %v1717 = vand.u32 %v1020, 4294901760
      %v1718 = vsub.f32 %v1020, %v1717
      %v1719 = vand.u32 %v1718, 4294901760
      %v1720 = vsub.f32 %v1718, %v1719
      %v1721 = vand.u32 %v1720, 4294901760
      %1722 = vmatmul.mubr.f32.gmra.mrb[0].mxu0 %v1721
      %v1723 = vpop.f32.mrb[0].mxu0
      %v1724 = vadd.f32 0.0, %v1723
      %v1725 = vpop.f32.mrb[0].mxu0
      %v1726 = vand.u32 %v1025, 4294901760
      %v1727 = vsub.f32 %v1025, %v1726
      %v1728 = vand.u32 %v1727, 4294901760
      %v1729 = vsub.f32 %v1727, %v1728
      %v1730 = vand.u32 %v1729, 4294901760
      %1731 = vmatprep.mubr.f32.mxu0 %v1730
      %v1732 = vand.u32 %v1024, 4294901760
      %v1733 = vsub.f32 %v1024, %v1732
      %v1734 = vand.u32 %v1733, 4294901760
      %v1735 = vsub.f32 %v1733, %v1734
      %v1736 = vand.u32 %v1735, 4294901760
      %1737 = vmatmul.mubr.f32.gmra.mrb[0].mxu0 %v1736
      %v1738 = vpop.f32.mrb[0].mxu0
      %v1739 = vadd.f32 0.0, %v1738
      %v1740 = vpop.f32.mrb[0].mxu0
      %v1741 = vand.u32 %v1029, 4294901760
      %v1742 = vsub.f32 %v1029, %v1741
      %v1743 = vand.u32 %v1742, 4294901760
      %v1744 = vsub.f32 %v1742, %v1743
      %v1745 = vand.u32 %v1744, 4294901760
      %1746 = vmatprep.mubr.f32.mxu0 %v1745
      %v1747 = vand.u32 %v1028, 4294901760
      %v1748 = vsub.f32 %v1028, %v1747
      %v1749 = vand.u32 %v1748, 4294901760
      %v1750 = vsub.f32 %v1748, %v1749
      %v1751 = vand.u32 %v1750, 4294901760
      %1752 = vmatmul.mubr.f32.gmra.mrb[0].mxu0 %v1751
      %v1753 = vpop.f32.mrb[0].mxu0
      %v1754 = vadd.f32 0.0, %v1753
      %v1755 = vpop.f32.mrb[0].mxu0
      %v1756 = vand.u32 %v1033, 4294901760
      %v1757 = vsub.f32 %v1033, %v1756
      %v1758 = vand.u32 %v1757, 4294901760
      %v1759 = vsub.f32 %v1757, %v1758
      %v1760 = vand.u32 %v1759, 4294901760
      %1761 = vmatprep.mubr.f32.mxu0 %v1760
      %v1762 = vand.u32 %v1032, 4294901760
      %v1763 = vsub.f32 %v1032, %v1762
      %v1764 = vand.u32 %v1763, 4294901760
      %v1765 = vsub.f32 %v1763, %v1764
      %v1766 = vand.u32 %v1765, 4294901760
      %1767 = vmatmul.mubr.f32.gmra.mrb[0].mxu0 %v1766
      %v1768 = vpop.f32.mrb[0].mxu0
      %v1769 = vadd.f32 0.0, %v1768
      %v1770 = vpop.f32.mrb[0].mxu0
      %v1771 = vand.u32 %v1037, 4294901760
      %v1772 = vsub.f32 %v1037, %v1771
      %v1773 = vand.u32 %v1772, 4294901760
      %v1774 = vsub.f32 %v1772, %v1773
      %v1775 = vand.u32 %v1774, 4294901760
      %1776 = vmatprep.mubr.f32.mxu0 %v1775
      %v1777 = vand.u32 %v1036, 4294901760
      %v1778 = vsub.f32 %v1036, %v1777
      %v1779 = vand.u32 %v1778, 4294901760
      %v1780 = vsub.f32 %v1778, %v1779
      %v1781 = vand.u32 %v1780, 4294901760
      %1782 = vmatmul.mubr.f32.gmra.mrb[0].mxu0 %v1781
      %v1783 = vpop.f32.mrb[0].mxu0
      %v1784 = vadd.f32 0.0, %v1783
      %v1785 = vpop.f32.mrb[0].mxu0
      %v1786 = vand.u32 %v1041, 4294901760
      %v1787 = vsub.f32 %v1041, %v1786
      %v1788 = vand.u32 %v1787, 4294901760
      %v1789 = vsub.f32 %v1787, %v1788
      %v1790 = vand.u32 %v1789, 4294901760
      %1791 = vmatprep.mubr.f32.mxu0 %v1790
      %v1792 = vand.u32 %v1040, 4294901760
      %v1793 = vsub.f32 %v1040, %v1792
      %v1794 = vand.u32 %v1793, 4294901760
      %v1795 = vsub.f32 %v1793, %v1794
      %v1796 = vand.u32 %v1795, 4294901760
      %1797 = vmatmul.mubr.f32.gmra.mrb[0].mxu0 %v1796
      %v1798 = vpop.f32.mrb[0].mxu0
      %v1799 = vadd.f32 0.0, %v1798
      %v1800 = vpop.f32.mrb[0].mxu0
      %v1801 = vand.u32 %v1045, 4294901760
      %v1802 = vsub.f32 %v1045, %v1801
      %v1803 = vand.u32 %v1802, 4294901760
      %v1804 = vsub.f32 %v1802, %v1803
      %v1805 = vand.u32 %v1804, 4294901760
      %1806 = vmatprep.mubr.f32.mxu0 %v1805
      %v1807 = vand.u32 %v1044, 4294901760
      %v1808 = vsub.f32 %v1044, %v1807
      %v1809 = vand.u32 %v1808, 4294901760
      %v1810 = vsub.f32 %v1808, %v1809
      %v1811 = vand.u32 %v1810, 4294901760
      %1812 = vmatmul.mubr.f32.gmra.mrb[0].mxu0 %v1811
      %v1813 = vpop.f32.mrb[0].mxu0
      %v1814 = vadd.f32 0.0, %v1813
      %v1815 = vpop.f32.mrb[0].mxu0
      %v1816 = vand.u32 %v1049, 4294901760
      %v1817 = vsub.f32 %v1049, %v1816
      %v1818 = vand.u32 %v1817, 4294901760
      %v1819 = vsub.f32 %v1817, %v1818
      %v1820 = vand.u32 %v1819, 4294901760
      %1821 = vmatprep.mubr.f32.mxu0 %v1820
      %v1822 = vand.u32 %v1048, 4294901760
      %v1823 = vsub.f32 %v1048, %v1822
      %v1824 = vand.u32 %v1823, 4294901760
      %v1825 = vsub.f32 %v1823, %v1824
      %v1826 = vand.u32 %v1825, 4294901760
      %1827 = vmatmul.mubr.f32.gmra.mrb[0].mxu0 %v1826
      %v1828 = vpop.f32.mrb[0].mxu0
      %v1829 = vadd.f32 0.0, %v1828
      %v1830 = vpop.f32.mrb[0].mxu0
      %v1831 = vand.u32 %v1053, 4294901760
      %v1832 = vsub.f32 %v1053, %v1831
      %v1833 = vand.u32 %v1832, 4294901760
      %v1834 = vsub.f32 %v1832, %v1833
      %v1835 = vand.u32 %v1834, 4294901760
      %1836 = vmatprep.mubr.f32.mxu0 %v1835
      %v1837 = vand.u32 %v1052, 4294901760
      %v1838 = vsub.f32 %v1052, %v1837
      %v1839 = vand.u32 %v1838, 4294901760
      %v1840 = vsub.f32 %v1838, %v1839
      %v1841 = vand.u32 %v1840, 4294901760
      %1842 = vmatmul.mubr.f32.gmra.mrb[0].mxu0 %v1841
      %v1843 = vpop.f32.mrb[0].mxu0
      %v1844 = vadd.f32 0.0, %v1843
      %v1845 = vpop.f32.mrb[0].mxu0
      %v1846 = vand.u32 %v1057, 4294901760
      %v1847 = vsub.f32 %v1057, %v1846
      %v1848 = vand.u32 %v1847, 4294901760
      %v1849 = vsub.f32 %v1847, %v1848
      %v1850 = vand.u32 %v1849, 4294901760
      %1851 = vmatprep.mubr.f32.mxu0 %v1850
      %v1852 = vand.u32 %v1056, 4294901760
      %v1853 = vsub.f32 %v1056, %v1852
      %v1854 = vand.u32 %v1853, 4294901760
      %v1855 = vsub.f32 %v1853, %v1854
      %v1856 = vand.u32 %v1855, 4294901760
      %1857 = vmatmul.mubr.f32.gmra.mrb[0].mxu0 %v1856
      %v1858 = vpop.f32.mrb[0].mxu0
      %v1859 = vadd.f32 0.0, %v1858
      %v1860 = vpop.f32.mrb[0].mxu0
      %v1861 = vand.u32 %v1061, 4294901760
      %v1862 = vsub.f32 %v1061, %v1861
      %v1863 = vand.u32 %v1862, 4294901760
      %v1864 = vsub.f32 %v1862, %v1863
      %v1865 = vand.u32 %v1864, 4294901760
      %1866 = vmatprep.mubr.f32.mxu0 %v1865
      %v1867 = vand.u32 %v1060, 4294901760
      %v1868 = vsub.f32 %v1060, %v1867
      %v1869 = vand.u32 %v1868, 4294901760
      %v1870 = vsub.f32 %v1868, %v1869
      %v1871 = vand.u32 %v1870, 4294901760
      %1872 = vmatmul.mubr.f32.gmra.mrb[0].mxu0 %v1871
      %v1873 = vpop.f32.mrb[0].mxu0
      %v1874 = vadd.f32 0.0, %v1873
      %v1875 = vpop.f32.mrb[0].mxu0
      %v1876 = vand.u32 %v1065, 4294901760
      %v1877 = vsub.f32 %v1065, %v1876
      %v1878 = vand.u32 %v1877, 4294901760
      %v1879 = vsub.f32 %v1877, %v1878
      %v1880 = vand.u32 %v1879, 4294901760
      %1881 = vmatprep.mubr.f32.mxu0 %v1880
      %v1882 = vand.u32 %v1064, 4294901760
      %v1883 = vsub.f32 %v1064, %v1882
      %v1884 = vand.u32 %v1883, 4294901760
      %v1885 = vsub.f32 %v1883, %v1884
      %v1886 = vand.u32 %v1885, 4294901760
      %1887 = vmatmul.mubr.f32.gmra.mrb[0].mxu0 %v1886
      %v1888 = vpop.f32.mrb[0].mxu0
      %v1889 = vadd.f32 0.0, %v1888
      %v1890 = vpop.f32.mrb[0].mxu0
      %v1891 = vand.u32 %v1069, 4294901760
      %v1892 = vsub.f32 %v1069, %v1891
      %v1893 = vand.u32 %v1892, 4294901760
      %v1894 = vsub.f32 %v1892, %v1893
      %v1895 = vand.u32 %v1894, 4294901760
      %1896 = vmatprep.mubr.f32.mxu0 %v1895
      %v1897 = vand.u32 %v1068, 4294901760
      %v1898 = vsub.f32 %v1068, %v1897
      %v1899 = vand.u32 %v1898, 4294901760
      %v1900 = vsub.f32 %v1898, %v1899
      %v1901 = vand.u32 %v1900, 4294901760
      %1902 = vmatmul.mubr.f32.gmra.mrb[0].mxu0 %v1901
      %v1903 = vpop.f32.mrb[0].mxu0
      %v1904 = vadd.f32 0.0, %v1903
      %v1905 = vpop.f32.mrb[0].mxu0
      %v1906 = vand.u32 %v1073, 4294901760
      %v1907 = vsub.f32 %v1073, %v1906
      %v1908 = vand.u32 %v1907, 4294901760
      %v1909 = vsub.f32 %v1907, %v1908
      %v1910 = vand.u32 %v1909, 4294901760
      %1911 = vmatprep.mubr.f32.mxu0 %v1910
      %v1912 = vand.u32 %v1072, 4294901760
      %v1913 = vsub.f32 %v1072, %v1912
      %v1914 = vand.u32 %v1913, 4294901760
      %v1915 = vsub.f32 %v1913, %v1914
      %v1916 = vand.u32 %v1915, 4294901760
      %1917 = vmatmul.mubr.f32.gmra.mrb[0].mxu0 %v1916
      %v1918 = vpop.f32.mrb[0].mxu0
      %v1919 = vadd.f32 0.0, %v1918
      %v1920 = vpop.f32.mrb[0].mxu0
      %v1921 = vand.u32 %v1077, 4294901760
      %v1922 = vsub.f32 %v1077, %v1921
      %v1923 = vand.u32 %v1922, 4294901760
      %v1924 = vsub.f32 %v1922, %v1923
      %v1925 = vand.u32 %v1924, 4294901760
      %1926 = vmatprep.mubr.f32.mxu0 %v1925
      %v1927 = vand.u32 %v1076, 4294901760
      %v1928 = vsub.f32 %v1076, %v1927
      %v1929 = vand.u32 %v1928, 4294901760
      %v1930 = vsub.f32 %v1928, %v1929
      %v1931 = vand.u32 %v1930, 4294901760
      %1932 = vmatmul.mubr.f32.gmra.mrb[0].mxu0 %v1931
      %v1933 = vpop.f32.mrb[0].mxu0
      %v1934 = vadd.f32 0.0, %v1933
      %v1935 = vpop.f32.mrb[0].mxu0
      %v1936 = vand.u32 %v1081, 4294901760
      %v1937 = vsub.f32 %v1081, %v1936
      %v1938 = vand.u32 %v1937, 4294901760
      %v1939 = vsub.f32 %v1937, %v1938
      %v1940 = vand.u32 %v1939, 4294901760
      %1941 = vmatprep.mubr.f32.mxu0 %v1940
      %v1942 = vand.u32 %v1080, 4294901760
      %v1943 = vsub.f32 %v1080, %v1942
      %v1944 = vand.u32 %v1943, 4294901760
      %v1945 = vsub.f32 %v1943, %v1944
      %v1946 = vand.u32 %v1945, 4294901760
      %1947 = vmatmul.mubr.f32.gmra.mrb[0].mxu0 %v1946
      %v1948 = vpop.f32.mrb[0].mxu0
      %v1949 = vadd.f32 0.0, %v1948
      %v1950 = vpop.f32.mrb[0].mxu0
      %v1951 = vand.u32 %v1085, 4294901760
      %v1952 = vsub.f32 %v1085, %v1951
      %v1953 = vand.u32 %v1952, 4294901760
      %v1954 = vsub.f32 %v1952, %v1953
      %v1955 = vand.u32 %v1954, 4294901760
      %1956 = vmatprep.mubr.f32.mxu0 %v1955
      %v1957 = vand.u32 %v1084, 4294901760
      %v1958 = vsub.f32 %v1084, %v1957
      %v1959 = vand.u32 %v1958, 4294901760
      %v1960 = vsub.f32 %v1958, %v1959
      %v1961 = vand.u32 %v1960, 4294901760
      %1962 = vmatmul.mubr.f32.gmra.mrb[0].mxu0 %v1961
      %v1963 = vpop.f32.mrb[0].mxu0
      %v1964 = vadd.f32 0.0, %v1963
      %v1965 = vpop.f32.mrb[0].mxu0
      %v1966 = vand.u32 %v1089, 4294901760
      %v1967 = vsub.f32 %v1089, %v1966
      %v1968 = vand.u32 %v1967, 4294901760
      %v1969 = vsub.f32 %v1967, %v1968
      %v1970 = vand.u32 %v1969, 4294901760
      %1971 = vmatprep.mubr.f32.mxu0 %v1970
      %v1972 = vand.u32 %v1088, 4294901760
      %v1973 = vsub.f32 %v1088, %v1972
      %v1974 = vand.u32 %v1973, 4294901760
      %v1975 = vsub.f32 %v1973, %v1974
      %v1976 = vand.u32 %v1975, 4294901760
      %1977 = vmatmul.mubr.f32.gmra.mrb[0].mxu0 %v1976
      %v1978 = vpop.f32.mrb[0].mxu0
      %v1979 = vadd.f32 0.0, %v1978
      %v1980 = vpop.f32.mrb[0].mxu0
      %v1981 = vand.u32 %v1093, 4294901760
      %v1982 = vsub.f32 %v1093, %v1981
      %v1983 = vand.u32 %v1982, 4294901760
      %v1984 = vsub.f32 %v1982, %v1983
      %v1985 = vand.u32 %v1984, 4294901760
      %1986 = vmatprep.mubr.f32.mxu0 %v1985
      %v1987 = vand.u32 %v1092, 4294901760
      %v1988 = vsub.f32 %v1092, %v1987
      %v1989 = vand.u32 %v1988, 4294901760
      %v1990 = vsub.f32 %v1988, %v1989
      %v1991 = vand.u32 %v1990, 4294901760
      %1992 = vmatmul.mubr.f32.gmra.mrb[0].mxu0 %v1991
      %v1993 = vpop.f32.mrb[0].mxu0
      %v1994 = vadd.f32 0.0, %v1993
      %v1995 = vpop.f32.mrb[0].mxu0
      %v1996 = vand.u32 %v1097, 4294901760
      %v1997 = vsub.f32 %v1097, %v1996
      %v1998 = vand.u32 %v1997, 4294901760
      %v1999 = vsub.f32 %v1997, %v1998
      %v2000 = vand.u32 %v1999, 4294901760
      %2001 = vmatprep.mubr.f32.mxu0 %v2000
      %v2002 = vand.u32 %v1096, 4294901760
      %v2003 = vsub.f32 %v1096, %v2002
      %v2004 = vand.u32 %v2003, 4294901760
      %v2005 = vsub.f32 %v2003, %v2004
      %v2006 = vand.u32 %v2005, 4294901760
      %2007 = vmatmul.mubr.f32.gmra.mrb[0].mxu0 %v2006
      %v2008 = vpop.f32.mrb[0].mxu0
      %v2009 = vadd.f32 0.0, %v2008
      %v2010 = vpop.f32.mrb[0].mxu0
      %v2011 = vand.u32 %v1101, 4294901760
      %v2012 = vsub.f32 %v1101, %v2011
      %v2013 = vand.u32 %v2012, 4294901760
      %v2014 = vsub.f32 %v2012, %v2013
      %v2015 = vand.u32 %v2014, 4294901760
      %2016 = vmatprep.mubr.f32.mxu0 %v2015
      %v2017 = vand.u32 %v1100, 4294901760
      %v2018 = vsub.f32 %v1100, %v2017
      %v2019 = vand.u32 %v2018, 4294901760
      %v2020 = vsub.f32 %v2018, %v2019
      %v2021 = vand.u32 %v2020, 4294901760
      %2022 = vmatmul.mubr.f32.gmra.mrb[0].mxu0 %v2021
      %v2023 = vpop.f32.mrb[0].mxu0
      %v2024 = vadd.f32 0.0, %v2023
      %v2025 = vpop.f32.mrb[0].mxu0
      %v2026 = vand.u32 %v1105, 4294901760
      %v2027 = vsub.f32 %v1105, %v2026
      %v2028 = vand.u32 %v2027, 4294901760
      %v2029 = vsub.f32 %v2027, %v2028
      %v2030 = vand.u32 %v2029, 4294901760
      %2031 = vmatprep.mubr.f32.mxu0 %v2030
      %v2032 = vand.u32 %v1104, 4294901760
      %v2033 = vsub.f32 %v1104, %v2032
      %v2034 = vand.u32 %v2033, 4294901760
      %v2035 = vsub.f32 %v2033, %v2034
      %v2036 = vand.u32 %v2035, 4294901760
      %2037 = vmatmul.mubr.f32.gmra.mrb[0].mxu0 %v2036
      %v2038 = vpop.f32.mrb[0].mxu0
      %v2039 = vadd.f32 0.0, %v2038
      %v2040 = vpop.f32.mrb[0].mxu0
      %v2041 = vand.u32 %v1109, 4294901760
      %v2042 = vsub.f32 %v1109, %v2041
      %v2043 = vand.u32 %v2042, 4294901760
      %v2044 = vsub.f32 %v2042, %v2043
      %v2045 = vand.u32 %v2044, 4294901760
      %2046 = vmatprep.mubr.f32.mxu0 %v2045
      %v2047 = vand.u32 %v1108, 4294901760
      %v2048 = vsub.f32 %v1108, %v2047
      %v2049 = vand.u32 %v2048, 4294901760
      %v2050 = vsub.f32 %v2048, %v2049
      %v2051 = vand.u32 %v2050, 4294901760
      %2052 = vmatmul.mubr.f32.gmra.mrb[0].mxu0 %v2051
      %v2053 = vpop.f32.mrb[0].mxu0
      %v2054 = vadd.f32 0.0, %v2053
      %v2055 = vpop.f32.mrb[0].mxu0
      %v2056 = vand.u32 %v1113, 4294901760
      %v2057 = vsub.f32 %v1113, %v2056
      %v2058 = vand.u32 %v2057, 4294901760
      %v2059 = vsub.f32 %v2057, %v2058
      %v2060 = vand.u32 %v2059, 4294901760
      %2061 = vmatprep.mubr.f32.mxu0 %v2060
      %v2062 = vand.u32 %v1112, 4294901760
      %v2063 = vsub.f32 %v1112, %v2062
      %v2064 = vand.u32 %v2063, 4294901760
      %v2065 = vsub.f32 %v2063, %v2064
      %v2066 = vand.u32 %v2065, 4294901760
      %2067 = vmatmul.mubr.f32.gmra.mrb[0].mxu0 %v2066
      %v2068 = vpop.f32.mrb[0].mxu0
      %v2069 = vadd.f32 0.0, %v2068
      %v2070 = vpop.f32.mrb[0].mxu0
      %v2071 = vand.u32 %v1117, 4294901760
      %v2072 = vsub.f32 %v1117, %v2071
      %v2073 = vand.u32 %v2072, 4294901760
      %v2074 = vsub.f32 %v2072, %v2073
      %v2075 = vand.u32 %v2074, 4294901760
      %2076 = vmatprep.mubr.f32.mxu0 %v2075
      %v2077 = vand.u32 %v1116, 4294901760
      %v2078 = vsub.f32 %v1116, %v2077
      %v2079 = vand.u32 %v2078, 4294901760
      %v2080 = vsub.f32 %v2078, %v2079
      %v2081 = vand.u32 %v2080, 4294901760
      %2082 = vmatmul.mubr.f32.gmra.mrb[0].mxu0 %v2081
      %v2083 = vpop.f32.mrb[0].mxu0
      %v2084 = vadd.f32 0.0, %v2083
      %v2085 = vpop.f32.mrb[0].mxu0
      %v2086 = vand.u32 %v1121, 4294901760
      %v2087 = vsub.f32 %v1121, %v2086
      %v2088 = vand.u32 %v2087, 4294901760
      %v2089 = vsub.f32 %v2087, %v2088
      %v2090 = vand.u32 %v2089, 4294901760
      %2091 = vmatprep.mubr.f32.mxu0 %v2090
      %v2092 = vand.u32 %v1120, 4294901760
      %v2093 = vsub.f32 %v1120, %v2092
      %v2094 = vand.u32 %v2093, 4294901760
      %v2095 = vsub.f32 %v2093, %v2094
      %v2096 = vand.u32 %v2095, 4294901760
      %2097 = vmatmul.mubr.f32.gmra.mrb[0].mxu0 %v2096
      %v2098 = vpop.f32.mrb[0].mxu0
      %v2099 = vadd.f32 0.0, %v2098
      %v2100 = vpop.f32.mrb[0].mxu0
      %v2101 = vand.u32 %v1125, 4294901760
      %v2102 = vsub.f32 %v1125, %v2101
      %v2103 = vand.u32 %v2102, 4294901760
      %v2104 = vsub.f32 %v2102, %v2103
      %v2105 = vand.u32 %v2104, 4294901760
      %2106 = vmatprep.mubr.f32.mxu0 %v2105
      %v2107 = vand.u32 %v1124, 4294901760
      %v2108 = vsub.f32 %v1124, %v2107
      %v2109 = vand.u32 %v2108, 4294901760
      %v2110 = vsub.f32 %v2108, %v2109
      %v2111 = vand.u32 %v2110, 4294901760
      %2112 = vmatmul.mubr.f32.gmra.mrb[0].mxu0 %v2111
      %v2113 = vpop.f32.mrb[0].mxu0
      %v2114 = vadd.f32 0.0, %v2113
      %v2115 = vpop.f32.mrb[0].mxu0
      %v2116 = vand.u32 %v1129, 4294901760
      %v2117 = vsub.f32 %v1129, %v2116
      %v2118 = vand.u32 %v2117, 4294901760
      %v2119 = vsub.f32 %v2117, %v2118
      %v2120 = vand.u32 %v2119, 4294901760
      %2121 = vmatprep.mubr.f32.mxu0 %v2120
      %v2122 = vand.u32 %v1128, 4294901760
      %v2123 = vsub.f32 %v1128, %v2122
      %v2124 = vand.u32 %v2123, 4294901760
      %v2125 = vsub.f32 %v2123, %v2124
      %v2126 = vand.u32 %v2125, 4294901760
      %2127 = vmatmul.mubr.f32.gmra.mrb[0].mxu0 %v2126
      %v2128 = vpop.f32.mrb[0].mxu0
      %v2129 = vadd.f32 0.0, %v2128
      %v2130 = vpop.f32.mrb[0].mxu0
      %v2131 = vand.u32 %v1133, 4294901760
      %v2132 = vsub.f32 %v1133, %v2131
      %v2133 = vand.u32 %v2132, 4294901760
      %v2134 = vsub.f32 %v2132, %v2133
      %v2135 = vand.u32 %v2134, 4294901760
      %2136 = vmatprep.mubr.f32.mxu0 %v2135
      %v2137 = vand.u32 %v1132, 4294901760
      %v2138 = vsub.f32 %v1132, %v2137
      %v2139 = vand.u32 %v2138, 4294901760
      %v2140 = vsub.f32 %v2138, %v2139
      %v2141 = vand.u32 %v2140, 4294901760
      %2142 = vmatmul.mubr.f32.gmra.mrb[0].mxu0 %v2141
      %v2143 = vpop.f32.mrb[0].mxu0
      %v2144 = vadd.f32 0.0, %v2143
      %v2145 = vpop.f32.mrb[0].mxu0
      %v2146 = vand.u32 %v1137, 4294901760
      %v2147 = vsub.f32 %v1137, %v2146
      %v2148 = vand.u32 %v2147, 4294901760
      %v2149 = vsub.f32 %v2147, %v2148
      %v2150 = vand.u32 %v2149, 4294901760
      %2151 = vmatprep.mubr.f32.mxu0 %v2150
      %v2152 = vand.u32 %v1136, 4294901760
      %v2153 = vsub.f32 %v1136, %v2152
      %v2154 = vand.u32 %v2153, 4294901760
      %v2155 = vsub.f32 %v2153, %v2154
      %v2156 = vand.u32 %v2155, 4294901760
      %2157 = vmatmul.mubr.f32.gmra.mrb[0].mxu0 %v2156
      %v2158 = vpop.f32.mrb[0].mxu0
      %v2159 = vadd.f32 0.0, %v2158
      %v2160 = vpop.f32.mrb[0].mxu0
      %v2161 = vand.u32 %v1141, 4294901760
      %v2162 = vsub.f32 %v1141, %v2161
      %v2163 = vand.u32 %v2162, 4294901760
      %v2164 = vsub.f32 %v2162, %v2163
      %v2165 = vand.u32 %v2164, 4294901760
      %2166 = vmatprep.mubr.f32.mxu0 %v2165
      %v2167 = vand.u32 %v1140, 4294901760
      %v2168 = vsub.f32 %v1140, %v2167
      %v2169 = vand.u32 %v2168, 4294901760
      %v2170 = vsub.f32 %v2168, %v2169
      %v2171 = vand.u32 %v2170, 4294901760
      %2172 = vmatmul.mubr.f32.gmra.mrb[0].mxu0 %v2171
      %v2173 = vpop.f32.mrb[0].mxu0
      %v2174 = vadd.f32 0.0, %v2173
      %v2175 = vpop.f32.mrb[0].mxu0
      %v2176 = vand.u32 %v1145, 4294901760
      %v2177 = vsub.f32 %v1145, %v2176
      %v2178 = vand.u32 %v2177, 4294901760
      %v2179 = vsub.f32 %v2177, %v2178
      %v2180 = vand.u32 %v2179, 4294901760
      %2181 = vmatprep.mubr.f32.mxu0 %v2180
      %v2182 = vand.u32 %v1144, 4294901760
      %v2183 = vsub.f32 %v1144, %v2182
      %v2184 = vand.u32 %v2183, 4294901760
      %v2185 = vsub.f32 %v2183, %v2184
      %v2186 = vand.u32 %v2185, 4294901760
      %2187 = vmatmul.mubr.f32.gmra.mrb[0].mxu0 %v2186
      %v2188 = vpop.f32.mrb[0].mxu0
      %v2189 = vadd.f32 0.0, %v2188
      %v2190 = vpop.f32.mrb[0].mxu0
      %v2191 = vand.u32 %v1149, 4294901760
      %v2192 = vsub.f32 %v1149, %v2191
      %v2193 = vand.u32 %v2192, 4294901760
      %v2194 = vsub.f32 %v2192, %v2193
      %v2195 = vand.u32 %v2194, 4294901760
      %2196 = vmatprep.mubr.f32.mxu0 %v2195
      %v2197 = vand.u32 %v1148, 4294901760
      %v2198 = vsub.f32 %v1148, %v2197
      %v2199 = vand.u32 %v2198, 4294901760
      %v2200 = vsub.f32 %v2198, %v2199
      %v2201 = vand.u32 %v2200, 4294901760
      %2202 = vmatmul.mubr.f32.gmra.mrb[0].mxu0 %v2201
      %v2203 = vpop.f32.mrb[0].mxu0
      %v2204 = vadd.f32 0.0, %v2203
      %v2205 = vpop.f32.mrb[0].mxu0
      %v2206 = vand.u32 %v1153, 4294901760
      %v2207 = vsub.f32 %v1153, %v2206
      %v2208 = vand.u32 %v2207, 4294901760
      %v2209 = vsub.f32 %v2207, %v2208
      %v2210 = vand.u32 %v2209, 4294901760
      %2211 = vmatprep.mubr.f32.mxu0 %v2210
      %v2212 = vand.u32 %v1152, 4294901760
      %v2213 = vsub.f32 %v1152, %v2212
      %v2214 = vand.u32 %v2213, 4294901760
      %v2215 = vsub.f32 %v2213, %v2214
      %v2216 = vand.u32 %v2215, 4294901760
      %2217 = vmatmul.mubr.f32.gmra.mrb[0].mxu0 %v2216
      %v2218 = vpop.f32.mrb[0].mxu0
      %v2219 = vadd.f32 0.0, %v2218
      %v2220 = vpop.f32.mrb[0].mxu0
      %v2221 = vand.u32 %v1157, 4294901760
      %v2222 = vsub.f32 %v1157, %v2221
      %v2223 = vand.u32 %v2222, 4294901760
      %v2224 = vsub.f32 %v2222, %v2223
      %v2225 = vand.u32 %v2224, 4294901760
      %2226 = vmatprep.mubr.f32.mxu0 %v2225
      %v2227 = vand.u32 %v1156, 4294901760
      %v2228 = vsub.f32 %v1156, %v2227
      %v2229 = vand.u32 %v2228, 4294901760
      %v2230 = vsub.f32 %v2228, %v2229
      %v2231 = vand.u32 %v2230, 4294901760
      %2232 = vmatmul.mubr.f32.gmra.mrb[0].mxu0 %v2231
      %v2233 = vpop.f32.mrb[0].mxu0
      %v2234 = vadd.f32 0.0, %v2233
      %v2235 = vpop.f32.mrb[0].mxu0
      %v2236 = vand.u32 %v1161, 4294901760
      %v2237 = vsub.f32 %v1161, %v2236
      %v2238 = vand.u32 %v2237, 4294901760
      %v2239 = vsub.f32 %v2237, %v2238
      %v2240 = vand.u32 %v2239, 4294901760
      %2241 = vmatprep.mubr.f32.mxu0 %v2240
      %v2242 = vand.u32 %v1160, 4294901760
      %v2243 = vsub.f32 %v1160, %v2242
      %v2244 = vand.u32 %v2243, 4294901760
      %v2245 = vsub.f32 %v2243, %v2244
      %v2246 = vand.u32 %v2245, 4294901760
      %2247 = vmatmul.mubr.f32.gmra.mrb[0].mxu0 %v2246
      %v2248 = vpop.f32.mrb[0].mxu0
      %v2249 = vadd.f32 0.0, %v2248
      %v2250 = vpop.f32.mrb[0].mxu0
      %v2251 = vand.u32 %v1165, 4294901760
      %v2252 = vsub.f32 %v1165, %v2251
      %v2253 = vand.u32 %v2252, 4294901760
      %v2254 = vsub.f32 %v2252, %v2253
      %v2255 = vand.u32 %v2254, 4294901760
      %2256 = vmatprep.mubr.f32.mxu0 %v2255
      %v2257 = vand.u32 %v1164, 4294901760
      %v2258 = vsub.f32 %v1164, %v2257
      %v2259 = vand.u32 %v2258, 4294901760
      %v2260 = vsub.f32 %v2258, %v2259
      %v2261 = vand.u32 %v2260, 4294901760
      %2262 = vmatmul.mubr.f32.gmra.mrb[0].mxu0 %v2261
      %v2263 = vpop.f32.mrb[0].mxu0
      %v2264 = vadd.f32 0.0, %v2263
      %v2265 = vpop.f32.mrb[0].mxu0
      %v2266 = vand.u32 %v1169, 4294901760
      %v2267 = vsub.f32 %v1169, %v2266
      %v2268 = vand.u32 %v2267, 4294901760
      %v2269 = vsub.f32 %v2267, %v2268
      %v2270 = vand.u32 %v2269, 4294901760
      %2271 = vmatprep.mubr.f32.mxu0 %v2270
      %v2272 = vand.u32 %v1168, 4294901760
      %v2273 = vsub.f32 %v1168, %v2272
      %v2274 = vand.u32 %v2273, 4294901760
      %v2275 = vsub.f32 %v2273, %v2274
      %v2276 = vand.u32 %v2275, 4294901760
      %2277 = vmatmul.mubr.f32.gmra.mrb[0].mxu0 %v2276
      %v2278 = vpop.f32.mrb[0].mxu0
      %v2279 = vadd.f32 0.0, %v2278
      %v2280 = vpop.f32.mrb[0].mxu0
      %v2281 = vand.u32 %v1173, 4294901760
      %v2282 = vsub.f32 %v1173, %v2281
      %v2283 = vand.u32 %v2282, 4294901760
      %v2284 = vsub.f32 %v2282, %v2283
      %v2285 = vand.u32 %v2284, 4294901760
      %2286 = vmatprep.mubr.f32.mxu0 %v2285
      %v2287 = vand.u32 %v1172, 4294901760
      %v2288 = vsub.f32 %v1172, %v2287
      %v2289 = vand.u32 %v2288, 4294901760
      %v2290 = vsub.f32 %v2288, %v2289
      %v2291 = vand.u32 %v2290, 4294901760
      %2292 = vmatmul.mubr.f32.gmra.mrb[0].mxu0 %v2291
      %v2293 = vpop.f32.mrb[0].mxu0
      %v2294 = vadd.f32 0.0, %v2293
      %v2295 = vpop.f32.mrb[0].mxu0
      %2296 = vdwg.mxu0
      %2297 = vmatprep.subr.mxu0 0.0
      %v2298 = vand.u32 %v1176, 4294901760
      %v2299 = vsub.f32 %v1176, %v2298
      %v2300 = vand.u32 %v2299, 4294901760
      %v2301 = vsub.f32 %v2299, %v2300
      %v2302 = vand.u32 %v2301, 4294901760
      %2303 = vmatpush1.msra.mxu0 %v2302
      %2304 = vmatprep.subr.mxu0 0.0
      %v2305 = vand.u32 %v1177, 4294901760
      %v2306 = vsub.f32 %v1177, %v2305
      %v2307 = vand.u32 %v2306, 4294901760
      %v2308 = vsub.f32 %v2306, %v2307
      %v2309 = vand.u32 %v2308, 4294901760
      %2310 = vmatpush1.msra.mxu0 %v2309
      %2311 = vmatprep.subr.mxu0 0.0
      %v2312 = vand.u32 %v1178, 4294901760
      %v2313 = vsub.f32 %v1178, %v2312
      %v2314 = vand.u32 %v2313, 4294901760
      %v2315 = vsub.f32 %v2313, %v2314
      %v2316 = vand.u32 %v2315, 4294901760
      %2317 = vmatpush1.msra.mxu0 %v2316
      %2318 = vmatprep.subr.mxu0 0.0
      %v2319 = vand.u32 %v1179, 4294901760
      %v2320 = vsub.f32 %v1179, %v2319
      %v2321 = vand.u32 %v2320, 4294901760
      %v2322 = vsub.f32 %v2320, %v2321
      %v2323 = vand.u32 %v2322, 4294901760
      %2324 = vmatpush1.msra.mxu0 %v2323
      %2325 = vmatprep.subr.mxu0 0.0
      %v2326 = vand.u32 %v1180, 4294901760
      %v2327 = vsub.f32 %v1180, %v2326
      %v2328 = vand.u32 %v2327, 4294901760
      %v2329 = vsub.f32 %v2327, %v2328
      %v2330 = vand.u32 %v2329, 4294901760
      %2331 = vmatpush1.msra.mxu0 %v2330
      %2332 = vmatprep.subr.mxu0 0.0
      %v2333 = vand.u32 %v1181, 4294901760
      %v2334 = vsub.f32 %v1181, %v2333
      %v2335 = vand.u32 %v2334, 4294901760
      %v2336 = vsub.f32 %v2334, %v2335
      %v2337 = vand.u32 %v2336, 4294901760
      %2338 = vmatpush1.msra.mxu0 %v2337
      %2339 = vmatprep.subr.mxu0 0.0
      %v2340 = vand.u32 %v1182, 4294901760
      %v2341 = vsub.f32 %v1182, %v2340
      %v2342 = vand.u32 %v2341, 4294901760
      %v2343 = vsub.f32 %v2341, %v2342
      %v2344 = vand.u32 %v2343, 4294901760
      %2345 = vmatpush1.msra.mxu0 %v2344
      %2346 = vmatprep.subr.mxu0 0.0
      %v2347 = vand.u32 %v1183, 4294901760
      %v2348 = vsub.f32 %v1183, %v2347
      %v2349 = vand.u32 %v2348, 4294901760
      %v2350 = vsub.f32 %v2348, %v2349
      %v2351 = vand.u32 %v2350, 4294901760
      %2352 = vmatpush1.msra.mxu0 %v2351
      %2353 = vmatprep.subr.mxu0 0.0
      %v2354 = vand.u32 %v1184, 4294901760
      %v2355 = vsub.f32 %v1184, %v2354
      %v2356 = vand.u32 %v2355, 4294901760
      %v2357 = vsub.f32 %v2355, %v2356
      %v2358 = vand.u32 %v2357, 4294901760
      %2359 = vmatpush1.msra.mxu0 %v2358
      %2360 = vmatprep.subr.mxu0 0.0
      %v2361 = vand.u32 %v1185, 4294901760
      %v2362 = vsub.f32 %v1185, %v2361
      %v2363 = vand.u32 %v2362, 4294901760
      %v2364 = vsub.f32 %v2362, %v2363
      %v2365 = vand.u32 %v2364, 4294901760
      %2366 = vmatpush1.msra.mxu0 %v2365
      %2367 = vmatprep.subr.mxu0 0.0
      %v2368 = vand.u32 %v1186, 4294901760
      %v2369 = vsub.f32 %v1186, %v2368
      %v2370 = vand.u32 %v2369, 4294901760
      %v2371 = vsub.f32 %v2369, %v2370
      %v2372 = vand.u32 %v2371, 4294901760
      %2373 = vmatpush1.msra.mxu0 %v2372
      %2374 = vmatprep.subr.mxu0 0.0
      %v2375 = vand.u32 %v1187, 4294901760
      %v2376 = vsub.f32 %v1187, %v2375
      %v2377 = vand.u32 %v2376, 4294901760
      %v2378 = vsub.f32 %v2376, %v2377
      %v2379 = vand.u32 %v2378, 4294901760
      %2380 = vmatpush1.msra.mxu0 %v2379
      %2381 = vmatprep.subr.mxu0 0.0
      %v2382 = vand.u32 %v1188, 4294901760
      %v2383 = vsub.f32 %v1188, %v2382
      %v2384 = vand.u32 %v2383, 4294901760
      %v2385 = vsub.f32 %v2383, %v2384
      %v2386 = vand.u32 %v2385, 4294901760
      %2387 = vmatpush1.msra.mxu0 %v2386
      %2388 = vmatprep.subr.mxu0 0.0
      %v2389 = vand.u32 %v1189, 4294901760
      %v2390 = vsub.f32 %v1189, %v2389
      %v2391 = vand.u32 %v2390, 4294901760
      %v2392 = vsub.f32 %v2390, %v2391
      %v2393 = vand.u32 %v2392, 4294901760
      %2394 = vmatpush1.msra.mxu0 %v2393
      %2395 = vmatprep.subr.mxu0 0.0
      %v2396 = vand.u32 %v1190, 4294901760
      %v2397 = vsub.f32 %v1190, %v2396
      %v2398 = vand.u32 %v2397, 4294901760
      %v2399 = vsub.f32 %v2397, %v2398
      %v2400 = vand.u32 %v2399, 4294901760
      %2401 = vmatpush1.msra.mxu0 %v2400
      %2402 = vmatprep.subr.mxu0 0.0
      %v2403 = vand.u32 %v1191, 4294901760
      %v2404 = vsub.f32 %v1191, %v2403
      %v2405 = vand.u32 %v2404, 4294901760
      %v2406 = vsub.f32 %v2404, %v2405
      %v2407 = vand.u32 %v2406, 4294901760
      %2408 = vmatpush1.msra.mxu0 %v2407
      %2409 = vmatprep.subr.mxu0 0.0
      %v2410 = vand.u32 %v1192, 4294901760
      %v2411 = vsub.f32 %v1192, %v2410
      %v2412 = vand.u32 %v2411, 4294901760
      %v2413 = vsub.f32 %v2411, %v2412
      %v2414 = vand.u32 %v2413, 4294901760
      %2415 = vmatpush1.msra.mxu0 %v2414
      %2416 = vmatprep.subr.mxu0 0.0
      %v2417 = vand.u32 %v1193, 4294901760
      %v2418 = vsub.f32 %v1193, %v2417
      %v2419 = vand.u32 %v2418, 4294901760
      %v2420 = vsub.f32 %v2418, %v2419
      %v2421 = vand.u32 %v2420, 4294901760
      %2422 = vmatpush1.msra.mxu0 %v2421
      %2423 = vmatprep.subr.mxu0 0.0
      %v2424 = vand.u32 %v1194, 4294901760
      %v2425 = vsub.f32 %v1194, %v2424
      %v2426 = vand.u32 %v2425, 4294901760
      %v2427 = vsub.f32 %v2425, %v2426
      %v2428 = vand.u32 %v2427, 4294901760
      %2429 = vmatpush1.msra.mxu0 %v2428
      %2430 = vmatprep.subr.mxu0 0.0
      %v2431 = vand.u32 %v1195, 4294901760
      %v2432 = vsub.f32 %v1195, %v2431
      %v2433 = vand.u32 %v2432, 4294901760
      %v2434 = vsub.f32 %v2432, %v2433
      %v2435 = vand.u32 %v2434, 4294901760
      %2436 = vmatpush1.msra.mxu0 %v2435
      %2437 = vmatprep.subr.mxu0 0.0
      %v2438 = vand.u32 %v1196, 4294901760
      %v2439 = vsub.f32 %v1196, %v2438
      %v2440 = vand.u32 %v2439, 4294901760
      %v2441 = vsub.f32 %v2439, %v2440
      %v2442 = vand.u32 %v2441, 4294901760
      %2443 = vmatpush1.msra.mxu0 %v2442
      %2444 = vmatprep.subr.mxu0 0.0
      %v2445 = vand.u32 %v1197, 4294901760
      %v2446 = vsub.f32 %v1197, %v2445
      %v2447 = vand.u32 %v2446, 4294901760
      %v2448 = vsub.f32 %v2446, %v2447
      %v2449 = vand.u32 %v2448, 4294901760
      %2450 = vmatpush1.msra.mxu0 %v2449
      %2451 = vmatprep.subr.mxu0 0.0
      %v2452 = vand.u32 %v1198, 4294901760
      %v2453 = vsub.f32 %v1198, %v2452
      %v2454 = vand.u32 %v2453, 4294901760
      %v2455 = vsub.f32 %v2453, %v2454
      %v2456 = vand.u32 %v2455, 4294901760
      %2457 = vmatpush1.msra.mxu0 %v2456
      %2458 = vmatprep.subr.mxu0 0.0
      %v2459 = vand.u32 %v1199, 4294901760
      %v2460 = vsub.f32 %v1199, %v2459
      %v2461 = vand.u32 %v2460, 4294901760
      %v2462 = vsub.f32 %v2460, %v2461
      %v2463 = vand.u32 %v2462, 4294901760
      %2464 = vmatpush1.msra.mxu0 %v2463
      %2465 = vmatprep.subr.mxu0 0.0
      %v2466 = vand.u32 %v1200, 4294901760
      %v2467 = vsub.f32 %v1200, %v2466
      %v2468 = vand.u32 %v2467, 4294901760
      %v2469 = vsub.f32 %v2467, %v2468
      %v2470 = vand.u32 %v2469, 4294901760
      %2471 = vmatpush1.msra.mxu0 %v2470
      %2472 = vmatprep.subr.mxu0 0.0
      %v2473 = vand.u32 %v1201, 4294901760
      %v2474 = vsub.f32 %v1201, %v2473
      %v2475 = vand.u32 %v2474, 4294901760
      %v2476 = vsub.f32 %v2474, %v2475
      %v2477 = vand.u32 %v2476, 4294901760
      %2478 = vmatpush1.msra.mxu0 %v2477
      %2479 = vmatprep.subr.mxu0 0.0
      %v2480 = vand.u32 %v1202, 4294901760
      %v2481 = vsub.f32 %v1202, %v2480
      %v2482 = vand.u32 %v2481, 4294901760
      %v2483 = vsub.f32 %v2481, %v2482
      %v2484 = vand.u32 %v2483, 4294901760
      %2485 = vmatpush1.msra.mxu0 %v2484
      %2486 = vmatprep.subr.mxu0 0.0
      %v2487 = vand.u32 %v1203, 4294901760
      %v2488 = vsub.f32 %v1203, %v2487
      %v2489 = vand.u32 %v2488, 4294901760
      %v2490 = vsub.f32 %v2488, %v2489
      %v2491 = vand.u32 %v2490, 4294901760
      %2492 = vmatpush1.msra.mxu0 %v2491
      %2493 = vmatprep.subr.mxu0 0.0
      %v2494 = vand.u32 %v1204, 4294901760
      %v2495 = vsub.f32 %v1204, %v2494
      %v2496 = vand.u32 %v2495, 4294901760
      %v2497 = vsub.f32 %v2495, %v2496
      %v2498 = vand.u32 %v2497, 4294901760
      %2499 = vmatpush1.msra.mxu0 %v2498
      %2500 = vmatprep.subr.mxu0 0.0
      %v2501 = vand.u32 %v1205, 4294901760
      %v2502 = vsub.f32 %v1205, %v2501
      %v2503 = vand.u32 %v2502, 4294901760
      %v2504 = vsub.f32 %v2502, %v2503
      %v2505 = vand.u32 %v2504, 4294901760
      %2506 = vmatpush1.msra.mxu0 %v2505
      %2507 = vmatprep.subr.mxu0 0.0
      %v2508 = vand.u32 %v1206, 4294901760
      %v2509 = vsub.f32 %v1206, %v2508
      %v2510 = vand.u32 %v2509, 4294901760
      %v2511 = vsub.f32 %v2509, %v2510
      %v2512 = vand.u32 %v2511, 4294901760
      %2513 = vmatpush1.msra.mxu0 %v2512
      %2514 = vmatprep.subr.mxu0 0.0
      %v2515 = vand.u32 %v1207, 4294901760
      %v2516 = vsub.f32 %v1207, %v2515
      %v2517 = vand.u32 %v2516, 4294901760
      %v2518 = vsub.f32 %v2516, %v2517
      %v2519 = vand.u32 %v2518, 4294901760
      %2520 = vmatpush1.msra.mxu0 %v2519
      %v2521 = vand.u32 %v921, 4294901760
      %2522 = vmatprep.mubr.f32.mxu0 %v2521
      %v2523 = vand.u32 %v920, 4294901760
      %2524 = vmatmul.mubr.f32.gmra.mrb[0].mxu0 %v2523
      %v2525 = vpop.f32.mrb[0].mxu0
      %v2526 = vadd.f32 %v1349, %v2525
      %v2527 = vpop.f32.mrb[0].mxu0
      %v2528 = vand.u32 %v925, 4294901760
      %2529 = vmatprep.mubr.f32.mxu0 %v2528
      %v2530 = vand.u32 %v924, 4294901760
      %2531 = vmatmul.mubr.f32.gmra.mrb[0].mxu0 %v2530
      %v2532 = vpop.f32.mrb[0].mxu0
      %v2533 = vadd.f32 %v1364, %v2532
      %v2534 = vpop.f32.mrb[0].mxu0
      %v2535 = vand.u32 %v929, 4294901760
      %2536 = vmatprep.mubr.f32.mxu0 %v2535
      %v2537 = vand.u32 %v928, 4294901760
      %2538 = vmatmul.mubr.f32.gmra.mrb[0].mxu0 %v2537
      %v2539 = vpop.f32.mrb[0].mxu0
      %v2540 = vadd.f32 %v1379, %v2539
      %v2541 = vpop.f32.mrb[0].mxu0
      %v2542 = vand.u32 %v933, 4294901760
      %2543 = vmatprep.mubr.f32.mxu0 %v2542
      %v2544 = vand.u32 %v932, 4294901760
      %2545 = vmatmul.mubr.f32.gmra.mrb[0].mxu0 %v2544
      %v2546 = vpop.f32.mrb[0].mxu0
      %v2547 = vadd.f32 %v1394, %v2546
      %v2548 = vpop.f32.mrb[0].mxu0
      %v2549 = vand.u32 %v937, 4294901760
      %2550 = vmatprep.mubr.f32.mxu0 %v2549
      %v2551 = vand.u32 %v936, 4294901760
      %2552 = vmatmul.mubr.f32.gmra.mrb[0].mxu0 %v2551
      %v2553 = vpop.f32.mrb[0].mxu0
      %v2554 = vadd.f32 %v1409, %v2553
      %v2555 = vpop.f32.mrb[0].mxu0
      %v2556 = vand.u32 %v941, 4294901760
      %2557 = vmatprep.mubr.f32.mxu0 %v2556
      %v2558 = vand.u32 %v940, 4294901760
      %2559 = vmatmul.mubr.f32.gmra.mrb[0].mxu0 %v2558
      %v2560 = vpop.f32.mrb[0].mxu0
      %v2561 = vadd.f32 %v1424, %v2560
      %v2562 = vpop.f32.mrb[0].mxu0
      %v2563 = vand.u32 %v945, 4294901760
      %2564 = vmatprep.mubr.f32.mxu0 %v2563
      %v2565 = vand.u32 %v944, 4294901760
      %2566 = vmatmul.mubr.f32.gmra.mrb[0].mxu0 %v2565
      %v2567 = vpop.f32.mrb[0].mxu0
      %v2568 = vadd.f32 %v1439, %v2567
      %v2569 = vpop.f32.mrb[0].mxu0
      %v2570 = vand.u32 %v949, 4294901760
      %2571 = vmatprep.mubr.f32.mxu0 %v2570
      %v2572 = vand.u32 %v948, 4294901760
      %2573 = vmatmul.mubr.f32.gmra.mrb[0].mxu0 %v2572
      %v2574 = vpop.f32.mrb[0].mxu0
      %v2575 = vadd.f32 %v1454, %v2574
      %v2576 = vpop.f32.mrb[0].mxu0
      %v2577 = vand.u32 %v953, 4294901760
      %2578 = vmatprep.mubr.f32.mxu0 %v2577
      %v2579 = vand.u32 %v952, 4294901760
      %2580 = vmatmul.mubr.f32.gmra.mrb[0].mxu0 %v2579
      %v2581 = vpop.f32.mrb[0].mxu0
      %v2582 = vadd.f32 %v1469, %v2581
      %v2583 = vpop.f32.mrb[0].mxu0
      %v2584 = vand.u32 %v957, 4294901760
      %2585 = vmatprep.mubr.f32.mxu0 %v2584
      %v2586 = vand.u32 %v956, 4294901760
      %2587 = vmatmul.mubr.f32.gmra.mrb[0].mxu0 %v2586
      %v2588 = vpop.f32.mrb[0].mxu0
      %v2589 = vadd.f32 %v1484, %v2588
      %v2590 = vpop.f32.mrb[0].mxu0
      %v2591 = vand.u32 %v961, 4294901760
      %2592 = vmatprep.mubr.f32.mxu0 %v2591
      %v2593 = vand.u32 %v960, 4294901760
      %2594 = vmatmul.mubr.f32.gmra.mrb[0].mxu0 %v2593
      %v2595 = vpop.f32.mrb[0].mxu0
      %v2596 = vadd.f32 %v1499, %v2595
      %v2597 = vpop.f32.mrb[0].mxu0
      %v2598 = vand.u32 %v965, 4294901760
      %2599 = vmatprep.mubr.f32.mxu0 %v2598
      %v2600 = vand.u32 %v964, 4294901760
      %2601 = vmatmul.mubr.f32.gmra.mrb[0].mxu0 %v2600
      %v2602 = vpop.f32.mrb[0].mxu0
      %v2603 = vadd.f32 %v1514, %v2602
      %v2604 = vpop.f32.mrb[0].mxu0
      %v2605 = vand.u32 %v969, 4294901760
      %2606 = vmatprep.mubr.f32.mxu0 %v2605
      %v2607 = vand.u32 %v968, 4294901760
      %2608 = vmatmul.mubr.f32.gmra.mrb[0].mxu0 %v2607
      %v2609 = vpop.f32.mrb[0].mxu0
      %v2610 = vadd.f32 %v1529, %v2609
      %v2611 = vpop.f32.mrb[0].mxu0
      %v2612 = vand.u32 %v973, 4294901760
      %2613 = vmatprep.mubr.f32.mxu0 %v2612
      %v2614 = vand.u32 %v972, 4294901760
      %2615 = vmatmul.mubr.f32.gmra.mrb[0].mxu0 %v2614
      %v2616 = vpop.f32.mrb[0].mxu0
      %v2617 = vadd.f32 %v1544, %v2616
      %v2618 = vpop.f32.mrb[0].mxu0
      %v2619 = vand.u32 %v977, 4294901760
      %2620 = vmatprep.mubr.f32.mxu0 %v2619
      %v2621 = vand.u32 %v976, 4294901760
      %2622 = vmatmul.mubr.f32.gmra.mrb[0].mxu0 %v2621
      %v2623 = vpop.f32.mrb[0].mxu0
      %v2624 = vadd.f32 %v1559, %v2623
      %v2625 = vpop.f32.mrb[0].mxu0
      %v2626 = vand.u32 %v981, 4294901760
      %2627 = vmatprep.mubr.f32.mxu0 %v2626
      %v2628 = vand.u32 %v980, 4294901760
      %2629 = vmatmul.mubr.f32.gmra.mrb[0].mxu0 %v2628
      %v2630 = vpop.f32.mrb[0].mxu0
      %v2631 = vadd.f32 %v1574, %v2630
      %v2632 = vpop.f32.mrb[0].mxu0
      %v2633 = vand.u32 %v985, 4294901760
      %2634 = vmatprep.mubr.f32.mxu0 %v2633
      %v2635 = vand.u32 %v984, 4294901760
      %2636 = vmatmul.mubr.f32.gmra.mrb[0].mxu0 %v2635
      %v2637 = vpop.f32.mrb[0].mxu0
      %v2638 = vadd.f32 %v1589, %v2637
      %v2639 = vpop.f32.mrb[0].mxu0
      %v2640 = vand.u32 %v989, 4294901760
      %2641 = vmatprep.mubr.f32.mxu0 %v2640
      %v2642 = vand.u32 %v988, 4294901760
      %2643 = vmatmul.mubr.f32.gmra.mrb[0].mxu0 %v2642
      %v2644 = vpop.f32.mrb[0].mxu0
      %v2645 = vadd.f32 %v1604, %v2644
      %v2646 = vpop.f32.mrb[0].mxu0
      %v2647 = vand.u32 %v993, 4294901760
      %2648 = vmatprep.mubr.f32.mxu0 %v2647
      %v2649 = vand.u32 %v992, 4294901760
      %2650 = vmatmul.mubr.f32.gmra.mrb[0].mxu0 %v2649
      %v2651 = vpop.f32.mrb[0].mxu0
      %v2652 = vadd.f32 %v1619, %v2651
      %v2653 = vpop.f32.mrb[0].mxu0
      %v2654 = vand.u32 %v997, 4294901760
      %2655 = vmatprep.mubr.f32.mxu0 %v2654
      %v2656 = vand.u32 %v996, 4294901760
      %2657 = vmatmul.mubr.f32.gmra.mrb[0].mxu0 %v2656
      %v2658 = vpop.f32.mrb[0].mxu0
      %v2659 = vadd.f32 %v1634, %v2658
      %v2660 = vpop.f32.mrb[0].mxu0
      %v2661 = vand.u32 %v1001, 4294901760
      %2662 = vmatprep.mubr.f32.mxu0 %v2661
      %v2663 = vand.u32 %v1000, 4294901760
      %2664 = vmatmul.mubr.f32.gmra.mrb[0].mxu0 %v2663
      %v2665 = vpop.f32.mrb[0].mxu0
      %v2666 = vadd.f32 %v1649, %v2665
      %v2667 = vpop.f32.mrb[0].mxu0
      %v2668 = vand.u32 %v1005, 4294901760
      %2669 = vmatprep.mubr.f32.mxu0 %v2668
      %v2670 = vand.u32 %v1004, 4294901760
      %2671 = vmatmul.mubr.f32.gmra.mrb[0].mxu0 %v2670
      %v2672 = vpop.f32.mrb[0].mxu0
      %v2673 = vadd.f32 %v1664, %v2672
      %v2674 = vpop.f32.mrb[0].mxu0
      %v2675 = vand.u32 %v1009, 4294901760
      %2676 = vmatprep.mubr.f32.mxu0 %v2675
      %v2677 = vand.u32 %v1008, 4294901760
      %2678 = vmatmul.mubr.f32.gmra.mrb[0].mxu0 %v2677
      %v2679 = vpop.f32.mrb[0].mxu0
      %v2680 = vadd.f32 %v1679, %v2679
      %v2681 = vpop.f32.mrb[0].mxu0
      %v2682 = vand.u32 %v1013, 4294901760
      %2683 = vmatprep.mubr.f32.mxu0 %v2682
      %v2684 = vand.u32 %v1012, 4294901760
      %2685 = vmatmul.mubr.f32.gmra.mrb[0].mxu0 %v2684
      %v2686 = vpop.f32.mrb[0].mxu0
      %v2687 = vadd.f32 %v1694, %v2686
      %v2688 = vpop.f32.mrb[0].mxu0
      %v2689 = vand.u32 %v1017, 4294901760
      %2690 = vmatprep.mubr.f32.mxu0 %v2689
      %v2691 = vand.u32 %v1016, 4294901760
      %2692 = vmatmul.mubr.f32.gmra.mrb[0].mxu0 %v2691
      %v2693 = vpop.f32.mrb[0].mxu0
      %v2694 = vadd.f32 %v1709, %v2693
      %v2695 = vpop.f32.mrb[0].mxu0
      %v2696 = vand.u32 %v1021, 4294901760
      %2697 = vmatprep.mubr.f32.mxu0 %v2696
      %v2698 = vand.u32 %v1020, 4294901760
      %2699 = vmatmul.mubr.f32.gmra.mrb[0].mxu0 %v2698
      %v2700 = vpop.f32.mrb[0].mxu0
      %v2701 = vadd.f32 %v1724, %v2700
      %v2702 = vpop.f32.mrb[0].mxu0
      %v2703 = vand.u32 %v1025, 4294901760
      %2704 = vmatprep.mubr.f32.mxu0 %v2703
      %v2705 = vand.u32 %v1024, 4294901760
      %2706 = vmatmul.mubr.f32.gmra.mrb[0].mxu0 %v2705
      %v2707 = vpop.f32.mrb[0].mxu0
      %v2708 = vadd.f32 %v1739, %v2707
      %v2709 = vpop.f32.mrb[0].mxu0
      %v2710 = vand.u32 %v1029, 4294901760
      %2711 = vmatprep.mubr.f32.mxu0 %v2710
      %v2712 = vand.u32 %v1028, 4294901760
      %2713 = vmatmul.mubr.f32.gmra.mrb[0].mxu0 %v2712
      %v2714 = vpop.f32.mrb[0].mxu0
      %v2715 = vadd.f32 %v1754, %v2714
      %v2716 = vpop.f32.mrb[0].mxu0
      %v2717 = vand.u32 %v1033, 4294901760
      %2718 = vmatprep.mubr.f32.mxu0 %v2717
      %v2719 = vand.u32 %v1032, 4294901760
      %2720 = vmatmul.mubr.f32.gmra.mrb[0].mxu0 %v2719
      %v2721 = vpop.f32.mrb[0].mxu0
      %v2722 = vadd.f32 %v1769, %v2721
      %v2723 = vpop.f32.mrb[0].mxu0
      %v2724 = vand.u32 %v1037, 4294901760
      %2725 = vmatprep.mubr.f32.mxu0 %v2724
      %v2726 = vand.u32 %v1036, 4294901760
      %2727 = vmatmul.mubr.f32.gmra.mrb[0].mxu0 %v2726
      %v2728 = vpop.f32.mrb[0].mxu0
      %v2729 = vadd.f32 %v1784, %v2728
      %v2730 = vpop.f32.mrb[0].mxu0
      %v2731 = vand.u32 %v1041, 4294901760
      %2732 = vmatprep.mubr.f32.mxu0 %v2731
      %v2733 = vand.u32 %v1040, 4294901760
      %2734 = vmatmul.mubr.f32.gmra.mrb[0].mxu0 %v2733
      %v2735 = vpop.f32.mrb[0].mxu0
      %v2736 = vadd.f32 %v1799, %v2735
      %v2737 = vpop.f32.mrb[0].mxu0
      %v2738 = vand.u32 %v1045, 4294901760
      %2739 = vmatprep.mubr.f32.mxu0 %v2738
      %v2740 = vand.u32 %v1044, 4294901760
      %2741 = vmatmul.mubr.f32.gmra.mrb[0].mxu0 %v2740
      %v2742 = vpop.f32.mrb[0].mxu0
      %v2743 = vadd.f32 %v1814, %v2742
      %v2744 = vpop.f32.mrb[0].mxu0
      %v2745 = vand.u32 %v1049, 4294901760
      %2746 = vmatprep.mubr.f32.mxu0 %v2745
      %v2747 = vand.u32 %v1048, 4294901760
      %2748 = vmatmul.mubr.f32.gmra.mrb[0].mxu0 %v2747
      %v2749 = vpop.f32.mrb[0].mxu0
      %v2750 = vadd.f32 %v1829, %v2749
      %v2751 = vpop.f32.mrb[0].mxu0
      %v2752 = vand.u32 %v1053, 4294901760
      %2753 = vmatprep.mubr.f32.mxu0 %v2752
      %v2754 = vand.u32 %v1052, 4294901760
      %2755 = vmatmul.mubr.f32.gmra.mrb[0].mxu0 %v2754
      %v2756 = vpop.f32.mrb[0].mxu0
      %v2757 = vadd.f32 %v1844, %v2756
      %v2758 = vpop.f32.mrb[0].mxu0
      %v2759 = vand.u32 %v1057, 4294901760
      %2760 = vmatprep.mubr.f32.mxu0 %v2759
      %v2761 = vand.u32 %v1056, 4294901760
      %2762 = vmatmul.mubr.f32.gmra.mrb[0].mxu0 %v2761
      %v2763 = vpop.f32.mrb[0].mxu0
      %v2764 = vadd.f32 %v1859, %v2763
      %v2765 = vpop.f32.mrb[0].mxu0
      %v2766 = vand.u32 %v1061, 4294901760
      %2767 = vmatprep.mubr.f32.mxu0 %v2766
      %v2768 = vand.u32 %v1060, 4294901760
      %2769 = vmatmul.mubr.f32.gmra.mrb[0].mxu0 %v2768
      %v2770 = vpop.f32.mrb[0].mxu0
      %v2771 = vadd.f32 %v1874, %v2770
      %v2772 = vpop.f32.mrb[0].mxu0
      %v2773 = vand.u32 %v1065, 4294901760
      %2774 = vmatprep.mubr.f32.mxu0 %v2773
      %v2775 = vand.u32 %v1064, 4294901760
      %2776 = vmatmul.mubr.f32.gmra.mrb[0].mxu0 %v2775
      %v2777 = vpop.f32.mrb[0].mxu0
      %v2778 = vadd.f32 %v1889, %v2777
      %v2779 = vpop.f32.mrb[0].mxu0
      %v2780 = vand.u32 %v1069, 4294901760
      %2781 = vmatprep.mubr.f32.mxu0 %v2780
      %v2782 = vand.u32 %v1068, 4294901760
      %2783 = vmatmul.mubr.f32.gmra.mrb[0].mxu0 %v2782
      %v2784 = vpop.f32.mrb[0].mxu0
      %v2785 = vadd.f32 %v1904, %v2784
      %v2786 = vpop.f32.mrb[0].mxu0
      %v2787 = vand.u32 %v1073, 4294901760
      %2788 = vmatprep.mubr.f32.mxu0 %v2787
      %v2789 = vand.u32 %v1072, 4294901760
      %2790 = vmatmul.mubr.f32.gmra.mrb[0].mxu0 %v2789
      %v2791 = vpop.f32.mrb[0].mxu0
      %v2792 = vadd.f32 %v1919, %v2791
      %v2793 = vpop.f32.mrb[0].mxu0
      %v2794 = vand.u32 %v1077, 4294901760
      %2795 = vmatprep.mubr.f32.mxu0 %v2794
      %v2796 = vand.u32 %v1076, 4294901760
      %2797 = vmatmul.mubr.f32.gmra.mrb[0].mxu0 %v2796
      %v2798 = vpop.f32.mrb[0].mxu0
      %v2799 = vadd.f32 %v1934, %v2798
      %v2800 = vpop.f32.mrb[0].mxu0
      %v2801 = vand.u32 %v1081, 4294901760
      %2802 = vmatprep.mubr.f32.mxu0 %v2801
      %v2803 = vand.u32 %v1080, 4294901760
      %2804 = vmatmul.mubr.f32.gmra.mrb[0].mxu0 %v2803
      %v2805 = vpop.f32.mrb[0].mxu0
      %v2806 = vadd.f32 %v1949, %v2805
      %v2807 = vpop.f32.mrb[0].mxu0
      %v2808 = vand.u32 %v1085, 4294901760
      %2809 = vmatprep.mubr.f32.mxu0 %v2808
      %v2810 = vand.u32 %v1084, 4294901760
      %2811 = vmatmul.mubr.f32.gmra.mrb[0].mxu0 %v2810
      %v2812 = vpop.f32.mrb[0].mxu0
      %v2813 = vadd.f32 %v1964, %v2812
      %v2814 = vpop.f32.mrb[0].mxu0
      %v2815 = vand.u32 %v1089, 4294901760
      %2816 = vmatprep.mubr.f32.mxu0 %v2815
      %v2817 = vand.u32 %v1088, 4294901760
      %2818 = vmatmul.mubr.f32.gmra.mrb[0].mxu0 %v2817
      %v2819 = vpop.f32.mrb[0].mxu0
      %v2820 = vadd.f32 %v1979, %v2819
      %v2821 = vpop.f32.mrb[0].mxu0
      %v2822 = vand.u32 %v1093, 4294901760
      %2823 = vmatprep.mubr.f32.mxu0 %v2822
      %v2824 = vand.u32 %v1092, 4294901760
      %2825 = vmatmul.mubr.f32.gmra.mrb[0].mxu0 %v2824
      %v2826 = vpop.f32.mrb[0].mxu0
      %v2827 = vadd.f32 %v1994, %v2826
      %v2828 = vpop.f32.mrb[0].mxu0
      %v2829 = vand.u32 %v1097, 4294901760
      %2830 = vmatprep.mubr.f32.mxu0 %v2829
      %v2831 = vand.u32 %v1096, 4294901760
      %2832 = vmatmul.mubr.f32.gmra.mrb[0].mxu0 %v2831
      %v2833 = vpop.f32.mrb[0].mxu0
      %v2834 = vadd.f32 %v2009, %v2833
      %v2835 = vpop.f32.mrb[0].mxu0
      %v2836 = vand.u32 %v1101, 4294901760
      %2837 = vmatprep.mubr.f32.mxu0 %v2836
      %v2838 = vand.u32 %v1100, 4294901760
      %2839 = vmatmul.mubr.f32.gmra.mrb[0].mxu0 %v2838
      %v2840 = vpop.f32.mrb[0].mxu0
      %v2841 = vadd.f32 %v2024, %v2840
      %v2842 = vpop.f32.mrb[0].mxu0
      %v2843 = vand.u32 %v1105, 4294901760
      %2844 = vmatprep.mubr.f32.mxu0 %v2843
      %v2845 = vand.u32 %v1104, 4294901760
      %2846 = vmatmul.mubr.f32.gmra.mrb[0].mxu0 %v2845
      %v2847 = vpop.f32.mrb[0].mxu0
      %v2848 = vadd.f32 %v2039, %v2847
      %v2849 = vpop.f32.mrb[0].mxu0
      %v2850 = vand.u32 %v1109, 4294901760
      %2851 = vmatprep.mubr.f32.mxu0 %v2850
      %v2852 = vand.u32 %v1108, 4294901760
      %2853 = vmatmul.mubr.f32.gmra.mrb[0].mxu0 %v2852
      %v2854 = vpop.f32.mrb[0].mxu0
      %v2855 = vadd.f32 %v2054, %v2854
      %v2856 = vpop.f32.mrb[0].mxu0
      %v2857 = vand.u32 %v1113, 4294901760
      %2858 = vmatprep.mubr.f32.mxu0 %v2857
      %v2859 = vand.u32 %v1112, 4294901760
      %2860 = vmatmul.mubr.f32.gmra.mrb[0].mxu0 %v2859
      %v2861 = vpop.f32.mrb[0].mxu0
      %v2862 = vadd.f32 %v2069, %v2861
      %v2863 = vpop.f32.mrb[0].mxu0
      %v2864 = vand.u32 %v1117, 4294901760
      %2865 = vmatprep.mubr.f32.mxu0 %v2864
      %v2866 = vand.u32 %v1116, 4294901760
      %2867 = vmatmul.mubr.f32.gmra.mrb[0].mxu0 %v2866
      %v2868 = vpop.f32.mrb[0].mxu0
      %v2869 = vadd.f32 %v2084, %v2868
      %v2870 = vpop.f32.mrb[0].mxu0
      %v2871 = vand.u32 %v1121, 4294901760
      %2872 = vmatprep.mubr.f32.mxu0 %v2871
      %v2873 = vand.u32 %v1120, 4294901760
      %2874 = vmatmul.mubr.f32.gmra.mrb[0].mxu0 %v2873
      %v2875 = vpop.f32.mrb[0].mxu0
      %v2876 = vadd.f32 %v2099, %v2875
      %v2877 = vpop.f32.mrb[0].mxu0
      %v2878 = vand.u32 %v1125, 4294901760
      %2879 = vmatprep.mubr.f32.mxu0 %v2878
      %v2880 = vand.u32 %v1124, 4294901760
      %2881 = vmatmul.mubr.f32.gmra.mrb[0].mxu0 %v2880
      %v2882 = vpop.f32.mrb[0].mxu0
      %v2883 = vadd.f32 %v2114, %v2882
      %v2884 = vpop.f32.mrb[0].mxu0
      %v2885 = vand.u32 %v1129, 4294901760
      %2886 = vmatprep.mubr.f32.mxu0 %v2885
      %v2887 = vand.u32 %v1128, 4294901760
      %2888 = vmatmul.mubr.f32.gmra.mrb[0].mxu0 %v2887
      %v2889 = vpop.f32.mrb[0].mxu0
      %v2890 = vadd.f32 %v2129, %v2889
      %v2891 = vpop.f32.mrb[0].mxu0
      %v2892 = vand.u32 %v1133, 4294901760
      %2893 = vmatprep.mubr.f32.mxu0 %v2892
      %v2894 = vand.u32 %v1132, 4294901760
      %2895 = vmatmul.mubr.f32.gmra.mrb[0].mxu0 %v2894
      %v2896 = vpop.f32.mrb[0].mxu0
      %v2897 = vadd.f32 %v2144, %v2896
      %v2898 = vpop.f32.mrb[0].mxu0
      %v2899 = vand.u32 %v1137, 4294901760
      %2900 = vmatprep.mubr.f32.mxu0 %v2899
      %v2901 = vand.u32 %v1136, 4294901760
      %2902 = vmatmul.mubr.f32.gmra.mrb[0].mxu0 %v2901
      %v2903 = vpop.f32.mrb[0].mxu0
      %v2904 = vadd.f32 %v2159, %v2903
      %v2905 = vpop.f32.mrb[0].mxu0
      %v2906 = vand.u32 %v1141, 4294901760
      %2907 = vmatprep.mubr.f32.mxu0 %v2906
      %v2908 = vand.u32 %v1140, 4294901760
      %2909 = vmatmul.mubr.f32.gmra.mrb[0].mxu0 %v2908
      %v2910 = vpop.f32.mrb[0].mxu0
      %v2911 = vadd.f32 %v2174, %v2910
      %v2912 = vpop.f32.mrb[0].mxu0
      %v2913 = vand.u32 %v1145, 4294901760
      %2914 = vmatprep.mubr.f32.mxu0 %v2913
      %v2915 = vand.u32 %v1144, 4294901760
      %2916 = vmatmul.mubr.f32.gmra.mrb[0].mxu0 %v2915
      %v2917 = vpop.f32.mrb[0].mxu0
      %v2918 = vadd.f32 %v2189, %v2917
      %v2919 = vpop.f32.mrb[0].mxu0
      %v2920 = vand.u32 %v1149, 4294901760
      %2921 = vmatprep.mubr.f32.mxu0 %v2920
      %v2922 = vand.u32 %v1148, 4294901760
      %2923 = vmatmul.mubr.f32.gmra.mrb[0].mxu0 %v2922
      %v2924 = vpop.f32.mrb[0].mxu0
      %v2925 = vadd.f32 %v2204, %v2924
      %v2926 = vpop.f32.mrb[0].mxu0
      %v2927 = vand.u32 %v1153, 4294901760
      %2928 = vmatprep.mubr.f32.mxu0 %v2927
      %v2929 = vand.u32 %v1152, 4294901760
      %2930 = vmatmul.mubr.f32.gmra.mrb[0].mxu0 %v2929
      %v2931 = vpop.f32.mrb[0].mxu0
      %v2932 = vadd.f32 %v2219, %v2931
      %v2933 = vpop.f32.mrb[0].mxu0
      %v2934 = vand.u32 %v1157, 4294901760
      %2935 = vmatprep.mubr.f32.mxu0 %v2934
      %v2936 = vand.u32 %v1156, 4294901760
      %2937 = vmatmul.mubr.f32.gmra.mrb[0].mxu0 %v2936
      %v2938 = vpop.f32.mrb[0].mxu0
      %v2939 = vadd.f32 %v2234, %v2938
      %v2940 = vpop.f32.mrb[0].mxu0
      %v2941 = vand.u32 %v1161, 4294901760
      %2942 = vmatprep.mubr.f32.mxu0 %v2941
      %v2943 = vand.u32 %v1160, 4294901760
      %2944 = vmatmul.mubr.f32.gmra.mrb[0].mxu0 %v2943
      %v2945 = vpop.f32.mrb[0].mxu0
      %v2946 = vadd.f32 %v2249, %v2945
      %v2947 = vpop.f32.mrb[0].mxu0
      %v2948 = vand.u32 %v1165, 4294901760
      %2949 = vmatprep.mubr.f32.mxu0 %v2948
      %v2950 = vand.u32 %v1164, 4294901760
      %2951 = vmatmul.mubr.f32.gmra.mrb[0].mxu0 %v2950
      %v2952 = vpop.f32.mrb[0].mxu0
      %v2953 = vadd.f32 %v2264, %v2952
      %v2954 = vpop.f32.mrb[0].mxu0
      %v2955 = vand.u32 %v1169, 4294901760
      %2956 = vmatprep.mubr.f32.mxu0 %v2955
      %v2957 = vand.u32 %v1168, 4294901760
      %2958 = vmatmul.mubr.f32.gmra.mrb[0].mxu0 %v2957
      %v2959 = vpop.f32.mrb[0].mxu0
      %v2960 = vadd.f32 %v2279, %v2959
      %v2961 = vpop.f32.mrb[0].mxu0
      %v2962 = vand.u32 %v1173, 4294901760
      %2963 = vmatprep.mubr.f32.mxu0 %v2962
      %v2964 = vand.u32 %v1172, 4294901760
      %2965 = vmatmul.mubr.f32.gmra.mrb[0].mxu0 %v2964
      %v2966 = vpop.f32.mrb[0].mxu0
      %v2967 = vadd.f32 %v2294, %v2966
      %v2968 = vpop.f32.mrb[0].mxu0
      %2969 = vdwg.mxu0
      %2970 = vmatprep.subr.mxu0 0.0
      %v2971 = vand.u32 %v1176, 4294901760
      %v2972 = vsub.f32 %v1176, %v2971
      %2973 = vmatpush1.msra.mxu0 %v2972
      %2974 = vmatprep.subr.mxu0 0.0
      %v2975 = vand.u32 %v1177, 4294901760
      %v2976 = vsub.f32 %v1177, %v2975
      %2977 = vmatpush1.msra.mxu0 %v2976
      %2978 = vmatprep.subr.mxu0 0.0
      %v2979 = vand.u32 %v1178, 4294901760
      %v2980 = vsub.f32 %v1178, %v2979
      %2981 = vmatpush1.msra.mxu0 %v2980
      %2982 = vmatprep.subr.mxu0 0.0
      %v2983 = vand.u32 %v1179, 4294901760
      %v2984 = vsub.f32 %v1179, %v2983
      %2985 = vmatpush1.msra.mxu0 %v2984
      %2986 = vmatprep.subr.mxu0 0.0
      %v2987 = vand.u32 %v1180, 4294901760
      %v2988 = vsub.f32 %v1180, %v2987
      %2989 = vmatpush1.msra.mxu0 %v2988
      %2990 = vmatprep.subr.mxu0 0.0
      %v2991 = vand.u32 %v1181, 4294901760
      %v2992 = vsub.f32 %v1181, %v2991
      %2993 = vmatpush1.msra.mxu0 %v2992
      %2994 = vmatprep.subr.mxu0 0.0
      %v2995 = vand.u32 %v1182, 4294901760
      %v2996 = vsub.f32 %v1182, %v2995
      %2997 = vmatpush1.msra.mxu0 %v2996
      %2998 = vmatprep.subr.mxu0 0.0
      %v2999 = vand.u32 %v1183, 4294901760
      %v3000 = vsub.f32 %v1183, %v2999
      %3001 = vmatpush1.msra.mxu0 %v3000
      %3002 = vmatprep.subr.mxu0 0.0
      %v3003 = vand.u32 %v1184, 4294901760
      %v3004 = vsub.f32 %v1184, %v3003
      %3005 = vmatpush1.msra.mxu0 %v3004
      %3006 = vmatprep.subr.mxu0 0.0
      %v3007 = vand.u32 %v1185, 4294901760
      %v3008 = vsub.f32 %v1185, %v3007
      %3009 = vmatpush1.msra.mxu0 %v3008
      %3010 = vmatprep.subr.mxu0 0.0
      %v3011 = vand.u32 %v1186, 4294901760
      %v3012 = vsub.f32 %v1186, %v3011
      %3013 = vmatpush1.msra.mxu0 %v3012
      %3014 = vmatprep.subr.mxu0 0.0
      %v3015 = vand.u32 %v1187, 4294901760
      %v3016 = vsub.f32 %v1187, %v3015
      %3017 = vmatpush1.msra.mxu0 %v3016
      %3018 = vmatprep.subr.mxu0 0.0
      %v3019 = vand.u32 %v1188, 4294901760
      %v3020 = vsub.f32 %v1188, %v3019
      %3021 = vmatpush1.msra.mxu0 %v3020
      %3022 = vmatprep.subr.mxu0 0.0
      %v3023 = vand.u32 %v1189, 4294901760
      %v3024 = vsub.f32 %v1189, %v3023
      %3025 = vmatpush1.msra.mxu0 %v3024
      %3026 = vmatprep.subr.mxu0 0.0
      %v3027 = vand.u32 %v1190, 4294901760
      %v3028 = vsub.f32 %v1190, %v3027
      %3029 = vmatpush1.msra.mxu0 %v3028
      %3030 = vmatprep.subr.mxu0 0.0
      %v3031 = vand.u32 %v1191, 4294901760
      %v3032 = vsub.f32 %v1191, %v3031
      %3033 = vmatpush1.msra.mxu0 %v3032
      %3034 = vmatprep.subr.mxu0 0.0
      %v3035 = vand.u32 %v1192, 4294901760
      %v3036 = vsub.f32 %v1192, %v3035
      %3037 = vmatpush1.msra.mxu0 %v3036
      %3038 = vmatprep.subr.mxu0 0.0
      %v3039 = vand.u32 %v1193, 4294901760
      %v3040 = vsub.f32 %v1193, %v3039
      %3041 = vmatpush1.msra.mxu0 %v3040
      %3042 = vmatprep.subr.mxu0 0.0
      %v3043 = vand.u32 %v1194, 4294901760
      %v3044 = vsub.f32 %v1194, %v3043
      %3045 = vmatpush1.msra.mxu0 %v3044
      %3046 = vmatprep.subr.mxu0 0.0
      %v3047 = vand.u32 %v1195, 4294901760
      %v3048 = vsub.f32 %v1195, %v3047
      %3049 = vmatpush1.msra.mxu0 %v3048
      %3050 = vmatprep.subr.mxu0 0.0
      %v3051 = vand.u32 %v1196, 4294901760
      %v3052 = vsub.f32 %v1196, %v3051
      %3053 = vmatpush1.msra.mxu0 %v3052
      %3054 = vmatprep.subr.mxu0 0.0
      %v3055 = vand.u32 %v1197, 4294901760
      %v3056 = vsub.f32 %v1197, %v3055
      %3057 = vmatpush1.msra.mxu0 %v3056
      %3058 = vmatprep.subr.mxu0 0.0
      %v3059 = vand.u32 %v1198, 4294901760
      %v3060 = vsub.f32 %v1198, %v3059
      %3061 = vmatpush1.msra.mxu0 %v3060
      %3062 = vmatprep.subr.mxu0 0.0
      %v3063 = vand.u32 %v1199, 4294901760
      %v3064 = vsub.f32 %v1199, %v3063
      %3065 = vmatpush1.msra.mxu0 %v3064
      %3066 = vmatprep.subr.mxu0 0.0
      %v3067 = vand.u32 %v1200, 4294901760
      %v3068 = vsub.f32 %v1200, %v3067
      %3069 = vmatpush1.msra.mxu0 %v3068
      %3070 = vmatprep.subr.mxu0 0.0
      %v3071 = vand.u32 %v1201, 4294901760
      %v3072 = vsub.f32 %v1201, %v3071
      %3073 = vmatpush1.msra.mxu0 %v3072
      %3074 = vmatprep.subr.mxu0 0.0
      %v3075 = vand.u32 %v1202, 4294901760
      %v3076 = vsub.f32 %v1202, %v3075
      %3077 = vmatpush1.msra.mxu0 %v3076
      %3078 = vmatprep.subr.mxu0 0.0
      %v3079 = vand.u32 %v1203, 4294901760
      %v3080 = vsub.f32 %v1203, %v3079
      %3081 = vmatpush1.msra.mxu0 %v3080
      %3082 = vmatprep.subr.mxu0 0.0
      %v3083 = vand.u32 %v1204, 4294901760
      %v3084 = vsub.f32 %v1204, %v3083
      %3085 = vmatpush1.msra.mxu0 %v3084
      %3086 = vmatprep.subr.mxu0 0.0
      %v3087 = vand.u32 %v1205, 4294901760
      %v3088 = vsub.f32 %v1205, %v3087
      %3089 = vmatpush1.msra.mxu0 %v3088
      %3090 = vmatprep.subr.mxu0 0.0
      %v3091 = vand.u32 %v1206, 4294901760
      %v3092 = vsub.f32 %v1206, %v3091
      %3093 = vmatpush1.msra.mxu0 %v3092
      %3094 = vmatprep.subr.mxu0 0.0
      %v3095 = vand.u32 %v1207, 4294901760
      %v3096 = vsub.f32 %v1207, %v3095
      %3097 = vmatpush1.msra.mxu0 %v3096
      %v3098 = vand.u32 %v921, 4294901760
      %v3099 = vsub.f32 %v921, %v3098
      %3100 = vmatprep.mubr.f32.mxu0 %v3099
      %v3101 = vand.u32 %v920, 4294901760
      %v3102 = vsub.f32 %v920, %v3101
      %3103 = vmatmul.mubr.f32.gmra.mrb[0].mxu0 %v3102
      %v3104 = vpop.f32.mrb[0].mxu0
      %v3105 = vadd.f32 %v2526, %v3104
      %v3106 = vpop.f32.mrb[0].mxu0
      %v3107 = vand.u32 %v925, 4294901760
      %v3108 = vsub.f32 %v925, %v3107
      %3109 = vmatprep.mubr.f32.mxu0 %v3108
      %v3110 = vand.u32 %v924, 4294901760
      %v3111 = vsub.f32 %v924, %v3110
      %3112 = vmatmul.mubr.f32.gmra.mrb[0].mxu0 %v3111
      %v3113 = vpop.f32.mrb[0].mxu0
      %v3114 = vadd.f32 %v2533, %v3113
      %v3115 = vpop.f32.mrb[0].mxu0
      %v3116 = vand.u32 %v929, 4294901760
      %v3117 = vsub.f32 %v929, %v3116
      %3118 = vmatprep.mubr.f32.mxu0 %v3117
      %v3119 = vand.u32 %v928, 4294901760
      %v3120 = vsub.f32 %v928, %v3119
      %3121 = vmatmul.mubr.f32.gmra.mrb[0].mxu0 %v3120
      %v3122 = vpop.f32.mrb[0].mxu0
      %v3123 = vadd.f32 %v2540, %v3122
      %v3124 = vpop.f32.mrb[0].mxu0
      %v3125 = vand.u32 %v933, 4294901760
      %v3126 = vsub.f32 %v933, %v3125
      %3127 = vmatprep.mubr.f32.mxu0 %v3126
      %v3128 = vand.u32 %v932, 4294901760
      %v3129 = vsub.f32 %v932, %v3128
      %3130 = vmatmul.mubr.f32.gmra.mrb[0].mxu0 %v3129
      %v3131 = vpop.f32.mrb[0].mxu0
      %v3132 = vadd.f32 %v2547, %v3131
      %v3133 = vpop.f32.mrb[0].mxu0
      %v3134 = vand.u32 %v937, 4294901760
      %v3135 = vsub.f32 %v937, %v3134
      %3136 = vmatprep.mubr.f32.mxu0 %v3135
      %v3137 = vand.u32 %v936, 4294901760
      %v3138 = vsub.f32 %v936, %v3137
      %3139 = vmatmul.mubr.f32.gmra.mrb[0].mxu0 %v3138
      %v3140 = vpop.f32.mrb[0].mxu0
      %v3141 = vadd.f32 %v2554, %v3140
      %v3142 = vpop.f32.mrb[0].mxu0
      %v3143 = vand.u32 %v941, 4294901760
      %v3144 = vsub.f32 %v941, %v3143
      %3145 = vmatprep.mubr.f32.mxu0 %v3144
      %v3146 = vand.u32 %v940, 4294901760
      %v3147 = vsub.f32 %v940, %v3146
      %3148 = vmatmul.mubr.f32.gmra.mrb[0].mxu0 %v3147
      %v3149 = vpop.f32.mrb[0].mxu0
      %v3150 = vadd.f32 %v2561, %v3149
      %v3151 = vpop.f32.mrb[0].mxu0
      %v3152 = vand.u32 %v945, 4294901760
      %v3153 = vsub.f32 %v945, %v3152
      %3154 = vmatprep.mubr.f32.mxu0 %v3153
      %v3155 = vand.u32 %v944, 4294901760
      %v3156 = vsub.f32 %v944, %v3155
      %3157 = vmatmul.mubr.f32.gmra.mrb[0].mxu0 %v3156
      %v3158 = vpop.f32.mrb[0].mxu0
      %v3159 = vadd.f32 %v2568, %v3158
      %v3160 = vpop.f32.mrb[0].mxu0
      %v3161 = vand.u32 %v949, 4294901760
      %v3162 = vsub.f32 %v949, %v3161
      %3163 = vmatprep.mubr.f32.mxu0 %v3162
      %v3164 = vand.u32 %v948, 4294901760
      %v3165 = vsub.f32 %v948, %v3164
      %3166 = vmatmul.mubr.f32.gmra.mrb[0].mxu0 %v3165
      %v3167 = vpop.f32.mrb[0].mxu0
      %v3168 = vadd.f32 %v2575, %v3167
      %v3169 = vpop.f32.mrb[0].mxu0
      %v3170 = vand.u32 %v953, 4294901760
      %v3171 = vsub.f32 %v953, %v3170
      %3172 = vmatprep.mubr.f32.mxu0 %v3171
      %v3173 = vand.u32 %v952, 4294901760
      %v3174 = vsub.f32 %v952, %v3173
      %3175 = vmatmul.mubr.f32.gmra.mrb[0].mxu0 %v3174
      %v3176 = vpop.f32.mrb[0].mxu0
      %v3177 = vadd.f32 %v2582, %v3176
      %v3178 = vpop.f32.mrb[0].mxu0
      %v3179 = vand.u32 %v957, 4294901760
      %v3180 = vsub.f32 %v957, %v3179
      %3181 = vmatprep.mubr.f32.mxu0 %v3180
      %v3182 = vand.u32 %v956, 4294901760
      %v3183 = vsub.f32 %v956, %v3182
      %3184 = vmatmul.mubr.f32.gmra.mrb[0].mxu0 %v3183
      %v3185 = vpop.f32.mrb[0].mxu0
      %v3186 = vadd.f32 %v2589, %v3185
      %v3187 = vpop.f32.mrb[0].mxu0
      %v3188 = vand.u32 %v961, 4294901760
      %v3189 = vsub.f32 %v961, %v3188
      %3190 = vmatprep.mubr.f32.mxu0 %v3189
      %v3191 = vand.u32 %v960, 4294901760
      %v3192 = vsub.f32 %v960, %v3191
      %3193 = vmatmul.mubr.f32.gmra.mrb[0].mxu0 %v3192
      %v3194 = vpop.f32.mrb[0].mxu0
      %v3195 = vadd.f32 %v2596, %v3194
      %v3196 = vpop.f32.mrb[0].mxu0
      %v3197 = vand.u32 %v965, 4294901760
      %v3198 = vsub.f32 %v965, %v3197
      %3199 = vmatprep.mubr.f32.mxu0 %v3198
      %v3200 = vand.u32 %v964, 4294901760
      %v3201 = vsub.f32 %v964, %v3200
      %3202 = vmatmul.mubr.f32.gmra.mrb[0].mxu0 %v3201
      %v3203 = vpop.f32.mrb[0].mxu0
      %v3204 = vadd.f32 %v2603, %v3203
      %v3205 = vpop.f32.mrb[0].mxu0
      %v3206 = vand.u32 %v969, 4294901760
      %v3207 = vsub.f32 %v969, %v3206
      %3208 = vmatprep.mubr.f32.mxu0 %v3207
      %v3209 = vand.u32 %v968, 4294901760
      %v3210 = vsub.f32 %v968, %v3209
      %3211 = vmatmul.mubr.f32.gmra.mrb[0].mxu0 %v3210
      %v3212 = vpop.f32.mrb[0].mxu0
      %v3213 = vadd.f32 %v2610, %v3212
      %v3214 = vpop.f32.mrb[0].mxu0
      %v3215 = vand.u32 %v973, 4294901760
      %v3216 = vsub.f32 %v973, %v3215
      %3217 = vmatprep.mubr.f32.mxu0 %v3216
      %v3218 = vand.u32 %v972, 4294901760
      %v3219 = vsub.f32 %v972, %v3218
      %3220 = vmatmul.mubr.f32.gmra.mrb[0].mxu0 %v3219
      %v3221 = vpop.f32.mrb[0].mxu0
      %v3222 = vadd.f32 %v2617, %v3221
      %v3223 = vpop.f32.mrb[0].mxu0
      %v3224 = vand.u32 %v977, 4294901760
      %v3225 = vsub.f32 %v977, %v3224
      %3226 = vmatprep.mubr.f32.mxu0 %v3225
      %v3227 = vand.u32 %v976, 4294901760
      %v3228 = vsub.f32 %v976, %v3227
      %3229 = vmatmul.mubr.f32.gmra.mrb[0].mxu0 %v3228
      %v3230 = vpop.f32.mrb[0].mxu0
      %v3231 = vadd.f32 %v2624, %v3230
      %v3232 = vpop.f32.mrb[0].mxu0
      %v3233 = vand.u32 %v981, 4294901760
      %v3234 = vsub.f32 %v981, %v3233
      %3235 = vmatprep.mubr.f32.mxu0 %v3234
      %v3236 = vand.u32 %v980, 4294901760
      %v3237 = vsub.f32 %v980, %v3236
      %3238 = vmatmul.mubr.f32.gmra.mrb[0].mxu0 %v3237
      %v3239 = vpop.f32.mrb[0].mxu0
      %v3240 = vadd.f32 %v2631, %v3239
      %v3241 = vpop.f32.mrb[0].mxu0
      %v3242 = vand.u32 %v985, 4294901760
      %v3243 = vsub.f32 %v985, %v3242
      %3244 = vmatprep.mubr.f32.mxu0 %v3243
      %v3245 = vand.u32 %v984, 4294901760
      %v3246 = vsub.f32 %v984, %v3245
      %3247 = vmatmul.mubr.f32.gmra.mrb[0].mxu0 %v3246
      %v3248 = vpop.f32.mrb[0].mxu0
      %v3249 = vadd.f32 %v2638, %v3248
      %v3250 = vpop.f32.mrb[0].mxu0
      %v3251 = vand.u32 %v989, 4294901760
      %v3252 = vsub.f32 %v989, %v3251
      %3253 = vmatprep.mubr.f32.mxu0 %v3252
      %v3254 = vand.u32 %v988, 4294901760
      %v3255 = vsub.f32 %v988, %v3254
      %3256 = vmatmul.mubr.f32.gmra.mrb[0].mxu0 %v3255
      %v3257 = vpop.f32.mrb[0].mxu0
      %v3258 = vadd.f32 %v2645, %v3257
      %v3259 = vpop.f32.mrb[0].mxu0
      %v3260 = vand.u32 %v993, 4294901760
      %v3261 = vsub.f32 %v993, %v3260
      %3262 = vmatprep.mubr.f32.mxu0 %v3261
      %v3263 = vand.u32 %v992, 4294901760
      %v3264 = vsub.f32 %v992, %v3263
      %3265 = vmatmul.mubr.f32.gmra.mrb[0].mxu0 %v3264
      %v3266 = vpop.f32.mrb[0].mxu0
      %v3267 = vadd.f32 %v2652, %v3266
      %v3268 = vpop.f32.mrb[0].mxu0
      %v3269 = vand.u32 %v997, 4294901760
      %v3270 = vsub.f32 %v997, %v3269
      %3271 = vmatprep.mubr.f32.mxu0 %v3270
      %v3272 = vand.u32 %v996, 4294901760
      %v3273 = vsub.f32 %v996, %v3272
      %3274 = vmatmul.mubr.f32.gmra.mrb[0].mxu0 %v3273
      %v3275 = vpop.f32.mrb[0].mxu0
      %v3276 = vadd.f32 %v2659, %v3275
      %v3277 = vpop.f32.mrb[0].mxu0
      %v3278 = vand.u32 %v1001, 4294901760
      %v3279 = vsub.f32 %v1001, %v3278
      %3280 = vmatprep.mubr.f32.mxu0 %v3279
      %v3281 = vand.u32 %v1000, 4294901760
      %v3282 = vsub.f32 %v1000, %v3281
      %3283 = vmatmul.mubr.f32.gmra.mrb[0].mxu0 %v3282
      %v3284 = vpop.f32.mrb[0].mxu0
      %v3285 = vadd.f32 %v2666, %v3284
      %v3286 = vpop.f32.mrb[0].mxu0
      %v3287 = vand.u32 %v1005, 4294901760
      %v3288 = vsub.f32 %v1005, %v3287
      %3289 = vmatprep.mubr.f32.mxu0 %v3288
      %v3290 = vand.u32 %v1004, 4294901760
      %v3291 = vsub.f32 %v1004, %v3290
      %3292 = vmatmul.mubr.f32.gmra.mrb[0].mxu0 %v3291
      %v3293 = vpop.f32.mrb[0].mxu0
      %v3294 = vadd.f32 %v2673, %v3293
      %v3295 = vpop.f32.mrb[0].mxu0
      %v3296 = vand.u32 %v1009, 4294901760
      %v3297 = vsub.f32 %v1009, %v3296
      %3298 = vmatprep.mubr.f32.mxu0 %v3297
      %v3299 = vand.u32 %v1008, 4294901760
      %v3300 = vsub.f32 %v1008, %v3299
      %3301 = vmatmul.mubr.f32.gmra.mrb[0].mxu0 %v3300
      %v3302 = vpop.f32.mrb[0].mxu0
      %v3303 = vadd.f32 %v2680, %v3302
      %v3304 = vpop.f32.mrb[0].mxu0
      %v3305 = vand.u32 %v1013, 4294901760
      %v3306 = vsub.f32 %v1013, %v3305
      %3307 = vmatprep.mubr.f32.mxu0 %v3306
      %v3308 = vand.u32 %v1012, 4294901760
      %v3309 = vsub.f32 %v1012, %v3308
      %3310 = vmatmul.mubr.f32.gmra.mrb[0].mxu0 %v3309
      %v3311 = vpop.f32.mrb[0].mxu0
      %v3312 = vadd.f32 %v2687, %v3311
      %v3313 = vpop.f32.mrb[0].mxu0
      %v3314 = vand.u32 %v1017, 4294901760
      %v3315 = vsub.f32 %v1017, %v3314
      %3316 = vmatprep.mubr.f32.mxu0 %v3315
      %v3317 = vand.u32 %v1016, 4294901760
      %v3318 = vsub.f32 %v1016, %v3317
      %3319 = vmatmul.mubr.f32.gmra.mrb[0].mxu0 %v3318
      %v3320 = vpop.f32.mrb[0].mxu0
      %v3321 = vadd.f32 %v2694, %v3320
      %v3322 = vpop.f32.mrb[0].mxu0
      %v3323 = vand.u32 %v1021, 4294901760
      %v3324 = vsub.f32 %v1021, %v3323
      %3325 = vmatprep.mubr.f32.mxu0 %v3324
      %v3326 = vand.u32 %v1020, 4294901760
      %v3327 = vsub.f32 %v1020, %v3326
      %3328 = vmatmul.mubr.f32.gmra.mrb[0].mxu0 %v3327
      %v3329 = vpop.f32.mrb[0].mxu0
      %v3330 = vadd.f32 %v2701, %v3329
      %v3331 = vpop.f32.mrb[0].mxu0
      %v3332 = vand.u32 %v1025, 4294901760
      %v3333 = vsub.f32 %v1025, %v3332
      %3334 = vmatprep.mubr.f32.mxu0 %v3333
      %v3335 = vand.u32 %v1024, 4294901760
      %v3336 = vsub.f32 %v1024, %v3335
      %3337 = vmatmul.mubr.f32.gmra.mrb[0].mxu0 %v3336
      %v3338 = vpop.f32.mrb[0].mxu0
      %v3339 = vadd.f32 %v2708, %v3338
      %v3340 = vpop.f32.mrb[0].mxu0
      %v3341 = vand.u32 %v1029, 4294901760
      %v3342 = vsub.f32 %v1029, %v3341
      %3343 = vmatprep.mubr.f32.mxu0 %v3342
      %v3344 = vand.u32 %v1028, 4294901760
      %v3345 = vsub.f32 %v1028, %v3344
      %3346 = vmatmul.mubr.f32.gmra.mrb[0].mxu0 %v3345
      %v3347 = vpop.f32.mrb[0].mxu0
      %v3348 = vadd.f32 %v2715, %v3347
      %v3349 = vpop.f32.mrb[0].mxu0
      %v3350 = vand.u32 %v1033, 4294901760
      %v3351 = vsub.f32 %v1033, %v3350
      %3352 = vmatprep.mubr.f32.mxu0 %v3351
      %v3353 = vand.u32 %v1032, 4294901760
      %v3354 = vsub.f32 %v1032, %v3353
      %3355 = vmatmul.mubr.f32.gmra.mrb[0].mxu0 %v3354
      %v3356 = vpop.f32.mrb[0].mxu0
      %v3357 = vadd.f32 %v2722, %v3356
      %v3358 = vpop.f32.mrb[0].mxu0
      %v3359 = vand.u32 %v1037, 4294901760
      %v3360 = vsub.f32 %v1037, %v3359
      %3361 = vmatprep.mubr.f32.mxu0 %v3360
      %v3362 = vand.u32 %v1036, 4294901760
      %v3363 = vsub.f32 %v1036, %v3362
      %3364 = vmatmul.mubr.f32.gmra.mrb[0].mxu0 %v3363
      %v3365 = vpop.f32.mrb[0].mxu0
      %v3366 = vadd.f32 %v2729, %v3365
      %v3367 = vpop.f32.mrb[0].mxu0
      %v3368 = vand.u32 %v1041, 4294901760
      %v3369 = vsub.f32 %v1041, %v3368
      %3370 = vmatprep.mubr.f32.mxu0 %v3369
      %v3371 = vand.u32 %v1040, 4294901760
      %v3372 = vsub.f32 %v1040, %v3371
      %3373 = vmatmul.mubr.f32.gmra.mrb[0].mxu0 %v3372
      %v3374 = vpop.f32.mrb[0].mxu0
      %v3375 = vadd.f32 %v2736, %v3374
      %v3376 = vpop.f32.mrb[0].mxu0
      %v3377 = vand.u32 %v1045, 4294901760
      %v3378 = vsub.f32 %v1045, %v3377
      %3379 = vmatprep.mubr.f32.mxu0 %v3378
      %v3380 = vand.u32 %v1044, 4294901760
      %v3381 = vsub.f32 %v1044, %v3380
      %3382 = vmatmul.mubr.f32.gmra.mrb[0].mxu0 %v3381
      %v3383 = vpop.f32.mrb[0].mxu0
      %v3384 = vadd.f32 %v2743, %v3383
      %v3385 = vpop.f32.mrb[0].mxu0
      %v3386 = vand.u32 %v1049, 4294901760
      %v3387 = vsub.f32 %v1049, %v3386
      %3388 = vmatprep.mubr.f32.mxu0 %v3387
      %v3389 = vand.u32 %v1048, 4294901760
      %v3390 = vsub.f32 %v1048, %v3389
      %3391 = vmatmul.mubr.f32.gmra.mrb[0].mxu0 %v3390
      %v3392 = vpop.f32.mrb[0].mxu0
      %v3393 = vadd.f32 %v2750, %v3392
      %v3394 = vpop.f32.mrb[0].mxu0
      %v3395 = vand.u32 %v1053, 4294901760
      %v3396 = vsub.f32 %v1053, %v3395
      %3397 = vmatprep.mubr.f32.mxu0 %v3396
      %v3398 = vand.u32 %v1052, 4294901760
      %v3399 = vsub.f32 %v1052, %v3398
      %3400 = vmatmul.mubr.f32.gmra.mrb[0].mxu0 %v3399
      %v3401 = vpop.f32.mrb[0].mxu0
      %v3402 = vadd.f32 %v2757, %v3401
      %v3403 = vpop.f32.mrb[0].mxu0
      %v3404 = vand.u32 %v1057, 4294901760
      %v3405 = vsub.f32 %v1057, %v3404
      %3406 = vmatprep.mubr.f32.mxu0 %v3405
      %v3407 = vand.u32 %v1056, 4294901760
      %v3408 = vsub.f32 %v1056, %v3407
      %3409 = vmatmul.mubr.f32.gmra.mrb[0].mxu0 %v3408
      %v3410 = vpop.f32.mrb[0].mxu0
      %v3411 = vadd.f32 %v2764, %v3410
      %v3412 = vpop.f32.mrb[0].mxu0
      %v3413 = vand.u32 %v1061, 4294901760
      %v3414 = vsub.f32 %v1061, %v3413
      %3415 = vmatprep.mubr.f32.mxu0 %v3414
      %v3416 = vand.u32 %v1060, 4294901760
      %v3417 = vsub.f32 %v1060, %v3416
      %3418 = vmatmul.mubr.f32.gmra.mrb[0].mxu0 %v3417
      %v3419 = vpop.f32.mrb[0].mxu0
      %v3420 = vadd.f32 %v2771, %v3419
      %v3421 = vpop.f32.mrb[0].mxu0
      %v3422 = vand.u32 %v1065, 4294901760
      %v3423 = vsub.f32 %v1065, %v3422
      %3424 = vmatprep.mubr.f32.mxu0 %v3423
      %v3425 = vand.u32 %v1064, 4294901760
      %v3426 = vsub.f32 %v1064, %v3425
      %3427 = vmatmul.mubr.f32.gmra.mrb[0].mxu0 %v3426
      %v3428 = vpop.f32.mrb[0].mxu0
      %v3429 = vadd.f32 %v2778, %v3428
      %v3430 = vpop.f32.mrb[0].mxu0
      %v3431 = vand.u32 %v1069, 4294901760
      %v3432 = vsub.f32 %v1069, %v3431
      %3433 = vmatprep.mubr.f32.mxu0 %v3432
      %v3434 = vand.u32 %v1068, 4294901760
      %v3435 = vsub.f32 %v1068, %v3434
      %3436 = vmatmul.mubr.f32.gmra.mrb[0].mxu0 %v3435
      %v3437 = vpop.f32.mrb[0].mxu0
      %v3438 = vadd.f32 %v2785, %v3437
      %v3439 = vpop.f32.mrb[0].mxu0
      %v3440 = vand.u32 %v1073, 4294901760
      %v3441 = vsub.f32 %v1073, %v3440
      %3442 = vmatprep.mubr.f32.mxu0 %v3441
      %v3443 = vand.u32 %v1072, 4294901760
      %v3444 = vsub.f32 %v1072, %v3443
      %3445 = vmatmul.mubr.f32.gmra.mrb[0].mxu0 %v3444
      %v3446 = vpop.f32.mrb[0].mxu0
      %v3447 = vadd.f32 %v2792, %v3446
      %v3448 = vpop.f32.mrb[0].mxu0
      %v3449 = vand.u32 %v1077, 4294901760
      %v3450 = vsub.f32 %v1077, %v3449
      %3451 = vmatprep.mubr.f32.mxu0 %v3450
      %v3452 = vand.u32 %v1076, 4294901760
      %v3453 = vsub.f32 %v1076, %v3452
      %3454 = vmatmul.mubr.f32.gmra.mrb[0].mxu0 %v3453
      %v3455 = vpop.f32.mrb[0].mxu0
      %v3456 = vadd.f32 %v2799, %v3455
      %v3457 = vpop.f32.mrb[0].mxu0
      %v3458 = vand.u32 %v1081, 4294901760
      %v3459 = vsub.f32 %v1081, %v3458
      %3460 = vmatprep.mubr.f32.mxu0 %v3459
      %v3461 = vand.u32 %v1080, 4294901760
      %v3462 = vsub.f32 %v1080, %v3461
      %3463 = vmatmul.mubr.f32.gmra.mrb[0].mxu0 %v3462
      %v3464 = vpop.f32.mrb[0].mxu0
      %v3465 = vadd.f32 %v2806, %v3464
      %v3466 = vpop.f32.mrb[0].mxu0
      %v3467 = vand.u32 %v1085, 4294901760
      %v3468 = vsub.f32 %v1085, %v3467
      %3469 = vmatprep.mubr.f32.mxu0 %v3468
      %v3470 = vand.u32 %v1084, 4294901760
      %v3471 = vsub.f32 %v1084, %v3470
      %3472 = vmatmul.mubr.f32.gmra.mrb[0].mxu0 %v3471
      %v3473 = vpop.f32.mrb[0].mxu0
      %v3474 = vadd.f32 %v2813, %v3473
      %v3475 = vpop.f32.mrb[0].mxu0
      %v3476 = vand.u32 %v1089, 4294901760
      %v3477 = vsub.f32 %v1089, %v3476
      %3478 = vmatprep.mubr.f32.mxu0 %v3477
      %v3479 = vand.u32 %v1088, 4294901760
      %v3480 = vsub.f32 %v1088, %v3479
      %3481 = vmatmul.mubr.f32.gmra.mrb[0].mxu0 %v3480
      %v3482 = vpop.f32.mrb[0].mxu0
      %v3483 = vadd.f32 %v2820, %v3482
      %v3484 = vpop.f32.mrb[0].mxu0
      %v3485 = vand.u32 %v1093, 4294901760
      %v3486 = vsub.f32 %v1093, %v3485
      %3487 = vmatprep.mubr.f32.mxu0 %v3486
      %v3488 = vand.u32 %v1092, 4294901760
      %v3489 = vsub.f32 %v1092, %v3488
      %3490 = vmatmul.mubr.f32.gmra.mrb[0].mxu0 %v3489
      %v3491 = vpop.f32.mrb[0].mxu0
      %v3492 = vadd.f32 %v2827, %v3491
      %v3493 = vpop.f32.mrb[0].mxu0
      %v3494 = vand.u32 %v1097, 4294901760
      %v3495 = vsub.f32 %v1097, %v3494
      %3496 = vmatprep.mubr.f32.mxu0 %v3495
      %v3497 = vand.u32 %v1096, 4294901760
      %v3498 = vsub.f32 %v1096, %v3497
      %3499 = vmatmul.mubr.f32.gmra.mrb[0].mxu0 %v3498
      %v3500 = vpop.f32.mrb[0].mxu0
      %v3501 = vadd.f32 %v2834, %v3500
      %v3502 = vpop.f32.mrb[0].mxu0
      %v3503 = vand.u32 %v1101, 4294901760
      %v3504 = vsub.f32 %v1101, %v3503
      %3505 = vmatprep.mubr.f32.mxu0 %v3504
      %v3506 = vand.u32 %v1100, 4294901760
      %v3507 = vsub.f32 %v1100, %v3506
      %3508 = vmatmul.mubr.f32.gmra.mrb[0].mxu0 %v3507
      %v3509 = vpop.f32.mrb[0].mxu0
      %v3510 = vadd.f32 %v2841, %v3509
      %v3511 = vpop.f32.mrb[0].mxu0
      %v3512 = vand.u32 %v1105, 4294901760
      %v3513 = vsub.f32 %v1105, %v3512
      %3514 = vmatprep.mubr.f32.mxu0 %v3513
      %v3515 = vand.u32 %v1104, 4294901760
      %v3516 = vsub.f32 %v1104, %v3515
      %3517 = vmatmul.mubr.f32.gmra.mrb[0].mxu0 %v3516
      %v3518 = vpop.f32.mrb[0].mxu0
      %v3519 = vadd.f32 %v2848, %v3518
      %v3520 = vpop.f32.mrb[0].mxu0
      %v3521 = vand.u32 %v1109, 4294901760
      %v3522 = vsub.f32 %v1109, %v3521
      %3523 = vmatprep.mubr.f32.mxu0 %v3522
      %v3524 = vand.u32 %v1108, 4294901760
      %v3525 = vsub.f32 %v1108, %v3524
      %3526 = vmatmul.mubr.f32.gmra.mrb[0].mxu0 %v3525
      %v3527 = vpop.f32.mrb[0].mxu0
      %v3528 = vadd.f32 %v2855, %v3527
      %v3529 = vpop.f32.mrb[0].mxu0
      %v3530 = vand.u32 %v1113, 4294901760
      %v3531 = vsub.f32 %v1113, %v3530
      %3532 = vmatprep.mubr.f32.mxu0 %v3531
      %v3533 = vand.u32 %v1112, 4294901760
      %v3534 = vsub.f32 %v1112, %v3533
      %3535 = vmatmul.mubr.f32.gmra.mrb[0].mxu0 %v3534
      %v3536 = vpop.f32.mrb[0].mxu0
      %v3537 = vadd.f32 %v2862, %v3536
      %v3538 = vpop.f32.mrb[0].mxu0
      %v3539 = vand.u32 %v1117, 4294901760
      %v3540 = vsub.f32 %v1117, %v3539
      %3541 = vmatprep.mubr.f32.mxu0 %v3540
      %v3542 = vand.u32 %v1116, 4294901760
      %v3543 = vsub.f32 %v1116, %v3542
      %3544 = vmatmul.mubr.f32.gmra.mrb[0].mxu0 %v3543
      %v3545 = vpop.f32.mrb[0].mxu0
      %v3546 = vadd.f32 %v2869, %v3545
      %v3547 = vpop.f32.mrb[0].mxu0
      %v3548 = vand.u32 %v1121, 4294901760
      %v3549 = vsub.f32 %v1121, %v3548
      %3550 = vmatprep.mubr.f32.mxu0 %v3549
      %v3551 = vand.u32 %v1120, 4294901760
      %v3552 = vsub.f32 %v1120, %v3551
      %3553 = vmatmul.mubr.f32.gmra.mrb[0].mxu0 %v3552
      %v3554 = vpop.f32.mrb[0].mxu0
      %v3555 = vadd.f32 %v2876, %v3554
      %v3556 = vpop.f32.mrb[0].mxu0
      %v3557 = vand.u32 %v1125, 4294901760
      %v3558 = vsub.f32 %v1125, %v3557
      %3559 = vmatprep.mubr.f32.mxu0 %v3558
      %v3560 = vand.u32 %v1124, 4294901760
      %v3561 = vsub.f32 %v1124, %v3560
      %3562 = vmatmul.mubr.f32.gmra.mrb[0].mxu0 %v3561
      %v3563 = vpop.f32.mrb[0].mxu0
      %v3564 = vadd.f32 %v2883, %v3563
      %v3565 = vpop.f32.mrb[0].mxu0
      %v3566 = vand.u32 %v1129, 4294901760
      %v3567 = vsub.f32 %v1129, %v3566
      %3568 = vmatprep.mubr.f32.mxu0 %v3567
      %v3569 = vand.u32 %v1128, 4294901760
      %v3570 = vsub.f32 %v1128, %v3569
      %3571 = vmatmul.mubr.f32.gmra.mrb[0].mxu0 %v3570
      %v3572 = vpop.f32.mrb[0].mxu0
      %v3573 = vadd.f32 %v2890, %v3572
      %v3574 = vpop.f32.mrb[0].mxu0
      %v3575 = vand.u32 %v1133, 4294901760
      %v3576 = vsub.f32 %v1133, %v3575
      %3577 = vmatprep.mubr.f32.mxu0 %v3576
      %v3578 = vand.u32 %v1132, 4294901760
      %v3579 = vsub.f32 %v1132, %v3578
      %3580 = vmatmul.mubr.f32.gmra.mrb[0].mxu0 %v3579
      %v3581 = vpop.f32.mrb[0].mxu0
      %v3582 = vadd.f32 %v2897, %v3581
      %v3583 = vpop.f32.mrb[0].mxu0
      %v3584 = vand.u32 %v1137, 4294901760
      %v3585 = vsub.f32 %v1137, %v3584
      %3586 = vmatprep.mubr.f32.mxu0 %v3585
      %v3587 = vand.u32 %v1136, 4294901760
      %v3588 = vsub.f32 %v1136, %v3587
      %3589 = vmatmul.mubr.f32.gmra.mrb[0].mxu0 %v3588
      %v3590 = vpop.f32.mrb[0].mxu0
      %v3591 = vadd.f32 %v2904, %v3590
      %v3592 = vpop.f32.mrb[0].mxu0
      %v3593 = vand.u32 %v1141, 4294901760
      %v3594 = vsub.f32 %v1141, %v3593
      %3595 = vmatprep.mubr.f32.mxu0 %v3594
      %v3596 = vand.u32 %v1140, 4294901760
      %v3597 = vsub.f32 %v1140, %v3596
      %3598 = vmatmul.mubr.f32.gmra.mrb[0].mxu0 %v3597
      %v3599 = vpop.f32.mrb[0].mxu0
      %v3600 = vadd.f32 %v2911, %v3599
      %v3601 = vpop.f32.mrb[0].mxu0
      %v3602 = vand.u32 %v1145, 4294901760
      %v3603 = vsub.f32 %v1145, %v3602
      %3604 = vmatprep.mubr.f32.mxu0 %v3603
      %v3605 = vand.u32 %v1144, 4294901760
      %v3606 = vsub.f32 %v1144, %v3605
      %3607 = vmatmul.mubr.f32.gmra.mrb[0].mxu0 %v3606
      %v3608 = vpop.f32.mrb[0].mxu0
      %v3609 = vadd.f32 %v2918, %v3608
      %v3610 = vpop.f32.mrb[0].mxu0
      %v3611 = vand.u32 %v1149, 4294901760
      %v3612 = vsub.f32 %v1149, %v3611
      %3613 = vmatprep.mubr.f32.mxu0 %v3612
      %v3614 = vand.u32 %v1148, 4294901760
      %v3615 = vsub.f32 %v1148, %v3614
      %3616 = vmatmul.mubr.f32.gmra.mrb[0].mxu0 %v3615
      %v3617 = vpop.f32.mrb[0].mxu0
      %v3618 = vadd.f32 %v2925, %v3617
      %v3619 = vpop.f32.mrb[0].mxu0
      %v3620 = vand.u32 %v1153, 4294901760
      %v3621 = vsub.f32 %v1153, %v3620
      %3622 = vmatprep.mubr.f32.mxu0 %v3621
      %v3623 = vand.u32 %v1152, 4294901760
      %v3624 = vsub.f32 %v1152, %v3623
      %3625 = vmatmul.mubr.f32.gmra.mrb[0].mxu0 %v3624
      %v3626 = vpop.f32.mrb[0].mxu0
      %v3627 = vadd.f32 %v2932, %v3626
      %v3628 = vpop.f32.mrb[0].mxu0
      %v3629 = vand.u32 %v1157, 4294901760
      %v3630 = vsub.f32 %v1157, %v3629
      %3631 = vmatprep.mubr.f32.mxu0 %v3630
      %v3632 = vand.u32 %v1156, 4294901760
      %v3633 = vsub.f32 %v1156, %v3632
      %3634 = vmatmul.mubr.f32.gmra.mrb[0].mxu0 %v3633
      %v3635 = vpop.f32.mrb[0].mxu0
      %v3636 = vadd.f32 %v2939, %v3635
      %v3637 = vpop.f32.mrb[0].mxu0
      %v3638 = vand.u32 %v1161, 4294901760
      %v3639 = vsub.f32 %v1161, %v3638
      %3640 = vmatprep.mubr.f32.mxu0 %v3639
      %v3641 = vand.u32 %v1160, 4294901760
      %v3642 = vsub.f32 %v1160, %v3641
      %3643 = vmatmul.mubr.f32.gmra.mrb[0].mxu0 %v3642
      %v3644 = vpop.f32.mrb[0].mxu0
      %v3645 = vadd.f32 %v2946, %v3644
      %v3646 = vpop.f32.mrb[0].mxu0
      %v3647 = vand.u32 %v1165, 4294901760
      %v3648 = vsub.f32 %v1165, %v3647
      %3649 = vmatprep.mubr.f32.mxu0 %v3648
      %v3650 = vand.u32 %v1164, 4294901760
      %v3651 = vsub.f32 %v1164, %v3650
      %3652 = vmatmul.mubr.f32.gmra.mrb[0].mxu0 %v3651
      %v3653 = vpop.f32.mrb[0].mxu0
      %v3654 = vadd.f32 %v2953, %v3653
      %v3655 = vpop.f32.mrb[0].mxu0
      %v3656 = vand.u32 %v1169, 4294901760
      %v3657 = vsub.f32 %v1169, %v3656
      %3658 = vmatprep.mubr.f32.mxu0 %v3657
      %v3659 = vand.u32 %v1168, 4294901760
      %v3660 = vsub.f32 %v1168, %v3659
      %3661 = vmatmul.mubr.f32.gmra.mrb[0].mxu0 %v3660
      %v3662 = vpop.f32.mrb[0].mxu0
      %v3663 = vadd.f32 %v2960, %v3662
      %v3664 = vpop.f32.mrb[0].mxu0
      %v3665 = vand.u32 %v1173, 4294901760
      %v3666 = vsub.f32 %v1173, %v3665
      %3667 = vmatprep.mubr.f32.mxu0 %v3666
      %v3668 = vand.u32 %v1172, 4294901760
      %v3669 = vsub.f32 %v1172, %v3668
      %3670 = vmatmul.mubr.f32.gmra.mrb[0].mxu0 %v3669
      %v3671 = vpop.f32.mrb[0].mxu0
      %v3672 = vadd.f32 %v2967, %v3671
      %v3673 = vpop.f32.mrb[0].mxu0
      %3674 = vdwg.mxu0
      %3675 = vmatprep.subr.mxu0 0.0
      %v3676 = vand.u32 %v1176, 4294901760
      %3677 = vmatpush1.msra.mxu0 %v3676
      %3678 = vmatprep.subr.mxu0 0.0
      %v3679 = vand.u32 %v1177, 4294901760
      %3680 = vmatpush1.msra.mxu0 %v3679
      %3681 = vmatprep.subr.mxu0 0.0
      %v3682 = vand.u32 %v1178, 4294901760
      %3683 = vmatpush1.msra.mxu0 %v3682
      %3684 = vmatprep.subr.mxu0 0.0
      %v3685 = vand.u32 %v1179, 4294901760
      %3686 = vmatpush1.msra.mxu0 %v3685
      %3687 = vmatprep.subr.mxu0 0.0
      %v3688 = vand.u32 %v1180, 4294901760
      %3689 = vmatpush1.msra.mxu0 %v3688
      %3690 = vmatprep.subr.mxu0 0.0
      %v3691 = vand.u32 %v1181, 4294901760
      %3692 = vmatpush1.msra.mxu0 %v3691
      %3693 = vmatprep.subr.mxu0 0.0
      %v3694 = vand.u32 %v1182, 4294901760
      %3695 = vmatpush1.msra.mxu0 %v3694
      %3696 = vmatprep.subr.mxu0 0.0
      %v3697 = vand.u32 %v1183, 4294901760
      %3698 = vmatpush1.msra.mxu0 %v3697
      %3699 = vmatprep.subr.mxu0 0.0
      %v3700 = vand.u32 %v1184, 4294901760
      %3701 = vmatpush1.msra.mxu0 %v3700
      %3702 = vmatprep.subr.mxu0 0.0
      %v3703 = vand.u32 %v1185, 4294901760
      %3704 = vmatpush1.msra.mxu0 %v3703
      %3705 = vmatprep.subr.mxu0 0.0
      %v3706 = vand.u32 %v1186, 4294901760
      %3707 = vmatpush1.msra.mxu0 %v3706
      %3708 = vmatprep.subr.mxu0 0.0
      %v3709 = vand.u32 %v1187, 4294901760
      %3710 = vmatpush1.msra.mxu0 %v3709
      %3711 = vmatprep.subr.mxu0 0.0
      %v3712 = vand.u32 %v1188, 4294901760
      %3713 = vmatpush1.msra.mxu0 %v3712
      %3714 = vmatprep.subr.mxu0 0.0
      %v3715 = vand.u32 %v1189, 4294901760
      %3716 = vmatpush1.msra.mxu0 %v3715
      %3717 = vmatprep.subr.mxu0 0.0
      %v3718 = vand.u32 %v1190, 4294901760
      %3719 = vmatpush1.msra.mxu0 %v3718
      %3720 = vmatprep.subr.mxu0 0.0
      %v3721 = vand.u32 %v1191, 4294901760
      %3722 = vmatpush1.msra.mxu0 %v3721
      %3723 = vmatprep.subr.mxu0 0.0
      %v3724 = vand.u32 %v1192, 4294901760
      %3725 = vmatpush1.msra.mxu0 %v3724
      %3726 = vmatprep.subr.mxu0 0.0
      %v3727 = vand.u32 %v1193, 4294901760
      %3728 = vmatpush1.msra.mxu0 %v3727
      %3729 = vmatprep.subr.mxu0 0.0
      %v3730 = vand.u32 %v1194, 4294901760
      %3731 = vmatpush1.msra.mxu0 %v3730
      %3732 = vmatprep.subr.mxu0 0.0
      %v3733 = vand.u32 %v1195, 4294901760
      %3734 = vmatpush1.msra.mxu0 %v3733
      %3735 = vmatprep.subr.mxu0 0.0
      %v3736 = vand.u32 %v1196, 4294901760
      %3737 = vmatpush1.msra.mxu0 %v3736
      %3738 = vmatprep.subr.mxu0 0.0
      %v3739 = vand.u32 %v1197, 4294901760
      %3740 = vmatpush1.msra.mxu0 %v3739
      %3741 = vmatprep.subr.mxu0 0.0
      %v3742 = vand.u32 %v1198, 4294901760
      %3743 = vmatpush1.msra.mxu0 %v3742
      %3744 = vmatprep.subr.mxu0 0.0
      %v3745 = vand.u32 %v1199, 4294901760
      %3746 = vmatpush1.msra.mxu0 %v3745
      %3747 = vmatprep.subr.mxu0 0.0
      %v3748 = vand.u32 %v1200, 4294901760
      %3749 = vmatpush1.msra.mxu0 %v3748
      %3750 = vmatprep.subr.mxu0 0.0
      %v3751 = vand.u32 %v1201, 4294901760
      %3752 = vmatpush1.msra.mxu0 %v3751
      %3753 = vmatprep.subr.mxu0 0.0
      %v3754 = vand.u32 %v1202, 4294901760
      %3755 = vmatpush1.msra.mxu0 %v3754
      %3756 = vmatprep.subr.mxu0 0.0
      %v3757 = vand.u32 %v1203, 4294901760
      %3758 = vmatpush1.msra.mxu0 %v3757
      %3759 = vmatprep.subr.mxu0 0.0
      %v3760 = vand.u32 %v1204, 4294901760
      %3761 = vmatpush1.msra.mxu0 %v3760
      %3762 = vmatprep.subr.mxu0 0.0
      %v3763 = vand.u32 %v1205, 4294901760
      %3764 = vmatpush1.msra.mxu0 %v3763
      %3765 = vmatprep.subr.mxu0 0.0
      %v3766 = vand.u32 %v1206, 4294901760
      %3767 = vmatpush1.msra.mxu0 %v3766
      %3768 = vmatprep.subr.mxu0 0.0
      %v3769 = vand.u32 %v1207, 4294901760
      %3770 = vmatpush1.msra.mxu0 %v3769
      %v3771 = vand.u32 %v921, 4294901760
      %v3772 = vsub.f32 %v921, %v3771
      %v3773 = vand.u32 %v3772, 4294901760
      %3774 = vmatprep.mubr.f32.mxu0 %v3773
      %v3775 = vand.u32 %v920, 4294901760
      %v3776 = vsub.f32 %v920, %v3775
      %v3777 = vand.u32 %v3776, 4294901760
      %3778 = vmatmul.mubr.f32.gmra.mrb[0].mxu0 %v3777
      %v3779 = vpop.f32.mrb[0].mxu0
      %v3780 = vadd.f32 %v3105, %v3779
      %v3781 = vpop.f32.mrb[0].mxu0
      %v3782 = vand.u32 %v925, 4294901760
      %v3783 = vsub.f32 %v925, %v3782
      %v3784 = vand.u32 %v3783, 4294901760
      %3785 = vmatprep.mubr.f32.mxu0 %v3784
      %v3786 = vand.u32 %v924, 4294901760
      %v3787 = vsub.f32 %v924, %v3786
      %v3788 = vand.u32 %v3787, 4294901760
      %3789 = vmatmul.mubr.f32.gmra.mrb[0].mxu0 %v3788
      %v3790 = vpop.f32.mrb[0].mxu0
      %v3791 = vadd.f32 %v3114, %v3790
      %v3792 = vpop.f32.mrb[0].mxu0
      %v3793 = vand.u32 %v929, 4294901760
      %v3794 = vsub.f32 %v929, %v3793
      %v3795 = vand.u32 %v3794, 4294901760
      %3796 = vmatprep.mubr.f32.mxu0 %v3795
      %v3797 = vand.u32 %v928, 4294901760
      %v3798 = vsub.f32 %v928, %v3797
      %v3799 = vand.u32 %v3798, 4294901760
      %3800 = vmatmul.mubr.f32.gmra.mrb[0].mxu0 %v3799
      %v3801 = vpop.f32.mrb[0].mxu0
      %v3802 = vadd.f32 %v3123, %v3801
      %v3803 = vpop.f32.mrb[0].mxu0
      %v3804 = vand.u32 %v933, 4294901760
      %v3805 = vsub.f32 %v933, %v3804
      %v3806 = vand.u32 %v3805, 4294901760
      %3807 = vmatprep.mubr.f32.mxu0 %v3806
      %v3808 = vand.u32 %v932, 4294901760
      %v3809 = vsub.f32 %v932, %v3808
      %v3810 = vand.u32 %v3809, 4294901760
      %3811 = vmatmul.mubr.f32.gmra.mrb[0].mxu0 %v3810
      %v3812 = vpop.f32.mrb[0].mxu0
      %v3813 = vadd.f32 %v3132, %v3812
      %v3814 = vpop.f32.mrb[0].mxu0
      %v3815 = vand.u32 %v937, 4294901760
      %v3816 = vsub.f32 %v937, %v3815
      %v3817 = vand.u32 %v3816, 4294901760
      %3818 = vmatprep.mubr.f32.mxu0 %v3817
      %v3819 = vand.u32 %v936, 4294901760
      %v3820 = vsub.f32 %v936, %v3819
      %v3821 = vand.u32 %v3820, 4294901760
      %3822 = vmatmul.mubr.f32.gmra.mrb[0].mxu0 %v3821
      %v3823 = vpop.f32.mrb[0].mxu0
      %v3824 = vadd.f32 %v3141, %v3823
      %v3825 = vpop.f32.mrb[0].mxu0
      %v3826 = vand.u32 %v941, 4294901760
      %v3827 = vsub.f32 %v941, %v3826
      %v3828 = vand.u32 %v3827, 4294901760
      %3829 = vmatprep.mubr.f32.mxu0 %v3828
      %v3830 = vand.u32 %v940, 4294901760
      %v3831 = vsub.f32 %v940, %v3830
      %v3832 = vand.u32 %v3831, 4294901760
      %3833 = vmatmul.mubr.f32.gmra.mrb[0].mxu0 %v3832
      %v3834 = vpop.f32.mrb[0].mxu0
      %v3835 = vadd.f32 %v3150, %v3834
      %v3836 = vpop.f32.mrb[0].mxu0
      %v3837 = vand.u32 %v945, 4294901760
      %v3838 = vsub.f32 %v945, %v3837
      %v3839 = vand.u32 %v3838, 4294901760
      %3840 = vmatprep.mubr.f32.mxu0 %v3839
      %v3841 = vand.u32 %v944, 4294901760
      %v3842 = vsub.f32 %v944, %v3841
      %v3843 = vand.u32 %v3842, 4294901760
      %3844 = vmatmul.mubr.f32.gmra.mrb[0].mxu0 %v3843
      %v3845 = vpop.f32.mrb[0].mxu0
      %v3846 = vadd.f32 %v3159, %v3845
      %v3847 = vpop.f32.mrb[0].mxu0
      %v3848 = vand.u32 %v949, 4294901760
      %v3849 = vsub.f32 %v949, %v3848
      %v3850 = vand.u32 %v3849, 4294901760
      %3851 = vmatprep.mubr.f32.mxu0 %v3850
      %v3852 = vand.u32 %v948, 4294901760
      %v3853 = vsub.f32 %v948, %v3852
      %v3854 = vand.u32 %v3853, 4294901760
      %3855 = vmatmul.mubr.f32.gmra.mrb[0].mxu0 %v3854
      %v3856 = vpop.f32.mrb[0].mxu0
      %v3857 = vadd.f32 %v3168, %v3856
      %v3858 = vpop.f32.mrb[0].mxu0
      %v3859 = vand.u32 %v953, 4294901760
      %v3860 = vsub.f32 %v953, %v3859
      %v3861 = vand.u32 %v3860, 4294901760
      %3862 = vmatprep.mubr.f32.mxu0 %v3861
      %v3863 = vand.u32 %v952, 4294901760
      %v3864 = vsub.f32 %v952, %v3863
      %v3865 = vand.u32 %v3864, 4294901760
      %3866 = vmatmul.mubr.f32.gmra.mrb[0].mxu0 %v3865
      %v3867 = vpop.f32.mrb[0].mxu0
      %v3868 = vadd.f32 %v3177, %v3867
      %v3869 = vpop.f32.mrb[0].mxu0
      %v3870 = vand.u32 %v957, 4294901760
      %v3871 = vsub.f32 %v957, %v3870
      %v3872 = vand.u32 %v3871, 4294901760
      %3873 = vmatprep.mubr.f32.mxu0 %v3872
      %v3874 = vand.u32 %v956, 4294901760
      %v3875 = vsub.f32 %v956, %v3874
      %v3876 = vand.u32 %v3875, 4294901760
      %3877 = vmatmul.mubr.f32.gmra.mrb[0].mxu0 %v3876
      %v3878 = vpop.f32.mrb[0].mxu0
      %v3879 = vadd.f32 %v3186, %v3878
      %v3880 = vpop.f32.mrb[0].mxu0
      %v3881 = vand.u32 %v961, 4294901760
      %v3882 = vsub.f32 %v961, %v3881
      %v3883 = vand.u32 %v3882, 4294901760
      %3884 = vmatprep.mubr.f32.mxu0 %v3883
      %v3885 = vand.u32 %v960, 4294901760
      %v3886 = vsub.f32 %v960, %v3885
      %v3887 = vand.u32 %v3886, 4294901760
      %3888 = vmatmul.mubr.f32.gmra.mrb[0].mxu0 %v3887
      %v3889 = vpop.f32.mrb[0].mxu0
      %v3890 = vadd.f32 %v3195, %v3889
      %v3891 = vpop.f32.mrb[0].mxu0
      %v3892 = vand.u32 %v965, 4294901760
      %v3893 = vsub.f32 %v965, %v3892
      %v3894 = vand.u32 %v3893, 4294901760
      %3895 = vmatprep.mubr.f32.mxu0 %v3894
      %v3896 = vand.u32 %v964, 4294901760
      %v3897 = vsub.f32 %v964, %v3896
      %v3898 = vand.u32 %v3897, 4294901760
      %3899 = vmatmul.mubr.f32.gmra.mrb[0].mxu0 %v3898
      %v3900 = vpop.f32.mrb[0].mxu0
      %v3901 = vadd.f32 %v3204, %v3900
      %v3902 = vpop.f32.mrb[0].mxu0
      %v3903 = vand.u32 %v969, 4294901760
      %v3904 = vsub.f32 %v969, %v3903
      %v3905 = vand.u32 %v3904, 4294901760
      %3906 = vmatprep.mubr.f32.mxu0 %v3905
      %v3907 = vand.u32 %v968, 4294901760
      %v3908 = vsub.f32 %v968, %v3907
      %v3909 = vand.u32 %v3908, 4294901760
      %3910 = vmatmul.mubr.f32.gmra.mrb[0].mxu0 %v3909
      %v3911 = vpop.f32.mrb[0].mxu0
      %v3912 = vadd.f32 %v3213, %v3911
      %v3913 = vpop.f32.mrb[0].mxu0
      %v3914 = vand.u32 %v973, 4294901760
      %v3915 = vsub.f32 %v973, %v3914
      %v3916 = vand.u32 %v3915, 4294901760
      %3917 = vmatprep.mubr.f32.mxu0 %v3916
      %v3918 = vand.u32 %v972, 4294901760
      %v3919 = vsub.f32 %v972, %v3918
      %v3920 = vand.u32 %v3919, 4294901760
      %3921 = vmatmul.mubr.f32.gmra.mrb[0].mxu0 %v3920
      %v3922 = vpop.f32.mrb[0].mxu0
      %v3923 = vadd.f32 %v3222, %v3922
      %v3924 = vpop.f32.mrb[0].mxu0
      %v3925 = vand.u32 %v977, 4294901760
      %v3926 = vsub.f32 %v977, %v3925
      %v3927 = vand.u32 %v3926, 4294901760
      %3928 = vmatprep.mubr.f32.mxu0 %v3927
      %v3929 = vand.u32 %v976, 4294901760
      %v3930 = vsub.f32 %v976, %v3929
      %v3931 = vand.u32 %v3930, 4294901760
      %3932 = vmatmul.mubr.f32.gmra.mrb[0].mxu0 %v3931
      %v3933 = vpop.f32.mrb[0].mxu0
      %v3934 = vadd.f32 %v3231, %v3933
      %v3935 = vpop.f32.mrb[0].mxu0
      %v3936 = vand.u32 %v981, 4294901760
      %v3937 = vsub.f32 %v981, %v3936
      %v3938 = vand.u32 %v3937, 4294901760
      %3939 = vmatprep.mubr.f32.mxu0 %v3938
      %v3940 = vand.u32 %v980, 4294901760
      %v3941 = vsub.f32 %v980, %v3940
      %v3942 = vand.u32 %v3941, 4294901760
      %3943 = vmatmul.mubr.f32.gmra.mrb[0].mxu0 %v3942
      %v3944 = vpop.f32.mrb[0].mxu0
      %v3945 = vadd.f32 %v3240, %v3944
      %v3946 = vpop.f32.mrb[0].mxu0
      %v3947 = vand.u32 %v985, 4294901760
      %v3948 = vsub.f32 %v985, %v3947
      %v3949 = vand.u32 %v3948, 4294901760
      %3950 = vmatprep.mubr.f32.mxu0 %v3949
      %v3951 = vand.u32 %v984, 4294901760
      %v3952 = vsub.f32 %v984, %v3951
      %v3953 = vand.u32 %v3952, 4294901760
      %3954 = vmatmul.mubr.f32.gmra.mrb[0].mxu0 %v3953
      %v3955 = vpop.f32.mrb[0].mxu0
      %v3956 = vadd.f32 %v3249, %v3955
      %v3957 = vpop.f32.mrb[0].mxu0
      %v3958 = vand.u32 %v989, 4294901760
      %v3959 = vsub.f32 %v989, %v3958
      %v3960 = vand.u32 %v3959, 4294901760
      %3961 = vmatprep.mubr.f32.mxu0 %v3960
      %v3962 = vand.u32 %v988, 4294901760
      %v3963 = vsub.f32 %v988, %v3962
      %v3964 = vand.u32 %v3963, 4294901760
      %3965 = vmatmul.mubr.f32.gmra.mrb[0].mxu0 %v3964
      %v3966 = vpop.f32.mrb[0].mxu0
      %v3967 = vadd.f32 %v3258, %v3966
      %v3968 = vpop.f32.mrb[0].mxu0
      %v3969 = vand.u32 %v993, 4294901760
      %v3970 = vsub.f32 %v993, %v3969
      %v3971 = vand.u32 %v3970, 4294901760
      %3972 = vmatprep.mubr.f32.mxu0 %v3971
      %v3973 = vand.u32 %v992, 4294901760
      %v3974 = vsub.f32 %v992, %v3973
      %v3975 = vand.u32 %v3974, 4294901760
      %3976 = vmatmul.mubr.f32.gmra.mrb[0].mxu0 %v3975
      %v3977 = vpop.f32.mrb[0].mxu0
      %v3978 = vadd.f32 %v3267, %v3977
      %v3979 = vpop.f32.mrb[0].mxu0
      %v3980 = vand.u32 %v997, 4294901760
      %v3981 = vsub.f32 %v997, %v3980
      %v3982 = vand.u32 %v3981, 4294901760
      %3983 = vmatprep.mubr.f32.mxu0 %v3982
      %v3984 = vand.u32 %v996, 4294901760
      %v3985 = vsub.f32 %v996, %v3984
      %v3986 = vand.u32 %v3985, 4294901760
      %3987 = vmatmul.mubr.f32.gmra.mrb[0].mxu0 %v3986
      %v3988 = vpop.f32.mrb[0].mxu0
      %v3989 = vadd.f32 %v3276, %v3988
      %v3990 = vpop.f32.mrb[0].mxu0
      %v3991 = vand.u32 %v1001, 4294901760
      %v3992 = vsub.f32 %v1001, %v3991
      %v3993 = vand.u32 %v3992, 4294901760
      %3994 = vmatprep.mubr.f32.mxu0 %v3993
      %v3995 = vand.u32 %v1000, 4294901760
      %v3996 = vsub.f32 %v1000, %v3995
      %v3997 = vand.u32 %v3996, 4294901760
      %3998 = vmatmul.mubr.f32.gmra.mrb[0].mxu0 %v3997
      %v3999 = vpop.f32.mrb[0].mxu0
      %v4000 = vadd.f32 %v3285, %v3999
      %v4001 = vpop.f32.mrb[0].mxu0
      %v4002 = vand.u32 %v1005, 4294901760
      %v4003 = vsub.f32 %v1005, %v4002
      %v4004 = vand.u32 %v4003, 4294901760
      %4005 = vmatprep.mubr.f32.mxu0 %v4004
      %v4006 = vand.u32 %v1004, 4294901760
      %v4007 = vsub.f32 %v1004, %v4006
      %v4008 = vand.u32 %v4007, 4294901760
      %4009 = vmatmul.mubr.f32.gmra.mrb[0].mxu0 %v4008
      %v4010 = vpop.f32.mrb[0].mxu0
      %v4011 = vadd.f32 %v3294, %v4010
      %v4012 = vpop.f32.mrb[0].mxu0
      %v4013 = vand.u32 %v1009, 4294901760
      %v4014 = vsub.f32 %v1009, %v4013
      %v4015 = vand.u32 %v4014, 4294901760
      %4016 = vmatprep.mubr.f32.mxu0 %v4015
      %v4017 = vand.u32 %v1008, 4294901760
      %v4018 = vsub.f32 %v1008, %v4017
      %v4019 = vand.u32 %v4018, 4294901760
      %4020 = vmatmul.mubr.f32.gmra.mrb[0].mxu0 %v4019
      %v4021 = vpop.f32.mrb[0].mxu0
      %v4022 = vadd.f32 %v3303, %v4021
      %v4023 = vpop.f32.mrb[0].mxu0
      %v4024 = vand.u32 %v1013, 4294901760
      %v4025 = vsub.f32 %v1013, %v4024
      %v4026 = vand.u32 %v4025, 4294901760
      %4027 = vmatprep.mubr.f32.mxu0 %v4026
      %v4028 = vand.u32 %v1012, 4294901760
      %v4029 = vsub.f32 %v1012, %v4028
      %v4030 = vand.u32 %v4029, 4294901760
      %4031 = vmatmul.mubr.f32.gmra.mrb[0].mxu0 %v4030
      %v4032 = vpop.f32.mrb[0].mxu0
      %v4033 = vadd.f32 %v3312, %v4032
      %v4034 = vpop.f32.mrb[0].mxu0
      %v4035 = vand.u32 %v1017, 4294901760
      %v4036 = vsub.f32 %v1017, %v4035
      %v4037 = vand.u32 %v4036, 4294901760
      %4038 = vmatprep.mubr.f32.mxu0 %v4037
      %v4039 = vand.u32 %v1016, 4294901760
      %v4040 = vsub.f32 %v1016, %v4039
      %v4041 = vand.u32 %v4040, 4294901760
      %4042 = vmatmul.mubr.f32.gmra.mrb[0].mxu0 %v4041
      %v4043 = vpop.f32.mrb[0].mxu0
      %v4044 = vadd.f32 %v3321, %v4043
      %v4045 = vpop.f32.mrb[0].mxu0
      %v4046 = vand.u32 %v1021, 4294901760
      %v4047 = vsub.f32 %v1021, %v4046
      %v4048 = vand.u32 %v4047, 4294901760
      %4049 = vmatprep.mubr.f32.mxu0 %v4048
      %v4050 = vand.u32 %v1020, 4294901760
      %v4051 = vsub.f32 %v1020, %v4050
      %v4052 = vand.u32 %v4051, 4294901760
      %4053 = vmatmul.mubr.f32.gmra.mrb[0].mxu0 %v4052
      %v4054 = vpop.f32.mrb[0].mxu0
      %v4055 = vadd.f32 %v3330, %v4054
      %v4056 = vpop.f32.mrb[0].mxu0
      %v4057 = vand.u32 %v1025, 4294901760
      %v4058 = vsub.f32 %v1025, %v4057
      %v4059 = vand.u32 %v4058, 4294901760
      %4060 = vmatprep.mubr.f32.mxu0 %v4059
      %v4061 = vand.u32 %v1024, 4294901760
      %v4062 = vsub.f32 %v1024, %v4061
      %v4063 = vand.u32 %v4062, 4294901760
      %4064 = vmatmul.mubr.f32.gmra.mrb[0].mxu0 %v4063
      %v4065 = vpop.f32.mrb[0].mxu0
      %v4066 = vadd.f32 %v3339, %v4065
      %v4067 = vpop.f32.mrb[0].mxu0
      %v4068 = vand.u32 %v1029, 4294901760
      %v4069 = vsub.f32 %v1029, %v4068
      %v4070 = vand.u32 %v4069, 4294901760
      %4071 = vmatprep.mubr.f32.mxu0 %v4070
      %v4072 = vand.u32 %v1028, 4294901760
      %v4073 = vsub.f32 %v1028, %v4072
      %v4074 = vand.u32 %v4073, 4294901760
      %4075 = vmatmul.mubr.f32.gmra.mrb[0].mxu0 %v4074
      %v4076 = vpop.f32.mrb[0].mxu0
      %v4077 = vadd.f32 %v3348, %v4076
      %v4078 = vpop.f32.mrb[0].mxu0
      %v4079 = vand.u32 %v1033, 4294901760
      %v4080 = vsub.f32 %v1033, %v4079
      %v4081 = vand.u32 %v4080, 4294901760
      %4082 = vmatprep.mubr.f32.mxu0 %v4081
      %v4083 = vand.u32 %v1032, 4294901760
      %v4084 = vsub.f32 %v1032, %v4083
      %v4085 = vand.u32 %v4084, 4294901760
      %4086 = vmatmul.mubr.f32.gmra.mrb[0].mxu0 %v4085
      %v4087 = vpop.f32.mrb[0].mxu0
      %v4088 = vadd.f32 %v3357, %v4087
      %v4089 = vpop.f32.mrb[0].mxu0
      %v4090 = vand.u32 %v1037, 4294901760
      %v4091 = vsub.f32 %v1037, %v4090
      %v4092 = vand.u32 %v4091, 4294901760
      %4093 = vmatprep.mubr.f32.mxu0 %v4092
      %v4094 = vand.u32 %v1036, 4294901760
      %v4095 = vsub.f32 %v1036, %v4094
      %v4096 = vand.u32 %v4095, 4294901760
      %4097 = vmatmul.mubr.f32.gmra.mrb[0].mxu0 %v4096
      %v4098 = vpop.f32.mrb[0].mxu0
      %v4099 = vadd.f32 %v3366, %v4098
      %v4100 = vpop.f32.mrb[0].mxu0
      %v4101 = vand.u32 %v1041, 4294901760
      %v4102 = vsub.f32 %v1041, %v4101
      %v4103 = vand.u32 %v4102, 4294901760
      %4104 = vmatprep.mubr.f32.mxu0 %v4103
      %v4105 = vand.u32 %v1040, 4294901760
      %v4106 = vsub.f32 %v1040, %v4105
      %v4107 = vand.u32 %v4106, 4294901760
      %4108 = vmatmul.mubr.f32.gmra.mrb[0].mxu0 %v4107
      %v4109 = vpop.f32.mrb[0].mxu0
      %v4110 = vadd.f32 %v3375, %v4109
      %v4111 = vpop.f32.mrb[0].mxu0
      %v4112 = vand.u32 %v1045, 4294901760
      %v4113 = vsub.f32 %v1045, %v4112
      %v4114 = vand.u32 %v4113, 4294901760
      %4115 = vmatprep.mubr.f32.mxu0 %v4114
      %v4116 = vand.u32 %v1044, 4294901760
      %v4117 = vsub.f32 %v1044, %v4116
      %v4118 = vand.u32 %v4117, 4294901760
      %4119 = vmatmul.mubr.f32.gmra.mrb[0].mxu0 %v4118
      %v4120 = vpop.f32.mrb[0].mxu0
      %v4121 = vadd.f32 %v3384, %v4120
      %v4122 = vpop.f32.mrb[0].mxu0
      %v4123 = vand.u32 %v1049, 4294901760
      %v4124 = vsub.f32 %v1049, %v4123
      %v4125 = vand.u32 %v4124, 4294901760
      %4126 = vmatprep.mubr.f32.mxu0 %v4125
      %v4127 = vand.u32 %v1048, 4294901760
      %v4128 = vsub.f32 %v1048, %v4127
      %v4129 = vand.u32 %v4128, 4294901760
      %4130 = vmatmul.mubr.f32.gmra.mrb[0].mxu0 %v4129
      %v4131 = vpop.f32.mrb[0].mxu0
      %v4132 = vadd.f32 %v3393, %v4131
      %v4133 = vpop.f32.mrb[0].mxu0
      %v4134 = vand.u32 %v1053, 4294901760
      %v4135 = vsub.f32 %v1053, %v4134
      %v4136 = vand.u32 %v4135, 4294901760
      %4137 = vmatprep.mubr.f32.mxu0 %v4136
      %v4138 = vand.u32 %v1052, 4294901760
      %v4139 = vsub.f32 %v1052, %v4138
      %v4140 = vand.u32 %v4139, 4294901760
      %4141 = vmatmul.mubr.f32.gmra.mrb[0].mxu0 %v4140
      %v4142 = vpop.f32.mrb[0].mxu0
      %v4143 = vadd.f32 %v3402, %v4142
      %v4144 = vpop.f32.mrb[0].mxu0
      %v4145 = vand.u32 %v1057, 4294901760
      %v4146 = vsub.f32 %v1057, %v4145
      %v4147 = vand.u32 %v4146, 4294901760
      %4148 = vmatprep.mubr.f32.mxu0 %v4147
      %v4149 = vand.u32 %v1056, 4294901760
      %v4150 = vsub.f32 %v1056, %v4149
      %v4151 = vand.u32 %v4150, 4294901760
      %4152 = vmatmul.mubr.f32.gmra.mrb[0].mxu0 %v4151
      %v4153 = vpop.f32.mrb[0].mxu0
      %v4154 = vadd.f32 %v3411, %v4153
      %v4155 = vpop.f32.mrb[0].mxu0
      %v4156 = vand.u32 %v1061, 4294901760
      %v4157 = vsub.f32 %v1061, %v4156
      %v4158 = vand.u32 %v4157, 4294901760
      %4159 = vmatprep.mubr.f32.mxu0 %v4158
      %v4160 = vand.u32 %v1060, 4294901760
      %v4161 = vsub.f32 %v1060, %v4160
      %v4162 = vand.u32 %v4161, 4294901760
      %4163 = vmatmul.mubr.f32.gmra.mrb[0].mxu0 %v4162
      %v4164 = vpop.f32.mrb[0].mxu0
      %v4165 = vadd.f32 %v3420, %v4164
      %v4166 = vpop.f32.mrb[0].mxu0
      %v4167 = vand.u32 %v1065, 4294901760
      %v4168 = vsub.f32 %v1065, %v4167
      %v4169 = vand.u32 %v4168, 4294901760
      %4170 = vmatprep.mubr.f32.mxu0 %v4169
      %v4171 = vand.u32 %v1064, 4294901760
      %v4172 = vsub.f32 %v1064, %v4171
      %v4173 = vand.u32 %v4172, 4294901760
      %4174 = vmatmul.mubr.f32.gmra.mrb[0].mxu0 %v4173
      %v4175 = vpop.f32.mrb[0].mxu0
      %v4176 = vadd.f32 %v3429, %v4175
      %v4177 = vpop.f32.mrb[0].mxu0
      %v4178 = vand.u32 %v1069, 4294901760
      %v4179 = vsub.f32 %v1069, %v4178
      %v4180 = vand.u32 %v4179, 4294901760
      %4181 = vmatprep.mubr.f32.mxu0 %v4180
      %v4182 = vand.u32 %v1068, 4294901760
      %v4183 = vsub.f32 %v1068, %v4182
      %v4184 = vand.u32 %v4183, 4294901760
      %4185 = vmatmul.mubr.f32.gmra.mrb[0].mxu0 %v4184
      %v4186 = vpop.f32.mrb[0].mxu0
      %v4187 = vadd.f32 %v3438, %v4186
      %v4188 = vpop.f32.mrb[0].mxu0
      %v4189 = vand.u32 %v1073, 4294901760
      %v4190 = vsub.f32 %v1073, %v4189
      %v4191 = vand.u32 %v4190, 4294901760
      %4192 = vmatprep.mubr.f32.mxu0 %v4191
      %v4193 = vand.u32 %v1072, 4294901760
      %v4194 = vsub.f32 %v1072, %v4193
      %v4195 = vand.u32 %v4194, 4294901760
      %4196 = vmatmul.mubr.f32.gmra.mrb[0].mxu0 %v4195
      %v4197 = vpop.f32.mrb[0].mxu0
      %v4198 = vadd.f32 %v3447, %v4197
      %v4199 = vpop.f32.mrb[0].mxu0
      %v4200 = vand.u32 %v1077, 4294901760
      %v4201 = vsub.f32 %v1077, %v4200
      %v4202 = vand.u32 %v4201, 4294901760
      %4203 = vmatprep.mubr.f32.mxu0 %v4202
      %v4204 = vand.u32 %v1076, 4294901760
      %v4205 = vsub.f32 %v1076, %v4204
      %v4206 = vand.u32 %v4205, 4294901760
      %4207 = vmatmul.mubr.f32.gmra.mrb[0].mxu0 %v4206
      %v4208 = vpop.f32.mrb[0].mxu0
      %v4209 = vadd.f32 %v3456, %v4208
      %v4210 = vpop.f32.mrb[0].mxu0
      %v4211 = vand.u32 %v1081, 4294901760
      %v4212 = vsub.f32 %v1081, %v4211
      %v4213 = vand.u32 %v4212, 4294901760
      %4214 = vmatprep.mubr.f32.mxu0 %v4213
      %v4215 = vand.u32 %v1080, 4294901760
      %v4216 = vsub.f32 %v1080, %v4215
      %v4217 = vand.u32 %v4216, 4294901760
      %4218 = vmatmul.mubr.f32.gmra.mrb[0].mxu0 %v4217
      %v4219 = vpop.f32.mrb[0].mxu0
      %v4220 = vadd.f32 %v3465, %v4219
      %v4221 = vpop.f32.mrb[0].mxu0
      %v4222 = vand.u32 %v1085, 4294901760
      %v4223 = vsub.f32 %v1085, %v4222
      %v4224 = vand.u32 %v4223, 4294901760
      %4225 = vmatprep.mubr.f32.mxu0 %v4224
      %v4226 = vand.u32 %v1084, 4294901760
      %v4227 = vsub.f32 %v1084, %v4226
      %v4228 = vand.u32 %v4227, 4294901760
      %4229 = vmatmul.mubr.f32.gmra.mrb[0].mxu0 %v4228
      %v4230 = vpop.f32.mrb[0].mxu0
      %v4231 = vadd.f32 %v3474, %v4230
      %v4232 = vpop.f32.mrb[0].mxu0
      %v4233 = vand.u32 %v1089, 4294901760
      %v4234 = vsub.f32 %v1089, %v4233
      %v4235 = vand.u32 %v4234, 4294901760
      %4236 = vmatprep.mubr.f32.mxu0 %v4235
      %v4237 = vand.u32 %v1088, 4294901760
      %v4238 = vsub.f32 %v1088, %v4237
      %v4239 = vand.u32 %v4238, 4294901760
      %4240 = vmatmul.mubr.f32.gmra.mrb[0].mxu0 %v4239
      %v4241 = vpop.f32.mrb[0].mxu0
      %v4242 = vadd.f32 %v3483, %v4241
      %v4243 = vpop.f32.mrb[0].mxu0
      %v4244 = vand.u32 %v1093, 4294901760
      %v4245 = vsub.f32 %v1093, %v4244
      %v4246 = vand.u32 %v4245, 4294901760
      %4247 = vmatprep.mubr.f32.mxu0 %v4246
      %v4248 = vand.u32 %v1092, 4294901760
      %v4249 = vsub.f32 %v1092, %v4248
      %v4250 = vand.u32 %v4249, 4294901760
      %4251 = vmatmul.mubr.f32.gmra.mrb[0].mxu0 %v4250
      %v4252 = vpop.f32.mrb[0].mxu0
      %v4253 = vadd.f32 %v3492, %v4252
      %v4254 = vpop.f32.mrb[0].mxu0
      %v4255 = vand.u32 %v1097, 4294901760
      %v4256 = vsub.f32 %v1097, %v4255
      %v4257 = vand.u32 %v4256, 4294901760
      %4258 = vmatprep.mubr.f32.mxu0 %v4257
      %v4259 = vand.u32 %v1096, 4294901760
      %v4260 = vsub.f32 %v1096, %v4259
      %v4261 = vand.u32 %v4260, 4294901760
      %4262 = vmatmul.mubr.f32.gmra.mrb[0].mxu0 %v4261
      %v4263 = vpop.f32.mrb[0].mxu0
      %v4264 = vadd.f32 %v3501, %v4263
      %v4265 = vpop.f32.mrb[0].mxu0
      %v4266 = vand.u32 %v1101, 4294901760
      %v4267 = vsub.f32 %v1101, %v4266
      %v4268 = vand.u32 %v4267, 4294901760
      %4269 = vmatprep.mubr.f32.mxu0 %v4268
      %v4270 = vand.u32 %v1100, 4294901760
      %v4271 = vsub.f32 %v1100, %v4270
      %v4272 = vand.u32 %v4271, 4294901760
      %4273 = vmatmul.mubr.f32.gmra.mrb[0].mxu0 %v4272
      %v4274 = vpop.f32.mrb[0].mxu0
      %v4275 = vadd.f32 %v3510, %v4274
      %v4276 = vpop.f32.mrb[0].mxu0
      %v4277 = vand.u32 %v1105, 4294901760
      %v4278 = vsub.f32 %v1105, %v4277
      %v4279 = vand.u32 %v4278, 4294901760
      %4280 = vmatprep.mubr.f32.mxu0 %v4279
      %v4281 = vand.u32 %v1104, 4294901760
      %v4282 = vsub.f32 %v1104, %v4281
      %v4283 = vand.u32 %v4282, 4294901760
      %4284 = vmatmul.mubr.f32.gmra.mrb[0].mxu0 %v4283
      %v4285 = vpop.f32.mrb[0].mxu0
      %v4286 = vadd.f32 %v3519, %v4285
      %v4287 = vpop.f32.mrb[0].mxu0
      %v4288 = vand.u32 %v1109, 4294901760
      %v4289 = vsub.f32 %v1109, %v4288
      %v4290 = vand.u32 %v4289, 4294901760
      %4291 = vmatprep.mubr.f32.mxu0 %v4290
      %v4292 = vand.u32 %v1108, 4294901760
      %v4293 = vsub.f32 %v1108, %v4292
      %v4294 = vand.u32 %v4293, 4294901760
      %4295 = vmatmul.mubr.f32.gmra.mrb[0].mxu0 %v4294
      %v4296 = vpop.f32.mrb[0].mxu0
      %v4297 = vadd.f32 %v3528, %v4296
      %v4298 = vpop.f32.mrb[0].mxu0
      %v4299 = vand.u32 %v1113, 4294901760
      %v4300 = vsub.f32 %v1113, %v4299
      %v4301 = vand.u32 %v4300, 4294901760
      %4302 = vmatprep.mubr.f32.mxu0 %v4301
      %v4303 = vand.u32 %v1112, 4294901760
      %v4304 = vsub.f32 %v1112, %v4303
      %v4305 = vand.u32 %v4304, 4294901760
      %4306 = vmatmul.mubr.f32.gmra.mrb[0].mxu0 %v4305
      %v4307 = vpop.f32.mrb[0].mxu0
      %v4308 = vadd.f32 %v3537, %v4307
      %v4309 = vpop.f32.mrb[0].mxu0
      %v4310 = vand.u32 %v1117, 4294901760
      %v4311 = vsub.f32 %v1117, %v4310
      %v4312 = vand.u32 %v4311, 4294901760
      %4313 = vmatprep.mubr.f32.mxu0 %v4312
      %v4314 = vand.u32 %v1116, 4294901760
      %v4315 = vsub.f32 %v1116, %v4314
      %v4316 = vand.u32 %v4315, 4294901760
      %4317 = vmatmul.mubr.f32.gmra.mrb[0].mxu0 %v4316
      %v4318 = vpop.f32.mrb[0].mxu0
      %v4319 = vadd.f32 %v3546, %v4318
      %v4320 = vpop.f32.mrb[0].mxu0
      %v4321 = vand.u32 %v1121, 4294901760
      %v4322 = vsub.f32 %v1121, %v4321
      %v4323 = vand.u32 %v4322, 4294901760
      %4324 = vmatprep.mubr.f32.mxu0 %v4323
      %v4325 = vand.u32 %v1120, 4294901760
      %v4326 = vsub.f32 %v1120, %v4325
      %v4327 = vand.u32 %v4326, 4294901760
      %4328 = vmatmul.mubr.f32.gmra.mrb[0].mxu0 %v4327
      %v4329 = vpop.f32.mrb[0].mxu0
      %v4330 = vadd.f32 %v3555, %v4329
      %v4331 = vpop.f32.mrb[0].mxu0
      %v4332 = vand.u32 %v1125, 4294901760
      %v4333 = vsub.f32 %v1125, %v4332
      %v4334 = vand.u32 %v4333, 4294901760
      %4335 = vmatprep.mubr.f32.mxu0 %v4334
      %v4336 = vand.u32 %v1124, 4294901760
      %v4337 = vsub.f32 %v1124, %v4336
      %v4338 = vand.u32 %v4337, 4294901760
      %4339 = vmatmul.mubr.f32.gmra.mrb[0].mxu0 %v4338
      %v4340 = vpop.f32.mrb[0].mxu0
      %v4341 = vadd.f32 %v3564, %v4340
      %v4342 = vpop.f32.mrb[0].mxu0
      %v4343 = vand.u32 %v1129, 4294901760
      %v4344 = vsub.f32 %v1129, %v4343
      %v4345 = vand.u32 %v4344, 4294901760
      %4346 = vmatprep.mubr.f32.mxu0 %v4345
      %v4347 = vand.u32 %v1128, 4294901760
      %v4348 = vsub.f32 %v1128, %v4347
      %v4349 = vand.u32 %v4348, 4294901760
      %4350 = vmatmul.mubr.f32.gmra.mrb[0].mxu0 %v4349
      %v4351 = vpop.f32.mrb[0].mxu0
      %v4352 = vadd.f32 %v3573, %v4351
      %v4353 = vpop.f32.mrb[0].mxu0
      %v4354 = vand.u32 %v1133, 4294901760
      %v4355 = vsub.f32 %v1133, %v4354
      %v4356 = vand.u32 %v4355, 4294901760
      %4357 = vmatprep.mubr.f32.mxu0 %v4356
      %v4358 = vand.u32 %v1132, 4294901760
      %v4359 = vsub.f32 %v1132, %v4358
      %v4360 = vand.u32 %v4359, 4294901760
      %4361 = vmatmul.mubr.f32.gmra.mrb[0].mxu0 %v4360
      %v4362 = vpop.f32.mrb[0].mxu0
      %v4363 = vadd.f32 %v3582, %v4362
      %v4364 = vpop.f32.mrb[0].mxu0
      %v4365 = vand.u32 %v1137, 4294901760
      %v4366 = vsub.f32 %v1137, %v4365
      %v4367 = vand.u32 %v4366, 4294901760
      %4368 = vmatprep.mubr.f32.mxu0 %v4367
      %v4369 = vand.u32 %v1136, 4294901760
      %v4370 = vsub.f32 %v1136, %v4369
      %v4371 = vand.u32 %v4370, 4294901760
      %4372 = vmatmul.mubr.f32.gmra.mrb[0].mxu0 %v4371
      %v4373 = vpop.f32.mrb[0].mxu0
      %v4374 = vadd.f32 %v3591, %v4373
      %v4375 = vpop.f32.mrb[0].mxu0
      %v4376 = vand.u32 %v1141, 4294901760
      %v4377 = vsub.f32 %v1141, %v4376
      %v4378 = vand.u32 %v4377, 4294901760
      %4379 = vmatprep.mubr.f32.mxu0 %v4378
      %v4380 = vand.u32 %v1140, 4294901760
      %v4381 = vsub.f32 %v1140, %v4380
      %v4382 = vand.u32 %v4381, 4294901760
      %4383 = vmatmul.mubr.f32.gmra.mrb[0].mxu0 %v4382
      %v4384 = vpop.f32.mrb[0].mxu0
      %v4385 = vadd.f32 %v3600, %v4384
      %v4386 = vpop.f32.mrb[0].mxu0
      %v4387 = vand.u32 %v1145, 4294901760
      %v4388 = vsub.f32 %v1145, %v4387
      %v4389 = vand.u32 %v4388, 4294901760
      %4390 = vmatprep.mubr.f32.mxu0 %v4389
      %v4391 = vand.u32 %v1144, 4294901760
      %v4392 = vsub.f32 %v1144, %v4391
      %v4393 = vand.u32 %v4392, 4294901760
      %4394 = vmatmul.mubr.f32.gmra.mrb[0].mxu0 %v4393
      %v4395 = vpop.f32.mrb[0].mxu0
      %v4396 = vadd.f32 %v3609, %v4395
      %v4397 = vpop.f32.mrb[0].mxu0
      %v4398 = vand.u32 %v1149, 4294901760
      %v4399 = vsub.f32 %v1149, %v4398
      %v4400 = vand.u32 %v4399, 4294901760
      %4401 = vmatprep.mubr.f32.mxu0 %v4400
      %v4402 = vand.u32 %v1148, 4294901760
      %v4403 = vsub.f32 %v1148, %v4402
      %v4404 = vand.u32 %v4403, 4294901760
      %4405 = vmatmul.mubr.f32.gmra.mrb[0].mxu0 %v4404
      %v4406 = vpop.f32.mrb[0].mxu0
      %v4407 = vadd.f32 %v3618, %v4406
      %v4408 = vpop.f32.mrb[0].mxu0
      %v4409 = vand.u32 %v1153, 4294901760
      %v4410 = vsub.f32 %v1153, %v4409
      %v4411 = vand.u32 %v4410, 4294901760
      %4412 = vmatprep.mubr.f32.mxu0 %v4411
      %v4413 = vand.u32 %v1152, 4294901760
      %v4414 = vsub.f32 %v1152, %v4413
      %v4415 = vand.u32 %v4414, 4294901760
      %4416 = vmatmul.mubr.f32.gmra.mrb[0].mxu0 %v4415
      %v4417 = vpop.f32.mrb[0].mxu0
      %v4418 = vadd.f32 %v3627, %v4417
      %v4419 = vpop.f32.mrb[0].mxu0
      %v4420 = vand.u32 %v1157, 4294901760
      %v4421 = vsub.f32 %v1157, %v4420
      %v4422 = vand.u32 %v4421, 4294901760
      %4423 = vmatprep.mubr.f32.mxu0 %v4422
      %v4424 = vand.u32 %v1156, 4294901760
      %v4425 = vsub.f32 %v1156, %v4424
      %v4426 = vand.u32 %v4425, 4294901760
      %4427 = vmatmul.mubr.f32.gmra.mrb[0].mxu0 %v4426
      %v4428 = vpop.f32.mrb[0].mxu0
      %v4429 = vadd.f32 %v3636, %v4428
      %v4430 = vpop.f32.mrb[0].mxu0
      %v4431 = vand.u32 %v1161, 4294901760
      %v4432 = vsub.f32 %v1161, %v4431
      %v4433 = vand.u32 %v4432, 4294901760
      %4434 = vmatprep.mubr.f32.mxu0 %v4433
      %v4435 = vand.u32 %v1160, 4294901760
      %v4436 = vsub.f32 %v1160, %v4435
      %v4437 = vand.u32 %v4436, 4294901760
      %4438 = vmatmul.mubr.f32.gmra.mrb[0].mxu0 %v4437
      %v4439 = vpop.f32.mrb[0].mxu0
      %v4440 = vadd.f32 %v3645, %v4439
      %v4441 = vpop.f32.mrb[0].mxu0
      %v4442 = vand.u32 %v1165, 4294901760
      %v4443 = vsub.f32 %v1165, %v4442
      %v4444 = vand.u32 %v4443, 4294901760
      %4445 = vmatprep.mubr.f32.mxu0 %v4444
      %v4446 = vand.u32 %v1164, 4294901760
      %v4447 = vsub.f32 %v1164, %v4446
      %v4448 = vand.u32 %v4447, 4294901760
      %4449 = vmatmul.mubr.f32.gmra.mrb[0].mxu0 %v4448
      %v4450 = vpop.f32.mrb[0].mxu0
      %v4451 = vadd.f32 %v3654, %v4450
      %v4452 = vpop.f32.mrb[0].mxu0
      %v4453 = vand.u32 %v1169, 4294901760
      %v4454 = vsub.f32 %v1169, %v4453
      %v4455 = vand.u32 %v4454, 4294901760
      %4456 = vmatprep.mubr.f32.mxu0 %v4455
      %v4457 = vand.u32 %v1168, 4294901760
      %v4458 = vsub.f32 %v1168, %v4457
      %v4459 = vand.u32 %v4458, 4294901760
      %4460 = vmatmul.mubr.f32.gmra.mrb[0].mxu0 %v4459
      %v4461 = vpop.f32.mrb[0].mxu0
      %v4462 = vadd.f32 %v3663, %v4461
      %v4463 = vpop.f32.mrb[0].mxu0
      %v4464 = vand.u32 %v1173, 4294901760
      %v4465 = vsub.f32 %v1173, %v4464
      %v4466 = vand.u32 %v4465, 4294901760
      %4467 = vmatprep.mubr.f32.mxu0 %v4466
      %v4468 = vand.u32 %v1172, 4294901760
      %v4469 = vsub.f32 %v1172, %v4468
      %v4470 = vand.u32 %v4469, 4294901760
      %4471 = vmatmul.mubr.f32.gmra.mrb[0].mxu0 %v4470
      %v4472 = vpop.f32.mrb[0].mxu0
      %v4473 = vadd.f32 %v3672, %v4472
      %v4474 = vpop.f32.mrb[0].mxu0
      %4475 = vdwg.mxu0
      %4476 = vmatprep.subr.mxu0 0.0
      %v4477 = vand.u32 %v1176, 4294901760
      %v4478 = vsub.f32 %v1176, %v4477
      %v4479 = vand.u32 %v4478, 4294901760
      %4480 = vmatpush1.msra.mxu0 %v4479
      %4481 = vmatprep.subr.mxu0 0.0
      %v4482 = vand.u32 %v1177, 4294901760
      %v4483 = vsub.f32 %v1177, %v4482
      %v4484 = vand.u32 %v4483, 4294901760
      %4485 = vmatpush1.msra.mxu0 %v4484
      %4486 = vmatprep.subr.mxu0 0.0
      %v4487 = vand.u32 %v1178, 4294901760
      %v4488 = vsub.f32 %v1178, %v4487
      %v4489 = vand.u32 %v4488, 4294901760
      %4490 = vmatpush1.msra.mxu0 %v4489
      %4491 = vmatprep.subr.mxu0 0.0
      %v4492 = vand.u32 %v1179, 4294901760
      %v4493 = vsub.f32 %v1179, %v4492
      %v4494 = vand.u32 %v4493, 4294901760
      %4495 = vmatpush1.msra.mxu0 %v4494
      %4496 = vmatprep.subr.mxu0 0.0
      %v4497 = vand.u32 %v1180, 4294901760
      %v4498 = vsub.f32 %v1180, %v4497
      %v4499 = vand.u32 %v4498, 4294901760
      %4500 = vmatpush1.msra.mxu0 %v4499
      %4501 = vmatprep.subr.mxu0 0.0
      %v4502 = vand.u32 %v1181, 4294901760
      %v4503 = vsub.f32 %v1181, %v4502
      %v4504 = vand.u32 %v4503, 4294901760
      %4505 = vmatpush1.msra.mxu0 %v4504
      %4506 = vmatprep.subr.mxu0 0.0
      %v4507 = vand.u32 %v1182, 4294901760
      %v4508 = vsub.f32 %v1182, %v4507
      %v4509 = vand.u32 %v4508, 4294901760
      %4510 = vmatpush1.msra.mxu0 %v4509
      %4511 = vmatprep.subr.mxu0 0.0
      %v4512 = vand.u32 %v1183, 4294901760
      %v4513 = vsub.f32 %v1183, %v4512
      %v4514 = vand.u32 %v4513, 4294901760
      %4515 = vmatpush1.msra.mxu0 %v4514
      %4516 = vmatprep.subr.mxu0 0.0
      %v4517 = vand.u32 %v1184, 4294901760
      %v4518 = vsub.f32 %v1184, %v4517
      %v4519 = vand.u32 %v4518, 4294901760
      %4520 = vmatpush1.msra.mxu0 %v4519
      %4521 = vmatprep.subr.mxu0 0.0
      %v4522 = vand.u32 %v1185, 4294901760
      %v4523 = vsub.f32 %v1185, %v4522
      %v4524 = vand.u32 %v4523, 4294901760
      %4525 = vmatpush1.msra.mxu0 %v4524
      %4526 = vmatprep.subr.mxu0 0.0
      %v4527 = vand.u32 %v1186, 4294901760
      %v4528 = vsub.f32 %v1186, %v4527
      %v4529 = vand.u32 %v4528, 4294901760
      %4530 = vmatpush1.msra.mxu0 %v4529
      %4531 = vmatprep.subr.mxu0 0.0
      %v4532 = vand.u32 %v1187, 4294901760
      %v4533 = vsub.f32 %v1187, %v4532
      %v4534 = vand.u32 %v4533, 4294901760
      %4535 = vmatpush1.msra.mxu0 %v4534
      %4536 = vmatprep.subr.mxu0 0.0
      %v4537 = vand.u32 %v1188, 4294901760
      %v4538 = vsub.f32 %v1188, %v4537
      %v4539 = vand.u32 %v4538, 4294901760
      %4540 = vmatpush1.msra.mxu0 %v4539
      %4541 = vmatprep.subr.mxu0 0.0
      %v4542 = vand.u32 %v1189, 4294901760
      %v4543 = vsub.f32 %v1189, %v4542
      %v4544 = vand.u32 %v4543, 4294901760
      %4545 = vmatpush1.msra.mxu0 %v4544
      %4546 = vmatprep.subr.mxu0 0.0
      %v4547 = vand.u32 %v1190, 4294901760
      %v4548 = vsub.f32 %v1190, %v4547
      %v4549 = vand.u32 %v4548, 4294901760
      %4550 = vmatpush1.msra.mxu0 %v4549
      %4551 = vmatprep.subr.mxu0 0.0
      %v4552 = vand.u32 %v1191, 4294901760
      %v4553 = vsub.f32 %v1191, %v4552
      %v4554 = vand.u32 %v4553, 4294901760
      %4555 = vmatpush1.msra.mxu0 %v4554
      %4556 = vmatprep.subr.mxu0 0.0
      %v4557 = vand.u32 %v1192, 4294901760
      %v4558 = vsub.f32 %v1192, %v4557
      %v4559 = vand.u32 %v4558, 4294901760
      %4560 = vmatpush1.msra.mxu0 %v4559
      %4561 = vmatprep.subr.mxu0 0.0
      %v4562 = vand.u32 %v1193, 4294901760
      %v4563 = vsub.f32 %v1193, %v4562
      %v4564 = vand.u32 %v4563, 4294901760
      %4565 = vmatpush1.msra.mxu0 %v4564
      %4566 = vmatprep.subr.mxu0 0.0
      %v4567 = vand.u32 %v1194, 4294901760
      %v4568 = vsub.f32 %v1194, %v4567
      %v4569 = vand.u32 %v4568, 4294901760
      %4570 = vmatpush1.msra.mxu0 %v4569
      %4571 = vmatprep.subr.mxu0 0.0
      %v4572 = vand.u32 %v1195, 4294901760
      %v4573 = vsub.f32 %v1195, %v4572
      %v4574 = vand.u32 %v4573, 4294901760
      %4575 = vmatpush1.msra.mxu0 %v4574
      %4576 = vmatprep.subr.mxu0 0.0
      %v4577 = vand.u32 %v1196, 4294901760
      %v4578 = vsub.f32 %v1196, %v4577
      %v4579 = vand.u32 %v4578, 4294901760
      %4580 = vmatpush1.msra.mxu0 %v4579
      %4581 = vmatprep.subr.mxu0 0.0
      %v4582 = vand.u32 %v1197, 4294901760
      %v4583 = vsub.f32 %v1197, %v4582
      %v4584 = vand.u32 %v4583, 4294901760
      %4585 = vmatpush1.msra.mxu0 %v4584
      %4586 = vmatprep.subr.mxu0 0.0
      %v4587 = vand.u32 %v1198, 4294901760
      %v4588 = vsub.f32 %v1198, %v4587
      %v4589 = vand.u32 %v4588, 4294901760
      %4590 = vmatpush1.msra.mxu0 %v4589
      %4591 = vmatprep.subr.mxu0 0.0
      %v4592 = vand.u32 %v1199, 4294901760
      %v4593 = vsub.f32 %v1199, %v4592
      %v4594 = vand.u32 %v4593, 4294901760
      %4595 = vmatpush1.msra.mxu0 %v4594
      %4596 = vmatprep.subr.mxu0 0.0
      %v4597 = vand.u32 %v1200, 4294901760
      %v4598 = vsub.f32 %v1200, %v4597
      %v4599 = vand.u32 %v4598, 4294901760
      %4600 = vmatpush1.msra.mxu0 %v4599
      %4601 = vmatprep.subr.mxu0 0.0
      %v4602 = vand.u32 %v1201, 4294901760
      %v4603 = vsub.f32 %v1201, %v4602
      %v4604 = vand.u32 %v4603, 4294901760
      %4605 = vmatpush1.msra.mxu0 %v4604
      %4606 = vmatprep.subr.mxu0 0.0
      %v4607 = vand.u32 %v1202, 4294901760
      %v4608 = vsub.f32 %v1202, %v4607
      %v4609 = vand.u32 %v4608, 4294901760
      %4610 = vmatpush1.msra.mxu0 %v4609
      %4611 = vmatprep.subr.mxu0 0.0
      %v4612 = vand.u32 %v1203, 4294901760
      %v4613 = vsub.f32 %v1203, %v4612
      %v4614 = vand.u32 %v4613, 4294901760
      %4615 = vmatpush1.msra.mxu0 %v4614
      %4616 = vmatprep.subr.mxu0 0.0
      %v4617 = vand.u32 %v1204, 4294901760
      %v4618 = vsub.f32 %v1204, %v4617
      %v4619 = vand.u32 %v4618, 4294901760
      %4620 = vmatpush1.msra.mxu0 %v4619
      %4621 = vmatprep.subr.mxu0 0.0
      %v4622 = vand.u32 %v1205, 4294901760
      %v4623 = vsub.f32 %v1205, %v4622
      %v4624 = vand.u32 %v4623, 4294901760
      %4625 = vmatpush1.msra.mxu0 %v4624
      %4626 = vmatprep.subr.mxu0 0.0
      %v4627 = vand.u32 %v1206, 4294901760
      %v4628 = vsub.f32 %v1206, %v4627
      %v4629 = vand.u32 %v4628, 4294901760
      %4630 = vmatpush1.msra.mxu0 %v4629
      %4631 = vmatprep.subr.mxu0 0.0
      %v4632 = vand.u32 %v1207, 4294901760
      %v4633 = vsub.f32 %v1207, %v4632
      %v4634 = vand.u32 %v4633, 4294901760
      %4635 = vmatpush1.msra.mxu0 %v4634
      %v4636 = vand.u32 %v921, 4294901760
      %4637 = vmatprep.mubr.f32.mxu0 %v4636
      %v4638 = vand.u32 %v920, 4294901760
      %4639 = vmatmul.mubr.f32.gmra.mrb[0].mxu0 %v4638
      %v4640 = vpop.f32.mrb[0].mxu0
      %v4641 = vadd.f32 %v3780, %v4640
      %v4642 = vpop.f32.mrb[0].mxu0
      %v4643 = vand.u32 %v925, 4294901760
      %4644 = vmatprep.mubr.f32.mxu0 %v4643
      %v4645 = vand.u32 %v924, 4294901760
      %4646 = vmatmul.mubr.f32.gmra.mrb[0].mxu0 %v4645
      %v4647 = vpop.f32.mrb[0].mxu0
      %v4648 = vadd.f32 %v3791, %v4647
      %v4649 = vpop.f32.mrb[0].mxu0
      %v4650 = vand.u32 %v929, 4294901760
      %4651 = vmatprep.mubr.f32.mxu0 %v4650
      %v4652 = vand.u32 %v928, 4294901760
      %4653 = vmatmul.mubr.f32.gmra.mrb[0].mxu0 %v4652
      %v4654 = vpop.f32.mrb[0].mxu0
      %v4655 = vadd.f32 %v3802, %v4654
      %v4656 = vpop.f32.mrb[0].mxu0
      %v4657 = vand.u32 %v933, 4294901760
      %4658 = vmatprep.mubr.f32.mxu0 %v4657
      %v4659 = vand.u32 %v932, 4294901760
      %4660 = vmatmul.mubr.f32.gmra.mrb[0].mxu0 %v4659
      %v4661 = vpop.f32.mrb[0].mxu0
      %v4662 = vadd.f32 %v3813, %v4661
      %v4663 = vpop.f32.mrb[0].mxu0
      %v4664 = vand.u32 %v937, 4294901760
      %4665 = vmatprep.mubr.f32.mxu0 %v4664
      %v4666 = vand.u32 %v936, 4294901760
      %4667 = vmatmul.mubr.f32.gmra.mrb[0].mxu0 %v4666
      %v4668 = vpop.f32.mrb[0].mxu0
      %v4669 = vadd.f32 %v3824, %v4668
      %v4670 = vpop.f32.mrb[0].mxu0
      %v4671 = vand.u32 %v941, 4294901760
      %4672 = vmatprep.mubr.f32.mxu0 %v4671
      %v4673 = vand.u32 %v940, 4294901760
      %4674 = vmatmul.mubr.f32.gmra.mrb[0].mxu0 %v4673
      %v4675 = vpop.f32.mrb[0].mxu0
      %v4676 = vadd.f32 %v3835, %v4675
      %v4677 = vpop.f32.mrb[0].mxu0
      %v4678 = vand.u32 %v945, 4294901760
      %4679 = vmatprep.mubr.f32.mxu0 %v4678
      %v4680 = vand.u32 %v944, 4294901760
      %4681 = vmatmul.mubr.f32.gmra.mrb[0].mxu0 %v4680
      %v4682 = vpop.f32.mrb[0].mxu0
      %v4683 = vadd.f32 %v3846, %v4682
      %v4684 = vpop.f32.mrb[0].mxu0
      %v4685 = vand.u32 %v949, 4294901760
      %4686 = vmatprep.mubr.f32.mxu0 %v4685
      %v4687 = vand.u32 %v948, 4294901760
      %4688 = vmatmul.mubr.f32.gmra.mrb[0].mxu0 %v4687
      %v4689 = vpop.f32.mrb[0].mxu0
      %v4690 = vadd.f32 %v3857, %v4689
      %v4691 = vpop.f32.mrb[0].mxu0
      %v4692 = vand.u32 %v953, 4294901760
      %4693 = vmatprep.mubr.f32.mxu0 %v4692
      %v4694 = vand.u32 %v952, 4294901760
      %4695 = vmatmul.mubr.f32.gmra.mrb[0].mxu0 %v4694
      %v4696 = vpop.f32.mrb[0].mxu0
      %v4697 = vadd.f32 %v3868, %v4696
      %v4698 = vpop.f32.mrb[0].mxu0
      %v4699 = vand.u32 %v957, 4294901760
      %4700 = vmatprep.mubr.f32.mxu0 %v4699
      %v4701 = vand.u32 %v956, 4294901760
      %4702 = vmatmul.mubr.f32.gmra.mrb[0].mxu0 %v4701
      %v4703 = vpop.f32.mrb[0].mxu0
      %v4704 = vadd.f32 %v3879, %v4703
      %v4705 = vpop.f32.mrb[0].mxu0
      %v4706 = vand.u32 %v961, 4294901760
      %4707 = vmatprep.mubr.f32.mxu0 %v4706
      %v4708 = vand.u32 %v960, 4294901760
      %4709 = vmatmul.mubr.f32.gmra.mrb[0].mxu0 %v4708
      %v4710 = vpop.f32.mrb[0].mxu0
      %v4711 = vadd.f32 %v3890, %v4710
      %v4712 = vpop.f32.mrb[0].mxu0
      %v4713 = vand.u32 %v965, 4294901760
      %4714 = vmatprep.mubr.f32.mxu0 %v4713
      %v4715 = vand.u32 %v964, 4294901760
      %4716 = vmatmul.mubr.f32.gmra.mrb[0].mxu0 %v4715
      %v4717 = vpop.f32.mrb[0].mxu0
      %v4718 = vadd.f32 %v3901, %v4717
      %v4719 = vpop.f32.mrb[0].mxu0
      %v4720 = vand.u32 %v969, 4294901760
      %4721 = vmatprep.mubr.f32.mxu0 %v4720
      %v4722 = vand.u32 %v968, 4294901760
      %4723 = vmatmul.mubr.f32.gmra.mrb[0].mxu0 %v4722
      %v4724 = vpop.f32.mrb[0].mxu0
      %v4725 = vadd.f32 %v3912, %v4724
      %v4726 = vpop.f32.mrb[0].mxu0
      %v4727 = vand.u32 %v973, 4294901760
      %4728 = vmatprep.mubr.f32.mxu0 %v4727
      %v4729 = vand.u32 %v972, 4294901760
      %4730 = vmatmul.mubr.f32.gmra.mrb[0].mxu0 %v4729
      %v4731 = vpop.f32.mrb[0].mxu0
      %v4732 = vadd.f32 %v3923, %v4731
      %v4733 = vpop.f32.mrb[0].mxu0
      %v4734 = vand.u32 %v977, 4294901760
      %4735 = vmatprep.mubr.f32.mxu0 %v4734
      %v4736 = vand.u32 %v976, 4294901760
      %4737 = vmatmul.mubr.f32.gmra.mrb[0].mxu0 %v4736
      %v4738 = vpop.f32.mrb[0].mxu0
      %v4739 = vadd.f32 %v3934, %v4738
      %v4740 = vpop.f32.mrb[0].mxu0
      %v4741 = vand.u32 %v981, 4294901760
      %4742 = vmatprep.mubr.f32.mxu0 %v4741
      %v4743 = vand.u32 %v980, 4294901760
      %4744 = vmatmul.mubr.f32.gmra.mrb[0].mxu0 %v4743
      %v4745 = vpop.f32.mrb[0].mxu0
      %v4746 = vadd.f32 %v3945, %v4745
      %v4747 = vpop.f32.mrb[0].mxu0
      %v4748 = vand.u32 %v985, 4294901760
      %4749 = vmatprep.mubr.f32.mxu0 %v4748
      %v4750 = vand.u32 %v984, 4294901760
      %4751 = vmatmul.mubr.f32.gmra.mrb[0].mxu0 %v4750
      %v4752 = vpop.f32.mrb[0].mxu0
      %v4753 = vadd.f32 %v3956, %v4752
      %v4754 = vpop.f32.mrb[0].mxu0
      %v4755 = vand.u32 %v989, 4294901760
      %4756 = vmatprep.mubr.f32.mxu0 %v4755
      %v4757 = vand.u32 %v988, 4294901760
      %4758 = vmatmul.mubr.f32.gmra.mrb[0].mxu0 %v4757
      %v4759 = vpop.f32.mrb[0].mxu0
      %v4760 = vadd.f32 %v3967, %v4759
      %v4761 = vpop.f32.mrb[0].mxu0
      %v4762 = vand.u32 %v993, 4294901760
      %4763 = vmatprep.mubr.f32.mxu0 %v4762
      %v4764 = vand.u32 %v992, 4294901760
      %4765 = vmatmul.mubr.f32.gmra.mrb[0].mxu0 %v4764
      %v4766 = vpop.f32.mrb[0].mxu0
      %v4767 = vadd.f32 %v3978, %v4766
      %v4768 = vpop.f32.mrb[0].mxu0
      %v4769 = vand.u32 %v997, 4294901760
      %4770 = vmatprep.mubr.f32.mxu0 %v4769
      %v4771 = vand.u32 %v996, 4294901760
      %4772 = vmatmul.mubr.f32.gmra.mrb[0].mxu0 %v4771
      %v4773 = vpop.f32.mrb[0].mxu0
      %v4774 = vadd.f32 %v3989, %v4773
      %v4775 = vpop.f32.mrb[0].mxu0
      %v4776 = vand.u32 %v1001, 4294901760
      %4777 = vmatprep.mubr.f32.mxu0 %v4776
      %v4778 = vand.u32 %v1000, 4294901760
      %4779 = vmatmul.mubr.f32.gmra.mrb[0].mxu0 %v4778
      %v4780 = vpop.f32.mrb[0].mxu0
      %v4781 = vadd.f32 %v4000, %v4780
      %v4782 = vpop.f32.mrb[0].mxu0
      %v4783 = vand.u32 %v1005, 4294901760
      %4784 = vmatprep.mubr.f32.mxu0 %v4783
      %v4785 = vand.u32 %v1004, 4294901760
      %4786 = vmatmul.mubr.f32.gmra.mrb[0].mxu0 %v4785
      %v4787 = vpop.f32.mrb[0].mxu0
      %v4788 = vadd.f32 %v4011, %v4787
      %v4789 = vpop.f32.mrb[0].mxu0
      %v4790 = vand.u32 %v1009, 4294901760
      %4791 = vmatprep.mubr.f32.mxu0 %v4790
      %v4792 = vand.u32 %v1008, 4294901760
      %4793 = vmatmul.mubr.f32.gmra.mrb[0].mxu0 %v4792
      %v4794 = vpop.f32.mrb[0].mxu0
      %v4795 = vadd.f32 %v4022, %v4794
      %v4796 = vpop.f32.mrb[0].mxu0
      %v4797 = vand.u32 %v1013, 4294901760
      %4798 = vmatprep.mubr.f32.mxu0 %v4797
      %v4799 = vand.u32 %v1012, 4294901760
      %4800 = vmatmul.mubr.f32.gmra.mrb[0].mxu0 %v4799
      %v4801 = vpop.f32.mrb[0].mxu0
      %v4802 = vadd.f32 %v4033, %v4801
      %v4803 = vpop.f32.mrb[0].mxu0
      %v4804 = vand.u32 %v1017, 4294901760
      %4805 = vmatprep.mubr.f32.mxu0 %v4804
      %v4806 = vand.u32 %v1016, 4294901760
      %4807 = vmatmul.mubr.f32.gmra.mrb[0].mxu0 %v4806
      %v4808 = vpop.f32.mrb[0].mxu0
      %v4809 = vadd.f32 %v4044, %v4808
      %v4810 = vpop.f32.mrb[0].mxu0
      %v4811 = vand.u32 %v1021, 4294901760
      %4812 = vmatprep.mubr.f32.mxu0 %v4811
      %v4813 = vand.u32 %v1020, 4294901760
      %4814 = vmatmul.mubr.f32.gmra.mrb[0].mxu0 %v4813
      %v4815 = vpop.f32.mrb[0].mxu0
      %v4816 = vadd.f32 %v4055, %v4815
      %v4817 = vpop.f32.mrb[0].mxu0
      %v4818 = vand.u32 %v1025, 4294901760
      %4819 = vmatprep.mubr.f32.mxu0 %v4818
      %v4820 = vand.u32 %v1024, 4294901760
      %4821 = vmatmul.mubr.f32.gmra.mrb[0].mxu0 %v4820
      %v4822 = vpop.f32.mrb[0].mxu0
      %v4823 = vadd.f32 %v4066, %v4822
      %v4824 = vpop.f32.mrb[0].mxu0
      %v4825 = vand.u32 %v1029, 4294901760
      %4826 = vmatprep.mubr.f32.mxu0 %v4825
      %v4827 = vand.u32 %v1028, 4294901760
      %4828 = vmatmul.mubr.f32.gmra.mrb[0].mxu0 %v4827
      %v4829 = vpop.f32.mrb[0].mxu0
      %v4830 = vadd.f32 %v4077, %v4829
      %v4831 = vpop.f32.mrb[0].mxu0
      %v4832 = vand.u32 %v1033, 4294901760
      %4833 = vmatprep.mubr.f32.mxu0 %v4832
      %v4834 = vand.u32 %v1032, 4294901760
      %4835 = vmatmul.mubr.f32.gmra.mrb[0].mxu0 %v4834
      %v4836 = vpop.f32.mrb[0].mxu0
      %v4837 = vadd.f32 %v4088, %v4836
      %v4838 = vpop.f32.mrb[0].mxu0
      %v4839 = vand.u32 %v1037, 4294901760
      %4840 = vmatprep.mubr.f32.mxu0 %v4839
      %v4841 = vand.u32 %v1036, 4294901760
      %4842 = vmatmul.mubr.f32.gmra.mrb[0].mxu0 %v4841
      %v4843 = vpop.f32.mrb[0].mxu0
      %v4844 = vadd.f32 %v4099, %v4843
      %v4845 = vpop.f32.mrb[0].mxu0
      %v4846 = vand.u32 %v1041, 4294901760
      %4847 = vmatprep.mubr.f32.mxu0 %v4846
      %v4848 = vand.u32 %v1040, 4294901760
      %4849 = vmatmul.mubr.f32.gmra.mrb[0].mxu0 %v4848
      %v4850 = vpop.f32.mrb[0].mxu0
      %v4851 = vadd.f32 %v4110, %v4850
      %v4852 = vpop.f32.mrb[0].mxu0
      %v4853 = vand.u32 %v1045, 4294901760
      %4854 = vmatprep.mubr.f32.mxu0 %v4853
      %v4855 = vand.u32 %v1044, 4294901760
      %4856 = vmatmul.mubr.f32.gmra.mrb[0].mxu0 %v4855
      %v4857 = vpop.f32.mrb[0].mxu0
      %v4858 = vadd.f32 %v4121, %v4857
      %v4859 = vpop.f32.mrb[0].mxu0
      %v4860 = vand.u32 %v1049, 4294901760
      %4861 = vmatprep.mubr.f32.mxu0 %v4860
      %v4862 = vand.u32 %v1048, 4294901760
      %4863 = vmatmul.mubr.f32.gmra.mrb[0].mxu0 %v4862
      %v4864 = vpop.f32.mrb[0].mxu0
      %v4865 = vadd.f32 %v4132, %v4864
      %v4866 = vpop.f32.mrb[0].mxu0
      %v4867 = vand.u32 %v1053, 4294901760
      %4868 = vmatprep.mubr.f32.mxu0 %v4867
      %v4869 = vand.u32 %v1052, 4294901760
      %4870 = vmatmul.mubr.f32.gmra.mrb[0].mxu0 %v4869
      %v4871 = vpop.f32.mrb[0].mxu0
      %v4872 = vadd.f32 %v4143, %v4871
      %v4873 = vpop.f32.mrb[0].mxu0
      %v4874 = vand.u32 %v1057, 4294901760
      %4875 = vmatprep.mubr.f32.mxu0 %v4874
      %v4876 = vand.u32 %v1056, 4294901760
      %4877 = vmatmul.mubr.f32.gmra.mrb[0].mxu0 %v4876
      %v4878 = vpop.f32.mrb[0].mxu0
      %v4879 = vadd.f32 %v4154, %v4878
      %v4880 = vpop.f32.mrb[0].mxu0
      %v4881 = vand.u32 %v1061, 4294901760
      %4882 = vmatprep.mubr.f32.mxu0 %v4881
      %v4883 = vand.u32 %v1060, 4294901760
      %4884 = vmatmul.mubr.f32.gmra.mrb[0].mxu0 %v4883
      %v4885 = vpop.f32.mrb[0].mxu0
      %v4886 = vadd.f32 %v4165, %v4885
      %v4887 = vpop.f32.mrb[0].mxu0
      %v4888 = vand.u32 %v1065, 4294901760
      %4889 = vmatprep.mubr.f32.mxu0 %v4888
      %v4890 = vand.u32 %v1064, 4294901760
      %4891 = vmatmul.mubr.f32.gmra.mrb[0].mxu0 %v4890
      %v4892 = vpop.f32.mrb[0].mxu0
      %v4893 = vadd.f32 %v4176, %v4892
      %v4894 = vpop.f32.mrb[0].mxu0
      %v4895 = vand.u32 %v1069, 4294901760
      %4896 = vmatprep.mubr.f32.mxu0 %v4895
      %v4897 = vand.u32 %v1068, 4294901760
      %4898 = vmatmul.mubr.f32.gmra.mrb[0].mxu0 %v4897
      %v4899 = vpop.f32.mrb[0].mxu0
      %v4900 = vadd.f32 %v4187, %v4899
      %v4901 = vpop.f32.mrb[0].mxu0
      %v4902 = vand.u32 %v1073, 4294901760
      %4903 = vmatprep.mubr.f32.mxu0 %v4902
      %v4904 = vand.u32 %v1072, 4294901760
      %4905 = vmatmul.mubr.f32.gmra.mrb[0].mxu0 %v4904
      %v4906 = vpop.f32.mrb[0].mxu0
      %v4907 = vadd.f32 %v4198, %v4906
      %v4908 = vpop.f32.mrb[0].mxu0
      %v4909 = vand.u32 %v1077, 4294901760
      %4910 = vmatprep.mubr.f32.mxu0 %v4909
      %v4911 = vand.u32 %v1076, 4294901760
      %4912 = vmatmul.mubr.f32.gmra.mrb[0].mxu0 %v4911
      %v4913 = vpop.f32.mrb[0].mxu0
      %v4914 = vadd.f32 %v4209, %v4913
      %v4915 = vpop.f32.mrb[0].mxu0
      %v4916 = vand.u32 %v1081, 4294901760
      %4917 = vmatprep.mubr.f32.mxu0 %v4916
      %v4918 = vand.u32 %v1080, 4294901760
      %4919 = vmatmul.mubr.f32.gmra.mrb[0].mxu0 %v4918
      %v4920 = vpop.f32.mrb[0].mxu0
      %v4921 = vadd.f32 %v4220, %v4920
      %v4922 = vpop.f32.mrb[0].mxu0
      %v4923 = vand.u32 %v1085, 4294901760
      %4924 = vmatprep.mubr.f32.mxu0 %v4923
      %v4925 = vand.u32 %v1084, 4294901760
      %4926 = vmatmul.mubr.f32.gmra.mrb[0].mxu0 %v4925
      %v4927 = vpop.f32.mrb[0].mxu0
      %v4928 = vadd.f32 %v4231, %v4927
      %v4929 = vpop.f32.mrb[0].mxu0
      %v4930 = vand.u32 %v1089, 4294901760
      %4931 = vmatprep.mubr.f32.mxu0 %v4930
      %v4932 = vand.u32 %v1088, 4294901760
      %4933 = vmatmul.mubr.f32.gmra.mrb[0].mxu0 %v4932
      %v4934 = vpop.f32.mrb[0].mxu0
      %v4935 = vadd.f32 %v4242, %v4934
      %v4936 = vpop.f32.mrb[0].mxu0
      %v4937 = vand.u32 %v1093, 4294901760
      %4938 = vmatprep.mubr.f32.mxu0 %v4937
      %v4939 = vand.u32 %v1092, 4294901760
      %4940 = vmatmul.mubr.f32.gmra.mrb[0].mxu0 %v4939
      %v4941 = vpop.f32.mrb[0].mxu0
      %v4942 = vadd.f32 %v4253, %v4941
      %v4943 = vpop.f32.mrb[0].mxu0
      %v4944 = vand.u32 %v1097, 4294901760
      %4945 = vmatprep.mubr.f32.mxu0 %v4944
      %v4946 = vand.u32 %v1096, 4294901760
      %4947 = vmatmul.mubr.f32.gmra.mrb[0].mxu0 %v4946
      %v4948 = vpop.f32.mrb[0].mxu0
      %v4949 = vadd.f32 %v4264, %v4948
      %v4950 = vpop.f32.mrb[0].mxu0
      %v4951 = vand.u32 %v1101, 4294901760
      %4952 = vmatprep.mubr.f32.mxu0 %v4951
      %v4953 = vand.u32 %v1100, 4294901760
      %4954 = vmatmul.mubr.f32.gmra.mrb[0].mxu0 %v4953
      %v4955 = vpop.f32.mrb[0].mxu0
      %v4956 = vadd.f32 %v4275, %v4955
      %v4957 = vpop.f32.mrb[0].mxu0
      %v4958 = vand.u32 %v1105, 4294901760
      %4959 = vmatprep.mubr.f32.mxu0 %v4958
      %v4960 = vand.u32 %v1104, 4294901760
      %4961 = vmatmul.mubr.f32.gmra.mrb[0].mxu0 %v4960
      %v4962 = vpop.f32.mrb[0].mxu0
      %v4963 = vadd.f32 %v4286, %v4962
      %v4964 = vpop.f32.mrb[0].mxu0
      %v4965 = vand.u32 %v1109, 4294901760
      %4966 = vmatprep.mubr.f32.mxu0 %v4965
      %v4967 = vand.u32 %v1108, 4294901760
      %4968 = vmatmul.mubr.f32.gmra.mrb[0].mxu0 %v4967
      %v4969 = vpop.f32.mrb[0].mxu0
      %v4970 = vadd.f32 %v4297, %v4969
      %v4971 = vpop.f32.mrb[0].mxu0
      %v4972 = vand.u32 %v1113, 4294901760
      %4973 = vmatprep.mubr.f32.mxu0 %v4972
      %v4974 = vand.u32 %v1112, 4294901760
      %4975 = vmatmul.mubr.f32.gmra.mrb[0].mxu0 %v4974
      %v4976 = vpop.f32.mrb[0].mxu0
      %v4977 = vadd.f32 %v4308, %v4976
      %v4978 = vpop.f32.mrb[0].mxu0
      %v4979 = vand.u32 %v1117, 4294901760
      %4980 = vmatprep.mubr.f32.mxu0 %v4979
      %v4981 = vand.u32 %v1116, 4294901760
      %4982 = vmatmul.mubr.f32.gmra.mrb[0].mxu0 %v4981
      %v4983 = vpop.f32.mrb[0].mxu0
      %v4984 = vadd.f32 %v4319, %v4983
      %v4985 = vpop.f32.mrb[0].mxu0
      %v4986 = vand.u32 %v1121, 4294901760
      %4987 = vmatprep.mubr.f32.mxu0 %v4986
      %v4988 = vand.u32 %v1120, 4294901760
      %4989 = vmatmul.mubr.f32.gmra.mrb[0].mxu0 %v4988
      %v4990 = vpop.f32.mrb[0].mxu0
      %v4991 = vadd.f32 %v4330, %v4990
      %v4992 = vpop.f32.mrb[0].mxu0
      %v4993 = vand.u32 %v1125, 4294901760
      %4994 = vmatprep.mubr.f32.mxu0 %v4993
      %v4995 = vand.u32 %v1124, 4294901760
      %4996 = vmatmul.mubr.f32.gmra.mrb[0].mxu0 %v4995
      %v4997 = vpop.f32.mrb[0].mxu0
      %v4998 = vadd.f32 %v4341, %v4997
      %v4999 = vpop.f32.mrb[0].mxu0
      %v5000 = vand.u32 %v1129, 4294901760
      %5001 = vmatprep.mubr.f32.mxu0 %v5000
      %v5002 = vand.u32 %v1128, 4294901760
      %5003 = vmatmul.mubr.f32.gmra.mrb[0].mxu0 %v5002
      %v5004 = vpop.f32.mrb[0].mxu0
      %v5005 = vadd.f32 %v4352, %v5004
      %v5006 = vpop.f32.mrb[0].mxu0
      %v5007 = vand.u32 %v1133, 4294901760
      %5008 = vmatprep.mubr.f32.mxu0 %v5007
      %v5009 = vand.u32 %v1132, 4294901760
      %5010 = vmatmul.mubr.f32.gmra.mrb[0].mxu0 %v5009
      %v5011 = vpop.f32.mrb[0].mxu0
      %v5012 = vadd.f32 %v4363, %v5011
      %v5013 = vpop.f32.mrb[0].mxu0
      %v5014 = vand.u32 %v1137, 4294901760
      %5015 = vmatprep.mubr.f32.mxu0 %v5014
      %v5016 = vand.u32 %v1136, 4294901760
      %5017 = vmatmul.mubr.f32.gmra.mrb[0].mxu0 %v5016
      %v5018 = vpop.f32.mrb[0].mxu0
      %v5019 = vadd.f32 %v4374, %v5018
      %v5020 = vpop.f32.mrb[0].mxu0
      %v5021 = vand.u32 %v1141, 4294901760
      %5022 = vmatprep.mubr.f32.mxu0 %v5021
      %v5023 = vand.u32 %v1140, 4294901760
      %5024 = vmatmul.mubr.f32.gmra.mrb[0].mxu0 %v5023
      %v5025 = vpop.f32.mrb[0].mxu0
      %v5026 = vadd.f32 %v4385, %v5025
      %v5027 = vpop.f32.mrb[0].mxu0
      %v5028 = vand.u32 %v1145, 4294901760
      %5029 = vmatprep.mubr.f32.mxu0 %v5028
      %v5030 = vand.u32 %v1144, 4294901760
      %5031 = vmatmul.mubr.f32.gmra.mrb[0].mxu0 %v5030
      %v5032 = vpop.f32.mrb[0].mxu0
      %v5033 = vadd.f32 %v4396, %v5032
      %v5034 = vpop.f32.mrb[0].mxu0
      %v5035 = vand.u32 %v1149, 4294901760
      %5036 = vmatprep.mubr.f32.mxu0 %v5035
      %v5037 = vand.u32 %v1148, 4294901760
      %5038 = vmatmul.mubr.f32.gmra.mrb[0].mxu0 %v5037
      %v5039 = vpop.f32.mrb[0].mxu0
      %v5040 = vadd.f32 %v4407, %v5039
      %v5041 = vpop.f32.mrb[0].mxu0
      %v5042 = vand.u32 %v1153, 4294901760
      %5043 = vmatprep.mubr.f32.mxu0 %v5042
      %v5044 = vand.u32 %v1152, 4294901760
      %5045 = vmatmul.mubr.f32.gmra.mrb[0].mxu0 %v5044
      %v5046 = vpop.f32.mrb[0].mxu0
      %v5047 = vadd.f32 %v4418, %v5046
      %v5048 = vpop.f32.mrb[0].mxu0
      %v5049 = vand.u32 %v1157, 4294901760
      %5050 = vmatprep.mubr.f32.mxu0 %v5049
      %v5051 = vand.u32 %v1156, 4294901760
      %5052 = vmatmul.mubr.f32.gmra.mrb[0].mxu0 %v5051
      %v5053 = vpop.f32.mrb[0].mxu0
      %v5054 = vadd.f32 %v4429, %v5053
      %v5055 = vpop.f32.mrb[0].mxu0
      %v5056 = vand.u32 %v1161, 4294901760
      %5057 = vmatprep.mubr.f32.mxu0 %v5056
      %v5058 = vand.u32 %v1160, 4294901760
      %5059 = vmatmul.mubr.f32.gmra.mrb[0].mxu0 %v5058
      %v5060 = vpop.f32.mrb[0].mxu0
      %v5061 = vadd.f32 %v4440, %v5060
      %v5062 = vpop.f32.mrb[0].mxu0
      %v5063 = vand.u32 %v1165, 4294901760
      %5064 = vmatprep.mubr.f32.mxu0 %v5063
      %v5065 = vand.u32 %v1164, 4294901760
      %5066 = vmatmul.mubr.f32.gmra.mrb[0].mxu0 %v5065
      %v5067 = vpop.f32.mrb[0].mxu0
      %v5068 = vadd.f32 %v4451, %v5067
      %v5069 = vpop.f32.mrb[0].mxu0
      %v5070 = vand.u32 %v1169, 4294901760
      %5071 = vmatprep.mubr.f32.mxu0 %v5070
      %v5072 = vand.u32 %v1168, 4294901760
      %5073 = vmatmul.mubr.f32.gmra.mrb[0].mxu0 %v5072
      %v5074 = vpop.f32.mrb[0].mxu0
      %v5075 = vadd.f32 %v4462, %v5074
      %v5076 = vpop.f32.mrb[0].mxu0
      %v5077 = vand.u32 %v1173, 4294901760
      %5078 = vmatprep.mubr.f32.mxu0 %v5077
      %v5079 = vand.u32 %v1172, 4294901760
      %5080 = vmatmul.mubr.f32.gmra.mrb[0].mxu0 %v5079
      %v5081 = vpop.f32.mrb[0].mxu0
      %v5082 = vadd.f32 %v4473, %v5081
      %v5083 = vpop.f32.mrb[0].mxu0
      %5084 = vdwg.mxu0
      %5085 = vmatprep.subr.mxu0 0.0
      %v5086 = vand.u32 %v1176, 4294901760
      %5087 = vmatpush1.msra.mxu0 %v5086
      %5088 = vmatprep.subr.mxu0 0.0
      %v5089 = vand.u32 %v1177, 4294901760
      %5090 = vmatpush1.msra.mxu0 %v5089
      %5091 = vmatprep.subr.mxu0 0.0
      %v5092 = vand.u32 %v1178, 4294901760
      %5093 = vmatpush1.msra.mxu0 %v5092
      %5094 = vmatprep.subr.mxu0 0.0
      %v5095 = vand.u32 %v1179, 4294901760
      %5096 = vmatpush1.msra.mxu0 %v5095
      %5097 = vmatprep.subr.mxu0 0.0
      %v5098 = vand.u32 %v1180, 4294901760
      %5099 = vmatpush1.msra.mxu0 %v5098
      %5100 = vmatprep.subr.mxu0 0.0
      %v5101 = vand.u32 %v1181, 4294901760
      %5102 = vmatpush1.msra.mxu0 %v5101
      %5103 = vmatprep.subr.mxu0 0.0
      %v5104 = vand.u32 %v1182, 4294901760
      %5105 = vmatpush1.msra.mxu0 %v5104
      %5106 = vmatprep.subr.mxu0 0.0
      %v5107 = vand.u32 %v1183, 4294901760
      %5108 = vmatpush1.msra.mxu0 %v5107
      %5109 = vmatprep.subr.mxu0 0.0
      %v5110 = vand.u32 %v1184, 4294901760
      %5111 = vmatpush1.msra.mxu0 %v5110
      %5112 = vmatprep.subr.mxu0 0.0
      %v5113 = vand.u32 %v1185, 4294901760
      %5114 = vmatpush1.msra.mxu0 %v5113
      %5115 = vmatprep.subr.mxu0 0.0
      %v5116 = vand.u32 %v1186, 4294901760
      %5117 = vmatpush1.msra.mxu0 %v5116
      %5118 = vmatprep.subr.mxu0 0.0
      %v5119 = vand.u32 %v1187, 4294901760
      %5120 = vmatpush1.msra.mxu0 %v5119
      %5121 = vmatprep.subr.mxu0 0.0
      %v5122 = vand.u32 %v1188, 4294901760
      %5123 = vmatpush1.msra.mxu0 %v5122
      %5124 = vmatprep.subr.mxu0 0.0
      %v5125 = vand.u32 %v1189, 4294901760
      %5126 = vmatpush1.msra.mxu0 %v5125
      %5127 = vmatprep.subr.mxu0 0.0
      %v5128 = vand.u32 %v1190, 4294901760
      %5129 = vmatpush1.msra.mxu0 %v5128
      %5130 = vmatprep.subr.mxu0 0.0
      %v5131 = vand.u32 %v1191, 4294901760
      %5132 = vmatpush1.msra.mxu0 %v5131
      %5133 = vmatprep.subr.mxu0 0.0
      %v5134 = vand.u32 %v1192, 4294901760
      %5135 = vmatpush1.msra.mxu0 %v5134
      %5136 = vmatprep.subr.mxu0 0.0
      %v5137 = vand.u32 %v1193, 4294901760
      %5138 = vmatpush1.msra.mxu0 %v5137
      %5139 = vmatprep.subr.mxu0 0.0
      %v5140 = vand.u32 %v1194, 4294901760
      %5141 = vmatpush1.msra.mxu0 %v5140
      %5142 = vmatprep.subr.mxu0 0.0
      %v5143 = vand.u32 %v1195, 4294901760
      %5144 = vmatpush1.msra.mxu0 %v5143
      %5145 = vmatprep.subr.mxu0 0.0
      %v5146 = vand.u32 %v1196, 4294901760
      %5147 = vmatpush1.msra.mxu0 %v5146
      %5148 = vmatprep.subr.mxu0 0.0
      %v5149 = vand.u32 %v1197, 4294901760
      %5150 = vmatpush1.msra.mxu0 %v5149
      %5151 = vmatprep.subr.mxu0 0.0
      %v5152 = vand.u32 %v1198, 4294901760
      %5153 = vmatpush1.msra.mxu0 %v5152
      %5154 = vmatprep.subr.mxu0 0.0
      %v5155 = vand.u32 %v1199, 4294901760
      %5156 = vmatpush1.msra.mxu0 %v5155
      %5157 = vmatprep.subr.mxu0 0.0
      %v5158 = vand.u32 %v1200, 4294901760
      %5159 = vmatpush1.msra.mxu0 %v5158
      %5160 = vmatprep.subr.mxu0 0.0
      %v5161 = vand.u32 %v1201, 4294901760
      %5162 = vmatpush1.msra.mxu0 %v5161
      %5163 = vmatprep.subr.mxu0 0.0
      %v5164 = vand.u32 %v1202, 4294901760
      %5165 = vmatpush1.msra.mxu0 %v5164
      %5166 = vmatprep.subr.mxu0 0.0
      %v5167 = vand.u32 %v1203, 4294901760
      %5168 = vmatpush1.msra.mxu0 %v5167
      %5169 = vmatprep.subr.mxu0 0.0
      %v5170 = vand.u32 %v1204, 4294901760
      %5171 = vmatpush1.msra.mxu0 %v5170
      %5172 = vmatprep.subr.mxu0 0.0
      %v5173 = vand.u32 %v1205, 4294901760
      %5174 = vmatpush1.msra.mxu0 %v5173
      %5175 = vmatprep.subr.mxu0 0.0
      %v5176 = vand.u32 %v1206, 4294901760
      %5177 = vmatpush1.msra.mxu0 %v5176
      %5178 = vmatprep.subr.mxu0 0.0
      %v5179 = vand.u32 %v1207, 4294901760
      %5180 = vmatpush1.msra.mxu0 %v5179
      %v5181 = vand.u32 %v921, 4294901760
      %5182 = vmatprep.mubr.f32.mxu0 %v5181
      %v5183 = vand.u32 %v920, 4294901760
      %5184 = vmatmul.mubr.f32.gmra.mrb[0].mxu0 %v5183
      %v5185 = vpop.f32.mrb[0].mxu0
      %v5186 = vadd.f32 %v4641, %v5185
      %v5187 = vpop.f32.mrb[0].mxu0
      %v5188 = vand.u32 %v925, 4294901760
      %5189 = vmatprep.mubr.f32.mxu0 %v5188
      %v5190 = vand.u32 %v924, 4294901760
      %5191 = vmatmul.mubr.f32.gmra.mrb[0].mxu0 %v5190
      %v5192 = vpop.f32.mrb[0].mxu0
      %v5193 = vadd.f32 %v4648, %v5192
      %v5194 = vpop.f32.mrb[0].mxu0
      %v5195 = vand.u32 %v929, 4294901760
      %5196 = vmatprep.mubr.f32.mxu0 %v5195
      %v5197 = vand.u32 %v928, 4294901760
      %5198 = vmatmul.mubr.f32.gmra.mrb[0].mxu0 %v5197
      %v5199 = vpop.f32.mrb[0].mxu0
      %v5200 = vadd.f32 %v4655, %v5199
      %v5201 = vpop.f32.mrb[0].mxu0
      %v5202 = vand.u32 %v933, 4294901760
      %5203 = vmatprep.mubr.f32.mxu0 %v5202
      %v5204 = vand.u32 %v932, 4294901760
      %5205 = vmatmul.mubr.f32.gmra.mrb[0].mxu0 %v5204
      %v5206 = vpop.f32.mrb[0].mxu0
      %v5207 = vadd.f32 %v4662, %v5206
      %v5208 = vpop.f32.mrb[0].mxu0
      %v5209 = vand.u32 %v937, 4294901760
      %5210 = vmatprep.mubr.f32.mxu0 %v5209
      %v5211 = vand.u32 %v936, 4294901760
      %5212 = vmatmul.mubr.f32.gmra.mrb[0].mxu0 %v5211
      %v5213 = vpop.f32.mrb[0].mxu0
      %v5214 = vadd.f32 %v4669, %v5213
      %v5215 = vpop.f32.mrb[0].mxu0
      %v5216 = vand.u32 %v941, 4294901760
      %5217 = vmatprep.mubr.f32.mxu0 %v5216
      %v5218 = vand.u32 %v940, 4294901760
      %5219 = vmatmul.mubr.f32.gmra.mrb[0].mxu0 %v5218
      %v5220 = vpop.f32.mrb[0].mxu0
      %v5221 = vadd.f32 %v4676, %v5220
      %v5222 = vpop.f32.mrb[0].mxu0
      %v5223 = vand.u32 %v945, 4294901760
      %5224 = vmatprep.mubr.f32.mxu0 %v5223
      %v5225 = vand.u32 %v944, 4294901760
      %5226 = vmatmul.mubr.f32.gmra.mrb[0].mxu0 %v5225
      %v5227 = vpop.f32.mrb[0].mxu0
      %v5228 = vadd.f32 %v4683, %v5227
      %v5229 = vpop.f32.mrb[0].mxu0
      %v5230 = vand.u32 %v949, 4294901760
      %5231 = vmatprep.mubr.f32.mxu0 %v5230
      %v5232 = vand.u32 %v948, 4294901760
      %5233 = vmatmul.mubr.f32.gmra.mrb[0].mxu0 %v5232
      %v5234 = vpop.f32.mrb[0].mxu0
      %v5235 = vadd.f32 %v4690, %v5234
      %v5236 = vpop.f32.mrb[0].mxu0
      %v5237 = vand.u32 %v953, 4294901760
      %5238 = vmatprep.mubr.f32.mxu0 %v5237
      %v5239 = vand.u32 %v952, 4294901760
      %5240 = vmatmul.mubr.f32.gmra.mrb[0].mxu0 %v5239
      %v5241 = vpop.f32.mrb[0].mxu0
      %v5242 = vadd.f32 %v4697, %v5241
      %v5243 = vpop.f32.mrb[0].mxu0
      %v5244 = vand.u32 %v957, 4294901760
      %5245 = vmatprep.mubr.f32.mxu0 %v5244
      %v5246 = vand.u32 %v956, 4294901760
      %5247 = vmatmul.mubr.f32.gmra.mrb[0].mxu0 %v5246
      %v5248 = vpop.f32.mrb[0].mxu0
      %v5249 = vadd.f32 %v4704, %v5248
      %v5250 = vpop.f32.mrb[0].mxu0
      %v5251 = vand.u32 %v961, 4294901760
      %5252 = vmatprep.mubr.f32.mxu0 %v5251
      %v5253 = vand.u32 %v960, 4294901760
      %5254 = vmatmul.mubr.f32.gmra.mrb[0].mxu0 %v5253
      %v5255 = vpop.f32.mrb[0].mxu0
      %v5256 = vadd.f32 %v4711, %v5255
      %v5257 = vpop.f32.mrb[0].mxu0
      %v5258 = vand.u32 %v965, 4294901760
      %5259 = vmatprep.mubr.f32.mxu0 %v5258
      %v5260 = vand.u32 %v964, 4294901760
      %5261 = vmatmul.mubr.f32.gmra.mrb[0].mxu0 %v5260
      %v5262 = vpop.f32.mrb[0].mxu0
      %v5263 = vadd.f32 %v4718, %v5262
      %v5264 = vpop.f32.mrb[0].mxu0
      %v5265 = vand.u32 %v969, 4294901760
      %5266 = vmatprep.mubr.f32.mxu0 %v5265
      %v5267 = vand.u32 %v968, 4294901760
      %5268 = vmatmul.mubr.f32.gmra.mrb[0].mxu0 %v5267
      %v5269 = vpop.f32.mrb[0].mxu0
      %v5270 = vadd.f32 %v4725, %v5269
      %v5271 = vpop.f32.mrb[0].mxu0
      %v5272 = vand.u32 %v973, 4294901760
      %5273 = vmatprep.mubr.f32.mxu0 %v5272
      %v5274 = vand.u32 %v972, 4294901760
      %5275 = vmatmul.mubr.f32.gmra.mrb[0].mxu0 %v5274
      %v5276 = vpop.f32.mrb[0].mxu0
      %v5277 = vadd.f32 %v4732, %v5276
      %v5278 = vpop.f32.mrb[0].mxu0
      %v5279 = vand.u32 %v977, 4294901760
      %5280 = vmatprep.mubr.f32.mxu0 %v5279
      %v5281 = vand.u32 %v976, 4294901760
      %5282 = vmatmul.mubr.f32.gmra.mrb[0].mxu0 %v5281
      %v5283 = vpop.f32.mrb[0].mxu0
      %v5284 = vadd.f32 %v4739, %v5283
      %v5285 = vpop.f32.mrb[0].mxu0
      %v5286 = vand.u32 %v981, 4294901760
      %5287 = vmatprep.mubr.f32.mxu0 %v5286
      %v5288 = vand.u32 %v980, 4294901760
      %5289 = vmatmul.mubr.f32.gmra.mrb[0].mxu0 %v5288
      %v5290 = vpop.f32.mrb[0].mxu0
      %v5291 = vadd.f32 %v4746, %v5290
      %v5292 = vpop.f32.mrb[0].mxu0
      %v5293 = vand.u32 %v985, 4294901760
      %5294 = vmatprep.mubr.f32.mxu0 %v5293
      %v5295 = vand.u32 %v984, 4294901760
      %5296 = vmatmul.mubr.f32.gmra.mrb[0].mxu0 %v5295
      %v5297 = vpop.f32.mrb[0].mxu0
      %v5298 = vadd.f32 %v4753, %v5297
      %v5299 = vpop.f32.mrb[0].mxu0
      %v5300 = vand.u32 %v989, 4294901760
      %5301 = vmatprep.mubr.f32.mxu0 %v5300
      %v5302 = vand.u32 %v988, 4294901760
      %5303 = vmatmul.mubr.f32.gmra.mrb[0].mxu0 %v5302
      %v5304 = vpop.f32.mrb[0].mxu0
      %v5305 = vadd.f32 %v4760, %v5304
      %v5306 = vpop.f32.mrb[0].mxu0
      %v5307 = vand.u32 %v993, 4294901760
      %5308 = vmatprep.mubr.f32.mxu0 %v5307
      %v5309 = vand.u32 %v992, 4294901760
      %5310 = vmatmul.mubr.f32.gmra.mrb[0].mxu0 %v5309
      %v5311 = vpop.f32.mrb[0].mxu0
      %v5312 = vadd.f32 %v4767, %v5311
      %v5313 = vpop.f32.mrb[0].mxu0
      %v5314 = vand.u32 %v997, 4294901760
      %5315 = vmatprep.mubr.f32.mxu0 %v5314
      %v5316 = vand.u32 %v996, 4294901760
      %5317 = vmatmul.mubr.f32.gmra.mrb[0].mxu0 %v5316
      %v5318 = vpop.f32.mrb[0].mxu0
      %v5319 = vadd.f32 %v4774, %v5318
      %v5320 = vpop.f32.mrb[0].mxu0
      %v5321 = vand.u32 %v1001, 4294901760
      %5322 = vmatprep.mubr.f32.mxu0 %v5321
      %v5323 = vand.u32 %v1000, 4294901760
      %5324 = vmatmul.mubr.f32.gmra.mrb[0].mxu0 %v5323
      %v5325 = vpop.f32.mrb[0].mxu0
      %v5326 = vadd.f32 %v4781, %v5325
      %v5327 = vpop.f32.mrb[0].mxu0
      %v5328 = vand.u32 %v1005, 4294901760
      %5329 = vmatprep.mubr.f32.mxu0 %v5328
      %v5330 = vand.u32 %v1004, 4294901760
      %5331 = vmatmul.mubr.f32.gmra.mrb[0].mxu0 %v5330
      %v5332 = vpop.f32.mrb[0].mxu0
      %v5333 = vadd.f32 %v4788, %v5332
      %v5334 = vpop.f32.mrb[0].mxu0
      %v5335 = vand.u32 %v1009, 4294901760
      %5336 = vmatprep.mubr.f32.mxu0 %v5335
      %v5337 = vand.u32 %v1008, 4294901760
      %5338 = vmatmul.mubr.f32.gmra.mrb[0].mxu0 %v5337
      %v5339 = vpop.f32.mrb[0].mxu0
      %v5340 = vadd.f32 %v4795, %v5339
      %v5341 = vpop.f32.mrb[0].mxu0
      %v5342 = vand.u32 %v1013, 4294901760
      %5343 = vmatprep.mubr.f32.mxu0 %v5342
      %v5344 = vand.u32 %v1012, 4294901760
      %5345 = vmatmul.mubr.f32.gmra.mrb[0].mxu0 %v5344
      %v5346 = vpop.f32.mrb[0].mxu0
      %v5347 = vadd.f32 %v4802, %v5346
      %v5348 = vpop.f32.mrb[0].mxu0
      %v5349 = vand.u32 %v1017, 4294901760
      %5350 = vmatprep.mubr.f32.mxu0 %v5349
      %v5351 = vand.u32 %v1016, 4294901760
      %5352 = vmatmul.mubr.f32.gmra.mrb[0].mxu0 %v5351
      %v5353 = vpop.f32.mrb[0].mxu0
      %v5354 = vadd.f32 %v4809, %v5353
      %v5355 = vpop.f32.mrb[0].mxu0
      %v5356 = vand.u32 %v1021, 4294901760
      %5357 = vmatprep.mubr.f32.mxu0 %v5356
      %v5358 = vand.u32 %v1020, 4294901760
      %5359 = vmatmul.mubr.f32.gmra.mrb[0].mxu0 %v5358
      %v5360 = vpop.f32.mrb[0].mxu0
      %v5361 = vadd.f32 %v4816, %v5360
      %v5362 = vpop.f32.mrb[0].mxu0
      %v5363 = vand.u32 %v1025, 4294901760
      %5364 = vmatprep.mubr.f32.mxu0 %v5363
      %v5365 = vand.u32 %v1024, 4294901760
      %5366 = vmatmul.mubr.f32.gmra.mrb[0].mxu0 %v5365
      %v5367 = vpop.f32.mrb[0].mxu0
      %v5368 = vadd.f32 %v4823, %v5367
      %v5369 = vpop.f32.mrb[0].mxu0
      %v5370 = vand.u32 %v1029, 4294901760
      %5371 = vmatprep.mubr.f32.mxu0 %v5370
      %v5372 = vand.u32 %v1028, 4294901760
      %5373 = vmatmul.mubr.f32.gmra.mrb[0].mxu0 %v5372
      %v5374 = vpop.f32.mrb[0].mxu0
      %v5375 = vadd.f32 %v4830, %v5374
      %v5376 = vpop.f32.mrb[0].mxu0
      %v5377 = vand.u32 %v1033, 4294901760
      %5378 = vmatprep.mubr.f32.mxu0 %v5377
      %v5379 = vand.u32 %v1032, 4294901760
      %5380 = vmatmul.mubr.f32.gmra.mrb[0].mxu0 %v5379
      %v5381 = vpop.f32.mrb[0].mxu0
      %v5382 = vadd.f32 %v4837, %v5381
      %v5383 = vpop.f32.mrb[0].mxu0
      %v5384 = vand.u32 %v1037, 4294901760
      %5385 = vmatprep.mubr.f32.mxu0 %v5384
      %v5386 = vand.u32 %v1036, 4294901760
      %5387 = vmatmul.mubr.f32.gmra.mrb[0].mxu0 %v5386
      %v5388 = vpop.f32.mrb[0].mxu0
      %v5389 = vadd.f32 %v4844, %v5388
      %v5390 = vpop.f32.mrb[0].mxu0
      %v5391 = vand.u32 %v1041, 4294901760
      %5392 = vmatprep.mubr.f32.mxu0 %v5391
      %v5393 = vand.u32 %v1040, 4294901760
      %5394 = vmatmul.mubr.f32.gmra.mrb[0].mxu0 %v5393
      %v5395 = vpop.f32.mrb[0].mxu0
      %v5396 = vadd.f32 %v4851, %v5395
      %v5397 = vpop.f32.mrb[0].mxu0
      %v5398 = vand.u32 %v1045, 4294901760
      %5399 = vmatprep.mubr.f32.mxu0 %v5398
      %v5400 = vand.u32 %v1044, 4294901760
      %5401 = vmatmul.mubr.f32.gmra.mrb[0].mxu0 %v5400
      %v5402 = vpop.f32.mrb[0].mxu0
      %v5403 = vadd.f32 %v4858, %v5402
      %v5404 = vpop.f32.mrb[0].mxu0
      %v5405 = vand.u32 %v1049, 4294901760
      %5406 = vmatprep.mubr.f32.mxu0 %v5405
      %v5407 = vand.u32 %v1048, 4294901760
      %5408 = vmatmul.mubr.f32.gmra.mrb[0].mxu0 %v5407
      %v5409 = vpop.f32.mrb[0].mxu0
      %v5410 = vadd.f32 %v4865, %v5409
      %v5411 = vpop.f32.mrb[0].mxu0
      %v5412 = vand.u32 %v1053, 4294901760
      %5413 = vmatprep.mubr.f32.mxu0 %v5412
      %v5414 = vand.u32 %v1052, 4294901760
      %5415 = vmatmul.mubr.f32.gmra.mrb[0].mxu0 %v5414
      %v5416 = vpop.f32.mrb[0].mxu0
      %v5417 = vadd.f32 %v4872, %v5416
      %v5418 = vpop.f32.mrb[0].mxu0
      %v5419 = vand.u32 %v1057, 4294901760
      %5420 = vmatprep.mubr.f32.mxu0 %v5419
      %v5421 = vand.u32 %v1056, 4294901760
      %5422 = vmatmul.mubr.f32.gmra.mrb[0].mxu0 %v5421
      %v5423 = vpop.f32.mrb[0].mxu0
      %v5424 = vadd.f32 %v4879, %v5423
      %v5425 = vpop.f32.mrb[0].mxu0
      %v5426 = vand.u32 %v1061, 4294901760
      %5427 = vmatprep.mubr.f32.mxu0 %v5426
      %v5428 = vand.u32 %v1060, 4294901760
      %5429 = vmatmul.mubr.f32.gmra.mrb[0].mxu0 %v5428
      %v5430 = vpop.f32.mrb[0].mxu0
      %v5431 = vadd.f32 %v4886, %v5430
      %v5432 = vpop.f32.mrb[0].mxu0
      %v5433 = vand.u32 %v1065, 4294901760
      %5434 = vmatprep.mubr.f32.mxu0 %v5433
      %v5435 = vand.u32 %v1064, 4294901760
      %5436 = vmatmul.mubr.f32.gmra.mrb[0].mxu0 %v5435
      %v5437 = vpop.f32.mrb[0].mxu0
      %v5438 = vadd.f32 %v4893, %v5437
      %v5439 = vpop.f32.mrb[0].mxu0
      %v5440 = vand.u32 %v1069, 4294901760
      %5441 = vmatprep.mubr.f32.mxu0 %v5440
      %v5442 = vand.u32 %v1068, 4294901760
      %5443 = vmatmul.mubr.f32.gmra.mrb[0].mxu0 %v5442
      %v5444 = vpop.f32.mrb[0].mxu0
      %v5445 = vadd.f32 %v4900, %v5444
      %v5446 = vpop.f32.mrb[0].mxu0
      %v5447 = vand.u32 %v1073, 4294901760
      %5448 = vmatprep.mubr.f32.mxu0 %v5447
      %v5449 = vand.u32 %v1072, 4294901760
      %5450 = vmatmul.mubr.f32.gmra.mrb[0].mxu0 %v5449
      %v5451 = vpop.f32.mrb[0].mxu0
      %v5452 = vadd.f32 %v4907, %v5451
      %v5453 = vpop.f32.mrb[0].mxu0
      %v5454 = vand.u32 %v1077, 4294901760
      %5455 = vmatprep.mubr.f32.mxu0 %v5454
      %v5456 = vand.u32 %v1076, 4294901760
      %5457 = vmatmul.mubr.f32.gmra.mrb[0].mxu0 %v5456
      %v5458 = vpop.f32.mrb[0].mxu0
      %v5459 = vadd.f32 %v4914, %v5458
      %v5460 = vpop.f32.mrb[0].mxu0
      %v5461 = vand.u32 %v1081, 4294901760
      %5462 = vmatprep.mubr.f32.mxu0 %v5461
      %v5463 = vand.u32 %v1080, 4294901760
      %5464 = vmatmul.mubr.f32.gmra.mrb[0].mxu0 %v5463
      %v5465 = vpop.f32.mrb[0].mxu0
      %v5466 = vadd.f32 %v4921, %v5465
      %v5467 = vpop.f32.mrb[0].mxu0
      %v5468 = vand.u32 %v1085, 4294901760
      %5469 = vmatprep.mubr.f32.mxu0 %v5468
      %v5470 = vand.u32 %v1084, 4294901760
      %5471 = vmatmul.mubr.f32.gmra.mrb[0].mxu0 %v5470
      %v5472 = vpop.f32.mrb[0].mxu0
      %v5473 = vadd.f32 %v4928, %v5472
      %v5474 = vpop.f32.mrb[0].mxu0
      %v5475 = vand.u32 %v1089, 4294901760
      %5476 = vmatprep.mubr.f32.mxu0 %v5475
      %v5477 = vand.u32 %v1088, 4294901760
      %5478 = vmatmul.mubr.f32.gmra.mrb[0].mxu0 %v5477
      %v5479 = vpop.f32.mrb[0].mxu0
      %v5480 = vadd.f32 %v4935, %v5479
      %v5481 = vpop.f32.mrb[0].mxu0
      %v5482 = vand.u32 %v1093, 4294901760
      %5483 = vmatprep.mubr.f32.mxu0 %v5482
      %v5484 = vand.u32 %v1092, 4294901760
      %5485 = vmatmul.mubr.f32.gmra.mrb[0].mxu0 %v5484
      %v5486 = vpop.f32.mrb[0].mxu0
      %v5487 = vadd.f32 %v4942, %v5486
      %v5488 = vpop.f32.mrb[0].mxu0
      %v5489 = vand.u32 %v1097, 4294901760
      %5490 = vmatprep.mubr.f32.mxu0 %v5489
      %v5491 = vand.u32 %v1096, 4294901760
      %5492 = vmatmul.mubr.f32.gmra.mrb[0].mxu0 %v5491
      %v5493 = vpop.f32.mrb[0].mxu0
      %v5494 = vadd.f32 %v4949, %v5493
      %v5495 = vpop.f32.mrb[0].mxu0
      %v5496 = vand.u32 %v1101, 4294901760
      %5497 = vmatprep.mubr.f32.mxu0 %v5496
      %v5498 = vand.u32 %v1100, 4294901760
      %5499 = vmatmul.mubr.f32.gmra.mrb[0].mxu0 %v5498
      %v5500 = vpop.f32.mrb[0].mxu0
      %v5501 = vadd.f32 %v4956, %v5500
      %v5502 = vpop.f32.mrb[0].mxu0
      %v5503 = vand.u32 %v1105, 4294901760
      %5504 = vmatprep.mubr.f32.mxu0 %v5503
      %v5505 = vand.u32 %v1104, 4294901760
      %5506 = vmatmul.mubr.f32.gmra.mrb[0].mxu0 %v5505
      %v5507 = vpop.f32.mrb[0].mxu0
      %v5508 = vadd.f32 %v4963, %v5507
      %v5509 = vpop.f32.mrb[0].mxu0
      %v5510 = vand.u32 %v1109, 4294901760
      %5511 = vmatprep.mubr.f32.mxu0 %v5510
      %v5512 = vand.u32 %v1108, 4294901760
      %5513 = vmatmul.mubr.f32.gmra.mrb[0].mxu0 %v5512
      %v5514 = vpop.f32.mrb[0].mxu0
      %v5515 = vadd.f32 %v4970, %v5514
      %v5516 = vpop.f32.mrb[0].mxu0
      %v5517 = vand.u32 %v1113, 4294901760
      %5518 = vmatprep.mubr.f32.mxu0 %v5517
      %v5519 = vand.u32 %v1112, 4294901760
      %5520 = vmatmul.mubr.f32.gmra.mrb[0].mxu0 %v5519
      %v5521 = vpop.f32.mrb[0].mxu0
      %v5522 = vadd.f32 %v4977, %v5521
      %v5523 = vpop.f32.mrb[0].mxu0
      %v5524 = vand.u32 %v1117, 4294901760
      %5525 = vmatprep.mubr.f32.mxu0 %v5524
      %v5526 = vand.u32 %v1116, 4294901760
      %5527 = vmatmul.mubr.f32.gmra.mrb[0].mxu0 %v5526
      %v5528 = vpop.f32.mrb[0].mxu0
      %v5529 = vadd.f32 %v4984, %v5528
      %v5530 = vpop.f32.mrb[0].mxu0
      %v5531 = vand.u32 %v1121, 4294901760
      %5532 = vmatprep.mubr.f32.mxu0 %v5531
      %v5533 = vand.u32 %v1120, 4294901760
      %5534 = vmatmul.mubr.f32.gmra.mrb[0].mxu0 %v5533
      %v5535 = vpop.f32.mrb[0].mxu0
      %v5536 = vadd.f32 %v4991, %v5535
      %v5537 = vpop.f32.mrb[0].mxu0
      %v5538 = vand.u32 %v1125, 4294901760
      %5539 = vmatprep.mubr.f32.mxu0 %v5538
      %v5540 = vand.u32 %v1124, 4294901760
      %5541 = vmatmul.mubr.f32.gmra.mrb[0].mxu0 %v5540
      %v5542 = vpop.f32.mrb[0].mxu0
      %v5543 = vadd.f32 %v4998, %v5542
      %v5544 = vpop.f32.mrb[0].mxu0
      %v5545 = vand.u32 %v1129, 4294901760
      %5546 = vmatprep.mubr.f32.mxu0 %v5545
      %v5547 = vand.u32 %v1128, 4294901760
      %5548 = vmatmul.mubr.f32.gmra.mrb[0].mxu0 %v5547
      %v5549 = vpop.f32.mrb[0].mxu0
      %v5550 = vadd.f32 %v5005, %v5549
      %v5551 = vpop.f32.mrb[0].mxu0
      %v5552 = vand.u32 %v1133, 4294901760
      %5553 = vmatprep.mubr.f32.mxu0 %v5552
      %v5554 = vand.u32 %v1132, 4294901760
      %5555 = vmatmul.mubr.f32.gmra.mrb[0].mxu0 %v5554
      %v5556 = vpop.f32.mrb[0].mxu0
      %v5557 = vadd.f32 %v5012, %v5556
      %v5558 = vpop.f32.mrb[0].mxu0
      %v5559 = vand.u32 %v1137, 4294901760
      %5560 = vmatprep.mubr.f32.mxu0 %v5559
      %v5561 = vand.u32 %v1136, 4294901760
      %5562 = vmatmul.mubr.f32.gmra.mrb[0].mxu0 %v5561
      %v5563 = vpop.f32.mrb[0].mxu0
      %v5564 = vadd.f32 %v5019, %v5563
      %v5565 = vpop.f32.mrb[0].mxu0
      %v5566 = vand.u32 %v1141, 4294901760
      %5567 = vmatprep.mubr.f32.mxu0 %v5566
      %v5568 = vand.u32 %v1140, 4294901760
      %5569 = vmatmul.mubr.f32.gmra.mrb[0].mxu0 %v5568
      %v5570 = vpop.f32.mrb[0].mxu0
      %v5571 = vadd.f32 %v5026, %v5570
      %v5572 = vpop.f32.mrb[0].mxu0
      %v5573 = vand.u32 %v1145, 4294901760
      %5574 = vmatprep.mubr.f32.mxu0 %v5573
      %v5575 = vand.u32 %v1144, 4294901760
      %5576 = vmatmul.mubr.f32.gmra.mrb[0].mxu0 %v5575
      %v5577 = vpop.f32.mrb[0].mxu0
      %v5578 = vadd.f32 %v5033, %v5577
      %v5579 = vpop.f32.mrb[0].mxu0
      %v5580 = vand.u32 %v1149, 4294901760
      %5581 = vmatprep.mubr.f32.mxu0 %v5580
      %v5582 = vand.u32 %v1148, 4294901760
      %5583 = vmatmul.mubr.f32.gmra.mrb[0].mxu0 %v5582
      %v5584 = vpop.f32.mrb[0].mxu0
      %v5585 = vadd.f32 %v5040, %v5584
      %v5586 = vpop.f32.mrb[0].mxu0
      %v5587 = vand.u32 %v1153, 4294901760
      %5588 = vmatprep.mubr.f32.mxu0 %v5587
      %v5589 = vand.u32 %v1152, 4294901760
      %5590 = vmatmul.mubr.f32.gmra.mrb[0].mxu0 %v5589
      %v5591 = vpop.f32.mrb[0].mxu0
      %v5592 = vadd.f32 %v5047, %v5591
      %v5593 = vpop.f32.mrb[0].mxu0
      %v5594 = vand.u32 %v1157, 4294901760
      %5595 = vmatprep.mubr.f32.mxu0 %v5594
      %v5596 = vand.u32 %v1156, 4294901760
      %5597 = vmatmul.mubr.f32.gmra.mrb[0].mxu0 %v5596
      %v5598 = vpop.f32.mrb[0].mxu0
      %v5599 = vadd.f32 %v5054, %v5598
      %v5600 = vpop.f32.mrb[0].mxu0
      %v5601 = vand.u32 %v1161, 4294901760
      %5602 = vmatprep.mubr.f32.mxu0 %v5601
      %v5603 = vand.u32 %v1160, 4294901760
      %5604 = vmatmul.mubr.f32.gmra.mrb[0].mxu0 %v5603
      %v5605 = vpop.f32.mrb[0].mxu0
      %v5606 = vadd.f32 %v5061, %v5605
      %v5607 = vpop.f32.mrb[0].mxu0
      %v5608 = vand.u32 %v1165, 4294901760
      %5609 = vmatprep.mubr.f32.mxu0 %v5608
      %v5610 = vand.u32 %v1164, 4294901760
      %5611 = vmatmul.mubr.f32.gmra.mrb[0].mxu0 %v5610
      %v5612 = vpop.f32.mrb[0].mxu0
      %v5613 = vadd.f32 %v5068, %v5612
      %v5614 = vpop.f32.mrb[0].mxu0
      %v5615 = vand.u32 %v1169, 4294901760
      %5616 = vmatprep.mubr.f32.mxu0 %v5615
      %v5617 = vand.u32 %v1168, 4294901760
      %5618 = vmatmul.mubr.f32.gmra.mrb[0].mxu0 %v5617
      %v5619 = vpop.f32.mrb[0].mxu0
      %v5620 = vadd.f32 %v5075, %v5619
      %v5621 = vpop.f32.mrb[0].mxu0
      %v5622 = vand.u32 %v1173, 4294901760
      %5623 = vmatprep.mubr.f32.mxu0 %v5622
      %v5624 = vand.u32 %v1172, 4294901760
      %5625 = vmatmul.mubr.f32.gmra.mrb[0].mxu0 %v5624
      %v5626 = vpop.f32.mrb[0].mxu0
      %v5627 = vadd.f32 %v5082, %v5626
      %v5628 = vpop.f32.mrb[0].mxu0
      %5629 = vdwg.mxu0
      %5630 = vmatprep.subr.mxu0 0.0
      %v5631 = vand.u32 %v1208, 4294901760
      %5632 = vmatpush1.msra.mxu0 %v5631
      %5633 = vmatprep.subr.mxu0 0.0
      %v5634 = vand.u32 %v1209, 4294901760
      %5635 = vmatpush1.msra.mxu0 %v5634
      %5636 = vmatprep.subr.mxu0 0.0
      %v5637 = vand.u32 %v1210, 4294901760
      %5638 = vmatpush1.msra.mxu0 %v5637
      %5639 = vmatprep.subr.mxu0 0.0
      %v5640 = vand.u32 %v1211, 4294901760
      %5641 = vmatpush1.msra.mxu0 %v5640
      %5642 = vmatprep.subr.mxu0 0.0
      %v5643 = vand.u32 %v1212, 4294901760
      %5644 = vmatpush1.msra.mxu0 %v5643
      %5645 = vmatprep.subr.mxu0 0.0
      %v5646 = vand.u32 %v1213, 4294901760
      %5647 = vmatpush1.msra.mxu0 %v5646
      %5648 = vmatprep.subr.mxu0 0.0
      %v5649 = vand.u32 %v1214, 4294901760
      %5650 = vmatpush1.msra.mxu0 %v5649
      %5651 = vmatprep.subr.mxu0 0.0
      %v5652 = vand.u32 %v1215, 4294901760
      %5653 = vmatpush1.msra.mxu0 %v5652
      %5654 = vmatprep.subr.mxu0 0.0
      %v5655 = vand.u32 %v1216, 4294901760
      %5656 = vmatpush1.msra.mxu0 %v5655
      %5657 = vmatprep.subr.mxu0 0.0
      %v5658 = vand.u32 %v1217, 4294901760
      %5659 = vmatpush1.msra.mxu0 %v5658
      %5660 = vmatprep.subr.mxu0 0.0
      %v5661 = vand.u32 %v1218, 4294901760
      %5662 = vmatpush1.msra.mxu0 %v5661
      %5663 = vmatprep.subr.mxu0 0.0
      %v5664 = vand.u32 %v1219, 4294901760
      %5665 = vmatpush1.msra.mxu0 %v5664
      %5666 = vmatprep.subr.mxu0 0.0
      %v5667 = vand.u32 %v1220, 4294901760
      %5668 = vmatpush1.msra.mxu0 %v5667
      %5669 = vmatprep.subr.mxu0 0.0
      %v5670 = vand.u32 %v1221, 4294901760
      %5671 = vmatpush1.msra.mxu0 %v5670
      %5672 = vmatprep.subr.mxu0 0.0
      %v5673 = vand.u32 %v1222, 4294901760
      %5674 = vmatpush1.msra.mxu0 %v5673
      %5675 = vmatprep.subr.mxu0 0.0
      %v5676 = vand.u32 %v1223, 4294901760
      %5677 = vmatpush1.msra.mxu0 %v5676
      %5678 = vmatprep.subr.mxu0 0.0
      %v5679 = vand.u32 %v1224, 4294901760
      %5680 = vmatpush1.msra.mxu0 %v5679
      %5681 = vmatprep.subr.mxu0 0.0
      %v5682 = vand.u32 %v1225, 4294901760
      %5683 = vmatpush1.msra.mxu0 %v5682
      %5684 = vmatprep.subr.mxu0 0.0
      %v5685 = vand.u32 %v1226, 4294901760
      %5686 = vmatpush1.msra.mxu0 %v5685
      %5687 = vmatprep.subr.mxu0 0.0
      %v5688 = vand.u32 %v1227, 4294901760
      %5689 = vmatpush1.msra.mxu0 %v5688
      %5690 = vmatprep.subr.mxu0 0.0
      %v5691 = vand.u32 %v1228, 4294901760
      %5692 = vmatpush1.msra.mxu0 %v5691
      %5693 = vmatprep.subr.mxu0 0.0
      %v5694 = vand.u32 %v1229, 4294901760
      %5695 = vmatpush1.msra.mxu0 %v5694
      %5696 = vmatprep.subr.mxu0 0.0
      %v5697 = vand.u32 %v1230, 4294901760
      %5698 = vmatpush1.msra.mxu0 %v5697
      %5699 = vmatprep.subr.mxu0 0.0
      %v5700 = vand.u32 %v1231, 4294901760
      %5701 = vmatpush1.msra.mxu0 %v5700
      %5702 = vmatprep.subr.mxu0 0.0
      %v5703 = vand.u32 %v1232, 4294901760
      %5704 = vmatpush1.msra.mxu0 %v5703
      %5705 = vmatprep.subr.mxu0 0.0
      %v5706 = vand.u32 %v1233, 4294901760
      %5707 = vmatpush1.msra.mxu0 %v5706
      %5708 = vmatprep.subr.mxu0 0.0
      %v5709 = vand.u32 %v1234, 4294901760
      %5710 = vmatpush1.msra.mxu0 %v5709
      %5711 = vmatprep.subr.mxu0 0.0
      %v5712 = vand.u32 %v1235, 4294901760
      %5713 = vmatpush1.msra.mxu0 %v5712
      %5714 = vmatprep.subr.mxu0 0.0
      %v5715 = vand.u32 %v1236, 4294901760
      %5716 = vmatpush1.msra.mxu0 %v5715
      %5717 = vmatprep.subr.mxu0 0.0
      %v5718 = vand.u32 %v1237, 4294901760
      %5719 = vmatpush1.msra.mxu0 %v5718
      %5720 = vmatprep.subr.mxu0 0.0
      %v5721 = vand.u32 %v1238, 4294901760
      %5722 = vmatpush1.msra.mxu0 %v5721
      %5723 = vmatprep.subr.mxu0 0.0
      %v5724 = vand.u32 %v1239, 4294901760
      %5725 = vmatpush1.msra.mxu0 %v5724
      %v5726 = vand.u32 %v923, 4294901760
      %v5727 = vsub.f32 %v923, %v5726
      %v5728 = vand.u32 %v5727, 4294901760
      %v5729 = vsub.f32 %v5727, %v5728
      %v5730 = vand.u32 %v5729, 4294901760
      %5731 = vmatprep.mubr.f32.mxu0 %v5730
      %v5732 = vand.u32 %v922, 4294901760
      %v5733 = vsub.f32 %v922, %v5732
      %v5734 = vand.u32 %v5733, 4294901760
      %v5735 = vsub.f32 %v5733, %v5734
      %v5736 = vand.u32 %v5735, 4294901760
      %5737 = vmatmul.mubr.f32.gmra.mrb[0].mxu0 %v5736
      %v5738 = vpop.f32.mrb[0].mxu0
      %v5739 = vadd.f32 %v5186, %v5738
      %v5740 = vpop.f32.mrb[0].mxu0
      %v5741 = vand.u32 %v927, 4294901760
      %v5742 = vsub.f32 %v927, %v5741
      %v5743 = vand.u32 %v5742, 4294901760
      %v5744 = vsub.f32 %v5742, %v5743
      %v5745 = vand.u32 %v5744, 4294901760
      %5746 = vmatprep.mubr.f32.mxu0 %v5745
      %v5747 = vand.u32 %v926, 4294901760
      %v5748 = vsub.f32 %v926, %v5747
      %v5749 = vand.u32 %v5748, 4294901760
      %v5750 = vsub.f32 %v5748, %v5749
      %v5751 = vand.u32 %v5750, 4294901760
      %5752 = vmatmul.mubr.f32.gmra.mrb[0].mxu0 %v5751
      %v5753 = vpop.f32.mrb[0].mxu0
      %v5754 = vadd.f32 %v5193, %v5753
      %v5755 = vpop.f32.mrb[0].mxu0
      %v5756 = vand.u32 %v931, 4294901760
      %v5757 = vsub.f32 %v931, %v5756
      %v5758 = vand.u32 %v5757, 4294901760
      %v5759 = vsub.f32 %v5757, %v5758
      %v5760 = vand.u32 %v5759, 4294901760
      %5761 = vmatprep.mubr.f32.mxu0 %v5760
      %v5762 = vand.u32 %v930, 4294901760
      %v5763 = vsub.f32 %v930, %v5762
      %v5764 = vand.u32 %v5763, 4294901760
      %v5765 = vsub.f32 %v5763, %v5764
      %v5766 = vand.u32 %v5765, 4294901760
      %5767 = vmatmul.mubr.f32.gmra.mrb[0].mxu0 %v5766
      %v5768 = vpop.f32.mrb[0].mxu0
      %v5769 = vadd.f32 %v5200, %v5768
      %v5770 = vpop.f32.mrb[0].mxu0
      %v5771 = vand.u32 %v935, 4294901760
      %v5772 = vsub.f32 %v935, %v5771
      %v5773 = vand.u32 %v5772, 4294901760
      %v5774 = vsub.f32 %v5772, %v5773
      %v5775 = vand.u32 %v5774, 4294901760
      %5776 = vmatprep.mubr.f32.mxu0 %v5775
      %v5777 = vand.u32 %v934, 4294901760
      %v5778 = vsub.f32 %v934, %v5777
      %v5779 = vand.u32 %v5778, 4294901760
      %v5780 = vsub.f32 %v5778, %v5779
      %v5781 = vand.u32 %v5780, 4294901760
      %5782 = vmatmul.mubr.f32.gmra.mrb[0].mxu0 %v5781
      %v5783 = vpop.f32.mrb[0].mxu0
      %v5784 = vadd.f32 %v5207, %v5783
      %v5785 = vpop.f32.mrb[0].mxu0
      %v5786 = vand.u32 %v939, 4294901760
      %v5787 = vsub.f32 %v939, %v5786
      %v5788 = vand.u32 %v5787, 4294901760
      %v5789 = vsub.f32 %v5787, %v5788
      %v5790 = vand.u32 %v5789, 4294901760
      %5791 = vmatprep.mubr.f32.mxu0 %v5790
      %v5792 = vand.u32 %v938, 4294901760
      %v5793 = vsub.f32 %v938, %v5792
      %v5794 = vand.u32 %v5793, 4294901760
      %v5795 = vsub.f32 %v5793, %v5794
      %v5796 = vand.u32 %v5795, 4294901760
      %5797 = vmatmul.mubr.f32.gmra.mrb[0].mxu0 %v5796
      %v5798 = vpop.f32.mrb[0].mxu0
      %v5799 = vadd.f32 %v5214, %v5798
      %v5800 = vpop.f32.mrb[0].mxu0
      %v5801 = vand.u32 %v943, 4294901760
      %v5802 = vsub.f32 %v943, %v5801
      %v5803 = vand.u32 %v5802, 4294901760
      %v5804 = vsub.f32 %v5802, %v5803
      %v5805 = vand.u32 %v5804, 4294901760
      %5806 = vmatprep.mubr.f32.mxu0 %v5805
      %v5807 = vand.u32 %v942, 4294901760
      %v5808 = vsub.f32 %v942, %v5807
      %v5809 = vand.u32 %v5808, 4294901760
      %v5810 = vsub.f32 %v5808, %v5809
      %v5811 = vand.u32 %v5810, 4294901760
      %5812 = vmatmul.mubr.f32.gmra.mrb[0].mxu0 %v5811
      %v5813 = vpop.f32.mrb[0].mxu0
      %v5814 = vadd.f32 %v5221, %v5813
      %v5815 = vpop.f32.mrb[0].mxu0
      %v5816 = vand.u32 %v947, 4294901760
      %v5817 = vsub.f32 %v947, %v5816
      %v5818 = vand.u32 %v5817, 4294901760
      %v5819 = vsub.f32 %v5817, %v5818
      %v5820 = vand.u32 %v5819, 4294901760
      %5821 = vmatprep.mubr.f32.mxu0 %v5820
      %v5822 = vand.u32 %v946, 4294901760
      %v5823 = vsub.f32 %v946, %v5822
      %v5824 = vand.u32 %v5823, 4294901760
      %v5825 = vsub.f32 %v5823, %v5824
      %v5826 = vand.u32 %v5825, 4294901760
      %5827 = vmatmul.mubr.f32.gmra.mrb[0].mxu0 %v5826
      %v5828 = vpop.f32.mrb[0].mxu0
      %v5829 = vadd.f32 %v5228, %v5828
      %v5830 = vpop.f32.mrb[0].mxu0
      %v5831 = vand.u32 %v951, 4294901760
      %v5832 = vsub.f32 %v951, %v5831
      %v5833 = vand.u32 %v5832, 4294901760
      %v5834 = vsub.f32 %v5832, %v5833
      %v5835 = vand.u32 %v5834, 4294901760
      %5836 = vmatprep.mubr.f32.mxu0 %v5835
      %v5837 = vand.u32 %v950, 4294901760
      %v5838 = vsub.f32 %v950, %v5837
      %v5839 = vand.u32 %v5838, 4294901760
      %v5840 = vsub.f32 %v5838, %v5839
      %v5841 = vand.u32 %v5840, 4294901760
      %5842 = vmatmul.mubr.f32.gmra.mrb[0].mxu0 %v5841
      %v5843 = vpop.f32.mrb[0].mxu0
      %v5844 = vadd.f32 %v5235, %v5843
      %v5845 = vpop.f32.mrb[0].mxu0
      %v5846 = vand.u32 %v955, 4294901760
      %v5847 = vsub.f32 %v955, %v5846
      %v5848 = vand.u32 %v5847, 4294901760
      %v5849 = vsub.f32 %v5847, %v5848
      %v5850 = vand.u32 %v5849, 4294901760
      %5851 = vmatprep.mubr.f32.mxu0 %v5850
      %v5852 = vand.u32 %v954, 4294901760
      %v5853 = vsub.f32 %v954, %v5852
      %v5854 = vand.u32 %v5853, 4294901760
      %v5855 = vsub.f32 %v5853, %v5854
      %v5856 = vand.u32 %v5855, 4294901760
      %5857 = vmatmul.mubr.f32.gmra.mrb[0].mxu0 %v5856
      %v5858 = vpop.f32.mrb[0].mxu0
      %v5859 = vadd.f32 %v5242, %v5858
      %v5860 = vpop.f32.mrb[0].mxu0
      %v5861 = vand.u32 %v959, 4294901760
      %v5862 = vsub.f32 %v959, %v5861
      %v5863 = vand.u32 %v5862, 4294901760
      %v5864 = vsub.f32 %v5862, %v5863
      %v5865 = vand.u32 %v5864, 4294901760
      %5866 = vmatprep.mubr.f32.mxu0 %v5865
      %v5867 = vand.u32 %v958, 4294901760
      %v5868 = vsub.f32 %v958, %v5867
      %v5869 = vand.u32 %v5868, 4294901760
      %v5870 = vsub.f32 %v5868, %v5869
      %v5871 = vand.u32 %v5870, 4294901760
      %5872 = vmatmul.mubr.f32.gmra.mrb[0].mxu0 %v5871
      %v5873 = vpop.f32.mrb[0].mxu0
      %v5874 = vadd.f32 %v5249, %v5873
      %v5875 = vpop.f32.mrb[0].mxu0
      %v5876 = vand.u32 %v963, 4294901760
      %v5877 = vsub.f32 %v963, %v5876
      %v5878 = vand.u32 %v5877, 4294901760
      %v5879 = vsub.f32 %v5877, %v5878
      %v5880 = vand.u32 %v5879, 4294901760
      %5881 = vmatprep.mubr.f32.mxu0 %v5880
      %v5882 = vand.u32 %v962, 4294901760
      %v5883 = vsub.f32 %v962, %v5882
      %v5884 = vand.u32 %v5883, 4294901760
      %v5885 = vsub.f32 %v5883, %v5884
      %v5886 = vand.u32 %v5885, 4294901760
      %5887 = vmatmul.mubr.f32.gmra.mrb[0].mxu0 %v5886
      %v5888 = vpop.f32.mrb[0].mxu0
      %v5889 = vadd.f32 %v5256, %v5888
      %v5890 = vpop.f32.mrb[0].mxu0
      %v5891 = vand.u32 %v967, 4294901760
      %v5892 = vsub.f32 %v967, %v5891
      %v5893 = vand.u32 %v5892, 4294901760
      %v5894 = vsub.f32 %v5892, %v5893
      %v5895 = vand.u32 %v5894, 4294901760
      %5896 = vmatprep.mubr.f32.mxu0 %v5895
      %v5897 = vand.u32 %v966, 4294901760
      %v5898 = vsub.f32 %v966, %v5897
      %v5899 = vand.u32 %v5898, 4294901760
      %v5900 = vsub.f32 %v5898, %v5899
      %v5901 = vand.u32 %v5900, 4294901760
      %5902 = vmatmul.mubr.f32.gmra.mrb[0].mxu0 %v5901
      %v5903 = vpop.f32.mrb[0].mxu0
      %v5904 = vadd.f32 %v5263, %v5903
      %v5905 = vpop.f32.mrb[0].mxu0
      %v5906 = vand.u32 %v971, 4294901760
      %v5907 = vsub.f32 %v971, %v5906
      %v5908 = vand.u32 %v5907, 4294901760
      %v5909 = vsub.f32 %v5907, %v5908
      %v5910 = vand.u32 %v5909, 4294901760
      %5911 = vmatprep.mubr.f32.mxu0 %v5910
      %v5912 = vand.u32 %v970, 4294901760
      %v5913 = vsub.f32 %v970, %v5912
      %v5914 = vand.u32 %v5913, 4294901760
      %v5915 = vsub.f32 %v5913, %v5914
      %v5916 = vand.u32 %v5915, 4294901760
      %5917 = vmatmul.mubr.f32.gmra.mrb[0].mxu0 %v5916
      %v5918 = vpop.f32.mrb[0].mxu0
      %v5919 = vadd.f32 %v5270, %v5918
      %v5920 = vpop.f32.mrb[0].mxu0
      %v5921 = vand.u32 %v975, 4294901760
      %v5922 = vsub.f32 %v975, %v5921
      %v5923 = vand.u32 %v5922, 4294901760
      %v5924 = vsub.f32 %v5922, %v5923
      %v5925 = vand.u32 %v5924, 4294901760
      %5926 = vmatprep.mubr.f32.mxu0 %v5925
      %v5927 = vand.u32 %v974, 4294901760
      %v5928 = vsub.f32 %v974, %v5927
      %v5929 = vand.u32 %v5928, 4294901760
      %v5930 = vsub.f32 %v5928, %v5929
      %v5931 = vand.u32 %v5930, 4294901760
      %5932 = vmatmul.mubr.f32.gmra.mrb[0].mxu0 %v5931
      %v5933 = vpop.f32.mrb[0].mxu0
      %v5934 = vadd.f32 %v5277, %v5933
      %v5935 = vpop.f32.mrb[0].mxu0
      %v5936 = vand.u32 %v979, 4294901760
      %v5937 = vsub.f32 %v979, %v5936
      %v5938 = vand.u32 %v5937, 4294901760
      %v5939 = vsub.f32 %v5937, %v5938
      %v5940 = vand.u32 %v5939, 4294901760
      %5941 = vmatprep.mubr.f32.mxu0 %v5940
      %v5942 = vand.u32 %v978, 4294901760
      %v5943 = vsub.f32 %v978, %v5942
      %v5944 = vand.u32 %v5943, 4294901760
      %v5945 = vsub.f32 %v5943, %v5944
      %v5946 = vand.u32 %v5945, 4294901760
      %5947 = vmatmul.mubr.f32.gmra.mrb[0].mxu0 %v5946
      %v5948 = vpop.f32.mrb[0].mxu0
      %v5949 = vadd.f32 %v5284, %v5948
      %v5950 = vpop.f32.mrb[0].mxu0
      %v5951 = vand.u32 %v983, 4294901760
      %v5952 = vsub.f32 %v983, %v5951
      %v5953 = vand.u32 %v5952, 4294901760
      %v5954 = vsub.f32 %v5952, %v5953
      %v5955 = vand.u32 %v5954, 4294901760
      %5956 = vmatprep.mubr.f32.mxu0 %v5955
      %v5957 = vand.u32 %v982, 4294901760
      %v5958 = vsub.f32 %v982, %v5957
      %v5959 = vand.u32 %v5958, 4294901760
      %v5960 = vsub.f32 %v5958, %v5959
      %v5961 = vand.u32 %v5960, 4294901760
      %5962 = vmatmul.mubr.f32.gmra.mrb[0].mxu0 %v5961
      %v5963 = vpop.f32.mrb[0].mxu0
      %v5964 = vadd.f32 %v5291, %v5963
      %v5965 = vpop.f32.mrb[0].mxu0
      %v5966 = vand.u32 %v987, 4294901760
      %v5967 = vsub.f32 %v987, %v5966
      %v5968 = vand.u32 %v5967, 4294901760
      %v5969 = vsub.f32 %v5967, %v5968
      %v5970 = vand.u32 %v5969, 4294901760
      %5971 = vmatprep.mubr.f32.mxu0 %v5970
      %v5972 = vand.u32 %v986, 4294901760
      %v5973 = vsub.f32 %v986, %v5972
      %v5974 = vand.u32 %v5973, 4294901760
      %v5975 = vsub.f32 %v5973, %v5974
      %v5976 = vand.u32 %v5975, 4294901760
      %5977 = vmatmul.mubr.f32.gmra.mrb[0].mxu0 %v5976
      %v5978 = vpop.f32.mrb[0].mxu0
      %v5979 = vadd.f32 %v5298, %v5978
      %v5980 = vpop.f32.mrb[0].mxu0
      %v5981 = vand.u32 %v991, 4294901760
      %v5982 = vsub.f32 %v991, %v5981
      %v5983 = vand.u32 %v5982, 4294901760
      %v5984 = vsub.f32 %v5982, %v5983
      %v5985 = vand.u32 %v5984, 4294901760
      %5986 = vmatprep.mubr.f32.mxu0 %v5985
      %v5987 = vand.u32 %v990, 4294901760
      %v5988 = vsub.f32 %v990, %v5987
      %v5989 = vand.u32 %v5988, 4294901760
      %v5990 = vsub.f32 %v5988, %v5989
      %v5991 = vand.u32 %v5990, 4294901760
      %5992 = vmatmul.mubr.f32.gmra.mrb[0].mxu0 %v5991
      %v5993 = vpop.f32.mrb[0].mxu0
      %v5994 = vadd.f32 %v5305, %v5993
      %v5995 = vpop.f32.mrb[0].mxu0
      %v5996 = vand.u32 %v995, 4294901760
      %v5997 = vsub.f32 %v995, %v5996
      %v5998 = vand.u32 %v5997, 4294901760
      %v5999 = vsub.f32 %v5997, %v5998
      %v6000 = vand.u32 %v5999, 4294901760
      %6001 = vmatprep.mubr.f32.mxu0 %v6000
      %v6002 = vand.u32 %v994, 4294901760
      %v6003 = vsub.f32 %v994, %v6002
      %v6004 = vand.u32 %v6003, 4294901760
      %v6005 = vsub.f32 %v6003, %v6004
      %v6006 = vand.u32 %v6005, 4294901760
      %6007 = vmatmul.mubr.f32.gmra.mrb[0].mxu0 %v6006
      %v6008 = vpop.f32.mrb[0].mxu0
      %v6009 = vadd.f32 %v5312, %v6008
      %v6010 = vpop.f32.mrb[0].mxu0
      %v6011 = vand.u32 %v999, 4294901760
      %v6012 = vsub.f32 %v999, %v6011
      %v6013 = vand.u32 %v6012, 4294901760
      %v6014 = vsub.f32 %v6012, %v6013
      %v6015 = vand.u32 %v6014, 4294901760
      %6016 = vmatprep.mubr.f32.mxu0 %v6015
      %v6017 = vand.u32 %v998, 4294901760
      %v6018 = vsub.f32 %v998, %v6017
      %v6019 = vand.u32 %v6018, 4294901760
      %v6020 = vsub.f32 %v6018, %v6019
      %v6021 = vand.u32 %v6020, 4294901760
      %6022 = vmatmul.mubr.f32.gmra.mrb[0].mxu0 %v6021
      %v6023 = vpop.f32.mrb[0].mxu0
      %v6024 = vadd.f32 %v5319, %v6023
      %v6025 = vpop.f32.mrb[0].mxu0
      %v6026 = vand.u32 %v1003, 4294901760
      %v6027 = vsub.f32 %v1003, %v6026
      %v6028 = vand.u32 %v6027, 4294901760
      %v6029 = vsub.f32 %v6027, %v6028
      %v6030 = vand.u32 %v6029, 4294901760
      %6031 = vmatprep.mubr.f32.mxu0 %v6030
      %v6032 = vand.u32 %v1002, 4294901760
      %v6033 = vsub.f32 %v1002, %v6032
      %v6034 = vand.u32 %v6033, 4294901760
      %v6035 = vsub.f32 %v6033, %v6034
      %v6036 = vand.u32 %v6035, 4294901760
      %6037 = vmatmul.mubr.f32.gmra.mrb[0].mxu0 %v6036
      %v6038 = vpop.f32.mrb[0].mxu0
      %v6039 = vadd.f32 %v5326, %v6038
      %v6040 = vpop.f32.mrb[0].mxu0
      %v6041 = vand.u32 %v1007, 4294901760
      %v6042 = vsub.f32 %v1007, %v6041
      %v6043 = vand.u32 %v6042, 4294901760
      %v6044 = vsub.f32 %v6042, %v6043
      %v6045 = vand.u32 %v6044, 4294901760
      %6046 = vmatprep.mubr.f32.mxu0 %v6045
      %v6047 = vand.u32 %v1006, 4294901760
      %v6048 = vsub.f32 %v1006, %v6047
      %v6049 = vand.u32 %v6048, 4294901760
      %v6050 = vsub.f32 %v6048, %v6049
      %v6051 = vand.u32 %v6050, 4294901760
      %6052 = vmatmul.mubr.f32.gmra.mrb[0].mxu0 %v6051
      %v6053 = vpop.f32.mrb[0].mxu0
      %v6054 = vadd.f32 %v5333, %v6053
      %v6055 = vpop.f32.mrb[0].mxu0
      %v6056 = vand.u32 %v1011, 4294901760
      %v6057 = vsub.f32 %v1011, %v6056
      %v6058 = vand.u32 %v6057, 4294901760
      %v6059 = vsub.f32 %v6057, %v6058
      %v6060 = vand.u32 %v6059, 4294901760
      %6061 = vmatprep.mubr.f32.mxu0 %v6060
      %v6062 = vand.u32 %v1010, 4294901760
      %v6063 = vsub.f32 %v1010, %v6062
      %v6064 = vand.u32 %v6063, 4294901760
      %v6065 = vsub.f32 %v6063, %v6064
      %v6066 = vand.u32 %v6065, 4294901760
      %6067 = vmatmul.mubr.f32.gmra.mrb[0].mxu0 %v6066
      %v6068 = vpop.f32.mrb[0].mxu0
      %v6069 = vadd.f32 %v5340, %v6068
      %v6070 = vpop.f32.mrb[0].mxu0
      %v6071 = vand.u32 %v1015, 4294901760
      %v6072 = vsub.f32 %v1015, %v6071
      %v6073 = vand.u32 %v6072, 4294901760
      %v6074 = vsub.f32 %v6072, %v6073
      %v6075 = vand.u32 %v6074, 4294901760
      %6076 = vmatprep.mubr.f32.mxu0 %v6075
      %v6077 = vand.u32 %v1014, 4294901760
      %v6078 = vsub.f32 %v1014, %v6077
      %v6079 = vand.u32 %v6078, 4294901760
      %v6080 = vsub.f32 %v6078, %v6079
      %v6081 = vand.u32 %v6080, 4294901760
      %6082 = vmatmul.mubr.f32.gmra.mrb[0].mxu0 %v6081
      %v6083 = vpop.f32.mrb[0].mxu0
      %v6084 = vadd.f32 %v5347, %v6083
      %v6085 = vpop.f32.mrb[0].mxu0
      %v6086 = vand.u32 %v1019, 4294901760
      %v6087 = vsub.f32 %v1019, %v6086
      %v6088 = vand.u32 %v6087, 4294901760
      %v6089 = vsub.f32 %v6087, %v6088
      %v6090 = vand.u32 %v6089, 4294901760
      %6091 = vmatprep.mubr.f32.mxu0 %v6090
      %v6092 = vand.u32 %v1018, 4294901760
      %v6093 = vsub.f32 %v1018, %v6092
      %v6094 = vand.u32 %v6093, 4294901760
      %v6095 = vsub.f32 %v6093, %v6094
      %v6096 = vand.u32 %v6095, 4294901760
      %6097 = vmatmul.mubr.f32.gmra.mrb[0].mxu0 %v6096
      %v6098 = vpop.f32.mrb[0].mxu0
      %v6099 = vadd.f32 %v5354, %v6098
      %v6100 = vpop.f32.mrb[0].mxu0
      %v6101 = vand.u32 %v1023, 4294901760
      %v6102 = vsub.f32 %v1023, %v6101
      %v6103 = vand.u32 %v6102, 4294901760
      %v6104 = vsub.f32 %v6102, %v6103
      %v6105 = vand.u32 %v6104, 4294901760
      %6106 = vmatprep.mubr.f32.mxu0 %v6105
      %v6107 = vand.u32 %v1022, 4294901760
      %v6108 = vsub.f32 %v1022, %v6107
      %v6109 = vand.u32 %v6108, 4294901760
      %v6110 = vsub.f32 %v6108, %v6109
      %v6111 = vand.u32 %v6110, 4294901760
      %6112 = vmatmul.mubr.f32.gmra.mrb[0].mxu0 %v6111
      %v6113 = vpop.f32.mrb[0].mxu0
      %v6114 = vadd.f32 %v5361, %v6113
      %v6115 = vpop.f32.mrb[0].mxu0
      %v6116 = vand.u32 %v1027, 4294901760
      %v6117 = vsub.f32 %v1027, %v6116
      %v6118 = vand.u32 %v6117, 4294901760
      %v6119 = vsub.f32 %v6117, %v6118
      %v6120 = vand.u32 %v6119, 4294901760
      %6121 = vmatprep.mubr.f32.mxu0 %v6120
      %v6122 = vand.u32 %v1026, 4294901760
      %v6123 = vsub.f32 %v1026, %v6122
      %v6124 = vand.u32 %v6123, 4294901760
      %v6125 = vsub.f32 %v6123, %v6124
      %v6126 = vand.u32 %v6125, 4294901760
      %6127 = vmatmul.mubr.f32.gmra.mrb[0].mxu0 %v6126
      %v6128 = vpop.f32.mrb[0].mxu0
      %v6129 = vadd.f32 %v5368, %v6128
      %v6130 = vpop.f32.mrb[0].mxu0
      %v6131 = vand.u32 %v1031, 4294901760
      %v6132 = vsub.f32 %v1031, %v6131
      %v6133 = vand.u32 %v6132, 4294901760
      %v6134 = vsub.f32 %v6132, %v6133
      %v6135 = vand.u32 %v6134, 4294901760
      %6136 = vmatprep.mubr.f32.mxu0 %v6135
      %v6137 = vand.u32 %v1030, 4294901760
      %v6138 = vsub.f32 %v1030, %v6137
      %v6139 = vand.u32 %v6138, 4294901760
      %v6140 = vsub.f32 %v6138, %v6139
      %v6141 = vand.u32 %v6140, 4294901760
      %6142 = vmatmul.mubr.f32.gmra.mrb[0].mxu0 %v6141
      %v6143 = vpop.f32.mrb[0].mxu0
      %v6144 = vadd.f32 %v5375, %v6143
      %v6145 = vpop.f32.mrb[0].mxu0
      %v6146 = vand.u32 %v1035, 4294901760
      %v6147 = vsub.f32 %v1035, %v6146
      %v6148 = vand.u32 %v6147, 4294901760
      %v6149 = vsub.f32 %v6147, %v6148
      %v6150 = vand.u32 %v6149, 4294901760
      %6151 = vmatprep.mubr.f32.mxu0 %v6150
      %v6152 = vand.u32 %v1034, 4294901760
      %v6153 = vsub.f32 %v1034, %v6152
      %v6154 = vand.u32 %v6153, 4294901760
      %v6155 = vsub.f32 %v6153, %v6154
      %v6156 = vand.u32 %v6155, 4294901760
      %6157 = vmatmul.mubr.f32.gmra.mrb[0].mxu0 %v6156
      %v6158 = vpop.f32.mrb[0].mxu0
      %v6159 = vadd.f32 %v5382, %v6158
      %v6160 = vpop.f32.mrb[0].mxu0
      %v6161 = vand.u32 %v1039, 4294901760
      %v6162 = vsub.f32 %v1039, %v6161
      %v6163 = vand.u32 %v6162, 4294901760
      %v6164 = vsub.f32 %v6162, %v6163
      %v6165 = vand.u32 %v6164, 4294901760
      %6166 = vmatprep.mubr.f32.mxu0 %v6165
      %v6167 = vand.u32 %v1038, 4294901760
      %v6168 = vsub.f32 %v1038, %v6167
      %v6169 = vand.u32 %v6168, 4294901760
      %v6170 = vsub.f32 %v6168, %v6169
      %v6171 = vand.u32 %v6170, 4294901760
      %6172 = vmatmul.mubr.f32.gmra.mrb[0].mxu0 %v6171
      %v6173 = vpop.f32.mrb[0].mxu0
      %v6174 = vadd.f32 %v5389, %v6173
      %v6175 = vpop.f32.mrb[0].mxu0
      %v6176 = vand.u32 %v1043, 4294901760
      %v6177 = vsub.f32 %v1043, %v6176
      %v6178 = vand.u32 %v6177, 4294901760
      %v6179 = vsub.f32 %v6177, %v6178
      %v6180 = vand.u32 %v6179, 4294901760
      %6181 = vmatprep.mubr.f32.mxu0 %v6180
      %v6182 = vand.u32 %v1042, 4294901760
      %v6183 = vsub.f32 %v1042, %v6182
      %v6184 = vand.u32 %v6183, 4294901760
      %v6185 = vsub.f32 %v6183, %v6184
      %v6186 = vand.u32 %v6185, 4294901760
      %6187 = vmatmul.mubr.f32.gmra.mrb[0].mxu0 %v6186
      %v6188 = vpop.f32.mrb[0].mxu0
      %v6189 = vadd.f32 %v5396, %v6188
      %v6190 = vpop.f32.mrb[0].mxu0
      %v6191 = vand.u32 %v1047, 4294901760
      %v6192 = vsub.f32 %v1047, %v6191
      %v6193 = vand.u32 %v6192, 4294901760
      %v6194 = vsub.f32 %v6192, %v6193
      %v6195 = vand.u32 %v6194, 4294901760
      %6196 = vmatprep.mubr.f32.mxu0 %v6195
      %v6197 = vand.u32 %v1046, 4294901760
      %v6198 = vsub.f32 %v1046, %v6197
      %v6199 = vand.u32 %v6198, 4294901760
      %v6200 = vsub.f32 %v6198, %v6199
      %v6201 = vand.u32 %v6200, 4294901760
      %6202 = vmatmul.mubr.f32.gmra.mrb[0].mxu0 %v6201
      %v6203 = vpop.f32.mrb[0].mxu0
      %v6204 = vadd.f32 %v5403, %v6203
      %v6205 = vpop.f32.mrb[0].mxu0
      %v6206 = vand.u32 %v1051, 4294901760
      %v6207 = vsub.f32 %v1051, %v6206
      %v6208 = vand.u32 %v6207, 4294901760
      %v6209 = vsub.f32 %v6207, %v6208
      %v6210 = vand.u32 %v6209, 4294901760
      %6211 = vmatprep.mubr.f32.mxu0 %v6210
      %v6212 = vand.u32 %v1050, 4294901760
      %v6213 = vsub.f32 %v1050, %v6212
      %v6214 = vand.u32 %v6213, 4294901760
      %v6215 = vsub.f32 %v6213, %v6214
      %v6216 = vand.u32 %v6215, 4294901760
      %6217 = vmatmul.mubr.f32.gmra.mrb[0].mxu0 %v6216
      %v6218 = vpop.f32.mrb[0].mxu0
      %v6219 = vadd.f32 %v5410, %v6218
      %v6220 = vpop.f32.mrb[0].mxu0
      %v6221 = vand.u32 %v1055, 4294901760
      %v6222 = vsub.f32 %v1055, %v6221
      %v6223 = vand.u32 %v6222, 4294901760
      %v6224 = vsub.f32 %v6222, %v6223
      %v6225 = vand.u32 %v6224, 4294901760
      %6226 = vmatprep.mubr.f32.mxu0 %v6225
      %v6227 = vand.u32 %v1054, 4294901760
      %v6228 = vsub.f32 %v1054, %v6227
      %v6229 = vand.u32 %v6228, 4294901760
      %v6230 = vsub.f32 %v6228, %v6229
      %v6231 = vand.u32 %v6230, 4294901760
      %6232 = vmatmul.mubr.f32.gmra.mrb[0].mxu0 %v6231
      %v6233 = vpop.f32.mrb[0].mxu0
      %v6234 = vadd.f32 %v5417, %v6233
      %v6235 = vpop.f32.mrb[0].mxu0
      %v6236 = vand.u32 %v1059, 4294901760
      %v6237 = vsub.f32 %v1059, %v6236
      %v6238 = vand.u32 %v6237, 4294901760
      %v6239 = vsub.f32 %v6237, %v6238
      %v6240 = vand.u32 %v6239, 4294901760
      %6241 = vmatprep.mubr.f32.mxu0 %v6240
      %v6242 = vand.u32 %v1058, 4294901760
      %v6243 = vsub.f32 %v1058, %v6242
      %v6244 = vand.u32 %v6243, 4294901760
      %v6245 = vsub.f32 %v6243, %v6244
      %v6246 = vand.u32 %v6245, 4294901760
      %6247 = vmatmul.mubr.f32.gmra.mrb[0].mxu0 %v6246
      %v6248 = vpop.f32.mrb[0].mxu0
      %v6249 = vadd.f32 %v5424, %v6248
      %v6250 = vpop.f32.mrb[0].mxu0
      %v6251 = vand.u32 %v1063, 4294901760
      %v6252 = vsub.f32 %v1063, %v6251
      %v6253 = vand.u32 %v6252, 4294901760
      %v6254 = vsub.f32 %v6252, %v6253
      %v6255 = vand.u32 %v6254, 4294901760
      %6256 = vmatprep.mubr.f32.mxu0 %v6255
      %v6257 = vand.u32 %v1062, 4294901760
      %v6258 = vsub.f32 %v1062, %v6257
      %v6259 = vand.u32 %v6258, 4294901760
      %v6260 = vsub.f32 %v6258, %v6259
      %v6261 = vand.u32 %v6260, 4294901760
      %6262 = vmatmul.mubr.f32.gmra.mrb[0].mxu0 %v6261
      %v6263 = vpop.f32.mrb[0].mxu0
      %v6264 = vadd.f32 %v5431, %v6263
      %v6265 = vpop.f32.mrb[0].mxu0
      %v6266 = vand.u32 %v1067, 4294901760
      %v6267 = vsub.f32 %v1067, %v6266
      %v6268 = vand.u32 %v6267, 4294901760
      %v6269 = vsub.f32 %v6267, %v6268
      %v6270 = vand.u32 %v6269, 4294901760
      %6271 = vmatprep.mubr.f32.mxu0 %v6270
      %v6272 = vand.u32 %v1066, 4294901760
      %v6273 = vsub.f32 %v1066, %v6272
      %v6274 = vand.u32 %v6273, 4294901760
      %v6275 = vsub.f32 %v6273, %v6274
      %v6276 = vand.u32 %v6275, 4294901760
      %6277 = vmatmul.mubr.f32.gmra.mrb[0].mxu0 %v6276
      %v6278 = vpop.f32.mrb[0].mxu0
      %v6279 = vadd.f32 %v5438, %v6278
      %v6280 = vpop.f32.mrb[0].mxu0
      %v6281 = vand.u32 %v1071, 4294901760
      %v6282 = vsub.f32 %v1071, %v6281
      %v6283 = vand.u32 %v6282, 4294901760
      %v6284 = vsub.f32 %v6282, %v6283
      %v6285 = vand.u32 %v6284, 4294901760
      %6286 = vmatprep.mubr.f32.mxu0 %v6285
      %v6287 = vand.u32 %v1070, 4294901760
      %v6288 = vsub.f32 %v1070, %v6287
      %v6289 = vand.u32 %v6288, 4294901760
      %v6290 = vsub.f32 %v6288, %v6289
      %v6291 = vand.u32 %v6290, 4294901760
      %6292 = vmatmul.mubr.f32.gmra.mrb[0].mxu0 %v6291
      %v6293 = vpop.f32.mrb[0].mxu0
      %v6294 = vadd.f32 %v5445, %v6293
      %v6295 = vpop.f32.mrb[0].mxu0
      %v6296 = vand.u32 %v1075, 4294901760
      %v6297 = vsub.f32 %v1075, %v6296
      %v6298 = vand.u32 %v6297, 4294901760
      %v6299 = vsub.f32 %v6297, %v6298
      %v6300 = vand.u32 %v6299, 4294901760
      %6301 = vmatprep.mubr.f32.mxu0 %v6300
      %v6302 = vand.u32 %v1074, 4294901760
      %v6303 = vsub.f32 %v1074, %v6302
      %v6304 = vand.u32 %v6303, 4294901760
      %v6305 = vsub.f32 %v6303, %v6304
      %v6306 = vand.u32 %v6305, 4294901760
      %6307 = vmatmul.mubr.f32.gmra.mrb[0].mxu0 %v6306
      %v6308 = vpop.f32.mrb[0].mxu0
      %v6309 = vadd.f32 %v5452, %v6308
      %v6310 = vpop.f32.mrb[0].mxu0
      %v6311 = vand.u32 %v1079, 4294901760
      %v6312 = vsub.f32 %v1079, %v6311
      %v6313 = vand.u32 %v6312, 4294901760
      %v6314 = vsub.f32 %v6312, %v6313
      %v6315 = vand.u32 %v6314, 4294901760
      %6316 = vmatprep.mubr.f32.mxu0 %v6315
      %v6317 = vand.u32 %v1078, 4294901760
      %v6318 = vsub.f32 %v1078, %v6317
      %v6319 = vand.u32 %v6318, 4294901760
      %v6320 = vsub.f32 %v6318, %v6319
      %v6321 = vand.u32 %v6320, 4294901760
      %6322 = vmatmul.mubr.f32.gmra.mrb[0].mxu0 %v6321
      %v6323 = vpop.f32.mrb[0].mxu0
      %v6324 = vadd.f32 %v5459, %v6323
      %v6325 = vpop.f32.mrb[0].mxu0
      %v6326 = vand.u32 %v1083, 4294901760
      %v6327 = vsub.f32 %v1083, %v6326
      %v6328 = vand.u32 %v6327, 4294901760
      %v6329 = vsub.f32 %v6327, %v6328
      %v6330 = vand.u32 %v6329, 4294901760
      %6331 = vmatprep.mubr.f32.mxu0 %v6330
      %v6332 = vand.u32 %v1082, 4294901760
      %v6333 = vsub.f32 %v1082, %v6332
      %v6334 = vand.u32 %v6333, 4294901760
      %v6335 = vsub.f32 %v6333, %v6334
      %v6336 = vand.u32 %v6335, 4294901760
      %6337 = vmatmul.mubr.f32.gmra.mrb[0].mxu0 %v6336
      %v6338 = vpop.f32.mrb[0].mxu0
      %v6339 = vadd.f32 %v5466, %v6338
      %v6340 = vpop.f32.mrb[0].mxu0
      %v6341 = vand.u32 %v1087, 4294901760
      %v6342 = vsub.f32 %v1087, %v6341
      %v6343 = vand.u32 %v6342, 4294901760
      %v6344 = vsub.f32 %v6342, %v6343
      %v6345 = vand.u32 %v6344, 4294901760
      %6346 = vmatprep.mubr.f32.mxu0 %v6345
      %v6347 = vand.u32 %v1086, 4294901760
      %v6348 = vsub.f32 %v1086, %v6347
      %v6349 = vand.u32 %v6348, 4294901760
      %v6350 = vsub.f32 %v6348, %v6349
      %v6351 = vand.u32 %v6350, 4294901760
      %6352 = vmatmul.mubr.f32.gmra.mrb[0].mxu0 %v6351
      %v6353 = vpop.f32.mrb[0].mxu0
      %v6354 = vadd.f32 %v5473, %v6353
      %v6355 = vpop.f32.mrb[0].mxu0
      %v6356 = vand.u32 %v1091, 4294901760
      %v6357 = vsub.f32 %v1091, %v6356
      %v6358 = vand.u32 %v6357, 4294901760
      %v6359 = vsub.f32 %v6357, %v6358
      %v6360 = vand.u32 %v6359, 4294901760
      %6361 = vmatprep.mubr.f32.mxu0 %v6360
      %v6362 = vand.u32 %v1090, 4294901760
      %v6363 = vsub.f32 %v1090, %v6362
      %v6364 = vand.u32 %v6363, 4294901760
      %v6365 = vsub.f32 %v6363, %v6364
      %v6366 = vand.u32 %v6365, 4294901760
      %6367 = vmatmul.mubr.f32.gmra.mrb[0].mxu0 %v6366
      %v6368 = vpop.f32.mrb[0].mxu0
      %v6369 = vadd.f32 %v5480, %v6368
      %v6370 = vpop.f32.mrb[0].mxu0
      %v6371 = vand.u32 %v1095, 4294901760
      %v6372 = vsub.f32 %v1095, %v6371
      %v6373 = vand.u32 %v6372, 4294901760
      %v6374 = vsub.f32 %v6372, %v6373
      %v6375 = vand.u32 %v6374, 4294901760
      %6376 = vmatprep.mubr.f32.mxu0 %v6375
      %v6377 = vand.u32 %v1094, 4294901760
      %v6378 = vsub.f32 %v1094, %v6377
      %v6379 = vand.u32 %v6378, 4294901760
      %v6380 = vsub.f32 %v6378, %v6379
      %v6381 = vand.u32 %v6380, 4294901760
      %6382 = vmatmul.mubr.f32.gmra.mrb[0].mxu0 %v6381
      %v6383 = vpop.f32.mrb[0].mxu0
      %v6384 = vadd.f32 %v5487, %v6383
      %v6385 = vpop.f32.mrb[0].mxu0
      %v6386 = vand.u32 %v1099, 4294901760
      %v6387 = vsub.f32 %v1099, %v6386
      %v6388 = vand.u32 %v6387, 4294901760
      %v6389 = vsub.f32 %v6387, %v6388
      %v6390 = vand.u32 %v6389, 4294901760
      %6391 = vmatprep.mubr.f32.mxu0 %v6390
      %v6392 = vand.u32 %v1098, 4294901760
      %v6393 = vsub.f32 %v1098, %v6392
      %v6394 = vand.u32 %v6393, 4294901760
      %v6395 = vsub.f32 %v6393, %v6394
      %v6396 = vand.u32 %v6395, 4294901760
      %6397 = vmatmul.mubr.f32.gmra.mrb[0].mxu0 %v6396
      %v6398 = vpop.f32.mrb[0].mxu0
      %v6399 = vadd.f32 %v5494, %v6398
      %v6400 = vpop.f32.mrb[0].mxu0
      %v6401 = vand.u32 %v1103, 4294901760
      %v6402 = vsub.f32 %v1103, %v6401
      %v6403 = vand.u32 %v6402, 4294901760
      %v6404 = vsub.f32 %v6402, %v6403
      %v6405 = vand.u32 %v6404, 4294901760
      %6406 = vmatprep.mubr.f32.mxu0 %v6405
      %v6407 = vand.u32 %v1102, 4294901760
      %v6408 = vsub.f32 %v1102, %v6407
      %v6409 = vand.u32 %v6408, 4294901760
      %v6410 = vsub.f32 %v6408, %v6409
      %v6411 = vand.u32 %v6410, 4294901760
      %6412 = vmatmul.mubr.f32.gmra.mrb[0].mxu0 %v6411
      %v6413 = vpop.f32.mrb[0].mxu0
      %v6414 = vadd.f32 %v5501, %v6413
      %v6415 = vpop.f32.mrb[0].mxu0
      %v6416 = vand.u32 %v1107, 4294901760
      %v6417 = vsub.f32 %v1107, %v6416
      %v6418 = vand.u32 %v6417, 4294901760
      %v6419 = vsub.f32 %v6417, %v6418
      %v6420 = vand.u32 %v6419, 4294901760
      %6421 = vmatprep.mubr.f32.mxu0 %v6420
      %v6422 = vand.u32 %v1106, 4294901760
      %v6423 = vsub.f32 %v1106, %v6422
      %v6424 = vand.u32 %v6423, 4294901760
      %v6425 = vsub.f32 %v6423, %v6424
      %v6426 = vand.u32 %v6425, 4294901760
      %6427 = vmatmul.mubr.f32.gmra.mrb[0].mxu0 %v6426
      %v6428 = vpop.f32.mrb[0].mxu0
      %v6429 = vadd.f32 %v5508, %v6428
      %v6430 = vpop.f32.mrb[0].mxu0
      %v6431 = vand.u32 %v1111, 4294901760
      %v6432 = vsub.f32 %v1111, %v6431
      %v6433 = vand.u32 %v6432, 4294901760
      %v6434 = vsub.f32 %v6432, %v6433
      %v6435 = vand.u32 %v6434, 4294901760
      %6436 = vmatprep.mubr.f32.mxu0 %v6435
      %v6437 = vand.u32 %v1110, 4294901760
      %v6438 = vsub.f32 %v1110, %v6437
      %v6439 = vand.u32 %v6438, 4294901760
      %v6440 = vsub.f32 %v6438, %v6439
      %v6441 = vand.u32 %v6440, 4294901760
      %6442 = vmatmul.mubr.f32.gmra.mrb[0].mxu0 %v6441
      %v6443 = vpop.f32.mrb[0].mxu0
      %v6444 = vadd.f32 %v5515, %v6443
      %v6445 = vpop.f32.mrb[0].mxu0
      %v6446 = vand.u32 %v1115, 4294901760
      %v6447 = vsub.f32 %v1115, %v6446
      %v6448 = vand.u32 %v6447, 4294901760
      %v6449 = vsub.f32 %v6447, %v6448
      %v6450 = vand.u32 %v6449, 4294901760
      %6451 = vmatprep.mubr.f32.mxu0 %v6450
      %v6452 = vand.u32 %v1114, 4294901760
      %v6453 = vsub.f32 %v1114, %v6452
      %v6454 = vand.u32 %v6453, 4294901760
      %v6455 = vsub.f32 %v6453, %v6454
      %v6456 = vand.u32 %v6455, 4294901760
      %6457 = vmatmul.mubr.f32.gmra.mrb[0].mxu0 %v6456
      %v6458 = vpop.f32.mrb[0].mxu0
      %v6459 = vadd.f32 %v5522, %v6458
      %v6460 = vpop.f32.mrb[0].mxu0
      %v6461 = vand.u32 %v1119, 4294901760
      %v6462 = vsub.f32 %v1119, %v6461
      %v6463 = vand.u32 %v6462, 4294901760
      %v6464 = vsub.f32 %v6462, %v6463
      %v6465 = vand.u32 %v6464, 4294901760
      %6466 = vmatprep.mubr.f32.mxu0 %v6465
      %v6467 = vand.u32 %v1118, 4294901760
      %v6468 = vsub.f32 %v1118, %v6467
      %v6469 = vand.u32 %v6468, 4294901760
      %v6470 = vsub.f32 %v6468, %v6469
      %v6471 = vand.u32 %v6470, 4294901760
      %6472 = vmatmul.mubr.f32.gmra.mrb[0].mxu0 %v6471
      %v6473 = vpop.f32.mrb[0].mxu0
      %v6474 = vadd.f32 %v5529, %v6473
      %v6475 = vpop.f32.mrb[0].mxu0
      %v6476 = vand.u32 %v1123, 4294901760
      %v6477 = vsub.f32 %v1123, %v6476
      %v6478 = vand.u32 %v6477, 4294901760
      %v6479 = vsub.f32 %v6477, %v6478
      %v6480 = vand.u32 %v6479, 4294901760
      %6481 = vmatprep.mubr.f32.mxu0 %v6480
      %v6482 = vand.u32 %v1122, 4294901760
      %v6483 = vsub.f32 %v1122, %v6482
      %v6484 = vand.u32 %v6483, 4294901760
      %v6485 = vsub.f32 %v6483, %v6484
      %v6486 = vand.u32 %v6485, 4294901760
      %6487 = vmatmul.mubr.f32.gmra.mrb[0].mxu0 %v6486
      %v6488 = vpop.f32.mrb[0].mxu0
      %v6489 = vadd.f32 %v5536, %v6488
      %v6490 = vpop.f32.mrb[0].mxu0
      %v6491 = vand.u32 %v1127, 4294901760
      %v6492 = vsub.f32 %v1127, %v6491
      %v6493 = vand.u32 %v6492, 4294901760
      %v6494 = vsub.f32 %v6492, %v6493
      %v6495 = vand.u32 %v6494, 4294901760
      %6496 = vmatprep.mubr.f32.mxu0 %v6495
      %v6497 = vand.u32 %v1126, 4294901760
      %v6498 = vsub.f32 %v1126, %v6497
      %v6499 = vand.u32 %v6498, 4294901760
      %v6500 = vsub.f32 %v6498, %v6499
      %v6501 = vand.u32 %v6500, 4294901760
      %6502 = vmatmul.mubr.f32.gmra.mrb[0].mxu0 %v6501
      %v6503 = vpop.f32.mrb[0].mxu0
      %v6504 = vadd.f32 %v5543, %v6503
      %v6505 = vpop.f32.mrb[0].mxu0
      %v6506 = vand.u32 %v1131, 4294901760
      %v6507 = vsub.f32 %v1131, %v6506
      %v6508 = vand.u32 %v6507, 4294901760
      %v6509 = vsub.f32 %v6507, %v6508
      %v6510 = vand.u32 %v6509, 4294901760
      %6511 = vmatprep.mubr.f32.mxu0 %v6510
      %v6512 = vand.u32 %v1130, 4294901760
      %v6513 = vsub.f32 %v1130, %v6512
      %v6514 = vand.u32 %v6513, 4294901760
      %v6515 = vsub.f32 %v6513, %v6514
      %v6516 = vand.u32 %v6515, 4294901760
      %6517 = vmatmul.mubr.f32.gmra.mrb[0].mxu0 %v6516
      %v6518 = vpop.f32.mrb[0].mxu0
      %v6519 = vadd.f32 %v5550, %v6518
      %v6520 = vpop.f32.mrb[0].mxu0
      %v6521 = vand.u32 %v1135, 4294901760
      %v6522 = vsub.f32 %v1135, %v6521
      %v6523 = vand.u32 %v6522, 4294901760
      %v6524 = vsub.f32 %v6522, %v6523
      %v6525 = vand.u32 %v6524, 4294901760
      %6526 = vmatprep.mubr.f32.mxu0 %v6525
      %v6527 = vand.u32 %v1134, 4294901760
      %v6528 = vsub.f32 %v1134, %v6527
      %v6529 = vand.u32 %v6528, 4294901760
      %v6530 = vsub.f32 %v6528, %v6529
      %v6531 = vand.u32 %v6530, 4294901760
      %6532 = vmatmul.mubr.f32.gmra.mrb[0].mxu0 %v6531
      %v6533 = vpop.f32.mrb[0].mxu0
      %v6534 = vadd.f32 %v5557, %v6533
      %v6535 = vpop.f32.mrb[0].mxu0
      %v6536 = vand.u32 %v1139, 4294901760
      %v6537 = vsub.f32 %v1139, %v6536
      %v6538 = vand.u32 %v6537, 4294901760
      %v6539 = vsub.f32 %v6537, %v6538
      %v6540 = vand.u32 %v6539, 4294901760
      %6541 = vmatprep.mubr.f32.mxu0 %v6540
      %v6542 = vand.u32 %v1138, 4294901760
      %v6543 = vsub.f32 %v1138, %v6542
      %v6544 = vand.u32 %v6543, 4294901760
      %v6545 = vsub.f32 %v6543, %v6544
      %v6546 = vand.u32 %v6545, 4294901760
      %6547 = vmatmul.mubr.f32.gmra.mrb[0].mxu0 %v6546
      %v6548 = vpop.f32.mrb[0].mxu0
      %v6549 = vadd.f32 %v5564, %v6548
      %v6550 = vpop.f32.mrb[0].mxu0
      %v6551 = vand.u32 %v1143, 4294901760
      %v6552 = vsub.f32 %v1143, %v6551
      %v6553 = vand.u32 %v6552, 4294901760
      %v6554 = vsub.f32 %v6552, %v6553
      %v6555 = vand.u32 %v6554, 4294901760
      %6556 = vmatprep.mubr.f32.mxu0 %v6555
      %v6557 = vand.u32 %v1142, 4294901760
      %v6558 = vsub.f32 %v1142, %v6557
      %v6559 = vand.u32 %v6558, 4294901760
      %v6560 = vsub.f32 %v6558, %v6559
      %v6561 = vand.u32 %v6560, 4294901760
      %6562 = vmatmul.mubr.f32.gmra.mrb[0].mxu0 %v6561
      %v6563 = vpop.f32.mrb[0].mxu0
      %v6564 = vadd.f32 %v5571, %v6563
      %v6565 = vpop.f32.mrb[0].mxu0
      %v6566 = vand.u32 %v1147, 4294901760
      %v6567 = vsub.f32 %v1147, %v6566
      %v6568 = vand.u32 %v6567, 4294901760
      %v6569 = vsub.f32 %v6567, %v6568
      %v6570 = vand.u32 %v6569, 4294901760
      %6571 = vmatprep.mubr.f32.mxu0 %v6570
      %v6572 = vand.u32 %v1146, 4294901760
      %v6573 = vsub.f32 %v1146, %v6572
      %v6574 = vand.u32 %v6573, 4294901760
      %v6575 = vsub.f32 %v6573, %v6574
      %v6576 = vand.u32 %v6575, 4294901760
      %6577 = vmatmul.mubr.f32.gmra.mrb[0].mxu0 %v6576
      %v6578 = vpop.f32.mrb[0].mxu0
      %v6579 = vadd.f32 %v5578, %v6578
      %v6580 = vpop.f32.mrb[0].mxu0
      %v6581 = vand.u32 %v1151, 4294901760
      %v6582 = vsub.f32 %v1151, %v6581
      %v6583 = vand.u32 %v6582, 4294901760
      %v6584 = vsub.f32 %v6582, %v6583
      %v6585 = vand.u32 %v6584, 4294901760
      %6586 = vmatprep.mubr.f32.mxu0 %v6585
      %v6587 = vand.u32 %v1150, 4294901760
      %v6588 = vsub.f32 %v1150, %v6587
      %v6589 = vand.u32 %v6588, 4294901760
      %v6590 = vsub.f32 %v6588, %v6589
      %v6591 = vand.u32 %v6590, 4294901760
      %6592 = vmatmul.mubr.f32.gmra.mrb[0].mxu0 %v6591
      %v6593 = vpop.f32.mrb[0].mxu0
      %v6594 = vadd.f32 %v5585, %v6593
      %v6595 = vpop.f32.mrb[0].mxu0
      %v6596 = vand.u32 %v1155, 4294901760
      %v6597 = vsub.f32 %v1155, %v6596
      %v6598 = vand.u32 %v6597, 4294901760
      %v6599 = vsub.f32 %v6597, %v6598
      %v6600 = vand.u32 %v6599, 4294901760
      %6601 = vmatprep.mubr.f32.mxu0 %v6600
      %v6602 = vand.u32 %v1154, 4294901760
      %v6603 = vsub.f32 %v1154, %v6602
      %v6604 = vand.u32 %v6603, 4294901760
      %v6605 = vsub.f32 %v6603, %v6604
      %v6606 = vand.u32 %v6605, 4294901760
      %6607 = vmatmul.mubr.f32.gmra.mrb[0].mxu0 %v6606
      %v6608 = vpop.f32.mrb[0].mxu0
      %v6609 = vadd.f32 %v5592, %v6608
      %v6610 = vpop.f32.mrb[0].mxu0
      %v6611 = vand.u32 %v1159, 4294901760
      %v6612 = vsub.f32 %v1159, %v6611
      %v6613 = vand.u32 %v6612, 4294901760
      %v6614 = vsub.f32 %v6612, %v6613
      %v6615 = vand.u32 %v6614, 4294901760
      %6616 = vmatprep.mubr.f32.mxu0 %v6615
      %v6617 = vand.u32 %v1158, 4294901760
      %v6618 = vsub.f32 %v1158, %v6617
      %v6619 = vand.u32 %v6618, 4294901760
      %v6620 = vsub.f32 %v6618, %v6619
      %v6621 = vand.u32 %v6620, 4294901760
      %6622 = vmatmul.mubr.f32.gmra.mrb[0].mxu0 %v6621
      %v6623 = vpop.f32.mrb[0].mxu0
      %v6624 = vadd.f32 %v5599, %v6623
      %v6625 = vpop.f32.mrb[0].mxu0
      %v6626 = vand.u32 %v1163, 4294901760
      %v6627 = vsub.f32 %v1163, %v6626
      %v6628 = vand.u32 %v6627, 4294901760
      %v6629 = vsub.f32 %v6627, %v6628
      %v6630 = vand.u32 %v6629, 4294901760
      %6631 = vmatprep.mubr.f32.mxu0 %v6630
      %v6632 = vand.u32 %v1162, 4294901760
      %v6633 = vsub.f32 %v1162, %v6632
      %v6634 = vand.u32 %v6633, 4294901760
      %v6635 = vsub.f32 %v6633, %v6634
      %v6636 = vand.u32 %v6635, 4294901760
      %6637 = vmatmul.mubr.f32.gmra.mrb[0].mxu0 %v6636
      %v6638 = vpop.f32.mrb[0].mxu0
      %v6639 = vadd.f32 %v5606, %v6638
      %v6640 = vpop.f32.mrb[0].mxu0
      %v6641 = vand.u32 %v1167, 4294901760
      %v6642 = vsub.f32 %v1167, %v6641
      %v6643 = vand.u32 %v6642, 4294901760
      %v6644 = vsub.f32 %v6642, %v6643
      %v6645 = vand.u32 %v6644, 4294901760
      %6646 = vmatprep.mubr.f32.mxu0 %v6645
      %v6647 = vand.u32 %v1166, 4294901760
      %v6648 = vsub.f32 %v1166, %v6647
      %v6649 = vand.u32 %v6648, 4294901760
      %v6650 = vsub.f32 %v6648, %v6649
      %v6651 = vand.u32 %v6650, 4294901760
      %6652 = vmatmul.mubr.f32.gmra.mrb[0].mxu0 %v6651
      %v6653 = vpop.f32.mrb[0].mxu0
      %v6654 = vadd.f32 %v5613, %v6653
      %v6655 = vpop.f32.mrb[0].mxu0
      %v6656 = vand.u32 %v1171, 4294901760
      %v6657 = vsub.f32 %v1171, %v6656
      %v6658 = vand.u32 %v6657, 4294901760
      %v6659 = vsub.f32 %v6657, %v6658
      %v6660 = vand.u32 %v6659, 4294901760
      %6661 = vmatprep.mubr.f32.mxu0 %v6660
      %v6662 = vand.u32 %v1170, 4294901760
      %v6663 = vsub.f32 %v1170, %v6662
      %v6664 = vand.u32 %v6663, 4294901760
      %v6665 = vsub.f32 %v6663, %v6664
      %v6666 = vand.u32 %v6665, 4294901760
      %6667 = vmatmul.mubr.f32.gmra.mrb[0].mxu0 %v6666
      %v6668 = vpop.f32.mrb[0].mxu0
      %v6669 = vadd.f32 %v5620, %v6668
      %v6670 = vpop.f32.mrb[0].mxu0
      %v6671 = vand.u32 %v1175, 4294901760
      %v6672 = vsub.f32 %v1175, %v6671
      %v6673 = vand.u32 %v6672, 4294901760
      %v6674 = vsub.f32 %v6672, %v6673
      %v6675 = vand.u32 %v6674, 4294901760
      %6676 = vmatprep.mubr.f32.mxu0 %v6675
      %v6677 = vand.u32 %v1174, 4294901760
      %v6678 = vsub.f32 %v1174, %v6677
      %v6679 = vand.u32 %v6678, 4294901760
      %v6680 = vsub.f32 %v6678, %v6679
      %v6681 = vand.u32 %v6680, 4294901760
      %6682 = vmatmul.mubr.f32.gmra.mrb[0].mxu0 %v6681
      %v6683 = vpop.f32.mrb[0].mxu0
      %v6684 = vadd.f32 %v5627, %v6683
      %v6685 = vpop.f32.mrb[0].mxu0
      %6686 = vdwg.mxu0
      %6687 = vmatprep.subr.mxu0 0.0
      %v6688 = vand.u32 %v1208, 4294901760
      %v6689 = vsub.f32 %v1208, %v6688
      %v6690 = vand.u32 %v6689, 4294901760
      %v6691 = vsub.f32 %v6689, %v6690
      %v6692 = vand.u32 %v6691, 4294901760
      %6693 = vmatpush1.msra.mxu0 %v6692
      %6694 = vmatprep.subr.mxu0 0.0
      %v6695 = vand.u32 %v1209, 4294901760
      %v6696 = vsub.f32 %v1209, %v6695
      %v6697 = vand.u32 %v6696, 4294901760
      %v6698 = vsub.f32 %v6696, %v6697
      %v6699 = vand.u32 %v6698, 4294901760
      %6700 = vmatpush1.msra.mxu0 %v6699
      %6701 = vmatprep.subr.mxu0 0.0
      %v6702 = vand.u32 %v1210, 4294901760
      %v6703 = vsub.f32 %v1210, %v6702
      %v6704 = vand.u32 %v6703, 4294901760
      %v6705 = vsub.f32 %v6703, %v6704
      %v6706 = vand.u32 %v6705, 4294901760
      %6707 = vmatpush1.msra.mxu0 %v6706
      %6708 = vmatprep.subr.mxu0 0.0
      %v6709 = vand.u32 %v1211, 4294901760
      %v6710 = vsub.f32 %v1211, %v6709
      %v6711 = vand.u32 %v6710, 4294901760
      %v6712 = vsub.f32 %v6710, %v6711
      %v6713 = vand.u32 %v6712, 4294901760
      %6714 = vmatpush1.msra.mxu0 %v6713
      %6715 = vmatprep.subr.mxu0 0.0
      %v6716 = vand.u32 %v1212, 4294901760
      %v6717 = vsub.f32 %v1212, %v6716
      %v6718 = vand.u32 %v6717, 4294901760
      %v6719 = vsub.f32 %v6717, %v6718
      %v6720 = vand.u32 %v6719, 4294901760
      %6721 = vmatpush1.msra.mxu0 %v6720
      %6722 = vmatprep.subr.mxu0 0.0
      %v6723 = vand.u32 %v1213, 4294901760
      %v6724 = vsub.f32 %v1213, %v6723
      %v6725 = vand.u32 %v6724, 4294901760
      %v6726 = vsub.f32 %v6724, %v6725
      %v6727 = vand.u32 %v6726, 4294901760
      %6728 = vmatpush1.msra.mxu0 %v6727
      %6729 = vmatprep.subr.mxu0 0.0
      %v6730 = vand.u32 %v1214, 4294901760
      %v6731 = vsub.f32 %v1214, %v6730
      %v6732 = vand.u32 %v6731, 4294901760
      %v6733 = vsub.f32 %v6731, %v6732
      %v6734 = vand.u32 %v6733, 4294901760
      %6735 = vmatpush1.msra.mxu0 %v6734
      %6736 = vmatprep.subr.mxu0 0.0
      %v6737 = vand.u32 %v1215, 4294901760
      %v6738 = vsub.f32 %v1215, %v6737
      %v6739 = vand.u32 %v6738, 4294901760
      %v6740 = vsub.f32 %v6738, %v6739
      %v6741 = vand.u32 %v6740, 4294901760
      %6742 = vmatpush1.msra.mxu0 %v6741
      %6743 = vmatprep.subr.mxu0 0.0
      %v6744 = vand.u32 %v1216, 4294901760
      %v6745 = vsub.f32 %v1216, %v6744
      %v6746 = vand.u32 %v6745, 4294901760
      %v6747 = vsub.f32 %v6745, %v6746
      %v6748 = vand.u32 %v6747, 4294901760
      %6749 = vmatpush1.msra.mxu0 %v6748
      %6750 = vmatprep.subr.mxu0 0.0
      %v6751 = vand.u32 %v1217, 4294901760
      %v6752 = vsub.f32 %v1217, %v6751
      %v6753 = vand.u32 %v6752, 4294901760
      %v6754 = vsub.f32 %v6752, %v6753
      %v6755 = vand.u32 %v6754, 4294901760
      %6756 = vmatpush1.msra.mxu0 %v6755
      %6757 = vmatprep.subr.mxu0 0.0
      %v6758 = vand.u32 %v1218, 4294901760
      %v6759 = vsub.f32 %v1218, %v6758
      %v6760 = vand.u32 %v6759, 4294901760
      %v6761 = vsub.f32 %v6759, %v6760
      %v6762 = vand.u32 %v6761, 4294901760
      %6763 = vmatpush1.msra.mxu0 %v6762
      %6764 = vmatprep.subr.mxu0 0.0
      %v6765 = vand.u32 %v1219, 4294901760
      %v6766 = vsub.f32 %v1219, %v6765
      %v6767 = vand.u32 %v6766, 4294901760
      %v6768 = vsub.f32 %v6766, %v6767
      %v6769 = vand.u32 %v6768, 4294901760
      %6770 = vmatpush1.msra.mxu0 %v6769
      %6771 = vmatprep.subr.mxu0 0.0
      %v6772 = vand.u32 %v1220, 4294901760
      %v6773 = vsub.f32 %v1220, %v6772
      %v6774 = vand.u32 %v6773, 4294901760
      %v6775 = vsub.f32 %v6773, %v6774
      %v6776 = vand.u32 %v6775, 4294901760
      %6777 = vmatpush1.msra.mxu0 %v6776
      %6778 = vmatprep.subr.mxu0 0.0
      %v6779 = vand.u32 %v1221, 4294901760
      %v6780 = vsub.f32 %v1221, %v6779
      %v6781 = vand.u32 %v6780, 4294901760
      %v6782 = vsub.f32 %v6780, %v6781
      %v6783 = vand.u32 %v6782, 4294901760
      %6784 = vmatpush1.msra.mxu0 %v6783
      %6785 = vmatprep.subr.mxu0 0.0
      %v6786 = vand.u32 %v1222, 4294901760
      %v6787 = vsub.f32 %v1222, %v6786
      %v6788 = vand.u32 %v6787, 4294901760
      %v6789 = vsub.f32 %v6787, %v6788
      %v6790 = vand.u32 %v6789, 4294901760
      %6791 = vmatpush1.msra.mxu0 %v6790
      %6792 = vmatprep.subr.mxu0 0.0
      %v6793 = vand.u32 %v1223, 4294901760
      %v6794 = vsub.f32 %v1223, %v6793
      %v6795 = vand.u32 %v6794, 4294901760
      %v6796 = vsub.f32 %v6794, %v6795
      %v6797 = vand.u32 %v6796, 4294901760
      %6798 = vmatpush1.msra.mxu0 %v6797
      %6799 = vmatprep.subr.mxu0 0.0
      %v6800 = vand.u32 %v1224, 4294901760
      %v6801 = vsub.f32 %v1224, %v6800
      %v6802 = vand.u32 %v6801, 4294901760
      %v6803 = vsub.f32 %v6801, %v6802
      %v6804 = vand.u32 %v6803, 4294901760
      %6805 = vmatpush1.msra.mxu0 %v6804
      %6806 = vmatprep.subr.mxu0 0.0
      %v6807 = vand.u32 %v1225, 4294901760
      %v6808 = vsub.f32 %v1225, %v6807
      %v6809 = vand.u32 %v6808, 4294901760
      %v6810 = vsub.f32 %v6808, %v6809
      %v6811 = vand.u32 %v6810, 4294901760
      %6812 = vmatpush1.msra.mxu0 %v6811
      %6813 = vmatprep.subr.mxu0 0.0
      %v6814 = vand.u32 %v1226, 4294901760
      %v6815 = vsub.f32 %v1226, %v6814
      %v6816 = vand.u32 %v6815, 4294901760
      %v6817 = vsub.f32 %v6815, %v6816
      %v6818 = vand.u32 %v6817, 4294901760
      %6819 = vmatpush1.msra.mxu0 %v6818
      %6820 = vmatprep.subr.mxu0 0.0
      %v6821 = vand.u32 %v1227, 4294901760
      %v6822 = vsub.f32 %v1227, %v6821
      %v6823 = vand.u32 %v6822, 4294901760
      %v6824 = vsub.f32 %v6822, %v6823
      %v6825 = vand.u32 %v6824, 4294901760
      %6826 = vmatpush1.msra.mxu0 %v6825
      %6827 = vmatprep.subr.mxu0 0.0
      %v6828 = vand.u32 %v1228, 4294901760
      %v6829 = vsub.f32 %v1228, %v6828
      %v6830 = vand.u32 %v6829, 4294901760
      %v6831 = vsub.f32 %v6829, %v6830
      %v6832 = vand.u32 %v6831, 4294901760
      %6833 = vmatpush1.msra.mxu0 %v6832
      %6834 = vmatprep.subr.mxu0 0.0
      %v6835 = vand.u32 %v1229, 4294901760
      %v6836 = vsub.f32 %v1229, %v6835
      %v6837 = vand.u32 %v6836, 4294901760
      %v6838 = vsub.f32 %v6836, %v6837
      %v6839 = vand.u32 %v6838, 4294901760
      %6840 = vmatpush1.msra.mxu0 %v6839
      %6841 = vmatprep.subr.mxu0 0.0
      %v6842 = vand.u32 %v1230, 4294901760
      %v6843 = vsub.f32 %v1230, %v6842
      %v6844 = vand.u32 %v6843, 4294901760
      %v6845 = vsub.f32 %v6843, %v6844
      %v6846 = vand.u32 %v6845, 4294901760
      %6847 = vmatpush1.msra.mxu0 %v6846
      %6848 = vmatprep.subr.mxu0 0.0
      %v6849 = vand.u32 %v1231, 4294901760
      %v6850 = vsub.f32 %v1231, %v6849
      %v6851 = vand.u32 %v6850, 4294901760
      %v6852 = vsub.f32 %v6850, %v6851
      %v6853 = vand.u32 %v6852, 4294901760
      %6854 = vmatpush1.msra.mxu0 %v6853
      %6855 = vmatprep.subr.mxu0 0.0
      %v6856 = vand.u32 %v1232, 4294901760
      %v6857 = vsub.f32 %v1232, %v6856
      %v6858 = vand.u32 %v6857, 4294901760
      %v6859 = vsub.f32 %v6857, %v6858
      %v6860 = vand.u32 %v6859, 4294901760
      %6861 = vmatpush1.msra.mxu0 %v6860
      %6862 = vmatprep.subr.mxu0 0.0
      %v6863 = vand.u32 %v1233, 4294901760
      %v6864 = vsub.f32 %v1233, %v6863
      %v6865 = vand.u32 %v6864, 4294901760
      %v6866 = vsub.f32 %v6864, %v6865
      %v6867 = vand.u32 %v6866, 4294901760
      %6868 = vmatpush1.msra.mxu0 %v6867
      %6869 = vmatprep.subr.mxu0 0.0
      %v6870 = vand.u32 %v1234, 4294901760
      %v6871 = vsub.f32 %v1234, %v6870
      %v6872 = vand.u32 %v6871, 4294901760
      %v6873 = vsub.f32 %v6871, %v6872
      %v6874 = vand.u32 %v6873, 4294901760
      %6875 = vmatpush1.msra.mxu0 %v6874
      %6876 = vmatprep.subr.mxu0 0.0
      %v6877 = vand.u32 %v1235, 4294901760
      %v6878 = vsub.f32 %v1235, %v6877
      %v6879 = vand.u32 %v6878, 4294901760
      %v6880 = vsub.f32 %v6878, %v6879
      %v6881 = vand.u32 %v6880, 4294901760
      %6882 = vmatpush1.msra.mxu0 %v6881
      %6883 = vmatprep.subr.mxu0 0.0
      %v6884 = vand.u32 %v1236, 4294901760
      %v6885 = vsub.f32 %v1236, %v6884
      %v6886 = vand.u32 %v6885, 4294901760
      %v6887 = vsub.f32 %v6885, %v6886
      %v6888 = vand.u32 %v6887, 4294901760
      %6889 = vmatpush1.msra.mxu0 %v6888
      %6890 = vmatprep.subr.mxu0 0.0
      %v6891 = vand.u32 %v1237, 4294901760
      %v6892 = vsub.f32 %v1237, %v6891
      %v6893 = vand.u32 %v6892, 4294901760
      %v6894 = vsub.f32 %v6892, %v6893
      %v6895 = vand.u32 %v6894, 4294901760
      %6896 = vmatpush1.msra.mxu0 %v6895
      %6897 = vmatprep.subr.mxu0 0.0
      %v6898 = vand.u32 %v1238, 4294901760
      %v6899 = vsub.f32 %v1238, %v6898
      %v6900 = vand.u32 %v6899, 4294901760
      %v6901 = vsub.f32 %v6899, %v6900
      %v6902 = vand.u32 %v6901, 4294901760
      %6903 = vmatpush1.msra.mxu0 %v6902
      %6904 = vmatprep.subr.mxu0 0.0
      %v6905 = vand.u32 %v1239, 4294901760
      %v6906 = vsub.f32 %v1239, %v6905
      %v6907 = vand.u32 %v6906, 4294901760
      %v6908 = vsub.f32 %v6906, %v6907
      %v6909 = vand.u32 %v6908, 4294901760
      %6910 = vmatpush1.msra.mxu0 %v6909
      %v6911 = vand.u32 %v923, 4294901760
      %6912 = vmatprep.mubr.f32.mxu0 %v6911
      %v6913 = vand.u32 %v922, 4294901760
      %6914 = vmatmul.mubr.f32.gmra.mrb[0].mxu0 %v6913
      %v6915 = vpop.f32.mrb[0].mxu0
      %v6916 = vadd.f32 %v5739, %v6915
      %v6917 = vpop.f32.mrb[0].mxu0
      %v6918 = vand.u32 %v927, 4294901760
      %6919 = vmatprep.mubr.f32.mxu0 %v6918
      %v6920 = vand.u32 %v926, 4294901760
      %6921 = vmatmul.mubr.f32.gmra.mrb[0].mxu0 %v6920
      %v6922 = vpop.f32.mrb[0].mxu0
      %v6923 = vadd.f32 %v5754, %v6922
      %v6924 = vpop.f32.mrb[0].mxu0
      %v6925 = vand.u32 %v931, 4294901760
      %6926 = vmatprep.mubr.f32.mxu0 %v6925
      %v6927 = vand.u32 %v930, 4294901760
      %6928 = vmatmul.mubr.f32.gmra.mrb[0].mxu0 %v6927
      %v6929 = vpop.f32.mrb[0].mxu0
      %v6930 = vadd.f32 %v5769, %v6929
      %v6931 = vpop.f32.mrb[0].mxu0
      %v6932 = vand.u32 %v935, 4294901760
      %6933 = vmatprep.mubr.f32.mxu0 %v6932
      %v6934 = vand.u32 %v934, 4294901760
      %6935 = vmatmul.mubr.f32.gmra.mrb[0].mxu0 %v6934
      %v6936 = vpop.f32.mrb[0].mxu0
      %v6937 = vadd.f32 %v5784, %v6936
      %v6938 = vpop.f32.mrb[0].mxu0
      %v6939 = vand.u32 %v939, 4294901760
      %6940 = vmatprep.mubr.f32.mxu0 %v6939
      %v6941 = vand.u32 %v938, 4294901760
      %6942 = vmatmul.mubr.f32.gmra.mrb[0].mxu0 %v6941
      %v6943 = vpop.f32.mrb[0].mxu0
      %v6944 = vadd.f32 %v5799, %v6943
      %v6945 = vpop.f32.mrb[0].mxu0
      %v6946 = vand.u32 %v943, 4294901760
      %6947 = vmatprep.mubr.f32.mxu0 %v6946
      %v6948 = vand.u32 %v942, 4294901760
      %6949 = vmatmul.mubr.f32.gmra.mrb[0].mxu0 %v6948
      %v6950 = vpop.f32.mrb[0].mxu0
      %v6951 = vadd.f32 %v5814, %v6950
      %v6952 = vpop.f32.mrb[0].mxu0
      %v6953 = vand.u32 %v947, 4294901760
      %6954 = vmatprep.mubr.f32.mxu0 %v6953
      %v6955 = vand.u32 %v946, 4294901760
      %6956 = vmatmul.mubr.f32.gmra.mrb[0].mxu0 %v6955
      %v6957 = vpop.f32.mrb[0].mxu0
      %v6958 = vadd.f32 %v5829, %v6957
      %v6959 = vpop.f32.mrb[0].mxu0
      %v6960 = vand.u32 %v951, 4294901760
      %6961 = vmatprep.mubr.f32.mxu0 %v6960
      %v6962 = vand.u32 %v950, 4294901760
      %6963 = vmatmul.mubr.f32.gmra.mrb[0].mxu0 %v6962
      %v6964 = vpop.f32.mrb[0].mxu0
      %v6965 = vadd.f32 %v5844, %v6964
      %v6966 = vpop.f32.mrb[0].mxu0
      %v6967 = vand.u32 %v955, 4294901760
      %6968 = vmatprep.mubr.f32.mxu0 %v6967
      %v6969 = vand.u32 %v954, 4294901760
      %6970 = vmatmul.mubr.f32.gmra.mrb[0].mxu0 %v6969
      %v6971 = vpop.f32.mrb[0].mxu0
      %v6972 = vadd.f32 %v5859, %v6971
      %v6973 = vpop.f32.mrb[0].mxu0
      %v6974 = vand.u32 %v959, 4294901760
      %6975 = vmatprep.mubr.f32.mxu0 %v6974
      %v6976 = vand.u32 %v958, 4294901760
      %6977 = vmatmul.mubr.f32.gmra.mrb[0].mxu0 %v6976
      %v6978 = vpop.f32.mrb[0].mxu0
      %v6979 = vadd.f32 %v5874, %v6978
      %v6980 = vpop.f32.mrb[0].mxu0
      %v6981 = vand.u32 %v963, 4294901760
      %6982 = vmatprep.mubr.f32.mxu0 %v6981
      %v6983 = vand.u32 %v962, 4294901760
      %6984 = vmatmul.mubr.f32.gmra.mrb[0].mxu0 %v6983
      %v6985 = vpop.f32.mrb[0].mxu0
      %v6986 = vadd.f32 %v5889, %v6985
      %v6987 = vpop.f32.mrb[0].mxu0
      %v6988 = vand.u32 %v967, 4294901760
      %6989 = vmatprep.mubr.f32.mxu0 %v6988
      %v6990 = vand.u32 %v966, 4294901760
      %6991 = vmatmul.mubr.f32.gmra.mrb[0].mxu0 %v6990
      %v6992 = vpop.f32.mrb[0].mxu0
      %v6993 = vadd.f32 %v5904, %v6992
      %v6994 = vpop.f32.mrb[0].mxu0
      %v6995 = vand.u32 %v971, 4294901760
      %6996 = vmatprep.mubr.f32.mxu0 %v6995
      %v6997 = vand.u32 %v970, 4294901760
      %6998 = vmatmul.mubr.f32.gmra.mrb[0].mxu0 %v6997
      %v6999 = vpop.f32.mrb[0].mxu0
      %v7000 = vadd.f32 %v5919, %v6999
      %v7001 = vpop.f32.mrb[0].mxu0
      %v7002 = vand.u32 %v975, 4294901760
      %7003 = vmatprep.mubr.f32.mxu0 %v7002
      %v7004 = vand.u32 %v974, 4294901760
      %7005 = vmatmul.mubr.f32.gmra.mrb[0].mxu0 %v7004
      %v7006 = vpop.f32.mrb[0].mxu0
      %v7007 = vadd.f32 %v5934, %v7006
      %v7008 = vpop.f32.mrb[0].mxu0
      %v7009 = vand.u32 %v979, 4294901760
      %7010 = vmatprep.mubr.f32.mxu0 %v7009
      %v7011 = vand.u32 %v978, 4294901760
      %7012 = vmatmul.mubr.f32.gmra.mrb[0].mxu0 %v7011
      %v7013 = vpop.f32.mrb[0].mxu0
      %v7014 = vadd.f32 %v5949, %v7013
      %v7015 = vpop.f32.mrb[0].mxu0
      %v7016 = vand.u32 %v983, 4294901760
      %7017 = vmatprep.mubr.f32.mxu0 %v7016
      %v7018 = vand.u32 %v982, 4294901760
      %7019 = vmatmul.mubr.f32.gmra.mrb[0].mxu0 %v7018
      %v7020 = vpop.f32.mrb[0].mxu0
      %v7021 = vadd.f32 %v5964, %v7020
      %v7022 = vpop.f32.mrb[0].mxu0
      %v7023 = vand.u32 %v987, 4294901760
      %7024 = vmatprep.mubr.f32.mxu0 %v7023
      %v7025 = vand.u32 %v986, 4294901760
      %7026 = vmatmul.mubr.f32.gmra.mrb[0].mxu0 %v7025
      %v7027 = vpop.f32.mrb[0].mxu0
      %v7028 = vadd.f32 %v5979, %v7027
      %v7029 = vpop.f32.mrb[0].mxu0
      %v7030 = vand.u32 %v991, 4294901760
      %7031 = vmatprep.mubr.f32.mxu0 %v7030
      %v7032 = vand.u32 %v990, 4294901760
      %7033 = vmatmul.mubr.f32.gmra.mrb[0].mxu0 %v7032
      %v7034 = vpop.f32.mrb[0].mxu0
      %v7035 = vadd.f32 %v5994, %v7034
      %v7036 = vpop.f32.mrb[0].mxu0
      %v7037 = vand.u32 %v995, 4294901760
      %7038 = vmatprep.mubr.f32.mxu0 %v7037
      %v7039 = vand.u32 %v994, 4294901760
      %7040 = vmatmul.mubr.f32.gmra.mrb[0].mxu0 %v7039
      %v7041 = vpop.f32.mrb[0].mxu0
      %v7042 = vadd.f32 %v6009, %v7041
      %v7043 = vpop.f32.mrb[0].mxu0
      %v7044 = vand.u32 %v999, 4294901760
      %7045 = vmatprep.mubr.f32.mxu0 %v7044
      %v7046 = vand.u32 %v998, 4294901760
      %7047 = vmatmul.mubr.f32.gmra.mrb[0].mxu0 %v7046
      %v7048 = vpop.f32.mrb[0].mxu0
      %v7049 = vadd.f32 %v6024, %v7048
      %v7050 = vpop.f32.mrb[0].mxu0
      %v7051 = vand.u32 %v1003, 4294901760
      %7052 = vmatprep.mubr.f32.mxu0 %v7051
      %v7053 = vand.u32 %v1002, 4294901760
      %7054 = vmatmul.mubr.f32.gmra.mrb[0].mxu0 %v7053
      %v7055 = vpop.f32.mrb[0].mxu0
      %v7056 = vadd.f32 %v6039, %v7055
      %v7057 = vpop.f32.mrb[0].mxu0
      %v7058 = vand.u32 %v1007, 4294901760
      %7059 = vmatprep.mubr.f32.mxu0 %v7058
      %v7060 = vand.u32 %v1006, 4294901760
      %7061 = vmatmul.mubr.f32.gmra.mrb[0].mxu0 %v7060
      %v7062 = vpop.f32.mrb[0].mxu0
      %v7063 = vadd.f32 %v6054, %v7062
      %v7064 = vpop.f32.mrb[0].mxu0
      %v7065 = vand.u32 %v1011, 4294901760
      %7066 = vmatprep.mubr.f32.mxu0 %v7065
      %v7067 = vand.u32 %v1010, 4294901760
      %7068 = vmatmul.mubr.f32.gmra.mrb[0].mxu0 %v7067
      %v7069 = vpop.f32.mrb[0].mxu0
      %v7070 = vadd.f32 %v6069, %v7069
      %v7071 = vpop.f32.mrb[0].mxu0
      %v7072 = vand.u32 %v1015, 4294901760
      %7073 = vmatprep.mubr.f32.mxu0 %v7072
      %v7074 = vand.u32 %v1014, 4294901760
      %7075 = vmatmul.mubr.f32.gmra.mrb[0].mxu0 %v7074
      %v7076 = vpop.f32.mrb[0].mxu0
      %v7077 = vadd.f32 %v6084, %v7076
      %v7078 = vpop.f32.mrb[0].mxu0
      %v7079 = vand.u32 %v1019, 4294901760
      %7080 = vmatprep.mubr.f32.mxu0 %v7079
      %v7081 = vand.u32 %v1018, 4294901760
      %7082 = vmatmul.mubr.f32.gmra.mrb[0].mxu0 %v7081
      %v7083 = vpop.f32.mrb[0].mxu0
      %v7084 = vadd.f32 %v6099, %v7083
      %v7085 = vpop.f32.mrb[0].mxu0
      %v7086 = vand.u32 %v1023, 4294901760
      %7087 = vmatprep.mubr.f32.mxu0 %v7086
      %v7088 = vand.u32 %v1022, 4294901760
      %7089 = vmatmul.mubr.f32.gmra.mrb[0].mxu0 %v7088
      %v7090 = vpop.f32.mrb[0].mxu0
      %v7091 = vadd.f32 %v6114, %v7090
      %v7092 = vpop.f32.mrb[0].mxu0
      %v7093 = vand.u32 %v1027, 4294901760
      %7094 = vmatprep.mubr.f32.mxu0 %v7093
      %v7095 = vand.u32 %v1026, 4294901760
      %7096 = vmatmul.mubr.f32.gmra.mrb[0].mxu0 %v7095
      %v7097 = vpop.f32.mrb[0].mxu0
      %v7098 = vadd.f32 %v6129, %v7097
      %v7099 = vpop.f32.mrb[0].mxu0
      %v7100 = vand.u32 %v1031, 4294901760
      %7101 = vmatprep.mubr.f32.mxu0 %v7100
      %v7102 = vand.u32 %v1030, 4294901760
      %7103 = vmatmul.mubr.f32.gmra.mrb[0].mxu0 %v7102
      %v7104 = vpop.f32.mrb[0].mxu0
      %v7105 = vadd.f32 %v6144, %v7104
      %v7106 = vpop.f32.mrb[0].mxu0
      %v7107 = vand.u32 %v1035, 4294901760
      %7108 = vmatprep.mubr.f32.mxu0 %v7107
      %v7109 = vand.u32 %v1034, 4294901760
      %7110 = vmatmul.mubr.f32.gmra.mrb[0].mxu0 %v7109
      %v7111 = vpop.f32.mrb[0].mxu0
      %v7112 = vadd.f32 %v6159, %v7111
      %v7113 = vpop.f32.mrb[0].mxu0
      %v7114 = vand.u32 %v1039, 4294901760
      %7115 = vmatprep.mubr.f32.mxu0 %v7114
      %v7116 = vand.u32 %v1038, 4294901760
      %7117 = vmatmul.mubr.f32.gmra.mrb[0].mxu0 %v7116
      %v7118 = vpop.f32.mrb[0].mxu0
      %v7119 = vadd.f32 %v6174, %v7118
      %v7120 = vpop.f32.mrb[0].mxu0
      %v7121 = vand.u32 %v1043, 4294901760
      %7122 = vmatprep.mubr.f32.mxu0 %v7121
      %v7123 = vand.u32 %v1042, 4294901760
      %7124 = vmatmul.mubr.f32.gmra.mrb[0].mxu0 %v7123
      %v7125 = vpop.f32.mrb[0].mxu0
      %v7126 = vadd.f32 %v6189, %v7125
      %v7127 = vpop.f32.mrb[0].mxu0
      %v7128 = vand.u32 %v1047, 4294901760
      %7129 = vmatprep.mubr.f32.mxu0 %v7128
      %v7130 = vand.u32 %v1046, 4294901760
      %7131 = vmatmul.mubr.f32.gmra.mrb[0].mxu0 %v7130
      %v7132 = vpop.f32.mrb[0].mxu0
      %v7133 = vadd.f32 %v6204, %v7132
      %v7134 = vpop.f32.mrb[0].mxu0
      %v7135 = vand.u32 %v1051, 4294901760
      %7136 = vmatprep.mubr.f32.mxu0 %v7135
      %v7137 = vand.u32 %v1050, 4294901760
      %7138 = vmatmul.mubr.f32.gmra.mrb[0].mxu0 %v7137
      %v7139 = vpop.f32.mrb[0].mxu0
      %v7140 = vadd.f32 %v6219, %v7139
      %v7141 = vpop.f32.mrb[0].mxu0
      %v7142 = vand.u32 %v1055, 4294901760
      %7143 = vmatprep.mubr.f32.mxu0 %v7142
      %v7144 = vand.u32 %v1054, 4294901760
      %7145 = vmatmul.mubr.f32.gmra.mrb[0].mxu0 %v7144
      %v7146 = vpop.f32.mrb[0].mxu0
      %v7147 = vadd.f32 %v6234, %v7146
      %v7148 = vpop.f32.mrb[0].mxu0
      %v7149 = vand.u32 %v1059, 4294901760
      %7150 = vmatprep.mubr.f32.mxu0 %v7149
      %v7151 = vand.u32 %v1058, 4294901760
      %7152 = vmatmul.mubr.f32.gmra.mrb[0].mxu0 %v7151
      %v7153 = vpop.f32.mrb[0].mxu0
      %v7154 = vadd.f32 %v6249, %v7153
      %v7155 = vpop.f32.mrb[0].mxu0
      %v7156 = vand.u32 %v1063, 4294901760
      %7157 = vmatprep.mubr.f32.mxu0 %v7156
      %v7158 = vand.u32 %v1062, 4294901760
      %7159 = vmatmul.mubr.f32.gmra.mrb[0].mxu0 %v7158
      %v7160 = vpop.f32.mrb[0].mxu0
      %v7161 = vadd.f32 %v6264, %v7160
      %v7162 = vpop.f32.mrb[0].mxu0
      %v7163 = vand.u32 %v1067, 4294901760
      %7164 = vmatprep.mubr.f32.mxu0 %v7163
      %v7165 = vand.u32 %v1066, 4294901760
      %7166 = vmatmul.mubr.f32.gmra.mrb[0].mxu0 %v7165
      %v7167 = vpop.f32.mrb[0].mxu0
      %v7168 = vadd.f32 %v6279, %v7167
      %v7169 = vpop.f32.mrb[0].mxu0
      %v7170 = vand.u32 %v1071, 4294901760
      %7171 = vmatprep.mubr.f32.mxu0 %v7170
      %v7172 = vand.u32 %v1070, 4294901760
      %7173 = vmatmul.mubr.f32.gmra.mrb[0].mxu0 %v7172
      %v7174 = vpop.f32.mrb[0].mxu0
      %v7175 = vadd.f32 %v6294, %v7174
      %v7176 = vpop.f32.mrb[0].mxu0
      %v7177 = vand.u32 %v1075, 4294901760
      %7178 = vmatprep.mubr.f32.mxu0 %v7177
      %v7179 = vand.u32 %v1074, 4294901760
      %7180 = vmatmul.mubr.f32.gmra.mrb[0].mxu0 %v7179
      %v7181 = vpop.f32.mrb[0].mxu0
      %v7182 = vadd.f32 %v6309, %v7181
      %v7183 = vpop.f32.mrb[0].mxu0
      %v7184 = vand.u32 %v1079, 4294901760
      %7185 = vmatprep.mubr.f32.mxu0 %v7184
      %v7186 = vand.u32 %v1078, 4294901760
      %7187 = vmatmul.mubr.f32.gmra.mrb[0].mxu0 %v7186
      %v7188 = vpop.f32.mrb[0].mxu0
      %v7189 = vadd.f32 %v6324, %v7188
      %v7190 = vpop.f32.mrb[0].mxu0
      %v7191 = vand.u32 %v1083, 4294901760
      %7192 = vmatprep.mubr.f32.mxu0 %v7191
      %v7193 = vand.u32 %v1082, 4294901760
      %7194 = vmatmul.mubr.f32.gmra.mrb[0].mxu0 %v7193
      %v7195 = vpop.f32.mrb[0].mxu0
      %v7196 = vadd.f32 %v6339, %v7195
      %v7197 = vpop.f32.mrb[0].mxu0
      %v7198 = vand.u32 %v1087, 4294901760
      %7199 = vmatprep.mubr.f32.mxu0 %v7198
      %v7200 = vand.u32 %v1086, 4294901760
      %7201 = vmatmul.mubr.f32.gmra.mrb[0].mxu0 %v7200
      %v7202 = vpop.f32.mrb[0].mxu0
      %v7203 = vadd.f32 %v6354, %v7202
      %v7204 = vpop.f32.mrb[0].mxu0
      %v7205 = vand.u32 %v1091, 4294901760
      %7206 = vmatprep.mubr.f32.mxu0 %v7205
      %v7207 = vand.u32 %v1090, 4294901760
      %7208 = vmatmul.mubr.f32.gmra.mrb[0].mxu0 %v7207
      %v7209 = vpop.f32.mrb[0].mxu0
      %v7210 = vadd.f32 %v6369, %v7209
      %v7211 = vpop.f32.mrb[0].mxu0
      %v7212 = vand.u32 %v1095, 4294901760
      %7213 = vmatprep.mubr.f32.mxu0 %v7212
      %v7214 = vand.u32 %v1094, 4294901760
      %7215 = vmatmul.mubr.f32.gmra.mrb[0].mxu0 %v7214
      %v7216 = vpop.f32.mrb[0].mxu0
      %v7217 = vadd.f32 %v6384, %v7216
      %v7218 = vpop.f32.mrb[0].mxu0
      %v7219 = vand.u32 %v1099, 4294901760
      %7220 = vmatprep.mubr.f32.mxu0 %v7219
      %v7221 = vand.u32 %v1098, 4294901760
      %7222 = vmatmul.mubr.f32.gmra.mrb[0].mxu0 %v7221
      %v7223 = vpop.f32.mrb[0].mxu0
      %v7224 = vadd.f32 %v6399, %v7223
      %v7225 = vpop.f32.mrb[0].mxu0
      %v7226 = vand.u32 %v1103, 4294901760
      %7227 = vmatprep.mubr.f32.mxu0 %v7226
      %v7228 = vand.u32 %v1102, 4294901760
      %7229 = vmatmul.mubr.f32.gmra.mrb[0].mxu0 %v7228
      %v7230 = vpop.f32.mrb[0].mxu0
      %v7231 = vadd.f32 %v6414, %v7230
      %v7232 = vpop.f32.mrb[0].mxu0
      %v7233 = vand.u32 %v1107, 4294901760
      %7234 = vmatprep.mubr.f32.mxu0 %v7233
      %v7235 = vand.u32 %v1106, 4294901760
      %7236 = vmatmul.mubr.f32.gmra.mrb[0].mxu0 %v7235
      %v7237 = vpop.f32.mrb[0].mxu0
      %v7238 = vadd.f32 %v6429, %v7237
      %v7239 = vpop.f32.mrb[0].mxu0
      %v7240 = vand.u32 %v1111, 4294901760
      %7241 = vmatprep.mubr.f32.mxu0 %v7240
      %v7242 = vand.u32 %v1110, 4294901760
      %7243 = vmatmul.mubr.f32.gmra.mrb[0].mxu0 %v7242
      %v7244 = vpop.f32.mrb[0].mxu0
      %v7245 = vadd.f32 %v6444, %v7244
      %v7246 = vpop.f32.mrb[0].mxu0
      %v7247 = vand.u32 %v1115, 4294901760
      %7248 = vmatprep.mubr.f32.mxu0 %v7247
      %v7249 = vand.u32 %v1114, 4294901760
      %7250 = vmatmul.mubr.f32.gmra.mrb[0].mxu0 %v7249
      %v7251 = vpop.f32.mrb[0].mxu0
      %v7252 = vadd.f32 %v6459, %v7251
      %v7253 = vpop.f32.mrb[0].mxu0
      %v7254 = vand.u32 %v1119, 4294901760
      %7255 = vmatprep.mubr.f32.mxu0 %v7254
      %v7256 = vand.u32 %v1118, 4294901760
      %7257 = vmatmul.mubr.f32.gmra.mrb[0].mxu0 %v7256
      %v7258 = vpop.f32.mrb[0].mxu0
      %v7259 = vadd.f32 %v6474, %v7258
      %v7260 = vpop.f32.mrb[0].mxu0
      %v7261 = vand.u32 %v1123, 4294901760
      %7262 = vmatprep.mubr.f32.mxu0 %v7261
      %v7263 = vand.u32 %v1122, 4294901760
      %7264 = vmatmul.mubr.f32.gmra.mrb[0].mxu0 %v7263
      %v7265 = vpop.f32.mrb[0].mxu0
      %v7266 = vadd.f32 %v6489, %v7265
      %v7267 = vpop.f32.mrb[0].mxu0
      %v7268 = vand.u32 %v1127, 4294901760
      %7269 = vmatprep.mubr.f32.mxu0 %v7268
      %v7270 = vand.u32 %v1126, 4294901760
      %7271 = vmatmul.mubr.f32.gmra.mrb[0].mxu0 %v7270
      %v7272 = vpop.f32.mrb[0].mxu0
      %v7273 = vadd.f32 %v6504, %v7272
      %v7274 = vpop.f32.mrb[0].mxu0
      %v7275 = vand.u32 %v1131, 4294901760
      %7276 = vmatprep.mubr.f32.mxu0 %v7275
      %v7277 = vand.u32 %v1130, 4294901760
      %7278 = vmatmul.mubr.f32.gmra.mrb[0].mxu0 %v7277
      %v7279 = vpop.f32.mrb[0].mxu0
      %v7280 = vadd.f32 %v6519, %v7279
      %v7281 = vpop.f32.mrb[0].mxu0
      %v7282 = vand.u32 %v1135, 4294901760
      %7283 = vmatprep.mubr.f32.mxu0 %v7282
      %v7284 = vand.u32 %v1134, 4294901760
      %7285 = vmatmul.mubr.f32.gmra.mrb[0].mxu0 %v7284
      %v7286 = vpop.f32.mrb[0].mxu0
      %v7287 = vadd.f32 %v6534, %v7286
      %v7288 = vpop.f32.mrb[0].mxu0
      %v7289 = vand.u32 %v1139, 4294901760
      %7290 = vmatprep.mubr.f32.mxu0 %v7289
      %v7291 = vand.u32 %v1138, 4294901760
      %7292 = vmatmul.mubr.f32.gmra.mrb[0].mxu0 %v7291
      %v7293 = vpop.f32.mrb[0].mxu0
      %v7294 = vadd.f32 %v6549, %v7293
      %v7295 = vpop.f32.mrb[0].mxu0
      %v7296 = vand.u32 %v1143, 4294901760
      %7297 = vmatprep.mubr.f32.mxu0 %v7296
      %v7298 = vand.u32 %v1142, 4294901760
      %7299 = vmatmul.mubr.f32.gmra.mrb[0].mxu0 %v7298
      %v7300 = vpop.f32.mrb[0].mxu0
      %v7301 = vadd.f32 %v6564, %v7300
      %v7302 = vpop.f32.mrb[0].mxu0
      %v7303 = vand.u32 %v1147, 4294901760
      %7304 = vmatprep.mubr.f32.mxu0 %v7303
      %v7305 = vand.u32 %v1146, 4294901760
      %7306 = vmatmul.mubr.f32.gmra.mrb[0].mxu0 %v7305
      %v7307 = vpop.f32.mrb[0].mxu0
      %v7308 = vadd.f32 %v6579, %v7307
      %v7309 = vpop.f32.mrb[0].mxu0
      %v7310 = vand.u32 %v1151, 4294901760
      %7311 = vmatprep.mubr.f32.mxu0 %v7310
      %v7312 = vand.u32 %v1150, 4294901760
      %7313 = vmatmul.mubr.f32.gmra.mrb[0].mxu0 %v7312
      %v7314 = vpop.f32.mrb[0].mxu0
      %v7315 = vadd.f32 %v6594, %v7314
      %v7316 = vpop.f32.mrb[0].mxu0
      %v7317 = vand.u32 %v1155, 4294901760
      %7318 = vmatprep.mubr.f32.mxu0 %v7317
      %v7319 = vand.u32 %v1154, 4294901760
      %7320 = vmatmul.mubr.f32.gmra.mrb[0].mxu0 %v7319
      %v7321 = vpop.f32.mrb[0].mxu0
      %v7322 = vadd.f32 %v6609, %v7321
      %v7323 = vpop.f32.mrb[0].mxu0
      %v7324 = vand.u32 %v1159, 4294901760
      %7325 = vmatprep.mubr.f32.mxu0 %v7324
      %v7326 = vand.u32 %v1158, 4294901760
      %7327 = vmatmul.mubr.f32.gmra.mrb[0].mxu0 %v7326
      %v7328 = vpop.f32.mrb[0].mxu0
      %v7329 = vadd.f32 %v6624, %v7328
      %v7330 = vpop.f32.mrb[0].mxu0
      %v7331 = vand.u32 %v1163, 4294901760
      %7332 = vmatprep.mubr.f32.mxu0 %v7331
      %v7333 = vand.u32 %v1162, 4294901760
      %7334 = vmatmul.mubr.f32.gmra.mrb[0].mxu0 %v7333
      %v7335 = vpop.f32.mrb[0].mxu0
      %v7336 = vadd.f32 %v6639, %v7335
      %v7337 = vpop.f32.mrb[0].mxu0
      %v7338 = vand.u32 %v1167, 4294901760
      %7339 = vmatprep.mubr.f32.mxu0 %v7338
      %v7340 = vand.u32 %v1166, 4294901760
      %7341 = vmatmul.mubr.f32.gmra.mrb[0].mxu0 %v7340
      %v7342 = vpop.f32.mrb[0].mxu0
      %v7343 = vadd.f32 %v6654, %v7342
      %v7344 = vpop.f32.mrb[0].mxu0
      %v7345 = vand.u32 %v1171, 4294901760
      %7346 = vmatprep.mubr.f32.mxu0 %v7345
      %v7347 = vand.u32 %v1170, 4294901760
      %7348 = vmatmul.mubr.f32.gmra.mrb[0].mxu0 %v7347
      %v7349 = vpop.f32.mrb[0].mxu0
      %v7350 = vadd.f32 %v6669, %v7349
      %v7351 = vpop.f32.mrb[0].mxu0
      %v7352 = vand.u32 %v1175, 4294901760
      %7353 = vmatprep.mubr.f32.mxu0 %v7352
      %v7354 = vand.u32 %v1174, 4294901760
      %7355 = vmatmul.mubr.f32.gmra.mrb[0].mxu0 %v7354
      %v7356 = vpop.f32.mrb[0].mxu0
      %v7357 = vadd.f32 %v6684, %v7356
      %v7358 = vpop.f32.mrb[0].mxu0
      %7359 = vdwg.mxu0
      %7360 = vmatprep.subr.mxu0 0.0
      %v7361 = vand.u32 %v1208, 4294901760
      %v7362 = vsub.f32 %v1208, %v7361
      %7363 = vmatpush1.msra.mxu0 %v7362
      %7364 = vmatprep.subr.mxu0 0.0
      %v7365 = vand.u32 %v1209, 4294901760
      %v7366 = vsub.f32 %v1209, %v7365
      %7367 = vmatpush1.msra.mxu0 %v7366
      %7368 = vmatprep.subr.mxu0 0.0
      %v7369 = vand.u32 %v1210, 4294901760
      %v7370 = vsub.f32 %v1210, %v7369
      %7371 = vmatpush1.msra.mxu0 %v7370
      %7372 = vmatprep.subr.mxu0 0.0
      %v7373 = vand.u32 %v1211, 4294901760
      %v7374 = vsub.f32 %v1211, %v7373
      %7375 = vmatpush1.msra.mxu0 %v7374
      %7376 = vmatprep.subr.mxu0 0.0
      %v7377 = vand.u32 %v1212, 4294901760
      %v7378 = vsub.f32 %v1212, %v7377
      %7379 = vmatpush1.msra.mxu0 %v7378
      %7380 = vmatprep.subr.mxu0 0.0
      %v7381 = vand.u32 %v1213, 4294901760
      %v7382 = vsub.f32 %v1213, %v7381
      %7383 = vmatpush1.msra.mxu0 %v7382
      %7384 = vmatprep.subr.mxu0 0.0
      %v7385 = vand.u32 %v1214, 4294901760
      %v7386 = vsub.f32 %v1214, %v7385
      %7387 = vmatpush1.msra.mxu0 %v7386
      %7388 = vmatprep.subr.mxu0 0.0
      %v7389 = vand.u32 %v1215, 4294901760
      %v7390 = vsub.f32 %v1215, %v7389
      %7391 = vmatpush1.msra.mxu0 %v7390
      %7392 = vmatprep.subr.mxu0 0.0
      %v7393 = vand.u32 %v1216, 4294901760
      %v7394 = vsub.f32 %v1216, %v7393
      %7395 = vmatpush1.msra.mxu0 %v7394
      %7396 = vmatprep.subr.mxu0 0.0
      %v7397 = vand.u32 %v1217, 4294901760
      %v7398 = vsub.f32 %v1217, %v7397
      %7399 = vmatpush1.msra.mxu0 %v7398
      %7400 = vmatprep.subr.mxu0 0.0
      %v7401 = vand.u32 %v1218, 4294901760
      %v7402 = vsub.f32 %v1218, %v7401
      %7403 = vmatpush1.msra.mxu0 %v7402
      %7404 = vmatprep.subr.mxu0 0.0
      %v7405 = vand.u32 %v1219, 4294901760
      %v7406 = vsub.f32 %v1219, %v7405
      %7407 = vmatpush1.msra.mxu0 %v7406
      %7408 = vmatprep.subr.mxu0 0.0
      %v7409 = vand.u32 %v1220, 4294901760
      %v7410 = vsub.f32 %v1220, %v7409
      %7411 = vmatpush1.msra.mxu0 %v7410
      %7412 = vmatprep.subr.mxu0 0.0
      %v7413 = vand.u32 %v1221, 4294901760
      %v7414 = vsub.f32 %v1221, %v7413
      %7415 = vmatpush1.msra.mxu0 %v7414
      %7416 = vmatprep.subr.mxu0 0.0
      %v7417 = vand.u32 %v1222, 4294901760
      %v7418 = vsub.f32 %v1222, %v7417
      %7419 = vmatpush1.msra.mxu0 %v7418
      %7420 = vmatprep.subr.mxu0 0.0
      %v7421 = vand.u32 %v1223, 4294901760
      %v7422 = vsub.f32 %v1223, %v7421
      %7423 = vmatpush1.msra.mxu0 %v7422
      %7424 = vmatprep.subr.mxu0 0.0
      %v7425 = vand.u32 %v1224, 4294901760
      %v7426 = vsub.f32 %v1224, %v7425
      %7427 = vmatpush1.msra.mxu0 %v7426
      %7428 = vmatprep.subr.mxu0 0.0
      %v7429 = vand.u32 %v1225, 4294901760
      %v7430 = vsub.f32 %v1225, %v7429
      %7431 = vmatpush1.msra.mxu0 %v7430
      %7432 = vmatprep.subr.mxu0 0.0
      %v7433 = vand.u32 %v1226, 4294901760
      %v7434 = vsub.f32 %v1226, %v7433
      %7435 = vmatpush1.msra.mxu0 %v7434
      %7436 = vmatprep.subr.mxu0 0.0
      %v7437 = vand.u32 %v1227, 4294901760
      %v7438 = vsub.f32 %v1227, %v7437
      %7439 = vmatpush1.msra.mxu0 %v7438
      %7440 = vmatprep.subr.mxu0 0.0
      %v7441 = vand.u32 %v1228, 4294901760
      %v7442 = vsub.f32 %v1228, %v7441
      %7443 = vmatpush1.msra.mxu0 %v7442
      %7444 = vmatprep.subr.mxu0 0.0
      %v7445 = vand.u32 %v1229, 4294901760
      %v7446 = vsub.f32 %v1229, %v7445
      %7447 = vmatpush1.msra.mxu0 %v7446
      %7448 = vmatprep.subr.mxu0 0.0
      %v7449 = vand.u32 %v1230, 4294901760
      %v7450 = vsub.f32 %v1230, %v7449
      %7451 = vmatpush1.msra.mxu0 %v7450
      %7452 = vmatprep.subr.mxu0 0.0
      %v7453 = vand.u32 %v1231, 4294901760
      %v7454 = vsub.f32 %v1231, %v7453
      %7455 = vmatpush1.msra.mxu0 %v7454
      %7456 = vmatprep.subr.mxu0 0.0
      %v7457 = vand.u32 %v1232, 4294901760
      %v7458 = vsub.f32 %v1232, %v7457
      %7459 = vmatpush1.msra.mxu0 %v7458
      %7460 = vmatprep.subr.mxu0 0.0
      %v7461 = vand.u32 %v1233, 4294901760
      %v7462 = vsub.f32 %v1233, %v7461
      %7463 = vmatpush1.msra.mxu0 %v7462
      %7464 = vmatprep.subr.mxu0 0.0
      %v7465 = vand.u32 %v1234, 4294901760
      %v7466 = vsub.f32 %v1234, %v7465
      %7467 = vmatpush1.msra.mxu0 %v7466
      %7468 = vmatprep.subr.mxu0 0.0
      %v7469 = vand.u32 %v1235, 4294901760
      %v7470 = vsub.f32 %v1235, %v7469
      %7471 = vmatpush1.msra.mxu0 %v7470
      %7472 = vmatprep.subr.mxu0 0.0
      %v7473 = vand.u32 %v1236, 4294901760
      %v7474 = vsub.f32 %v1236, %v7473
      %7475 = vmatpush1.msra.mxu0 %v7474
      %7476 = vmatprep.subr.mxu0 0.0
      %v7477 = vand.u32 %v1237, 4294901760
      %v7478 = vsub.f32 %v1237, %v7477
      %7479 = vmatpush1.msra.mxu0 %v7478
      %7480 = vmatprep.subr.mxu0 0.0
      %v7481 = vand.u32 %v1238, 4294901760
      %v7482 = vsub.f32 %v1238, %v7481
      %7483 = vmatpush1.msra.mxu0 %v7482
      %7484 = vmatprep.subr.mxu0 0.0
      %v7485 = vand.u32 %v1239, 4294901760
      %v7486 = vsub.f32 %v1239, %v7485
      %7487 = vmatpush1.msra.mxu0 %v7486
      %v7488 = vand.u32 %v923, 4294901760
      %v7489 = vsub.f32 %v923, %v7488
      %7490 = vmatprep.mubr.f32.mxu0 %v7489
      %v7491 = vand.u32 %v922, 4294901760
      %v7492 = vsub.f32 %v922, %v7491
      %7493 = vmatmul.mubr.f32.gmra.mrb[0].mxu0 %v7492
      %v7494 = vpop.f32.mrb[0].mxu0
      %v7495 = vadd.f32 %v6916, %v7494
      %v7496 = vpop.f32.mrb[0].mxu0
      %v7497 = vand.u32 %v927, 4294901760
      %v7498 = vsub.f32 %v927, %v7497
      %7499 = vmatprep.mubr.f32.mxu0 %v7498
      %v7500 = vand.u32 %v926, 4294901760
      %v7501 = vsub.f32 %v926, %v7500
      %7502 = vmatmul.mubr.f32.gmra.mrb[0].mxu0 %v7501
      %v7503 = vpop.f32.mrb[0].mxu0
      %v7504 = vadd.f32 %v6923, %v7503
      %v7505 = vpop.f32.mrb[0].mxu0
      %v7506 = vand.u32 %v931, 4294901760
      %v7507 = vsub.f32 %v931, %v7506
      %7508 = vmatprep.mubr.f32.mxu0 %v7507
      %v7509 = vand.u32 %v930, 4294901760
      %v7510 = vsub.f32 %v930, %v7509
      %7511 = vmatmul.mubr.f32.gmra.mrb[0].mxu0 %v7510
      %v7512 = vpop.f32.mrb[0].mxu0
      %v7513 = vadd.f32 %v6930, %v7512
      %v7514 = vpop.f32.mrb[0].mxu0
      %v7515 = vand.u32 %v935, 4294901760
      %v7516 = vsub.f32 %v935, %v7515
      %7517 = vmatprep.mubr.f32.mxu0 %v7516
      %v7518 = vand.u32 %v934, 4294901760
      %v7519 = vsub.f32 %v934, %v7518
      %7520 = vmatmul.mubr.f32.gmra.mrb[0].mxu0 %v7519
      %v7521 = vpop.f32.mrb[0].mxu0
      %v7522 = vadd.f32 %v6937, %v7521
      %v7523 = vpop.f32.mrb[0].mxu0
      %v7524 = vand.u32 %v939, 4294901760
      %v7525 = vsub.f32 %v939, %v7524
      %7526 = vmatprep.mubr.f32.mxu0 %v7525
      %v7527 = vand.u32 %v938, 4294901760
      %v7528 = vsub.f32 %v938, %v7527
      %7529 = vmatmul.mubr.f32.gmra.mrb[0].mxu0 %v7528
      %v7530 = vpop.f32.mrb[0].mxu0
      %v7531 = vadd.f32 %v6944, %v7530
      %v7532 = vpop.f32.mrb[0].mxu0
      %v7533 = vand.u32 %v943, 4294901760
      %v7534 = vsub.f32 %v943, %v7533
      %7535 = vmatprep.mubr.f32.mxu0 %v7534
      %v7536 = vand.u32 %v942, 4294901760
      %v7537 = vsub.f32 %v942, %v7536
      %7538 = vmatmul.mubr.f32.gmra.mrb[0].mxu0 %v7537
      %v7539 = vpop.f32.mrb[0].mxu0
      %v7540 = vadd.f32 %v6951, %v7539
      %v7541 = vpop.f32.mrb[0].mxu0
      %v7542 = vand.u32 %v947, 4294901760
      %v7543 = vsub.f32 %v947, %v7542
      %7544 = vmatprep.mubr.f32.mxu0 %v7543
      %v7545 = vand.u32 %v946, 4294901760
      %v7546 = vsub.f32 %v946, %v7545
      %7547 = vmatmul.mubr.f32.gmra.mrb[0].mxu0 %v7546
      %v7548 = vpop.f32.mrb[0].mxu0
      %v7549 = vadd.f32 %v6958, %v7548
      %v7550 = vpop.f32.mrb[0].mxu0
      %v7551 = vand.u32 %v951, 4294901760
      %v7552 = vsub.f32 %v951, %v7551
      %7553 = vmatprep.mubr.f32.mxu0 %v7552
      %v7554 = vand.u32 %v950, 4294901760
      %v7555 = vsub.f32 %v950, %v7554
      %7556 = vmatmul.mubr.f32.gmra.mrb[0].mxu0 %v7555
      %v7557 = vpop.f32.mrb[0].mxu0
      %v7558 = vadd.f32 %v6965, %v7557
      %v7559 = vpop.f32.mrb[0].mxu0
      %v7560 = vand.u32 %v955, 4294901760
      %v7561 = vsub.f32 %v955, %v7560
      %7562 = vmatprep.mubr.f32.mxu0 %v7561
      %v7563 = vand.u32 %v954, 4294901760
      %v7564 = vsub.f32 %v954, %v7563
      %7565 = vmatmul.mubr.f32.gmra.mrb[0].mxu0 %v7564
      %v7566 = vpop.f32.mrb[0].mxu0
      %v7567 = vadd.f32 %v6972, %v7566
      %v7568 = vpop.f32.mrb[0].mxu0
      %v7569 = vand.u32 %v959, 4294901760
      %v7570 = vsub.f32 %v959, %v7569
      %7571 = vmatprep.mubr.f32.mxu0 %v7570
      %v7572 = vand.u32 %v958, 4294901760
      %v7573 = vsub.f32 %v958, %v7572
      %7574 = vmatmul.mubr.f32.gmra.mrb[0].mxu0 %v7573
      %v7575 = vpop.f32.mrb[0].mxu0
      %v7576 = vadd.f32 %v6979, %v7575
      %v7577 = vpop.f32.mrb[0].mxu0
      %v7578 = vand.u32 %v963, 4294901760
      %v7579 = vsub.f32 %v963, %v7578
      %7580 = vmatprep.mubr.f32.mxu0 %v7579
      %v7581 = vand.u32 %v962, 4294901760
      %v7582 = vsub.f32 %v962, %v7581
      %7583 = vmatmul.mubr.f32.gmra.mrb[0].mxu0 %v7582
      %v7584 = vpop.f32.mrb[0].mxu0
      %v7585 = vadd.f32 %v6986, %v7584
      %v7586 = vpop.f32.mrb[0].mxu0
      %v7587 = vand.u32 %v967, 4294901760
      %v7588 = vsub.f32 %v967, %v7587
      %7589 = vmatprep.mubr.f32.mxu0 %v7588
      %v7590 = vand.u32 %v966, 4294901760
      %v7591 = vsub.f32 %v966, %v7590
      %7592 = vmatmul.mubr.f32.gmra.mrb[0].mxu0 %v7591
      %v7593 = vpop.f32.mrb[0].mxu0
      %v7594 = vadd.f32 %v6993, %v7593
      %v7595 = vpop.f32.mrb[0].mxu0
      %v7596 = vand.u32 %v971, 4294901760
      %v7597 = vsub.f32 %v971, %v7596
      %7598 = vmatprep.mubr.f32.mxu0 %v7597
      %v7599 = vand.u32 %v970, 4294901760
      %v7600 = vsub.f32 %v970, %v7599
      %7601 = vmatmul.mubr.f32.gmra.mrb[0].mxu0 %v7600
      %v7602 = vpop.f32.mrb[0].mxu0
      %v7603 = vadd.f32 %v7000, %v7602
      %v7604 = vpop.f32.mrb[0].mxu0
      %v7605 = vand.u32 %v975, 4294901760
      %v7606 = vsub.f32 %v975, %v7605
      %7607 = vmatprep.mubr.f32.mxu0 %v7606
      %v7608 = vand.u32 %v974, 4294901760
      %v7609 = vsub.f32 %v974, %v7608
      %7610 = vmatmul.mubr.f32.gmra.mrb[0].mxu0 %v7609
      %v7611 = vpop.f32.mrb[0].mxu0
      %v7612 = vadd.f32 %v7007, %v7611
      %v7613 = vpop.f32.mrb[0].mxu0
      %v7614 = vand.u32 %v979, 4294901760
      %v7615 = vsub.f32 %v979, %v7614
      %7616 = vmatprep.mubr.f32.mxu0 %v7615
      %v7617 = vand.u32 %v978, 4294901760
      %v7618 = vsub.f32 %v978, %v7617
      %7619 = vmatmul.mubr.f32.gmra.mrb[0].mxu0 %v7618
      %v7620 = vpop.f32.mrb[0].mxu0
      %v7621 = vadd.f32 %v7014, %v7620
      %v7622 = vpop.f32.mrb[0].mxu0
      %v7623 = vand.u32 %v983, 4294901760
      %v7624 = vsub.f32 %v983, %v7623
      %7625 = vmatprep.mubr.f32.mxu0 %v7624
      %v7626 = vand.u32 %v982, 4294901760
      %v7627 = vsub.f32 %v982, %v7626
      %7628 = vmatmul.mubr.f32.gmra.mrb[0].mxu0 %v7627
      %v7629 = vpop.f32.mrb[0].mxu0
      %v7630 = vadd.f32 %v7021, %v7629
      %v7631 = vpop.f32.mrb[0].mxu0
      %v7632 = vand.u32 %v987, 4294901760
      %v7633 = vsub.f32 %v987, %v7632
      %7634 = vmatprep.mubr.f32.mxu0 %v7633
      %v7635 = vand.u32 %v986, 4294901760
      %v7636 = vsub.f32 %v986, %v7635
      %7637 = vmatmul.mubr.f32.gmra.mrb[0].mxu0 %v7636
      %v7638 = vpop.f32.mrb[0].mxu0
      %v7639 = vadd.f32 %v7028, %v7638
      %v7640 = vpop.f32.mrb[0].mxu0
      %v7641 = vand.u32 %v991, 4294901760
      %v7642 = vsub.f32 %v991, %v7641
      %7643 = vmatprep.mubr.f32.mxu0 %v7642
      %v7644 = vand.u32 %v990, 4294901760
      %v7645 = vsub.f32 %v990, %v7644
      %7646 = vmatmul.mubr.f32.gmra.mrb[0].mxu0 %v7645
      %v7647 = vpop.f32.mrb[0].mxu0
      %v7648 = vadd.f32 %v7035, %v7647
      %v7649 = vpop.f32.mrb[0].mxu0
      %v7650 = vand.u32 %v995, 4294901760
      %v7651 = vsub.f32 %v995, %v7650
      %7652 = vmatprep.mubr.f32.mxu0 %v7651
      %v7653 = vand.u32 %v994, 4294901760
      %v7654 = vsub.f32 %v994, %v7653
      %7655 = vmatmul.mubr.f32.gmra.mrb[0].mxu0 %v7654
      %v7656 = vpop.f32.mrb[0].mxu0
      %v7657 = vadd.f32 %v7042, %v7656
      %v7658 = vpop.f32.mrb[0].mxu0
      %v7659 = vand.u32 %v999, 4294901760
      %v7660 = vsub.f32 %v999, %v7659
      %7661 = vmatprep.mubr.f32.mxu0 %v7660
      %v7662 = vand.u32 %v998, 4294901760
      %v7663 = vsub.f32 %v998, %v7662
      %7664 = vmatmul.mubr.f32.gmra.mrb[0].mxu0 %v7663
      %v7665 = vpop.f32.mrb[0].mxu0
      %v7666 = vadd.f32 %v7049, %v7665
      %v7667 = vpop.f32.mrb[0].mxu0
      %v7668 = vand.u32 %v1003, 4294901760
      %v7669 = vsub.f32 %v1003, %v7668
      %7670 = vmatprep.mubr.f32.mxu0 %v7669
      %v7671 = vand.u32 %v1002, 4294901760
      %v7672 = vsub.f32 %v1002, %v7671
      %7673 = vmatmul.mubr.f32.gmra.mrb[0].mxu0 %v7672
      %v7674 = vpop.f32.mrb[0].mxu0
      %v7675 = vadd.f32 %v7056, %v7674
      %v7676 = vpop.f32.mrb[0].mxu0
      %v7677 = vand.u32 %v1007, 4294901760
      %v7678 = vsub.f32 %v1007, %v7677
      %7679 = vmatprep.mubr.f32.mxu0 %v7678
      %v7680 = vand.u32 %v1006, 4294901760
      %v7681 = vsub.f32 %v1006, %v7680
      %7682 = vmatmul.mubr.f32.gmra.mrb[0].mxu0 %v7681
      %v7683 = vpop.f32.mrb[0].mxu0
      %v7684 = vadd.f32 %v7063, %v7683
      %v7685 = vpop.f32.mrb[0].mxu0
      %v7686 = vand.u32 %v1011, 4294901760
      %v7687 = vsub.f32 %v1011, %v7686
      %7688 = vmatprep.mubr.f32.mxu0 %v7687
      %v7689 = vand.u32 %v1010, 4294901760
      %v7690 = vsub.f32 %v1010, %v7689
      %7691 = vmatmul.mubr.f32.gmra.mrb[0].mxu0 %v7690
      %v7692 = vpop.f32.mrb[0].mxu0
      %v7693 = vadd.f32 %v7070, %v7692
      %v7694 = vpop.f32.mrb[0].mxu0
      %v7695 = vand.u32 %v1015, 4294901760
      %v7696 = vsub.f32 %v1015, %v7695
      %7697 = vmatprep.mubr.f32.mxu0 %v7696
      %v7698 = vand.u32 %v1014, 4294901760
      %v7699 = vsub.f32 %v1014, %v7698
      %7700 = vmatmul.mubr.f32.gmra.mrb[0].mxu0 %v7699
      %v7701 = vpop.f32.mrb[0].mxu0
      %v7702 = vadd.f32 %v7077, %v7701
      %v7703 = vpop.f32.mrb[0].mxu0
      %v7704 = vand.u32 %v1019, 4294901760
      %v7705 = vsub.f32 %v1019, %v7704
      %7706 = vmatprep.mubr.f32.mxu0 %v7705
      %v7707 = vand.u32 %v1018, 4294901760
      %v7708 = vsub.f32 %v1018, %v7707
      %7709 = vmatmul.mubr.f32.gmra.mrb[0].mxu0 %v7708
      %v7710 = vpop.f32.mrb[0].mxu0
      %v7711 = vadd.f32 %v7084, %v7710
      %v7712 = vpop.f32.mrb[0].mxu0
      %v7713 = vand.u32 %v1023, 4294901760
      %v7714 = vsub.f32 %v1023, %v7713
      %7715 = vmatprep.mubr.f32.mxu0 %v7714
      %v7716 = vand.u32 %v1022, 4294901760
      %v7717 = vsub.f32 %v1022, %v7716
      %7718 = vmatmul.mubr.f32.gmra.mrb[0].mxu0 %v7717
      %v7719 = vpop.f32.mrb[0].mxu0
      %v7720 = vadd.f32 %v7091, %v7719
      %v7721 = vpop.f32.mrb[0].mxu0
      %v7722 = vand.u32 %v1027, 4294901760
      %v7723 = vsub.f32 %v1027, %v7722
      %7724 = vmatprep.mubr.f32.mxu0 %v7723
      %v7725 = vand.u32 %v1026, 4294901760
      %v7726 = vsub.f32 %v1026, %v7725
      %7727 = vmatmul.mubr.f32.gmra.mrb[0].mxu0 %v7726
      %v7728 = vpop.f32.mrb[0].mxu0
      %v7729 = vadd.f32 %v7098, %v7728
      %v7730 = vpop.f32.mrb[0].mxu0
      %v7731 = vand.u32 %v1031, 4294901760
      %v7732 = vsub.f32 %v1031, %v7731
      %7733 = vmatprep.mubr.f32.mxu0 %v7732
      %v7734 = vand.u32 %v1030, 4294901760
      %v7735 = vsub.f32 %v1030, %v7734
      %7736 = vmatmul.mubr.f32.gmra.mrb[0].mxu0 %v7735
      %v7737 = vpop.f32.mrb[0].mxu0
      %v7738 = vadd.f32 %v7105, %v7737
      %v7739 = vpop.f32.mrb[0].mxu0
      %v7740 = vand.u32 %v1035, 4294901760
      %v7741 = vsub.f32 %v1035, %v7740
      %7742 = vmatprep.mubr.f32.mxu0 %v7741
      %v7743 = vand.u32 %v1034, 4294901760
      %v7744 = vsub.f32 %v1034, %v7743
      %7745 = vmatmul.mubr.f32.gmra.mrb[0].mxu0 %v7744
      %v7746 = vpop.f32.mrb[0].mxu0
      %v7747 = vadd.f32 %v7112, %v7746
      %v7748 = vpop.f32.mrb[0].mxu0
      %v7749 = vand.u32 %v1039, 4294901760
      %v7750 = vsub.f32 %v1039, %v7749
      %7751 = vmatprep.mubr.f32.mxu0 %v7750
      %v7752 = vand.u32 %v1038, 4294901760
      %v7753 = vsub.f32 %v1038, %v7752
      %7754 = vmatmul.mubr.f32.gmra.mrb[0].mxu0 %v7753
      %v7755 = vpop.f32.mrb[0].mxu0
      %v7756 = vadd.f32 %v7119, %v7755
      %v7757 = vpop.f32.mrb[0].mxu0
      %v7758 = vand.u32 %v1043, 4294901760
      %v7759 = vsub.f32 %v1043, %v7758
      %7760 = vmatprep.mubr.f32.mxu0 %v7759
      %v7761 = vand.u32 %v1042, 4294901760
      %v7762 = vsub.f32 %v1042, %v7761
      %7763 = vmatmul.mubr.f32.gmra.mrb[0].mxu0 %v7762
      %v7764 = vpop.f32.mrb[0].mxu0
      %v7765 = vadd.f32 %v7126, %v7764
      %v7766 = vpop.f32.mrb[0].mxu0
      %v7767 = vand.u32 %v1047, 4294901760
      %v7768 = vsub.f32 %v1047, %v7767
      %7769 = vmatprep.mubr.f32.mxu0 %v7768
      %v7770 = vand.u32 %v1046, 4294901760
      %v7771 = vsub.f32 %v1046, %v7770
      %7772 = vmatmul.mubr.f32.gmra.mrb[0].mxu0 %v7771
      %v7773 = vpop.f32.mrb[0].mxu0
      %v7774 = vadd.f32 %v7133, %v7773
      %v7775 = vpop.f32.mrb[0].mxu0
      %v7776 = vand.u32 %v1051, 4294901760
      %v7777 = vsub.f32 %v1051, %v7776
      %7778 = vmatprep.mubr.f32.mxu0 %v7777
      %v7779 = vand.u32 %v1050, 4294901760
      %v7780 = vsub.f32 %v1050, %v7779
      %7781 = vmatmul.mubr.f32.gmra.mrb[0].mxu0 %v7780
      %v7782 = vpop.f32.mrb[0].mxu0
      %v7783 = vadd.f32 %v7140, %v7782
      %v7784 = vpop.f32.mrb[0].mxu0
      %v7785 = vand.u32 %v1055, 4294901760
      %v7786 = vsub.f32 %v1055, %v7785
      %7787 = vmatprep.mubr.f32.mxu0 %v7786
      %v7788 = vand.u32 %v1054, 4294901760
      %v7789 = vsub.f32 %v1054, %v7788
      %7790 = vmatmul.mubr.f32.gmra.mrb[0].mxu0 %v7789
      %v7791 = vpop.f32.mrb[0].mxu0
      %v7792 = vadd.f32 %v7147, %v7791
      %v7793 = vpop.f32.mrb[0].mxu0
      %v7794 = vand.u32 %v1059, 4294901760
      %v7795 = vsub.f32 %v1059, %v7794
      %7796 = vmatprep.mubr.f32.mxu0 %v7795
      %v7797 = vand.u32 %v1058, 4294901760
      %v7798 = vsub.f32 %v1058, %v7797
      %7799 = vmatmul.mubr.f32.gmra.mrb[0].mxu0 %v7798
      %v7800 = vpop.f32.mrb[0].mxu0
      %v7801 = vadd.f32 %v7154, %v7800
      %v7802 = vpop.f32.mrb[0].mxu0
      %v7803 = vand.u32 %v1063, 4294901760
      %v7804 = vsub.f32 %v1063, %v7803
      %7805 = vmatprep.mubr.f32.mxu0 %v7804
      %v7806 = vand.u32 %v1062, 4294901760
      %v7807 = vsub.f32 %v1062, %v7806
      %7808 = vmatmul.mubr.f32.gmra.mrb[0].mxu0 %v7807
      %v7809 = vpop.f32.mrb[0].mxu0
      %v7810 = vadd.f32 %v7161, %v7809
      %v7811 = vpop.f32.mrb[0].mxu0
      %v7812 = vand.u32 %v1067, 4294901760
      %v7813 = vsub.f32 %v1067, %v7812
      %7814 = vmatprep.mubr.f32.mxu0 %v7813
      %v7815 = vand.u32 %v1066, 4294901760
      %v7816 = vsub.f32 %v1066, %v7815
      %7817 = vmatmul.mubr.f32.gmra.mrb[0].mxu0 %v7816
      %v7818 = vpop.f32.mrb[0].mxu0
      %v7819 = vadd.f32 %v7168, %v7818
      %v7820 = vpop.f32.mrb[0].mxu0
      %v7821 = vand.u32 %v1071, 4294901760
      %v7822 = vsub.f32 %v1071, %v7821
      %7823 = vmatprep.mubr.f32.mxu0 %v7822
      %v7824 = vand.u32 %v1070, 4294901760
      %v7825 = vsub.f32 %v1070, %v7824
      %7826 = vmatmul.mubr.f32.gmra.mrb[0].mxu0 %v7825
      %v7827 = vpop.f32.mrb[0].mxu0
      %v7828 = vadd.f32 %v7175, %v7827
      %v7829 = vpop.f32.mrb[0].mxu0
      %v7830 = vand.u32 %v1075, 4294901760
      %v7831 = vsub.f32 %v1075, %v7830
      %7832 = vmatprep.mubr.f32.mxu0 %v7831
      %v7833 = vand.u32 %v1074, 4294901760
      %v7834 = vsub.f32 %v1074, %v7833
      %7835 = vmatmul.mubr.f32.gmra.mrb[0].mxu0 %v7834
      %v7836 = vpop.f32.mrb[0].mxu0
      %v7837 = vadd.f32 %v7182, %v7836
      %v7838 = vpop.f32.mrb[0].mxu0
      %v7839 = vand.u32 %v1079, 4294901760
      %v7840 = vsub.f32 %v1079, %v7839
      %7841 = vmatprep.mubr.f32.mxu0 %v7840
      %v7842 = vand.u32 %v1078, 4294901760
      %v7843 = vsub.f32 %v1078, %v7842
      %7844 = vmatmul.mubr.f32.gmra.mrb[0].mxu0 %v7843
      %v7845 = vpop.f32.mrb[0].mxu0
      %v7846 = vadd.f32 %v7189, %v7845
      %v7847 = vpop.f32.mrb[0].mxu0
      %v7848 = vand.u32 %v1083, 4294901760
      %v7849 = vsub.f32 %v1083, %v7848
      %7850 = vmatprep.mubr.f32.mxu0 %v7849
      %v7851 = vand.u32 %v1082, 4294901760
      %v7852 = vsub.f32 %v1082, %v7851
      %7853 = vmatmul.mubr.f32.gmra.mrb[0].mxu0 %v7852
      %v7854 = vpop.f32.mrb[0].mxu0
      %v7855 = vadd.f32 %v7196, %v7854
      %v7856 = vpop.f32.mrb[0].mxu0
      %v7857 = vand.u32 %v1087, 4294901760
      %v7858 = vsub.f32 %v1087, %v7857
      %7859 = vmatprep.mubr.f32.mxu0 %v7858
      %v7860 = vand.u32 %v1086, 4294901760
      %v7861 = vsub.f32 %v1086, %v7860
      %7862 = vmatmul.mubr.f32.gmra.mrb[0].mxu0 %v7861
      %v7863 = vpop.f32.mrb[0].mxu0
      %v7864 = vadd.f32 %v7203, %v7863
      %v7865 = vpop.f32.mrb[0].mxu0
      %v7866 = vand.u32 %v1091, 4294901760
      %v7867 = vsub.f32 %v1091, %v7866
      %7868 = vmatprep.mubr.f32.mxu0 %v7867
      %v7869 = vand.u32 %v1090, 4294901760
      %v7870 = vsub.f32 %v1090, %v7869
      %7871 = vmatmul.mubr.f32.gmra.mrb[0].mxu0 %v7870
      %v7872 = vpop.f32.mrb[0].mxu0
      %v7873 = vadd.f32 %v7210, %v7872
      %v7874 = vpop.f32.mrb[0].mxu0
      %v7875 = vand.u32 %v1095, 4294901760
      %v7876 = vsub.f32 %v1095, %v7875
      %7877 = vmatprep.mubr.f32.mxu0 %v7876
      %v7878 = vand.u32 %v1094, 4294901760
      %v7879 = vsub.f32 %v1094, %v7878
      %7880 = vmatmul.mubr.f32.gmra.mrb[0].mxu0 %v7879
      %v7881 = vpop.f32.mrb[0].mxu0
      %v7882 = vadd.f32 %v7217, %v7881
      %v7883 = vpop.f32.mrb[0].mxu0
      %v7884 = vand.u32 %v1099, 4294901760
      %v7885 = vsub.f32 %v1099, %v7884
      %7886 = vmatprep.mubr.f32.mxu0 %v7885
      %v7887 = vand.u32 %v1098, 4294901760
      %v7888 = vsub.f32 %v1098, %v7887
      %7889 = vmatmul.mubr.f32.gmra.mrb[0].mxu0 %v7888
      %v7890 = vpop.f32.mrb[0].mxu0
      %v7891 = vadd.f32 %v7224, %v7890
      %v7892 = vpop.f32.mrb[0].mxu0
      %v7893 = vand.u32 %v1103, 4294901760
      %v7894 = vsub.f32 %v1103, %v7893
      %7895 = vmatprep.mubr.f32.mxu0 %v7894
      %v7896 = vand.u32 %v1102, 4294901760
      %v7897 = vsub.f32 %v1102, %v7896
      %7898 = vmatmul.mubr.f32.gmra.mrb[0].mxu0 %v7897
      %v7899 = vpop.f32.mrb[0].mxu0
      %v7900 = vadd.f32 %v7231, %v7899
      %v7901 = vpop.f32.mrb[0].mxu0
      %v7902 = vand.u32 %v1107, 4294901760
      %v7903 = vsub.f32 %v1107, %v7902
      %7904 = vmatprep.mubr.f32.mxu0 %v7903
      %v7905 = vand.u32 %v1106, 4294901760
      %v7906 = vsub.f32 %v1106, %v7905
      %7907 = vmatmul.mubr.f32.gmra.mrb[0].mxu0 %v7906
      %v7908 = vpop.f32.mrb[0].mxu0
      %v7909 = vadd.f32 %v7238, %v7908
      %v7910 = vpop.f32.mrb[0].mxu0
      %v7911 = vand.u32 %v1111, 4294901760
      %v7912 = vsub.f32 %v1111, %v7911
      %7913 = vmatprep.mubr.f32.mxu0 %v7912
      %v7914 = vand.u32 %v1110, 4294901760
      %v7915 = vsub.f32 %v1110, %v7914
      %7916 = vmatmul.mubr.f32.gmra.mrb[0].mxu0 %v7915
      %v7917 = vpop.f32.mrb[0].mxu0
      %v7918 = vadd.f32 %v7245, %v7917
      %v7919 = vpop.f32.mrb[0].mxu0
      %v7920 = vand.u32 %v1115, 4294901760
      %v7921 = vsub.f32 %v1115, %v7920
      %7922 = vmatprep.mubr.f32.mxu0 %v7921
      %v7923 = vand.u32 %v1114, 4294901760
      %v7924 = vsub.f32 %v1114, %v7923
      %7925 = vmatmul.mubr.f32.gmra.mrb[0].mxu0 %v7924
      %v7926 = vpop.f32.mrb[0].mxu0
      %v7927 = vadd.f32 %v7252, %v7926
      %v7928 = vpop.f32.mrb[0].mxu0
      %v7929 = vand.u32 %v1119, 4294901760
      %v7930 = vsub.f32 %v1119, %v7929
      %7931 = vmatprep.mubr.f32.mxu0 %v7930
      %v7932 = vand.u32 %v1118, 4294901760
      %v7933 = vsub.f32 %v1118, %v7932
      %7934 = vmatmul.mubr.f32.gmra.mrb[0].mxu0 %v7933
      %v7935 = vpop.f32.mrb[0].mxu0
      %v7936 = vadd.f32 %v7259, %v7935
      %v7937 = vpop.f32.mrb[0].mxu0
      %v7938 = vand.u32 %v1123, 4294901760
      %v7939 = vsub.f32 %v1123, %v7938
      %7940 = vmatprep.mubr.f32.mxu0 %v7939
      %v7941 = vand.u32 %v1122, 4294901760
      %v7942 = vsub.f32 %v1122, %v7941
      %7943 = vmatmul.mubr.f32.gmra.mrb[0].mxu0 %v7942
      %v7944 = vpop.f32.mrb[0].mxu0
      %v7945 = vadd.f32 %v7266, %v7944
      %v7946 = vpop.f32.mrb[0].mxu0
      %v7947 = vand.u32 %v1127, 4294901760
      %v7948 = vsub.f32 %v1127, %v7947
      %7949 = vmatprep.mubr.f32.mxu0 %v7948
      %v7950 = vand.u32 %v1126, 4294901760
      %v7951 = vsub.f32 %v1126, %v7950
      %7952 = vmatmul.mubr.f32.gmra.mrb[0].mxu0 %v7951
      %v7953 = vpop.f32.mrb[0].mxu0
      %v7954 = vadd.f32 %v7273, %v7953
      %v7955 = vpop.f32.mrb[0].mxu0
      %v7956 = vand.u32 %v1131, 4294901760
      %v7957 = vsub.f32 %v1131, %v7956
      %7958 = vmatprep.mubr.f32.mxu0 %v7957
      %v7959 = vand.u32 %v1130, 4294901760
      %v7960 = vsub.f32 %v1130, %v7959
      %7961 = vmatmul.mubr.f32.gmra.mrb[0].mxu0 %v7960
      %v7962 = vpop.f32.mrb[0].mxu0
      %v7963 = vadd.f32 %v7280, %v7962
      %v7964 = vpop.f32.mrb[0].mxu0
      %v7965 = vand.u32 %v1135, 4294901760
      %v7966 = vsub.f32 %v1135, %v7965
      %7967 = vmatprep.mubr.f32.mxu0 %v7966
      %v7968 = vand.u32 %v1134, 4294901760
      %v7969 = vsub.f32 %v1134, %v7968
      %7970 = vmatmul.mubr.f32.gmra.mrb[0].mxu0 %v7969
      %v7971 = vpop.f32.mrb[0].mxu0
      %v7972 = vadd.f32 %v7287, %v7971
      %v7973 = vpop.f32.mrb[0].mxu0
      %v7974 = vand.u32 %v1139, 4294901760
      %v7975 = vsub.f32 %v1139, %v7974
      %7976 = vmatprep.mubr.f32.mxu0 %v7975
      %v7977 = vand.u32 %v1138, 4294901760
      %v7978 = vsub.f32 %v1138, %v7977
      %7979 = vmatmul.mubr.f32.gmra.mrb[0].mxu0 %v7978
      %v7980 = vpop.f32.mrb[0].mxu0
      %v7981 = vadd.f32 %v7294, %v7980
      %v7982 = vpop.f32.mrb[0].mxu0
      %v7983 = vand.u32 %v1143, 4294901760
      %v7984 = vsub.f32 %v1143, %v7983
      %7985 = vmatprep.mubr.f32.mxu0 %v7984
      %v7986 = vand.u32 %v1142, 4294901760
      %v7987 = vsub.f32 %v1142, %v7986
      %7988 = vmatmul.mubr.f32.gmra.mrb[0].mxu0 %v7987
      %v7989 = vpop.f32.mrb[0].mxu0
      %v7990 = vadd.f32 %v7301, %v7989
      %v7991 = vpop.f32.mrb[0].mxu0
      %v7992 = vand.u32 %v1147, 4294901760
      %v7993 = vsub.f32 %v1147, %v7992
      %7994 = vmatprep.mubr.f32.mxu0 %v7993
      %v7995 = vand.u32 %v1146, 4294901760
      %v7996 = vsub.f32 %v1146, %v7995
      %7997 = vmatmul.mubr.f32.gmra.mrb[0].mxu0 %v7996
      %v7998 = vpop.f32.mrb[0].mxu0
      %v7999 = vadd.f32 %v7308, %v7998
      %v8000 = vpop.f32.mrb[0].mxu0
      %v8001 = vand.u32 %v1151, 4294901760
      %v8002 = vsub.f32 %v1151, %v8001
      %8003 = vmatprep.mubr.f32.mxu0 %v8002
      %v8004 = vand.u32 %v1150, 4294901760
      %v8005 = vsub.f32 %v1150, %v8004
      %8006 = vmatmul.mubr.f32.gmra.mrb[0].mxu0 %v8005
      %v8007 = vpop.f32.mrb[0].mxu0
      %v8008 = vadd.f32 %v7315, %v8007
      %v8009 = vpop.f32.mrb[0].mxu0
      %v8010 = vand.u32 %v1155, 4294901760
      %v8011 = vsub.f32 %v1155, %v8010
      %8012 = vmatprep.mubr.f32.mxu0 %v8011
      %v8013 = vand.u32 %v1154, 4294901760
      %v8014 = vsub.f32 %v1154, %v8013
      %8015 = vmatmul.mubr.f32.gmra.mrb[0].mxu0 %v8014
      %v8016 = vpop.f32.mrb[0].mxu0
      %v8017 = vadd.f32 %v7322, %v8016
      %v8018 = vpop.f32.mrb[0].mxu0
      %v8019 = vand.u32 %v1159, 4294901760
      %v8020 = vsub.f32 %v1159, %v8019
      %8021 = vmatprep.mubr.f32.mxu0 %v8020
      %v8022 = vand.u32 %v1158, 4294901760
      %v8023 = vsub.f32 %v1158, %v8022
      %8024 = vmatmul.mubr.f32.gmra.mrb[0].mxu0 %v8023
      %v8025 = vpop.f32.mrb[0].mxu0
      %v8026 = vadd.f32 %v7329, %v8025
      %v8027 = vpop.f32.mrb[0].mxu0
      %v8028 = vand.u32 %v1163, 4294901760
      %v8029 = vsub.f32 %v1163, %v8028
      %8030 = vmatprep.mubr.f32.mxu0 %v8029
      %v8031 = vand.u32 %v1162, 4294901760
      %v8032 = vsub.f32 %v1162, %v8031
      %8033 = vmatmul.mubr.f32.gmra.mrb[0].mxu0 %v8032
      %v8034 = vpop.f32.mrb[0].mxu0
      %v8035 = vadd.f32 %v7336, %v8034
      %v8036 = vpop.f32.mrb[0].mxu0
      %v8037 = vand.u32 %v1167, 4294901760
      %v8038 = vsub.f32 %v1167, %v8037
      %8039 = vmatprep.mubr.f32.mxu0 %v8038
      %v8040 = vand.u32 %v1166, 4294901760
      %v8041 = vsub.f32 %v1166, %v8040
      %8042 = vmatmul.mubr.f32.gmra.mrb[0].mxu0 %v8041
      %v8043 = vpop.f32.mrb[0].mxu0
      %v8044 = vadd.f32 %v7343, %v8043
      %v8045 = vpop.f32.mrb[0].mxu0
      %v8046 = vand.u32 %v1171, 4294901760
      %v8047 = vsub.f32 %v1171, %v8046
      %8048 = vmatprep.mubr.f32.mxu0 %v8047
      %v8049 = vand.u32 %v1170, 4294901760
      %v8050 = vsub.f32 %v1170, %v8049
      %8051 = vmatmul.mubr.f32.gmra.mrb[0].mxu0 %v8050
      %v8052 = vpop.f32.mrb[0].mxu0
      %v8053 = vadd.f32 %v7350, %v8052
      %v8054 = vpop.f32.mrb[0].mxu0
      %v8055 = vand.u32 %v1175, 4294901760
      %v8056 = vsub.f32 %v1175, %v8055
      %8057 = vmatprep.mubr.f32.mxu0 %v8056
      %v8058 = vand.u32 %v1174, 4294901760
      %v8059 = vsub.f32 %v1174, %v8058
      %8060 = vmatmul.mubr.f32.gmra.mrb[0].mxu0 %v8059
      %v8061 = vpop.f32.mrb[0].mxu0
      %v8062 = vadd.f32 %v7357, %v8061
      %v8063 = vpop.f32.mrb[0].mxu0
      %8064 = vdwg.mxu0
      %8065 = vmatprep.subr.mxu0 0.0
      %v8066 = vand.u32 %v1208, 4294901760
      %8067 = vmatpush1.msra.mxu0 %v8066
      %8068 = vmatprep.subr.mxu0 0.0
      %v8069 = vand.u32 %v1209, 4294901760
      %8070 = vmatpush1.msra.mxu0 %v8069
      %8071 = vmatprep.subr.mxu0 0.0
      %v8072 = vand.u32 %v1210, 4294901760
      %8073 = vmatpush1.msra.mxu0 %v8072
      %8074 = vmatprep.subr.mxu0 0.0
      %v8075 = vand.u32 %v1211, 4294901760
      %8076 = vmatpush1.msra.mxu0 %v8075
      %8077 = vmatprep.subr.mxu0 0.0
      %v8078 = vand.u32 %v1212, 4294901760
      %8079 = vmatpush1.msra.mxu0 %v8078
      %8080 = vmatprep.subr.mxu0 0.0
      %v8081 = vand.u32 %v1213, 4294901760
      %8082 = vmatpush1.msra.mxu0 %v8081
      %8083 = vmatprep.subr.mxu0 0.0
      %v8084 = vand.u32 %v1214, 4294901760
      %8085 = vmatpush1.msra.mxu0 %v8084
      %8086 = vmatprep.subr.mxu0 0.0
      %v8087 = vand.u32 %v1215, 4294901760
      %8088 = vmatpush1.msra.mxu0 %v8087
      %8089 = vmatprep.subr.mxu0 0.0
      %v8090 = vand.u32 %v1216, 4294901760
      %8091 = vmatpush1.msra.mxu0 %v8090
      %8092 = vmatprep.subr.mxu0 0.0
      %v8093 = vand.u32 %v1217, 4294901760
      %8094 = vmatpush1.msra.mxu0 %v8093
      %8095 = vmatprep.subr.mxu0 0.0
      %v8096 = vand.u32 %v1218, 4294901760
      %8097 = vmatpush1.msra.mxu0 %v8096
      %8098 = vmatprep.subr.mxu0 0.0
      %v8099 = vand.u32 %v1219, 4294901760
      %8100 = vmatpush1.msra.mxu0 %v8099
      %8101 = vmatprep.subr.mxu0 0.0
      %v8102 = vand.u32 %v1220, 4294901760
      %8103 = vmatpush1.msra.mxu0 %v8102
      %8104 = vmatprep.subr.mxu0 0.0
      %v8105 = vand.u32 %v1221, 4294901760
      %8106 = vmatpush1.msra.mxu0 %v8105
      %8107 = vmatprep.subr.mxu0 0.0
      %v8108 = vand.u32 %v1222, 4294901760
      %8109 = vmatpush1.msra.mxu0 %v8108
      %8110 = vmatprep.subr.mxu0 0.0
      %v8111 = vand.u32 %v1223, 4294901760
      %8112 = vmatpush1.msra.mxu0 %v8111
      %8113 = vmatprep.subr.mxu0 0.0
      %v8114 = vand.u32 %v1224, 4294901760
      %8115 = vmatpush1.msra.mxu0 %v8114
      %8116 = vmatprep.subr.mxu0 0.0
      %v8117 = vand.u32 %v1225, 4294901760
      %8118 = vmatpush1.msra.mxu0 %v8117
      %8119 = vmatprep.subr.mxu0 0.0
      %v8120 = vand.u32 %v1226, 4294901760
      %8121 = vmatpush1.msra.mxu0 %v8120
      %8122 = vmatprep.subr.mxu0 0.0
      %v8123 = vand.u32 %v1227, 4294901760
      %8124 = vmatpush1.msra.mxu0 %v8123
      %8125 = vmatprep.subr.mxu0 0.0
      %v8126 = vand.u32 %v1228, 4294901760
      %8127 = vmatpush1.msra.mxu0 %v8126
      %8128 = vmatprep.subr.mxu0 0.0
      %v8129 = vand.u32 %v1229, 4294901760
      %8130 = vmatpush1.msra.mxu0 %v8129
      %8131 = vmatprep.subr.mxu0 0.0
      %v8132 = vand.u32 %v1230, 4294901760
      %8133 = vmatpush1.msra.mxu0 %v8132
      %8134 = vmatprep.subr.mxu0 0.0
      %v8135 = vand.u32 %v1231, 4294901760
      %8136 = vmatpush1.msra.mxu0 %v8135
      %8137 = vmatprep.subr.mxu0 0.0
      %v8138 = vand.u32 %v1232, 4294901760
      %8139 = vmatpush1.msra.mxu0 %v8138
      %8140 = vmatprep.subr.mxu0 0.0
      %v8141 = vand.u32 %v1233, 4294901760
      %8142 = vmatpush1.msra.mxu0 %v8141
      %8143 = vmatprep.subr.mxu0 0.0
      %v8144 = vand.u32 %v1234, 4294901760
      %8145 = vmatpush1.msra.mxu0 %v8144
      %8146 = vmatprep.subr.mxu0 0.0
      %v8147 = vand.u32 %v1235, 4294901760
      %8148 = vmatpush1.msra.mxu0 %v8147
      %8149 = vmatprep.subr.mxu0 0.0
      %v8150 = vand.u32 %v1236, 4294901760
      %8151 = vmatpush1.msra.mxu0 %v8150
      %8152 = vmatprep.subr.mxu0 0.0
      %v8153 = vand.u32 %v1237, 4294901760
      %8154 = vmatpush1.msra.mxu0 %v8153
      %8155 = vmatprep.subr.mxu0 0.0
      %v8156 = vand.u32 %v1238, 4294901760
      %8157 = vmatpush1.msra.mxu0 %v8156
      %8158 = vmatprep.subr.mxu0 0.0
      %v8159 = vand.u32 %v1239, 4294901760
      %8160 = vmatpush1.msra.mxu0 %v8159
      %v8161 = vand.u32 %v923, 4294901760
      %v8162 = vsub.f32 %v923, %v8161
      %v8163 = vand.u32 %v8162, 4294901760
      %8164 = vmatprep.mubr.f32.mxu0 %v8163
      %v8165 = vand.u32 %v922, 4294901760
      %v8166 = vsub.f32 %v922, %v8165
      %v8167 = vand.u32 %v8166, 4294901760
      %8168 = vmatmul.mubr.f32.gmra.mrb[0].mxu0 %v8167
      %v8169 = vpop.f32.mrb[0].mxu0
      %v8170 = vadd.f32 %v7495, %v8169
      %v8171 = vpop.f32.mrb[0].mxu0
      %v8172 = vand.u32 %v927, 4294901760
      %v8173 = vsub.f32 %v927, %v8172
      %v8174 = vand.u32 %v8173, 4294901760
      %8175 = vmatprep.mubr.f32.mxu0 %v8174
      %v8176 = vand.u32 %v926, 4294901760
      %v8177 = vsub.f32 %v926, %v8176
      %v8178 = vand.u32 %v8177, 4294901760
      %8179 = vmatmul.mubr.f32.gmra.mrb[0].mxu0 %v8178
      %v8180 = vpop.f32.mrb[0].mxu0
      %v8181 = vadd.f32 %v7504, %v8180
      %v8182 = vpop.f32.mrb[0].mxu0
      %v8183 = vand.u32 %v931, 4294901760
      %v8184 = vsub.f32 %v931, %v8183
      %v8185 = vand.u32 %v8184, 4294901760
      %8186 = vmatprep.mubr.f32.mxu0 %v8185
      %v8187 = vand.u32 %v930, 4294901760
      %v8188 = vsub.f32 %v930, %v8187
      %v8189 = vand.u32 %v8188, 4294901760
      %8190 = vmatmul.mubr.f32.gmra.mrb[0].mxu0 %v8189
      %v8191 = vpop.f32.mrb[0].mxu0
      %v8192 = vadd.f32 %v7513, %v8191
      %v8193 = vpop.f32.mrb[0].mxu0
      %v8194 = vand.u32 %v935, 4294901760
      %v8195 = vsub.f32 %v935, %v8194
      %v8196 = vand.u32 %v8195, 4294901760
      %8197 = vmatprep.mubr.f32.mxu0 %v8196
      %v8198 = vand.u32 %v934, 4294901760
      %v8199 = vsub.f32 %v934, %v8198
      %v8200 = vand.u32 %v8199, 4294901760
      %8201 = vmatmul.mubr.f32.gmra.mrb[0].mxu0 %v8200
      %v8202 = vpop.f32.mrb[0].mxu0
      %v8203 = vadd.f32 %v7522, %v8202
      %v8204 = vpop.f32.mrb[0].mxu0
      %v8205 = vand.u32 %v939, 4294901760
      %v8206 = vsub.f32 %v939, %v8205
      %v8207 = vand.u32 %v8206, 4294901760
      %8208 = vmatprep.mubr.f32.mxu0 %v8207
      %v8209 = vand.u32 %v938, 4294901760
      %v8210 = vsub.f32 %v938, %v8209
      %v8211 = vand.u32 %v8210, 4294901760
      %8212 = vmatmul.mubr.f32.gmra.mrb[0].mxu0 %v8211
      %v8213 = vpop.f32.mrb[0].mxu0
      %v8214 = vadd.f32 %v7531, %v8213
      %v8215 = vpop.f32.mrb[0].mxu0
      %v8216 = vand.u32 %v943, 4294901760
      %v8217 = vsub.f32 %v943, %v8216
      %v8218 = vand.u32 %v8217, 4294901760
      %8219 = vmatprep.mubr.f32.mxu0 %v8218
      %v8220 = vand.u32 %v942, 4294901760
      %v8221 = vsub.f32 %v942, %v8220
      %v8222 = vand.u32 %v8221, 4294901760
      %8223 = vmatmul.mubr.f32.gmra.mrb[0].mxu0 %v8222
      %v8224 = vpop.f32.mrb[0].mxu0
      %v8225 = vadd.f32 %v7540, %v8224
      %v8226 = vpop.f32.mrb[0].mxu0
      %v8227 = vand.u32 %v947, 4294901760
      %v8228 = vsub.f32 %v947, %v8227
      %v8229 = vand.u32 %v8228, 4294901760
      %8230 = vmatprep.mubr.f32.mxu0 %v8229
      %v8231 = vand.u32 %v946, 4294901760
      %v8232 = vsub.f32 %v946, %v8231
      %v8233 = vand.u32 %v8232, 4294901760
      %8234 = vmatmul.mubr.f32.gmra.mrb[0].mxu0 %v8233
      %v8235 = vpop.f32.mrb[0].mxu0
      %v8236 = vadd.f32 %v7549, %v8235
      %v8237 = vpop.f32.mrb[0].mxu0
      %v8238 = vand.u32 %v951, 4294901760
      %v8239 = vsub.f32 %v951, %v8238
      %v8240 = vand.u32 %v8239, 4294901760
      %8241 = vmatprep.mubr.f32.mxu0 %v8240
      %v8242 = vand.u32 %v950, 4294901760
      %v8243 = vsub.f32 %v950, %v8242
      %v8244 = vand.u32 %v8243, 4294901760
      %8245 = vmatmul.mubr.f32.gmra.mrb[0].mxu0 %v8244
      %v8246 = vpop.f32.mrb[0].mxu0
      %v8247 = vadd.f32 %v7558, %v8246
      %v8248 = vpop.f32.mrb[0].mxu0
      %v8249 = vand.u32 %v955, 4294901760
      %v8250 = vsub.f32 %v955, %v8249
      %v8251 = vand.u32 %v8250, 4294901760
      %8252 = vmatprep.mubr.f32.mxu0 %v8251
      %v8253 = vand.u32 %v954, 4294901760
      %v8254 = vsub.f32 %v954, %v8253
      %v8255 = vand.u32 %v8254, 4294901760
      %8256 = vmatmul.mubr.f32.gmra.mrb[0].mxu0 %v8255
      %v8257 = vpop.f32.mrb[0].mxu0
      %v8258 = vadd.f32 %v7567, %v8257
      %v8259 = vpop.f32.mrb[0].mxu0
      %v8260 = vand.u32 %v959, 4294901760
      %v8261 = vsub.f32 %v959, %v8260
      %v8262 = vand.u32 %v8261, 4294901760
      %8263 = vmatprep.mubr.f32.mxu0 %v8262
      %v8264 = vand.u32 %v958, 4294901760
      %v8265 = vsub.f32 %v958, %v8264
      %v8266 = vand.u32 %v8265, 4294901760
      %8267 = vmatmul.mubr.f32.gmra.mrb[0].mxu0 %v8266
      %v8268 = vpop.f32.mrb[0].mxu0
      %v8269 = vadd.f32 %v7576, %v8268
      %v8270 = vpop.f32.mrb[0].mxu0
      %v8271 = vand.u32 %v963, 4294901760
      %v8272 = vsub.f32 %v963, %v8271
      %v8273 = vand.u32 %v8272, 4294901760
      %8274 = vmatprep.mubr.f32.mxu0 %v8273
      %v8275 = vand.u32 %v962, 4294901760
      %v8276 = vsub.f32 %v962, %v8275
      %v8277 = vand.u32 %v8276, 4294901760
      %8278 = vmatmul.mubr.f32.gmra.mrb[0].mxu0 %v8277
      %v8279 = vpop.f32.mrb[0].mxu0
      %v8280 = vadd.f32 %v7585, %v8279
      %v8281 = vpop.f32.mrb[0].mxu0
      %v8282 = vand.u32 %v967, 4294901760
      %v8283 = vsub.f32 %v967, %v8282
      %v8284 = vand.u32 %v8283, 4294901760
      %8285 = vmatprep.mubr.f32.mxu0 %v8284
      %v8286 = vand.u32 %v966, 4294901760
      %v8287 = vsub.f32 %v966, %v8286
      %v8288 = vand.u32 %v8287, 4294901760
      %8289 = vmatmul.mubr.f32.gmra.mrb[0].mxu0 %v8288
      %v8290 = vpop.f32.mrb[0].mxu0
      %v8291 = vadd.f32 %v7594, %v8290
      %v8292 = vpop.f32.mrb[0].mxu0
      %v8293 = vand.u32 %v971, 4294901760
      %v8294 = vsub.f32 %v971, %v8293
      %v8295 = vand.u32 %v8294, 4294901760
      %8296 = vmatprep.mubr.f32.mxu0 %v8295
      %v8297 = vand.u32 %v970, 4294901760
      %v8298 = vsub.f32 %v970, %v8297
      %v8299 = vand.u32 %v8298, 4294901760
      %8300 = vmatmul.mubr.f32.gmra.mrb[0].mxu0 %v8299
      %v8301 = vpop.f32.mrb[0].mxu0
      %v8302 = vadd.f32 %v7603, %v8301
      %v8303 = vpop.f32.mrb[0].mxu0
      %v8304 = vand.u32 %v975, 4294901760
      %v8305 = vsub.f32 %v975, %v8304
      %v8306 = vand.u32 %v8305, 4294901760
      %8307 = vmatprep.mubr.f32.mxu0 %v8306
      %v8308 = vand.u32 %v974, 4294901760
      %v8309 = vsub.f32 %v974, %v8308
      %v8310 = vand.u32 %v8309, 4294901760
      %8311 = vmatmul.mubr.f32.gmra.mrb[0].mxu0 %v8310
      %v8312 = vpop.f32.mrb[0].mxu0
      %v8313 = vadd.f32 %v7612, %v8312
      %v8314 = vpop.f32.mrb[0].mxu0
      %v8315 = vand.u32 %v979, 4294901760
      %v8316 = vsub.f32 %v979, %v8315
      %v8317 = vand.u32 %v8316, 4294901760
      %8318 = vmatprep.mubr.f32.mxu0 %v8317
      %v8319 = vand.u32 %v978, 4294901760
      %v8320 = vsub.f32 %v978, %v8319
      %v8321 = vand.u32 %v8320, 4294901760
      %8322 = vmatmul.mubr.f32.gmra.mrb[0].mxu0 %v8321
      %v8323 = vpop.f32.mrb[0].mxu0
      %v8324 = vadd.f32 %v7621, %v8323
      %v8325 = vpop.f32.mrb[0].mxu0
      %v8326 = vand.u32 %v983, 4294901760
      %v8327 = vsub.f32 %v983, %v8326
      %v8328 = vand.u32 %v8327, 4294901760
      %8329 = vmatprep.mubr.f32.mxu0 %v8328
      %v8330 = vand.u32 %v982, 4294901760
      %v8331 = vsub.f32 %v982, %v8330
      %v8332 = vand.u32 %v8331, 4294901760
      %8333 = vmatmul.mubr.f32.gmra.mrb[0].mxu0 %v8332
      %v8334 = vpop.f32.mrb[0].mxu0
      %v8335 = vadd.f32 %v7630, %v8334
      %v8336 = vpop.f32.mrb[0].mxu0
      %v8337 = vand.u32 %v987, 4294901760
      %v8338 = vsub.f32 %v987, %v8337
      %v8339 = vand.u32 %v8338, 4294901760
      %8340 = vmatprep.mubr.f32.mxu0 %v8339
      %v8341 = vand.u32 %v986, 4294901760
      %v8342 = vsub.f32 %v986, %v8341
      %v8343 = vand.u32 %v8342, 4294901760
      %8344 = vmatmul.mubr.f32.gmra.mrb[0].mxu0 %v8343
      %v8345 = vpop.f32.mrb[0].mxu0
      %v8346 = vadd.f32 %v7639, %v8345
      %v8347 = vpop.f32.mrb[0].mxu0
      %v8348 = vand.u32 %v991, 4294901760
      %v8349 = vsub.f32 %v991, %v8348
      %v8350 = vand.u32 %v8349, 4294901760
      %8351 = vmatprep.mubr.f32.mxu0 %v8350
      %v8352 = vand.u32 %v990, 4294901760
      %v8353 = vsub.f32 %v990, %v8352
      %v8354 = vand.u32 %v8353, 4294901760
      %8355 = vmatmul.mubr.f32.gmra.mrb[0].mxu0 %v8354
      %v8356 = vpop.f32.mrb[0].mxu0
      %v8357 = vadd.f32 %v7648, %v8356
      %v8358 = vpop.f32.mrb[0].mxu0
      %v8359 = vand.u32 %v995, 4294901760
      %v8360 = vsub.f32 %v995, %v8359
      %v8361 = vand.u32 %v8360, 4294901760
      %8362 = vmatprep.mubr.f32.mxu0 %v8361
      %v8363 = vand.u32 %v994, 4294901760
      %v8364 = vsub.f32 %v994, %v8363
      %v8365 = vand.u32 %v8364, 4294901760
      %8366 = vmatmul.mubr.f32.gmra.mrb[0].mxu0 %v8365
      %v8367 = vpop.f32.mrb[0].mxu0
      %v8368 = vadd.f32 %v7657, %v8367
      %v8369 = vpop.f32.mrb[0].mxu0
      %v8370 = vand.u32 %v999, 4294901760
      %v8371 = vsub.f32 %v999, %v8370
      %v8372 = vand.u32 %v8371, 4294901760
      %8373 = vmatprep.mubr.f32.mxu0 %v8372
      %v8374 = vand.u32 %v998, 4294901760
      %v8375 = vsub.f32 %v998, %v8374
      %v8376 = vand.u32 %v8375, 4294901760
      %8377 = vmatmul.mubr.f32.gmra.mrb[0].mxu0 %v8376
      %v8378 = vpop.f32.mrb[0].mxu0
      %v8379 = vadd.f32 %v7666, %v8378
      %v8380 = vpop.f32.mrb[0].mxu0
      %v8381 = vand.u32 %v1003, 4294901760
      %v8382 = vsub.f32 %v1003, %v8381
      %v8383 = vand.u32 %v8382, 4294901760
      %8384 = vmatprep.mubr.f32.mxu0 %v8383
      %v8385 = vand.u32 %v1002, 4294901760
      %v8386 = vsub.f32 %v1002, %v8385
      %v8387 = vand.u32 %v8386, 4294901760
      %8388 = vmatmul.mubr.f32.gmra.mrb[0].mxu0 %v8387
      %v8389 = vpop.f32.mrb[0].mxu0
      %v8390 = vadd.f32 %v7675, %v8389
      %v8391 = vpop.f32.mrb[0].mxu0
      %v8392 = vand.u32 %v1007, 4294901760
      %v8393 = vsub.f32 %v1007, %v8392
      %v8394 = vand.u32 %v8393, 4294901760
      %8395 = vmatprep.mubr.f32.mxu0 %v8394
      %v8396 = vand.u32 %v1006, 4294901760
      %v8397 = vsub.f32 %v1006, %v8396
      %v8398 = vand.u32 %v8397, 4294901760
      %8399 = vmatmul.mubr.f32.gmra.mrb[0].mxu0 %v8398
      %v8400 = vpop.f32.mrb[0].mxu0
      %v8401 = vadd.f32 %v7684, %v8400
      %v8402 = vpop.f32.mrb[0].mxu0
      %v8403 = vand.u32 %v1011, 4294901760
      %v8404 = vsub.f32 %v1011, %v8403
      %v8405 = vand.u32 %v8404, 4294901760
      %8406 = vmatprep.mubr.f32.mxu0 %v8405
      %v8407 = vand.u32 %v1010, 4294901760
      %v8408 = vsub.f32 %v1010, %v8407
      %v8409 = vand.u32 %v8408, 4294901760
      %8410 = vmatmul.mubr.f32.gmra.mrb[0].mxu0 %v8409
      %v8411 = vpop.f32.mrb[0].mxu0
      %v8412 = vadd.f32 %v7693, %v8411
      %v8413 = vpop.f32.mrb[0].mxu0
      %v8414 = vand.u32 %v1015, 4294901760
      %v8415 = vsub.f32 %v1015, %v8414
      %v8416 = vand.u32 %v8415, 4294901760
      %8417 = vmatprep.mubr.f32.mxu0 %v8416
      %v8418 = vand.u32 %v1014, 4294901760
      %v8419 = vsub.f32 %v1014, %v8418
      %v8420 = vand.u32 %v8419, 4294901760
      %8421 = vmatmul.mubr.f32.gmra.mrb[0].mxu0 %v8420
      %v8422 = vpop.f32.mrb[0].mxu0
      %v8423 = vadd.f32 %v7702, %v8422
      %v8424 = vpop.f32.mrb[0].mxu0
      %v8425 = vand.u32 %v1019, 4294901760
      %v8426 = vsub.f32 %v1019, %v8425
      %v8427 = vand.u32 %v8426, 4294901760
      %8428 = vmatprep.mubr.f32.mxu0 %v8427
      %v8429 = vand.u32 %v1018, 4294901760
      %v8430 = vsub.f32 %v1018, %v8429
      %v8431 = vand.u32 %v8430, 4294901760
      %8432 = vmatmul.mubr.f32.gmra.mrb[0].mxu0 %v8431
      %v8433 = vpop.f32.mrb[0].mxu0
      %v8434 = vadd.f32 %v7711, %v8433
      %v8435 = vpop.f32.mrb[0].mxu0
      %v8436 = vand.u32 %v1023, 4294901760
      %v8437 = vsub.f32 %v1023, %v8436
      %v8438 = vand.u32 %v8437, 4294901760
      %8439 = vmatprep.mubr.f32.mxu0 %v8438
      %v8440 = vand.u32 %v1022, 4294901760
      %v8441 = vsub.f32 %v1022, %v8440
      %v8442 = vand.u32 %v8441, 4294901760
      %8443 = vmatmul.mubr.f32.gmra.mrb[0].mxu0 %v8442
      %v8444 = vpop.f32.mrb[0].mxu0
      %v8445 = vadd.f32 %v7720, %v8444
      %v8446 = vpop.f32.mrb[0].mxu0
      %v8447 = vand.u32 %v1027, 4294901760
      %v8448 = vsub.f32 %v1027, %v8447
      %v8449 = vand.u32 %v8448, 4294901760
      %8450 = vmatprep.mubr.f32.mxu0 %v8449
      %v8451 = vand.u32 %v1026, 4294901760
      %v8452 = vsub.f32 %v1026, %v8451
      %v8453 = vand.u32 %v8452, 4294901760
      %8454 = vmatmul.mubr.f32.gmra.mrb[0].mxu0 %v8453
      %v8455 = vpop.f32.mrb[0].mxu0
      %v8456 = vadd.f32 %v7729, %v8455
      %v8457 = vpop.f32.mrb[0].mxu0
      %v8458 = vand.u32 %v1031, 4294901760
      %v8459 = vsub.f32 %v1031, %v8458
      %v8460 = vand.u32 %v8459, 4294901760
      %8461 = vmatprep.mubr.f32.mxu0 %v8460
      %v8462 = vand.u32 %v1030, 4294901760
      %v8463 = vsub.f32 %v1030, %v8462
      %v8464 = vand.u32 %v8463, 4294901760
      %8465 = vmatmul.mubr.f32.gmra.mrb[0].mxu0 %v8464
      %v8466 = vpop.f32.mrb[0].mxu0
      %v8467 = vadd.f32 %v7738, %v8466
      %v8468 = vpop.f32.mrb[0].mxu0
      %v8469 = vand.u32 %v1035, 4294901760
      %v8470 = vsub.f32 %v1035, %v8469
      %v8471 = vand.u32 %v8470, 4294901760
      %8472 = vmatprep.mubr.f32.mxu0 %v8471
      %v8473 = vand.u32 %v1034, 4294901760
      %v8474 = vsub.f32 %v1034, %v8473
      %v8475 = vand.u32 %v8474, 4294901760
      %8476 = vmatmul.mubr.f32.gmra.mrb[0].mxu0 %v8475
      %v8477 = vpop.f32.mrb[0].mxu0
      %v8478 = vadd.f32 %v7747, %v8477
      %v8479 = vpop.f32.mrb[0].mxu0
      %v8480 = vand.u32 %v1039, 4294901760
      %v8481 = vsub.f32 %v1039, %v8480
      %v8482 = vand.u32 %v8481, 4294901760
      %8483 = vmatprep.mubr.f32.mxu0 %v8482
      %v8484 = vand.u32 %v1038, 4294901760
      %v8485 = vsub.f32 %v1038, %v8484
      %v8486 = vand.u32 %v8485, 4294901760
      %8487 = vmatmul.mubr.f32.gmra.mrb[0].mxu0 %v8486
      %v8488 = vpop.f32.mrb[0].mxu0
      %v8489 = vadd.f32 %v7756, %v8488
      %v8490 = vpop.f32.mrb[0].mxu0
      %v8491 = vand.u32 %v1043, 4294901760
      %v8492 = vsub.f32 %v1043, %v8491
      %v8493 = vand.u32 %v8492, 4294901760
      %8494 = vmatprep.mubr.f32.mxu0 %v8493
      %v8495 = vand.u32 %v1042, 4294901760
      %v8496 = vsub.f32 %v1042, %v8495
      %v8497 = vand.u32 %v8496, 4294901760
      %8498 = vmatmul.mubr.f32.gmra.mrb[0].mxu0 %v8497
      %v8499 = vpop.f32.mrb[0].mxu0
      %v8500 = vadd.f32 %v7765, %v8499
      %v8501 = vpop.f32.mrb[0].mxu0
      %v8502 = vand.u32 %v1047, 4294901760
      %v8503 = vsub.f32 %v1047, %v8502
      %v8504 = vand.u32 %v8503, 4294901760
      %8505 = vmatprep.mubr.f32.mxu0 %v8504
      %v8506 = vand.u32 %v1046, 4294901760
      %v8507 = vsub.f32 %v1046, %v8506
      %v8508 = vand.u32 %v8507, 4294901760
      %8509 = vmatmul.mubr.f32.gmra.mrb[0].mxu0 %v8508
      %v8510 = vpop.f32.mrb[0].mxu0
      %v8511 = vadd.f32 %v7774, %v8510
      %v8512 = vpop.f32.mrb[0].mxu0
      %v8513 = vand.u32 %v1051, 4294901760
      %v8514 = vsub.f32 %v1051, %v8513
      %v8515 = vand.u32 %v8514, 4294901760
      %8516 = vmatprep.mubr.f32.mxu0 %v8515
      %v8517 = vand.u32 %v1050, 4294901760
      %v8518 = vsub.f32 %v1050, %v8517
      %v8519 = vand.u32 %v8518, 4294901760
      %8520 = vmatmul.mubr.f32.gmra.mrb[0].mxu0 %v8519
      %v8521 = vpop.f32.mrb[0].mxu0
      %v8522 = vadd.f32 %v7783, %v8521
      %v8523 = vpop.f32.mrb[0].mxu0
      %v8524 = vand.u32 %v1055, 4294901760
      %v8525 = vsub.f32 %v1055, %v8524
      %v8526 = vand.u32 %v8525, 4294901760
      %8527 = vmatprep.mubr.f32.mxu0 %v8526
      %v8528 = vand.u32 %v1054, 4294901760
      %v8529 = vsub.f32 %v1054, %v8528
      %v8530 = vand.u32 %v8529, 4294901760
      %8531 = vmatmul.mubr.f32.gmra.mrb[0].mxu0 %v8530
      %v8532 = vpop.f32.mrb[0].mxu0
      %v8533 = vadd.f32 %v7792, %v8532
      %v8534 = vpop.f32.mrb[0].mxu0
      %v8535 = vand.u32 %v1059, 4294901760
      %v8536 = vsub.f32 %v1059, %v8535
      %v8537 = vand.u32 %v8536, 4294901760
      %8538 = vmatprep.mubr.f32.mxu0 %v8537
      %v8539 = vand.u32 %v1058, 4294901760
      %v8540 = vsub.f32 %v1058, %v8539
      %v8541 = vand.u32 %v8540, 4294901760
      %8542 = vmatmul.mubr.f32.gmra.mrb[0].mxu0 %v8541
      %v8543 = vpop.f32.mrb[0].mxu0
      %v8544 = vadd.f32 %v7801, %v8543
      %v8545 = vpop.f32.mrb[0].mxu0
      %v8546 = vand.u32 %v1063, 4294901760
      %v8547 = vsub.f32 %v1063, %v8546
      %v8548 = vand.u32 %v8547, 4294901760
      %8549 = vmatprep.mubr.f32.mxu0 %v8548
      %v8550 = vand.u32 %v1062, 4294901760
      %v8551 = vsub.f32 %v1062, %v8550
      %v8552 = vand.u32 %v8551, 4294901760
      %8553 = vmatmul.mubr.f32.gmra.mrb[0].mxu0 %v8552
      %v8554 = vpop.f32.mrb[0].mxu0
      %v8555 = vadd.f32 %v7810, %v8554
      %v8556 = vpop.f32.mrb[0].mxu0
      %v8557 = vand.u32 %v1067, 4294901760
      %v8558 = vsub.f32 %v1067, %v8557
      %v8559 = vand.u32 %v8558, 4294901760
      %8560 = vmatprep.mubr.f32.mxu0 %v8559
      %v8561 = vand.u32 %v1066, 4294901760
      %v8562 = vsub.f32 %v1066, %v8561
      %v8563 = vand.u32 %v8562, 4294901760
      %8564 = vmatmul.mubr.f32.gmra.mrb[0].mxu0 %v8563
      %v8565 = vpop.f32.mrb[0].mxu0
      %v8566 = vadd.f32 %v7819, %v8565
      %v8567 = vpop.f32.mrb[0].mxu0
      %v8568 = vand.u32 %v1071, 4294901760
      %v8569 = vsub.f32 %v1071, %v8568
      %v8570 = vand.u32 %v8569, 4294901760
      %8571 = vmatprep.mubr.f32.mxu0 %v8570
      %v8572 = vand.u32 %v1070, 4294901760
      %v8573 = vsub.f32 %v1070, %v8572
      %v8574 = vand.u32 %v8573, 4294901760
      %8575 = vmatmul.mubr.f32.gmra.mrb[0].mxu0 %v8574
      %v8576 = vpop.f32.mrb[0].mxu0
      %v8577 = vadd.f32 %v7828, %v8576
      %v8578 = vpop.f32.mrb[0].mxu0
      %v8579 = vand.u32 %v1075, 4294901760
      %v8580 = vsub.f32 %v1075, %v8579
      %v8581 = vand.u32 %v8580, 4294901760
      %8582 = vmatprep.mubr.f32.mxu0 %v8581
      %v8583 = vand.u32 %v1074, 4294901760
      %v8584 = vsub.f32 %v1074, %v8583
      %v8585 = vand.u32 %v8584, 4294901760
      %8586 = vmatmul.mubr.f32.gmra.mrb[0].mxu0 %v8585
      %v8587 = vpop.f32.mrb[0].mxu0
      %v8588 = vadd.f32 %v7837, %v8587
      %v8589 = vpop.f32.mrb[0].mxu0
      %v8590 = vand.u32 %v1079, 4294901760
      %v8591 = vsub.f32 %v1079, %v8590
      %v8592 = vand.u32 %v8591, 4294901760
      %8593 = vmatprep.mubr.f32.mxu0 %v8592
      %v8594 = vand.u32 %v1078, 4294901760
      %v8595 = vsub.f32 %v1078, %v8594
      %v8596 = vand.u32 %v8595, 4294901760
      %8597 = vmatmul.mubr.f32.gmra.mrb[0].mxu0 %v8596
      %v8598 = vpop.f32.mrb[0].mxu0
      %v8599 = vadd.f32 %v7846, %v8598
      %v8600 = vpop.f32.mrb[0].mxu0
      %v8601 = vand.u32 %v1083, 4294901760
      %v8602 = vsub.f32 %v1083, %v8601
      %v8603 = vand.u32 %v8602, 4294901760
      %8604 = vmatprep.mubr.f32.mxu0 %v8603
      %v8605 = vand.u32 %v1082, 4294901760
      %v8606 = vsub.f32 %v1082, %v8605
      %v8607 = vand.u32 %v8606, 4294901760
      %8608 = vmatmul.mubr.f32.gmra.mrb[0].mxu0 %v8607
      %v8609 = vpop.f32.mrb[0].mxu0
      %v8610 = vadd.f32 %v7855, %v8609
      %v8611 = vpop.f32.mrb[0].mxu0
      %v8612 = vand.u32 %v1087, 4294901760
      %v8613 = vsub.f32 %v1087, %v8612
      %v8614 = vand.u32 %v8613, 4294901760
      %8615 = vmatprep.mubr.f32.mxu0 %v8614
      %v8616 = vand.u32 %v1086, 4294901760
      %v8617 = vsub.f32 %v1086, %v8616
      %v8618 = vand.u32 %v8617, 4294901760
      %8619 = vmatmul.mubr.f32.gmra.mrb[0].mxu0 %v8618
      %v8620 = vpop.f32.mrb[0].mxu0
      %v8621 = vadd.f32 %v7864, %v8620
      %v8622 = vpop.f32.mrb[0].mxu0
      %v8623 = vand.u32 %v1091, 4294901760
      %v8624 = vsub.f32 %v1091, %v8623
      %v8625 = vand.u32 %v8624, 4294901760
      %8626 = vmatprep.mubr.f32.mxu0 %v8625
      %v8627 = vand.u32 %v1090, 4294901760
      %v8628 = vsub.f32 %v1090, %v8627
      %v8629 = vand.u32 %v8628, 4294901760
      %8630 = vmatmul.mubr.f32.gmra.mrb[0].mxu0 %v8629
      %v8631 = vpop.f32.mrb[0].mxu0
      %v8632 = vadd.f32 %v7873, %v8631
      %v8633 = vpop.f32.mrb[0].mxu0
      %v8634 = vand.u32 %v1095, 4294901760
      %v8635 = vsub.f32 %v1095, %v8634
      %v8636 = vand.u32 %v8635, 4294901760
      %8637 = vmatprep.mubr.f32.mxu0 %v8636
      %v8638 = vand.u32 %v1094, 4294901760
      %v8639 = vsub.f32 %v1094, %v8638
      %v8640 = vand.u32 %v8639, 4294901760
      %8641 = vmatmul.mubr.f32.gmra.mrb[0].mxu0 %v8640
      %v8642 = vpop.f32.mrb[0].mxu0
      %v8643 = vadd.f32 %v7882, %v8642
      %v8644 = vpop.f32.mrb[0].mxu0
      %v8645 = vand.u32 %v1099, 4294901760
      %v8646 = vsub.f32 %v1099, %v8645
      %v8647 = vand.u32 %v8646, 4294901760
      %8648 = vmatprep.mubr.f32.mxu0 %v8647
      %v8649 = vand.u32 %v1098, 4294901760
      %v8650 = vsub.f32 %v1098, %v8649
      %v8651 = vand.u32 %v8650, 4294901760
      %8652 = vmatmul.mubr.f32.gmra.mrb[0].mxu0 %v8651
      %v8653 = vpop.f32.mrb[0].mxu0
      %v8654 = vadd.f32 %v7891, %v8653
      %v8655 = vpop.f32.mrb[0].mxu0
      %v8656 = vand.u32 %v1103, 4294901760
      %v8657 = vsub.f32 %v1103, %v8656
      %v8658 = vand.u32 %v8657, 4294901760
      %8659 = vmatprep.mubr.f32.mxu0 %v8658
      %v8660 = vand.u32 %v1102, 4294901760
      %v8661 = vsub.f32 %v1102, %v8660
      %v8662 = vand.u32 %v8661, 4294901760
      %8663 = vmatmul.mubr.f32.gmra.mrb[0].mxu0 %v8662
      %v8664 = vpop.f32.mrb[0].mxu0
      %v8665 = vadd.f32 %v7900, %v8664
      %v8666 = vpop.f32.mrb[0].mxu0
      %v8667 = vand.u32 %v1107, 4294901760
      %v8668 = vsub.f32 %v1107, %v8667
      %v8669 = vand.u32 %v8668, 4294901760
      %8670 = vmatprep.mubr.f32.mxu0 %v8669
      %v8671 = vand.u32 %v1106, 4294901760
      %v8672 = vsub.f32 %v1106, %v8671
      %v8673 = vand.u32 %v8672, 4294901760
      %8674 = vmatmul.mubr.f32.gmra.mrb[0].mxu0 %v8673
      %v8675 = vpop.f32.mrb[0].mxu0
      %v8676 = vadd.f32 %v7909, %v8675
      %v8677 = vpop.f32.mrb[0].mxu0
      %v8678 = vand.u32 %v1111, 4294901760
      %v8679 = vsub.f32 %v1111, %v8678
      %v8680 = vand.u32 %v8679, 4294901760
      %8681 = vmatprep.mubr.f32.mxu0 %v8680
      %v8682 = vand.u32 %v1110, 4294901760
      %v8683 = vsub.f32 %v1110, %v8682
      %v8684 = vand.u32 %v8683, 4294901760
      %8685 = vmatmul.mubr.f32.gmra.mrb[0].mxu0 %v8684
      %v8686 = vpop.f32.mrb[0].mxu0
      %v8687 = vadd.f32 %v7918, %v8686
      %v8688 = vpop.f32.mrb[0].mxu0
      %v8689 = vand.u32 %v1115, 4294901760
      %v8690 = vsub.f32 %v1115, %v8689
      %v8691 = vand.u32 %v8690, 4294901760
      %8692 = vmatprep.mubr.f32.mxu0 %v8691
      %v8693 = vand.u32 %v1114, 4294901760
      %v8694 = vsub.f32 %v1114, %v8693
      %v8695 = vand.u32 %v8694, 4294901760
      %8696 = vmatmul.mubr.f32.gmra.mrb[0].mxu0 %v8695
      %v8697 = vpop.f32.mrb[0].mxu0
      %v8698 = vadd.f32 %v7927, %v8697
      %v8699 = vpop.f32.mrb[0].mxu0
      %v8700 = vand.u32 %v1119, 4294901760
      %v8701 = vsub.f32 %v1119, %v8700
      %v8702 = vand.u32 %v8701, 4294901760
      %8703 = vmatprep.mubr.f32.mxu0 %v8702
      %v8704 = vand.u32 %v1118, 4294901760
      %v8705 = vsub.f32 %v1118, %v8704
      %v8706 = vand.u32 %v8705, 4294901760
      %8707 = vmatmul.mubr.f32.gmra.mrb[0].mxu0 %v8706
      %v8708 = vpop.f32.mrb[0].mxu0
      %v8709 = vadd.f32 %v7936, %v8708
      %v8710 = vpop.f32.mrb[0].mxu0
      %v8711 = vand.u32 %v1123, 4294901760
      %v8712 = vsub.f32 %v1123, %v8711
      %v8713 = vand.u32 %v8712, 4294901760
      %8714 = vmatprep.mubr.f32.mxu0 %v8713
      %v8715 = vand.u32 %v1122, 4294901760
      %v8716 = vsub.f32 %v1122, %v8715
      %v8717 = vand.u32 %v8716, 4294901760
      %8718 = vmatmul.mubr.f32.gmra.mrb[0].mxu0 %v8717
      %v8719 = vpop.f32.mrb[0].mxu0
      %v8720 = vadd.f32 %v7945, %v8719
      %v8721 = vpop.f32.mrb[0].mxu0
      %v8722 = vand.u32 %v1127, 4294901760
      %v8723 = vsub.f32 %v1127, %v8722
      %v8724 = vand.u32 %v8723, 4294901760
      %8725 = vmatprep.mubr.f32.mxu0 %v8724
      %v8726 = vand.u32 %v1126, 4294901760
      %v8727 = vsub.f32 %v1126, %v8726
      %v8728 = vand.u32 %v8727, 4294901760
      %8729 = vmatmul.mubr.f32.gmra.mrb[0].mxu0 %v8728
      %v8730 = vpop.f32.mrb[0].mxu0
      %v8731 = vadd.f32 %v7954, %v8730
      %v8732 = vpop.f32.mrb[0].mxu0
      %v8733 = vand.u32 %v1131, 4294901760
      %v8734 = vsub.f32 %v1131, %v8733
      %v8735 = vand.u32 %v8734, 4294901760
      %8736 = vmatprep.mubr.f32.mxu0 %v8735
      %v8737 = vand.u32 %v1130, 4294901760
      %v8738 = vsub.f32 %v1130, %v8737
      %v8739 = vand.u32 %v8738, 4294901760
      %8740 = vmatmul.mubr.f32.gmra.mrb[0].mxu0 %v8739
      %v8741 = vpop.f32.mrb[0].mxu0
      %v8742 = vadd.f32 %v7963, %v8741
      %v8743 = vpop.f32.mrb[0].mxu0
      %v8744 = vand.u32 %v1135, 4294901760
      %v8745 = vsub.f32 %v1135, %v8744
      %v8746 = vand.u32 %v8745, 4294901760
      %8747 = vmatprep.mubr.f32.mxu0 %v8746
      %v8748 = vand.u32 %v1134, 4294901760
      %v8749 = vsub.f32 %v1134, %v8748
      %v8750 = vand.u32 %v8749, 4294901760
      %8751 = vmatmul.mubr.f32.gmra.mrb[0].mxu0 %v8750
      %v8752 = vpop.f32.mrb[0].mxu0
      %v8753 = vadd.f32 %v7972, %v8752
      %v8754 = vpop.f32.mrb[0].mxu0
      %v8755 = vand.u32 %v1139, 4294901760
      %v8756 = vsub.f32 %v1139, %v8755
      %v8757 = vand.u32 %v8756, 4294901760
      %8758 = vmatprep.mubr.f32.mxu0 %v8757
      %v8759 = vand.u32 %v1138, 4294901760
      %v8760 = vsub.f32 %v1138, %v8759
      %v8761 = vand.u32 %v8760, 4294901760
      %8762 = vmatmul.mubr.f32.gmra.mrb[0].mxu0 %v8761
      %v8763 = vpop.f32.mrb[0].mxu0
      %v8764 = vadd.f32 %v7981, %v8763
      %v8765 = vpop.f32.mrb[0].mxu0
      %v8766 = vand.u32 %v1143, 4294901760
      %v8767 = vsub.f32 %v1143, %v8766
      %v8768 = vand.u32 %v8767, 4294901760
      %8769 = vmatprep.mubr.f32.mxu0 %v8768
      %v8770 = vand.u32 %v1142, 4294901760
      %v8771 = vsub.f32 %v1142, %v8770
      %v8772 = vand.u32 %v8771, 4294901760
      %8773 = vmatmul.mubr.f32.gmra.mrb[0].mxu0 %v8772
      %v8774 = vpop.f32.mrb[0].mxu0
      %v8775 = vadd.f32 %v7990, %v8774
      %v8776 = vpop.f32.mrb[0].mxu0
      %v8777 = vand.u32 %v1147, 4294901760
      %v8778 = vsub.f32 %v1147, %v8777
      %v8779 = vand.u32 %v8778, 4294901760
      %8780 = vmatprep.mubr.f32.mxu0 %v8779
      %v8781 = vand.u32 %v1146, 4294901760
      %v8782 = vsub.f32 %v1146, %v8781
      %v8783 = vand.u32 %v8782, 4294901760
      %8784 = vmatmul.mubr.f32.gmra.mrb[0].mxu0 %v8783
      %v8785 = vpop.f32.mrb[0].mxu0
      %v8786 = vadd.f32 %v7999, %v8785
      %v8787 = vpop.f32.mrb[0].mxu0
      %v8788 = vand.u32 %v1151, 4294901760
      %v8789 = vsub.f32 %v1151, %v8788
      %v8790 = vand.u32 %v8789, 4294901760
      %8791 = vmatprep.mubr.f32.mxu0 %v8790
      %v8792 = vand.u32 %v1150, 4294901760
      %v8793 = vsub.f32 %v1150, %v8792
      %v8794 = vand.u32 %v8793, 4294901760
      %8795 = vmatmul.mubr.f32.gmra.mrb[0].mxu0 %v8794
      %v8796 = vpop.f32.mrb[0].mxu0
      %v8797 = vadd.f32 %v8008, %v8796
      %v8798 = vpop.f32.mrb[0].mxu0
      %v8799 = vand.u32 %v1155, 4294901760
      %v8800 = vsub.f32 %v1155, %v8799
      %v8801 = vand.u32 %v8800, 4294901760
      %8802 = vmatprep.mubr.f32.mxu0 %v8801
      %v8803 = vand.u32 %v1154, 4294901760
      %v8804 = vsub.f32 %v1154, %v8803
      %v8805 = vand.u32 %v8804, 4294901760
      %8806 = vmatmul.mubr.f32.gmra.mrb[0].mxu0 %v8805
      %v8807 = vpop.f32.mrb[0].mxu0
      %v8808 = vadd.f32 %v8017, %v8807
      %v8809 = vpop.f32.mrb[0].mxu0
      %v8810 = vand.u32 %v1159, 4294901760
      %v8811 = vsub.f32 %v1159, %v8810
      %v8812 = vand.u32 %v8811, 4294901760
      %8813 = vmatprep.mubr.f32.mxu0 %v8812
      %v8814 = vand.u32 %v1158, 4294901760
      %v8815 = vsub.f32 %v1158, %v8814
      %v8816 = vand.u32 %v8815, 4294901760
      %8817 = vmatmul.mubr.f32.gmra.mrb[0].mxu0 %v8816
      %v8818 = vpop.f32.mrb[0].mxu0
      %v8819 = vadd.f32 %v8026, %v8818
      %v8820 = vpop.f32.mrb[0].mxu0
      %v8821 = vand.u32 %v1163, 4294901760
      %v8822 = vsub.f32 %v1163, %v8821
      %v8823 = vand.u32 %v8822, 4294901760
      %8824 = vmatprep.mubr.f32.mxu0 %v8823
      %v8825 = vand.u32 %v1162, 4294901760
      %v8826 = vsub.f32 %v1162, %v8825
      %v8827 = vand.u32 %v8826, 4294901760
      %8828 = vmatmul.mubr.f32.gmra.mrb[0].mxu0 %v8827
      %v8829 = vpop.f32.mrb[0].mxu0
      %v8830 = vadd.f32 %v8035, %v8829
      %v8831 = vpop.f32.mrb[0].mxu0
      %v8832 = vand.u32 %v1167, 4294901760
      %v8833 = vsub.f32 %v1167, %v8832
      %v8834 = vand.u32 %v8833, 4294901760
      %8835 = vmatprep.mubr.f32.mxu0 %v8834
      %v8836 = vand.u32 %v1166, 4294901760
      %v8837 = vsub.f32 %v1166, %v8836
      %v8838 = vand.u32 %v8837, 4294901760
      %8839 = vmatmul.mubr.f32.gmra.mrb[0].mxu0 %v8838
      %v8840 = vpop.f32.mrb[0].mxu0
      %v8841 = vadd.f32 %v8044, %v8840
      %v8842 = vpop.f32.mrb[0].mxu0
      %v8843 = vand.u32 %v1171, 4294901760
      %v8844 = vsub.f32 %v1171, %v8843
      %v8845 = vand.u32 %v8844, 4294901760
      %8846 = vmatprep.mubr.f32.mxu0 %v8845
      %v8847 = vand.u32 %v1170, 4294901760
      %v8848 = vsub.f32 %v1170, %v8847
      %v8849 = vand.u32 %v8848, 4294901760
      %8850 = vmatmul.mubr.f32.gmra.mrb[0].mxu0 %v8849
      %v8851 = vpop.f32.mrb[0].mxu0
      %v8852 = vadd.f32 %v8053, %v8851
      %v8853 = vpop.f32.mrb[0].mxu0
      %v8854 = vand.u32 %v1175, 4294901760
      %v8855 = vsub.f32 %v1175, %v8854
      %v8856 = vand.u32 %v8855, 4294901760
      %8857 = vmatprep.mubr.f32.mxu0 %v8856
      %v8858 = vand.u32 %v1174, 4294901760
      %v8859 = vsub.f32 %v1174, %v8858
      %v8860 = vand.u32 %v8859, 4294901760
      %8861 = vmatmul.mubr.f32.gmra.mrb[0].mxu0 %v8860
      %v8862 = vpop.f32.mrb[0].mxu0
      %v8863 = vadd.f32 %v8062, %v8862
      %v8864 = vpop.f32.mrb[0].mxu0
      %8865 = vdwg.mxu0
      %8866 = vmatprep.subr.mxu0 0.0
      %v8867 = vand.u32 %v1208, 4294901760
      %v8868 = vsub.f32 %v1208, %v8867
      %v8869 = vand.u32 %v8868, 4294901760
      %8870 = vmatpush1.msra.mxu0 %v8869
      %8871 = vmatprep.subr.mxu0 0.0
      %v8872 = vand.u32 %v1209, 4294901760
      %v8873 = vsub.f32 %v1209, %v8872
      %v8874 = vand.u32 %v8873, 4294901760
      %8875 = vmatpush1.msra.mxu0 %v8874
      %8876 = vmatprep.subr.mxu0 0.0
      %v8877 = vand.u32 %v1210, 4294901760
      %v8878 = vsub.f32 %v1210, %v8877
      %v8879 = vand.u32 %v8878, 4294901760
      %8880 = vmatpush1.msra.mxu0 %v8879
      %8881 = vmatprep.subr.mxu0 0.0
      %v8882 = vand.u32 %v1211, 4294901760
      %v8883 = vsub.f32 %v1211, %v8882
      %v8884 = vand.u32 %v8883, 4294901760
      %8885 = vmatpush1.msra.mxu0 %v8884
      %8886 = vmatprep.subr.mxu0 0.0
      %v8887 = vand.u32 %v1212, 4294901760
      %v8888 = vsub.f32 %v1212, %v8887
      %v8889 = vand.u32 %v8888, 4294901760
      %8890 = vmatpush1.msra.mxu0 %v8889
      %8891 = vmatprep.subr.mxu0 0.0
      %v8892 = vand.u32 %v1213, 4294901760
      %v8893 = vsub.f32 %v1213, %v8892
      %v8894 = vand.u32 %v8893, 4294901760
      %8895 = vmatpush1.msra.mxu0 %v8894
      %8896 = vmatprep.subr.mxu0 0.0
      %v8897 = vand.u32 %v1214, 4294901760
      %v8898 = vsub.f32 %v1214, %v8897
      %v8899 = vand.u32 %v8898, 4294901760
      %8900 = vmatpush1.msra.mxu0 %v8899
      %8901 = vmatprep.subr.mxu0 0.0
      %v8902 = vand.u32 %v1215, 4294901760
      %v8903 = vsub.f32 %v1215, %v8902
      %v8904 = vand.u32 %v8903, 4294901760
      %8905 = vmatpush1.msra.mxu0 %v8904
      %8906 = vmatprep.subr.mxu0 0.0
      %v8907 = vand.u32 %v1216, 4294901760
      %v8908 = vsub.f32 %v1216, %v8907
      %v8909 = vand.u32 %v8908, 4294901760
      %8910 = vmatpush1.msra.mxu0 %v8909
      %8911 = vmatprep.subr.mxu0 0.0
      %v8912 = vand.u32 %v1217, 4294901760
      %v8913 = vsub.f32 %v1217, %v8912
      %v8914 = vand.u32 %v8913, 4294901760
      %8915 = vmatpush1.msra.mxu0 %v8914
      %8916 = vmatprep.subr.mxu0 0.0
      %v8917 = vand.u32 %v1218, 4294901760
      %v8918 = vsub.f32 %v1218, %v8917
      %v8919 = vand.u32 %v8918, 4294901760
      %8920 = vmatpush1.msra.mxu0 %v8919
      %8921 = vmatprep.subr.mxu0 0.0
      %v8922 = vand.u32 %v1219, 4294901760
      %v8923 = vsub.f32 %v1219, %v8922
      %v8924 = vand.u32 %v8923, 4294901760
      %8925 = vmatpush1.msra.mxu0 %v8924
      %8926 = vmatprep.subr.mxu0 0.0
      %v8927 = vand.u32 %v1220, 4294901760
      %v8928 = vsub.f32 %v1220, %v8927
      %v8929 = vand.u32 %v8928, 4294901760
      %8930 = vmatpush1.msra.mxu0 %v8929
      %8931 = vmatprep.subr.mxu0 0.0
      %v8932 = vand.u32 %v1221, 4294901760
      %v8933 = vsub.f32 %v1221, %v8932
      %v8934 = vand.u32 %v8933, 4294901760
      %8935 = vmatpush1.msra.mxu0 %v8934
      %8936 = vmatprep.subr.mxu0 0.0
      %v8937 = vand.u32 %v1222, 4294901760
      %v8938 = vsub.f32 %v1222, %v8937
      %v8939 = vand.u32 %v8938, 4294901760
      %8940 = vmatpush1.msra.mxu0 %v8939
      %8941 = vmatprep.subr.mxu0 0.0
      %v8942 = vand.u32 %v1223, 4294901760
      %v8943 = vsub.f32 %v1223, %v8942
      %v8944 = vand.u32 %v8943, 4294901760
      %8945 = vmatpush1.msra.mxu0 %v8944
      %8946 = vmatprep.subr.mxu0 0.0
      %v8947 = vand.u32 %v1224, 4294901760
      %v8948 = vsub.f32 %v1224, %v8947
      %v8949 = vand.u32 %v8948, 4294901760
      %8950 = vmatpush1.msra.mxu0 %v8949
      %8951 = vmatprep.subr.mxu0 0.0
      %v8952 = vand.u32 %v1225, 4294901760
      %v8953 = vsub.f32 %v1225, %v8952
      %v8954 = vand.u32 %v8953, 4294901760
      %8955 = vmatpush1.msra.mxu0 %v8954
      %8956 = vmatprep.subr.mxu0 0.0
      %v8957 = vand.u32 %v1226, 4294901760
      %v8958 = vsub.f32 %v1226, %v8957
      %v8959 = vand.u32 %v8958, 4294901760
      %8960 = vmatpush1.msra.mxu0 %v8959
      %8961 = vmatprep.subr.mxu0 0.0
      %v8962 = vand.u32 %v1227, 4294901760
      %v8963 = vsub.f32 %v1227, %v8962
      %v8964 = vand.u32 %v8963, 4294901760
      %8965 = vmatpush1.msra.mxu0 %v8964
      %8966 = vmatprep.subr.mxu0 0.0
      %v8967 = vand.u32 %v1228, 4294901760
      %v8968 = vsub.f32 %v1228, %v8967
      %v8969 = vand.u32 %v8968, 4294901760
      %8970 = vmatpush1.msra.mxu0 %v8969
      %8971 = vmatprep.subr.mxu0 0.0
      %v8972 = vand.u32 %v1229, 4294901760
      %v8973 = vsub.f32 %v1229, %v8972
      %v8974 = vand.u32 %v8973, 4294901760
      %8975 = vmatpush1.msra.mxu0 %v8974
      %8976 = vmatprep.subr.mxu0 0.0
      %v8977 = vand.u32 %v1230, 4294901760
      %v8978 = vsub.f32 %v1230, %v8977
      %v8979 = vand.u32 %v8978, 4294901760
      %8980 = vmatpush1.msra.mxu0 %v8979
      %8981 = vmatprep.subr.mxu0 0.0
      %v8982 = vand.u32 %v1231, 4294901760
      %v8983 = vsub.f32 %v1231, %v8982
      %v8984 = vand.u32 %v8983, 4294901760
      %8985 = vmatpush1.msra.mxu0 %v8984
      %8986 = vmatprep.subr.mxu0 0.0
      %v8987 = vand.u32 %v1232, 4294901760
      %v8988 = vsub.f32 %v1232, %v8987
      %v8989 = vand.u32 %v8988, 4294901760
      %8990 = vmatpush1.msra.mxu0 %v8989
      %8991 = vmatprep.subr.mxu0 0.0
      %v8992 = vand.u32 %v1233, 4294901760
      %v8993 = vsub.f32 %v1233, %v8992
      %v8994 = vand.u32 %v8993, 4294901760
      %8995 = vmatpush1.msra.mxu0 %v8994
      %8996 = vmatprep.subr.mxu0 0.0
      %v8997 = vand.u32 %v1234, 4294901760
      %v8998 = vsub.f32 %v1234, %v8997
      %v8999 = vand.u32 %v8998, 4294901760
      %9000 = vmatpush1.msra.mxu0 %v8999
      %9001 = vmatprep.subr.mxu0 0.0
      %v9002 = vand.u32 %v1235, 4294901760
      %v9003 = vsub.f32 %v1235, %v9002
      %v9004 = vand.u32 %v9003, 4294901760
      %9005 = vmatpush1.msra.mxu0 %v9004
      %9006 = vmatprep.subr.mxu0 0.0
      %v9007 = vand.u32 %v1236, 4294901760
      %v9008 = vsub.f32 %v1236, %v9007
      %v9009 = vand.u32 %v9008, 4294901760
      %9010 = vmatpush1.msra.mxu0 %v9009
      %9011 = vmatprep.subr.mxu0 0.0
      %v9012 = vand.u32 %v1237, 4294901760
      %v9013 = vsub.f32 %v1237, %v9012
      %v9014 = vand.u32 %v9013, 4294901760
      %9015 = vmatpush1.msra.mxu0 %v9014
      %9016 = vmatprep.subr.mxu0 0.0
      %v9017 = vand.u32 %v1238, 4294901760
      %v9018 = vsub.f32 %v1238, %v9017
      %v9019 = vand.u32 %v9018, 4294901760
      %9020 = vmatpush1.msra.mxu0 %v9019
      %9021 = vmatprep.subr.mxu0 0.0
      %v9022 = vand.u32 %v1239, 4294901760
      %v9023 = vsub.f32 %v1239, %v9022
      %v9024 = vand.u32 %v9023, 4294901760
      %9025 = vmatpush1.msra.mxu0 %v9024
      %v9026 = vand.u32 %v923, 4294901760
      %9027 = vmatprep.mubr.f32.mxu0 %v9026
      %v9028 = vand.u32 %v922, 4294901760
      %9029 = vmatmul.mubr.f32.gmra.mrb[0].mxu0 %v9028
      %v9030 = vpop.f32.mrb[0].mxu0
      %v9031 = vadd.f32 %v8170, %v9030
      %v9032 = vpop.f32.mrb[0].mxu0
      %v9033 = vand.u32 %v927, 4294901760
      %9034 = vmatprep.mubr.f32.mxu0 %v9033
      %v9035 = vand.u32 %v926, 4294901760
      %9036 = vmatmul.mubr.f32.gmra.mrb[0].mxu0 %v9035
      %v9037 = vpop.f32.mrb[0].mxu0
      %v9038 = vadd.f32 %v8181, %v9037
      %v9039 = vpop.f32.mrb[0].mxu0
      %v9040 = vand.u32 %v931, 4294901760
      %9041 = vmatprep.mubr.f32.mxu0 %v9040
      %v9042 = vand.u32 %v930, 4294901760
      %9043 = vmatmul.mubr.f32.gmra.mrb[0].mxu0 %v9042
      %v9044 = vpop.f32.mrb[0].mxu0
      %v9045 = vadd.f32 %v8192, %v9044
      %v9046 = vpop.f32.mrb[0].mxu0
      %v9047 = vand.u32 %v935, 4294901760
      %9048 = vmatprep.mubr.f32.mxu0 %v9047
      %v9049 = vand.u32 %v934, 4294901760
      %9050 = vmatmul.mubr.f32.gmra.mrb[0].mxu0 %v9049
      %v9051 = vpop.f32.mrb[0].mxu0
      %v9052 = vadd.f32 %v8203, %v9051
      %v9053 = vpop.f32.mrb[0].mxu0
      %v9054 = vand.u32 %v939, 4294901760
      %9055 = vmatprep.mubr.f32.mxu0 %v9054
      %v9056 = vand.u32 %v938, 4294901760
      %9057 = vmatmul.mubr.f32.gmra.mrb[0].mxu0 %v9056
      %v9058 = vpop.f32.mrb[0].mxu0
      %v9059 = vadd.f32 %v8214, %v9058
      %v9060 = vpop.f32.mrb[0].mxu0
      %v9061 = vand.u32 %v943, 4294901760
      %9062 = vmatprep.mubr.f32.mxu0 %v9061
      %v9063 = vand.u32 %v942, 4294901760
      %9064 = vmatmul.mubr.f32.gmra.mrb[0].mxu0 %v9063
      %v9065 = vpop.f32.mrb[0].mxu0
      %v9066 = vadd.f32 %v8225, %v9065
      %v9067 = vpop.f32.mrb[0].mxu0
      %v9068 = vand.u32 %v947, 4294901760
      %9069 = vmatprep.mubr.f32.mxu0 %v9068
      %v9070 = vand.u32 %v946, 4294901760
      %9071 = vmatmul.mubr.f32.gmra.mrb[0].mxu0 %v9070
      %v9072 = vpop.f32.mrb[0].mxu0
      %v9073 = vadd.f32 %v8236, %v9072
      %v9074 = vpop.f32.mrb[0].mxu0
      %v9075 = vand.u32 %v951, 4294901760
      %9076 = vmatprep.mubr.f32.mxu0 %v9075
      %v9077 = vand.u32 %v950, 4294901760
      %9078 = vmatmul.mubr.f32.gmra.mrb[0].mxu0 %v9077
      %v9079 = vpop.f32.mrb[0].mxu0
      %v9080 = vadd.f32 %v8247, %v9079
      %v9081 = vpop.f32.mrb[0].mxu0
      %v9082 = vand.u32 %v955, 4294901760
      %9083 = vmatprep.mubr.f32.mxu0 %v9082
      %v9084 = vand.u32 %v954, 4294901760
      %9085 = vmatmul.mubr.f32.gmra.mrb[0].mxu0 %v9084
      %v9086 = vpop.f32.mrb[0].mxu0
      %v9087 = vadd.f32 %v8258, %v9086
      %v9088 = vpop.f32.mrb[0].mxu0
      %v9089 = vand.u32 %v959, 4294901760
      %9090 = vmatprep.mubr.f32.mxu0 %v9089
      %v9091 = vand.u32 %v958, 4294901760
      %9092 = vmatmul.mubr.f32.gmra.mrb[0].mxu0 %v9091
      %v9093 = vpop.f32.mrb[0].mxu0
      %v9094 = vadd.f32 %v8269, %v9093
      %v9095 = vpop.f32.mrb[0].mxu0
      %v9096 = vand.u32 %v963, 4294901760
      %9097 = vmatprep.mubr.f32.mxu0 %v9096
      %v9098 = vand.u32 %v962, 4294901760
      %9099 = vmatmul.mubr.f32.gmra.mrb[0].mxu0 %v9098
      %v9100 = vpop.f32.mrb[0].mxu0
      %v9101 = vadd.f32 %v8280, %v9100
      %v9102 = vpop.f32.mrb[0].mxu0
      %v9103 = vand.u32 %v967, 4294901760
      %9104 = vmatprep.mubr.f32.mxu0 %v9103
      %v9105 = vand.u32 %v966, 4294901760
      %9106 = vmatmul.mubr.f32.gmra.mrb[0].mxu0 %v9105
      %v9107 = vpop.f32.mrb[0].mxu0
      %v9108 = vadd.f32 %v8291, %v9107
      %v9109 = vpop.f32.mrb[0].mxu0
      %v9110 = vand.u32 %v971, 4294901760
      %9111 = vmatprep.mubr.f32.mxu0 %v9110
      %v9112 = vand.u32 %v970, 4294901760
      %9113 = vmatmul.mubr.f32.gmra.mrb[0].mxu0 %v9112
      %v9114 = vpop.f32.mrb[0].mxu0
      %v9115 = vadd.f32 %v8302, %v9114
      %v9116 = vpop.f32.mrb[0].mxu0
      %v9117 = vand.u32 %v975, 4294901760
      %9118 = vmatprep.mubr.f32.mxu0 %v9117
      %v9119 = vand.u32 %v974, 4294901760
      %9120 = vmatmul.mubr.f32.gmra.mrb[0].mxu0 %v9119
      %v9121 = vpop.f32.mrb[0].mxu0
      %v9122 = vadd.f32 %v8313, %v9121
      %v9123 = vpop.f32.mrb[0].mxu0
      %v9124 = vand.u32 %v979, 4294901760
      %9125 = vmatprep.mubr.f32.mxu0 %v9124
      %v9126 = vand.u32 %v978, 4294901760
      %9127 = vmatmul.mubr.f32.gmra.mrb[0].mxu0 %v9126
      %v9128 = vpop.f32.mrb[0].mxu0
      %v9129 = vadd.f32 %v8324, %v9128
      %v9130 = vpop.f32.mrb[0].mxu0
      %v9131 = vand.u32 %v983, 4294901760
      %9132 = vmatprep.mubr.f32.mxu0 %v9131
      %v9133 = vand.u32 %v982, 4294901760
      %9134 = vmatmul.mubr.f32.gmra.mrb[0].mxu0 %v9133
      %v9135 = vpop.f32.mrb[0].mxu0
      %v9136 = vadd.f32 %v8335, %v9135
      %v9137 = vpop.f32.mrb[0].mxu0
      %v9138 = vand.u32 %v987, 4294901760
      %9139 = vmatprep.mubr.f32.mxu0 %v9138
      %v9140 = vand.u32 %v986, 4294901760
      %9141 = vmatmul.mubr.f32.gmra.mrb[0].mxu0 %v9140
      %v9142 = vpop.f32.mrb[0].mxu0
      %v9143 = vadd.f32 %v8346, %v9142
      %v9144 = vpop.f32.mrb[0].mxu0
      %v9145 = vand.u32 %v991, 4294901760
      %9146 = vmatprep.mubr.f32.mxu0 %v9145
      %v9147 = vand.u32 %v990, 4294901760
      %9148 = vmatmul.mubr.f32.gmra.mrb[0].mxu0 %v9147
      %v9149 = vpop.f32.mrb[0].mxu0
      %v9150 = vadd.f32 %v8357, %v9149
      %v9151 = vpop.f32.mrb[0].mxu0
      %v9152 = vand.u32 %v995, 4294901760
      %9153 = vmatprep.mubr.f32.mxu0 %v9152
      %v9154 = vand.u32 %v994, 4294901760
      %9155 = vmatmul.mubr.f32.gmra.mrb[0].mxu0 %v9154
      %v9156 = vpop.f32.mrb[0].mxu0
      %v9157 = vadd.f32 %v8368, %v9156
      %v9158 = vpop.f32.mrb[0].mxu0
      %v9159 = vand.u32 %v999, 4294901760
      %9160 = vmatprep.mubr.f32.mxu0 %v9159
      %v9161 = vand.u32 %v998, 4294901760
      %9162 = vmatmul.mubr.f32.gmra.mrb[0].mxu0 %v9161
      %v9163 = vpop.f32.mrb[0].mxu0
      %v9164 = vadd.f32 %v8379, %v9163
      %v9165 = vpop.f32.mrb[0].mxu0
      %v9166 = vand.u32 %v1003, 4294901760
      %9167 = vmatprep.mubr.f32.mxu0 %v9166
      %v9168 = vand.u32 %v1002, 4294901760
      %9169 = vmatmul.mubr.f32.gmra.mrb[0].mxu0 %v9168
      %v9170 = vpop.f32.mrb[0].mxu0
      %v9171 = vadd.f32 %v8390, %v9170
      %v9172 = vpop.f32.mrb[0].mxu0
      %v9173 = vand.u32 %v1007, 4294901760
      %9174 = vmatprep.mubr.f32.mxu0 %v9173
      %v9175 = vand.u32 %v1006, 4294901760
      %9176 = vmatmul.mubr.f32.gmra.mrb[0].mxu0 %v9175
      %v9177 = vpop.f32.mrb[0].mxu0
      %v9178 = vadd.f32 %v8401, %v9177
      %v9179 = vpop.f32.mrb[0].mxu0
      %v9180 = vand.u32 %v1011, 4294901760
      %9181 = vmatprep.mubr.f32.mxu0 %v9180
      %v9182 = vand.u32 %v1010, 4294901760
      %9183 = vmatmul.mubr.f32.gmra.mrb[0].mxu0 %v9182
      %v9184 = vpop.f32.mrb[0].mxu0
      %v9185 = vadd.f32 %v8412, %v9184
      %v9186 = vpop.f32.mrb[0].mxu0
      %v9187 = vand.u32 %v1015, 4294901760
      %9188 = vmatprep.mubr.f32.mxu0 %v9187
      %v9189 = vand.u32 %v1014, 4294901760
      %9190 = vmatmul.mubr.f32.gmra.mrb[0].mxu0 %v9189
      %v9191 = vpop.f32.mrb[0].mxu0
      %v9192 = vadd.f32 %v8423, %v9191
      %v9193 = vpop.f32.mrb[0].mxu0
      %v9194 = vand.u32 %v1019, 4294901760
      %9195 = vmatprep.mubr.f32.mxu0 %v9194
      %v9196 = vand.u32 %v1018, 4294901760
      %9197 = vmatmul.mubr.f32.gmra.mrb[0].mxu0 %v9196
      %v9198 = vpop.f32.mrb[0].mxu0
      %v9199 = vadd.f32 %v8434, %v9198
      %v9200 = vpop.f32.mrb[0].mxu0
      %v9201 = vand.u32 %v1023, 4294901760
      %9202 = vmatprep.mubr.f32.mxu0 %v9201
      %v9203 = vand.u32 %v1022, 4294901760
      %9204 = vmatmul.mubr.f32.gmra.mrb[0].mxu0 %v9203
      %v9205 = vpop.f32.mrb[0].mxu0
      %v9206 = vadd.f32 %v8445, %v9205
      %v9207 = vpop.f32.mrb[0].mxu0
      %v9208 = vand.u32 %v1027, 4294901760
      %9209 = vmatprep.mubr.f32.mxu0 %v9208
      %v9210 = vand.u32 %v1026, 4294901760
      %9211 = vmatmul.mubr.f32.gmra.mrb[0].mxu0 %v9210
      %v9212 = vpop.f32.mrb[0].mxu0
      %v9213 = vadd.f32 %v8456, %v9212
      %v9214 = vpop.f32.mrb[0].mxu0
      %v9215 = vand.u32 %v1031, 4294901760
      %9216 = vmatprep.mubr.f32.mxu0 %v9215
      %v9217 = vand.u32 %v1030, 4294901760
      %9218 = vmatmul.mubr.f32.gmra.mrb[0].mxu0 %v9217
      %v9219 = vpop.f32.mrb[0].mxu0
      %v9220 = vadd.f32 %v8467, %v9219
      %v9221 = vpop.f32.mrb[0].mxu0
      %v9222 = vand.u32 %v1035, 4294901760
      %9223 = vmatprep.mubr.f32.mxu0 %v9222
      %v9224 = vand.u32 %v1034, 4294901760
      %9225 = vmatmul.mubr.f32.gmra.mrb[0].mxu0 %v9224
      %v9226 = vpop.f32.mrb[0].mxu0
      %v9227 = vadd.f32 %v8478, %v9226
      %v9228 = vpop.f32.mrb[0].mxu0
      %v9229 = vand.u32 %v1039, 4294901760
      %9230 = vmatprep.mubr.f32.mxu0 %v9229
      %v9231 = vand.u32 %v1038, 4294901760
      %9232 = vmatmul.mubr.f32.gmra.mrb[0].mxu0 %v9231
      %v9233 = vpop.f32.mrb[0].mxu0
      %v9234 = vadd.f32 %v8489, %v9233
      %v9235 = vpop.f32.mrb[0].mxu0
      %v9236 = vand.u32 %v1043, 4294901760
      %9237 = vmatprep.mubr.f32.mxu0 %v9236
      %v9238 = vand.u32 %v1042, 4294901760
      %9239 = vmatmul.mubr.f32.gmra.mrb[0].mxu0 %v9238
      %v9240 = vpop.f32.mrb[0].mxu0
      %v9241 = vadd.f32 %v8500, %v9240
      %v9242 = vpop.f32.mrb[0].mxu0
      %v9243 = vand.u32 %v1047, 4294901760
      %9244 = vmatprep.mubr.f32.mxu0 %v9243
      %v9245 = vand.u32 %v1046, 4294901760
      %9246 = vmatmul.mubr.f32.gmra.mrb[0].mxu0 %v9245
      %v9247 = vpop.f32.mrb[0].mxu0
      %v9248 = vadd.f32 %v8511, %v9247
      %v9249 = vpop.f32.mrb[0].mxu0
      %v9250 = vand.u32 %v1051, 4294901760
      %9251 = vmatprep.mubr.f32.mxu0 %v9250
      %v9252 = vand.u32 %v1050, 4294901760
      %9253 = vmatmul.mubr.f32.gmra.mrb[0].mxu0 %v9252
      %v9254 = vpop.f32.mrb[0].mxu0
      %v9255 = vadd.f32 %v8522, %v9254
      %v9256 = vpop.f32.mrb[0].mxu0
      %v9257 = vand.u32 %v1055, 4294901760
      %9258 = vmatprep.mubr.f32.mxu0 %v9257
      %v9259 = vand.u32 %v1054, 4294901760
      %9260 = vmatmul.mubr.f32.gmra.mrb[0].mxu0 %v9259
      %v9261 = vpop.f32.mrb[0].mxu0
      %v9262 = vadd.f32 %v8533, %v9261
      %v9263 = vpop.f32.mrb[0].mxu0
      %v9264 = vand.u32 %v1059, 4294901760
      %9265 = vmatprep.mubr.f32.mxu0 %v9264
      %v9266 = vand.u32 %v1058, 4294901760
      %9267 = vmatmul.mubr.f32.gmra.mrb[0].mxu0 %v9266
      %v9268 = vpop.f32.mrb[0].mxu0
      %v9269 = vadd.f32 %v8544, %v9268
      %v9270 = vpop.f32.mrb[0].mxu0
      %v9271 = vand.u32 %v1063, 4294901760
      %9272 = vmatprep.mubr.f32.mxu0 %v9271
      %v9273 = vand.u32 %v1062, 4294901760
      %9274 = vmatmul.mubr.f32.gmra.mrb[0].mxu0 %v9273
      %v9275 = vpop.f32.mrb[0].mxu0
      %v9276 = vadd.f32 %v8555, %v9275
      %v9277 = vpop.f32.mrb[0].mxu0
      %v9278 = vand.u32 %v1067, 4294901760
      %9279 = vmatprep.mubr.f32.mxu0 %v9278
      %v9280 = vand.u32 %v1066, 4294901760
      %9281 = vmatmul.mubr.f32.gmra.mrb[0].mxu0 %v9280
      %v9282 = vpop.f32.mrb[0].mxu0
      %v9283 = vadd.f32 %v8566, %v9282
      %v9284 = vpop.f32.mrb[0].mxu0
      %v9285 = vand.u32 %v1071, 4294901760
      %9286 = vmatprep.mubr.f32.mxu0 %v9285
      %v9287 = vand.u32 %v1070, 4294901760
      %9288 = vmatmul.mubr.f32.gmra.mrb[0].mxu0 %v9287
      %v9289 = vpop.f32.mrb[0].mxu0
      %v9290 = vadd.f32 %v8577, %v9289
      %v9291 = vpop.f32.mrb[0].mxu0
      %v9292 = vand.u32 %v1075, 4294901760
      %9293 = vmatprep.mubr.f32.mxu0 %v9292
      %v9294 = vand.u32 %v1074, 4294901760
      %9295 = vmatmul.mubr.f32.gmra.mrb[0].mxu0 %v9294
      %v9296 = vpop.f32.mrb[0].mxu0
      %v9297 = vadd.f32 %v8588, %v9296
      %v9298 = vpop.f32.mrb[0].mxu0
      %v9299 = vand.u32 %v1079, 4294901760
      %9300 = vmatprep.mubr.f32.mxu0 %v9299
      %v9301 = vand.u32 %v1078, 4294901760
      %9302 = vmatmul.mubr.f32.gmra.mrb[0].mxu0 %v9301
      %v9303 = vpop.f32.mrb[0].mxu0
      %v9304 = vadd.f32 %v8599, %v9303
      %v9305 = vpop.f32.mrb[0].mxu0
      %v9306 = vand.u32 %v1083, 4294901760
      %9307 = vmatprep.mubr.f32.mxu0 %v9306
      %v9308 = vand.u32 %v1082, 4294901760
      %9309 = vmatmul.mubr.f32.gmra.mrb[0].mxu0 %v9308
      %v9310 = vpop.f32.mrb[0].mxu0
      %v9311 = vadd.f32 %v8610, %v9310
      %v9312 = vpop.f32.mrb[0].mxu0
      %v9313 = vand.u32 %v1087, 4294901760
      %9314 = vmatprep.mubr.f32.mxu0 %v9313
      %v9315 = vand.u32 %v1086, 4294901760
      %9316 = vmatmul.mubr.f32.gmra.mrb[0].mxu0 %v9315
      %v9317 = vpop.f32.mrb[0].mxu0
      %v9318 = vadd.f32 %v8621, %v9317
      %v9319 = vpop.f32.mrb[0].mxu0
      %v9320 = vand.u32 %v1091, 4294901760
      %9321 = vmatprep.mubr.f32.mxu0 %v9320
      %v9322 = vand.u32 %v1090, 4294901760
      %9323 = vmatmul.mubr.f32.gmra.mrb[0].mxu0 %v9322
      %v9324 = vpop.f32.mrb[0].mxu0
      %v9325 = vadd.f32 %v8632, %v9324
      %v9326 = vpop.f32.mrb[0].mxu0
      %v9327 = vand.u32 %v1095, 4294901760
      %9328 = vmatprep.mubr.f32.mxu0 %v9327
      %v9329 = vand.u32 %v1094, 4294901760
      %9330 = vmatmul.mubr.f32.gmra.mrb[0].mxu0 %v9329
      %v9331 = vpop.f32.mrb[0].mxu0
      %v9332 = vadd.f32 %v8643, %v9331
      %v9333 = vpop.f32.mrb[0].mxu0
      %v9334 = vand.u32 %v1099, 4294901760
      %9335 = vmatprep.mubr.f32.mxu0 %v9334
      %v9336 = vand.u32 %v1098, 4294901760
      %9337 = vmatmul.mubr.f32.gmra.mrb[0].mxu0 %v9336
      %v9338 = vpop.f32.mrb[0].mxu0
      %v9339 = vadd.f32 %v8654, %v9338
      %v9340 = vpop.f32.mrb[0].mxu0
      %v9341 = vand.u32 %v1103, 4294901760
      %9342 = vmatprep.mubr.f32.mxu0 %v9341
      %v9343 = vand.u32 %v1102, 4294901760
      %9344 = vmatmul.mubr.f32.gmra.mrb[0].mxu0 %v9343
      %v9345 = vpop.f32.mrb[0].mxu0
      %v9346 = vadd.f32 %v8665, %v9345
      %v9347 = vpop.f32.mrb[0].mxu0
      %v9348 = vand.u32 %v1107, 4294901760
      %9349 = vmatprep.mubr.f32.mxu0 %v9348
      %v9350 = vand.u32 %v1106, 4294901760
      %9351 = vmatmul.mubr.f32.gmra.mrb[0].mxu0 %v9350
      %v9352 = vpop.f32.mrb[0].mxu0
      %v9353 = vadd.f32 %v8676, %v9352
      %v9354 = vpop.f32.mrb[0].mxu0
      %v9355 = vand.u32 %v1111, 4294901760
      %9356 = vmatprep.mubr.f32.mxu0 %v9355
      %v9357 = vand.u32 %v1110, 4294901760
      %9358 = vmatmul.mubr.f32.gmra.mrb[0].mxu0 %v9357
      %v9359 = vpop.f32.mrb[0].mxu0
      %v9360 = vadd.f32 %v8687, %v9359
      %v9361 = vpop.f32.mrb[0].mxu0
      %v9362 = vand.u32 %v1115, 4294901760
      %9363 = vmatprep.mubr.f32.mxu0 %v9362
      %v9364 = vand.u32 %v1114, 4294901760
      %9365 = vmatmul.mubr.f32.gmra.mrb[0].mxu0 %v9364
      %v9366 = vpop.f32.mrb[0].mxu0
      %v9367 = vadd.f32 %v8698, %v9366
      %v9368 = vpop.f32.mrb[0].mxu0
      %v9369 = vand.u32 %v1119, 4294901760
      %9370 = vmatprep.mubr.f32.mxu0 %v9369
      %v9371 = vand.u32 %v1118, 4294901760
      %9372 = vmatmul.mubr.f32.gmra.mrb[0].mxu0 %v9371
      %v9373 = vpop.f32.mrb[0].mxu0
      %v9374 = vadd.f32 %v8709, %v9373
      %v9375 = vpop.f32.mrb[0].mxu0
      %v9376 = vand.u32 %v1123, 4294901760
      %9377 = vmatprep.mubr.f32.mxu0 %v9376
      %v9378 = vand.u32 %v1122, 4294901760
      %9379 = vmatmul.mubr.f32.gmra.mrb[0].mxu0 %v9378
      %v9380 = vpop.f32.mrb[0].mxu0
      %v9381 = vadd.f32 %v8720, %v9380
      %v9382 = vpop.f32.mrb[0].mxu0
      %v9383 = vand.u32 %v1127, 4294901760
      %9384 = vmatprep.mubr.f32.mxu0 %v9383
      %v9385 = vand.u32 %v1126, 4294901760
      %9386 = vmatmul.mubr.f32.gmra.mrb[0].mxu0 %v9385
      %v9387 = vpop.f32.mrb[0].mxu0
      %v9388 = vadd.f32 %v8731, %v9387
      %v9389 = vpop.f32.mrb[0].mxu0
      %v9390 = vand.u32 %v1131, 4294901760
      %9391 = vmatprep.mubr.f32.mxu0 %v9390
      %v9392 = vand.u32 %v1130, 4294901760
      %9393 = vmatmul.mubr.f32.gmra.mrb[0].mxu0 %v9392
      %v9394 = vpop.f32.mrb[0].mxu0
      %v9395 = vadd.f32 %v8742, %v9394
      %v9396 = vpop.f32.mrb[0].mxu0
      %v9397 = vand.u32 %v1135, 4294901760
      %9398 = vmatprep.mubr.f32.mxu0 %v9397
      %v9399 = vand.u32 %v1134, 4294901760
      %9400 = vmatmul.mubr.f32.gmra.mrb[0].mxu0 %v9399
      %v9401 = vpop.f32.mrb[0].mxu0
      %v9402 = vadd.f32 %v8753, %v9401
      %v9403 = vpop.f32.mrb[0].mxu0
      %v9404 = vand.u32 %v1139, 4294901760
      %9405 = vmatprep.mubr.f32.mxu0 %v9404
      %v9406 = vand.u32 %v1138, 4294901760
      %9407 = vmatmul.mubr.f32.gmra.mrb[0].mxu0 %v9406
      %v9408 = vpop.f32.mrb[0].mxu0
      %v9409 = vadd.f32 %v8764, %v9408
      %v9410 = vpop.f32.mrb[0].mxu0
      %v9411 = vand.u32 %v1143, 4294901760
      %9412 = vmatprep.mubr.f32.mxu0 %v9411
      %v9413 = vand.u32 %v1142, 4294901760
      %9414 = vmatmul.mubr.f32.gmra.mrb[0].mxu0 %v9413
      %v9415 = vpop.f32.mrb[0].mxu0
      %v9416 = vadd.f32 %v8775, %v9415
      %v9417 = vpop.f32.mrb[0].mxu0
      %v9418 = vand.u32 %v1147, 4294901760
      %9419 = vmatprep.mubr.f32.mxu0 %v9418
      %v9420 = vand.u32 %v1146, 4294901760
      %9421 = vmatmul.mubr.f32.gmra.mrb[0].mxu0 %v9420
      %v9422 = vpop.f32.mrb[0].mxu0
      %v9423 = vadd.f32 %v8786, %v9422
      %v9424 = vpop.f32.mrb[0].mxu0
      %v9425 = vand.u32 %v1151, 4294901760
      %9426 = vmatprep.mubr.f32.mxu0 %v9425
      %v9427 = vand.u32 %v1150, 4294901760
      %9428 = vmatmul.mubr.f32.gmra.mrb[0].mxu0 %v9427
      %v9429 = vpop.f32.mrb[0].mxu0
      %v9430 = vadd.f32 %v8797, %v9429
      %v9431 = vpop.f32.mrb[0].mxu0
      %v9432 = vand.u32 %v1155, 4294901760
      %9433 = vmatprep.mubr.f32.mxu0 %v9432
      %v9434 = vand.u32 %v1154, 4294901760
      %9435 = vmatmul.mubr.f32.gmra.mrb[0].mxu0 %v9434
      %v9436 = vpop.f32.mrb[0].mxu0
      %v9437 = vadd.f32 %v8808, %v9436
      %v9438 = vpop.f32.mrb[0].mxu0
      %v9439 = vand.u32 %v1159, 4294901760
      %9440 = vmatprep.mubr.f32.mxu0 %v9439
      %v9441 = vand.u32 %v1158, 4294901760
      %9442 = vmatmul.mubr.f32.gmra.mrb[0].mxu0 %v9441
      %v9443 = vpop.f32.mrb[0].mxu0
      %v9444 = vadd.f32 %v8819, %v9443
      %v9445 = vpop.f32.mrb[0].mxu0
      %v9446 = vand.u32 %v1163, 4294901760
      %9447 = vmatprep.mubr.f32.mxu0 %v9446
      %v9448 = vand.u32 %v1162, 4294901760
      %9449 = vmatmul.mubr.f32.gmra.mrb[0].mxu0 %v9448
      %v9450 = vpop.f32.mrb[0].mxu0
      %v9451 = vadd.f32 %v8830, %v9450
      %v9452 = vpop.f32.mrb[0].mxu0
      %v9453 = vand.u32 %v1167, 4294901760
      %9454 = vmatprep.mubr.f32.mxu0 %v9453
      %v9455 = vand.u32 %v1166, 4294901760
      %9456 = vmatmul.mubr.f32.gmra.mrb[0].mxu0 %v9455
      %v9457 = vpop.f32.mrb[0].mxu0
      %v9458 = vadd.f32 %v8841, %v9457
      %v9459 = vpop.f32.mrb[0].mxu0
      %v9460 = vand.u32 %v1171, 4294901760
      %9461 = vmatprep.mubr.f32.mxu0 %v9460
      %v9462 = vand.u32 %v1170, 4294901760
      %9463 = vmatmul.mubr.f32.gmra.mrb[0].mxu0 %v9462
      %v9464 = vpop.f32.mrb[0].mxu0
      %v9465 = vadd.f32 %v8852, %v9464
      %v9466 = vpop.f32.mrb[0].mxu0
      %v9467 = vand.u32 %v1175, 4294901760
      %9468 = vmatprep.mubr.f32.mxu0 %v9467
      %v9469 = vand.u32 %v1174, 4294901760
      %9470 = vmatmul.mubr.f32.gmra.mrb[0].mxu0 %v9469
      %v9471 = vpop.f32.mrb[0].mxu0
      %v9472 = vadd.f32 %v8863, %v9471
      %v9473 = vpop.f32.mrb[0].mxu0
      %9474 = vdwg.mxu0
      %9475 = vmatprep.subr.mxu0 0.0
      %v9476 = vand.u32 %v1208, 4294901760
      %9477 = vmatpush1.msra.mxu0 %v9476
      %9478 = vmatprep.subr.mxu0 0.0
      %v9479 = vand.u32 %v1209, 4294901760
      %9480 = vmatpush1.msra.mxu0 %v9479
      %9481 = vmatprep.subr.mxu0 0.0
      %v9482 = vand.u32 %v1210, 4294901760
      %9483 = vmatpush1.msra.mxu0 %v9482
      %9484 = vmatprep.subr.mxu0 0.0
      %v9485 = vand.u32 %v1211, 4294901760
      %9486 = vmatpush1.msra.mxu0 %v9485
      %9487 = vmatprep.subr.mxu0 0.0
      %v9488 = vand.u32 %v1212, 4294901760
      %9489 = vmatpush1.msra.mxu0 %v9488
      %9490 = vmatprep.subr.mxu0 0.0
      %v9491 = vand.u32 %v1213, 4294901760
      %9492 = vmatpush1.msra.mxu0 %v9491
      %9493 = vmatprep.subr.mxu0 0.0
      %v9494 = vand.u32 %v1214, 4294901760
      %9495 = vmatpush1.msra.mxu0 %v9494
      %9496 = vmatprep.subr.mxu0 0.0
      %v9497 = vand.u32 %v1215, 4294901760
      %9498 = vmatpush1.msra.mxu0 %v9497
      %9499 = vmatprep.subr.mxu0 0.0
      %v9500 = vand.u32 %v1216, 4294901760
      %9501 = vmatpush1.msra.mxu0 %v9500
      %9502 = vmatprep.subr.mxu0 0.0
      %v9503 = vand.u32 %v1217, 4294901760
      %9504 = vmatpush1.msra.mxu0 %v9503
      %9505 = vmatprep.subr.mxu0 0.0
      %v9506 = vand.u32 %v1218, 4294901760
      %9507 = vmatpush1.msra.mxu0 %v9506
      %9508 = vmatprep.subr.mxu0 0.0
      %v9509 = vand.u32 %v1219, 4294901760
      %9510 = vmatpush1.msra.mxu0 %v9509
      %9511 = vmatprep.subr.mxu0 0.0
      %v9512 = vand.u32 %v1220, 4294901760
      %9513 = vmatpush1.msra.mxu0 %v9512
      %9514 = vmatprep.subr.mxu0 0.0
      %v9515 = vand.u32 %v1221, 4294901760
      %9516 = vmatpush1.msra.mxu0 %v9515
      %9517 = vmatprep.subr.mxu0 0.0
      %v9518 = vand.u32 %v1222, 4294901760
      %9519 = vmatpush1.msra.mxu0 %v9518
      %9520 = vmatprep.subr.mxu0 0.0
      %v9521 = vand.u32 %v1223, 4294901760
      %9522 = vmatpush1.msra.mxu0 %v9521
      %9523 = vmatprep.subr.mxu0 0.0
      %v9524 = vand.u32 %v1224, 4294901760
      %9525 = vmatpush1.msra.mxu0 %v9524
      %9526 = vmatprep.subr.mxu0 0.0
      %v9527 = vand.u32 %v1225, 4294901760
      %9528 = vmatpush1.msra.mxu0 %v9527
      %9529 = vmatprep.subr.mxu0 0.0
      %v9530 = vand.u32 %v1226, 4294901760
      %9531 = vmatpush1.msra.mxu0 %v9530
      %9532 = vmatprep.subr.mxu0 0.0
      %v9533 = vand.u32 %v1227, 4294901760
      %9534 = vmatpush1.msra.mxu0 %v9533
      %9535 = vmatprep.subr.mxu0 0.0
      %v9536 = vand.u32 %v1228, 4294901760
      %9537 = vmatpush1.msra.mxu0 %v9536
      %9538 = vmatprep.subr.mxu0 0.0
      %v9539 = vand.u32 %v1229, 4294901760
      %9540 = vmatpush1.msra.mxu0 %v9539
      %9541 = vmatprep.subr.mxu0 0.0
      %v9542 = vand.u32 %v1230, 4294901760
      %9543 = vmatpush1.msra.mxu0 %v9542
      %9544 = vmatprep.subr.mxu0 0.0
      %v9545 = vand.u32 %v1231, 4294901760
      %9546 = vmatpush1.msra.mxu0 %v9545
      %9547 = vmatprep.subr.mxu0 0.0
      %v9548 = vand.u32 %v1232, 4294901760
      %9549 = vmatpush1.msra.mxu0 %v9548
      %9550 = vmatprep.subr.mxu0 0.0
      %v9551 = vand.u32 %v1233, 4294901760
      %9552 = vmatpush1.msra.mxu0 %v9551
      %9553 = vmatprep.subr.mxu0 0.0
      %v9554 = vand.u32 %v1234, 4294901760
      %9555 = vmatpush1.msra.mxu0 %v9554
      %9556 = vmatprep.subr.mxu0 0.0
      %v9557 = vand.u32 %v1235, 4294901760
      %9558 = vmatpush1.msra.mxu0 %v9557
      %9559 = vmatprep.subr.mxu0 0.0
      %v9560 = vand.u32 %v1236, 4294901760
      %9561 = vmatpush1.msra.mxu0 %v9560
      %9562 = vmatprep.subr.mxu0 0.0
      %v9563 = vand.u32 %v1237, 4294901760
      %9564 = vmatpush1.msra.mxu0 %v9563
      %9565 = vmatprep.subr.mxu0 0.0
      %v9566 = vand.u32 %v1238, 4294901760
      %9567 = vmatpush1.msra.mxu0 %v9566
      %9568 = vmatprep.subr.mxu0 0.0
      %v9569 = vand.u32 %v1239, 4294901760
      %9570 = vmatpush1.msra.mxu0 %v9569
      %v9571 = vand.u32 %v923, 4294901760
      %9572 = vmatprep.mubr.f32.mxu0 %v9571
      %v9573 = vand.u32 %v922, 4294901760
      %9574 = vmatmul.mubr.f32.gmra.mrb[0].mxu0 %v9573
      %v9575 = vpop.f32.mrb[0].mxu0
      %v9576 = vadd.f32 %v9031, %v9575
      %v9577 = vpop.f32.mrb[0].mxu0
      %v9578 = vand.u32 %v927, 4294901760
      %9579 = vmatprep.mubr.f32.mxu0 %v9578
      %v9580 = vand.u32 %v926, 4294901760
      %9581 = vmatmul.mubr.f32.gmra.mrb[0].mxu0 %v9580
      %v9582 = vpop.f32.mrb[0].mxu0
      %v9583 = vadd.f32 %v9038, %v9582
      %v9584 = vpop.f32.mrb[0].mxu0
      %v9585 = vand.u32 %v931, 4294901760
      %9586 = vmatprep.mubr.f32.mxu0 %v9585
      %v9587 = vand.u32 %v930, 4294901760
      %9588 = vmatmul.mubr.f32.gmra.mrb[0].mxu0 %v9587
      %v9589 = vpop.f32.mrb[0].mxu0
      %v9590 = vadd.f32 %v9045, %v9589
      %v9591 = vpop.f32.mrb[0].mxu0
      %v9592 = vand.u32 %v935, 4294901760
      %9593 = vmatprep.mubr.f32.mxu0 %v9592
      %v9594 = vand.u32 %v934, 4294901760
      %9595 = vmatmul.mubr.f32.gmra.mrb[0].mxu0 %v9594
      %v9596 = vpop.f32.mrb[0].mxu0
      %v9597 = vadd.f32 %v9052, %v9596
      %v9598 = vpop.f32.mrb[0].mxu0
      %v9599 = vand.u32 %v939, 4294901760
      %9600 = vmatprep.mubr.f32.mxu0 %v9599
      %v9601 = vand.u32 %v938, 4294901760
      %9602 = vmatmul.mubr.f32.gmra.mrb[0].mxu0 %v9601
      %v9603 = vpop.f32.mrb[0].mxu0
      %v9604 = vadd.f32 %v9059, %v9603
      %v9605 = vpop.f32.mrb[0].mxu0
      %v9606 = vand.u32 %v943, 4294901760
      %9607 = vmatprep.mubr.f32.mxu0 %v9606
      %v9608 = vand.u32 %v942, 4294901760
      %9609 = vmatmul.mubr.f32.gmra.mrb[0].mxu0 %v9608
      %v9610 = vpop.f32.mrb[0].mxu0
      %v9611 = vadd.f32 %v9066, %v9610
      %v9612 = vpop.f32.mrb[0].mxu0
      %v9613 = vand.u32 %v947, 4294901760
      %9614 = vmatprep.mubr.f32.mxu0 %v9613
      %v9615 = vand.u32 %v946, 4294901760
      %9616 = vmatmul.mubr.f32.gmra.mrb[0].mxu0 %v9615
      %v9617 = vpop.f32.mrb[0].mxu0
      %v9618 = vadd.f32 %v9073, %v9617
      %v9619 = vpop.f32.mrb[0].mxu0
      %v9620 = vand.u32 %v951, 4294901760
      %9621 = vmatprep.mubr.f32.mxu0 %v9620
      %v9622 = vand.u32 %v950, 4294901760
      %9623 = vmatmul.mubr.f32.gmra.mrb[0].mxu0 %v9622
      %v9624 = vpop.f32.mrb[0].mxu0
      %v9625 = vadd.f32 %v9080, %v9624
      %v9626 = vpop.f32.mrb[0].mxu0
      %v9627 = vand.u32 %v955, 4294901760
      %9628 = vmatprep.mubr.f32.mxu0 %v9627
      %v9629 = vand.u32 %v954, 4294901760
      %9630 = vmatmul.mubr.f32.gmra.mrb[0].mxu0 %v9629
      %v9631 = vpop.f32.mrb[0].mxu0
      %v9632 = vadd.f32 %v9087, %v9631
      %v9633 = vpop.f32.mrb[0].mxu0
      %v9634 = vand.u32 %v959, 4294901760
      %9635 = vmatprep.mubr.f32.mxu0 %v9634
      %v9636 = vand.u32 %v958, 4294901760
      %9637 = vmatmul.mubr.f32.gmra.mrb[0].mxu0 %v9636
      %v9638 = vpop.f32.mrb[0].mxu0
      %v9639 = vadd.f32 %v9094, %v9638
      %v9640 = vpop.f32.mrb[0].mxu0
      %v9641 = vand.u32 %v963, 4294901760
      %9642 = vmatprep.mubr.f32.mxu0 %v9641
      %v9643 = vand.u32 %v962, 4294901760
      %9644 = vmatmul.mubr.f32.gmra.mrb[0].mxu0 %v9643
      %v9645 = vpop.f32.mrb[0].mxu0
      %v9646 = vadd.f32 %v9101, %v9645
      %v9647 = vpop.f32.mrb[0].mxu0
      %v9648 = vand.u32 %v967, 4294901760
      %9649 = vmatprep.mubr.f32.mxu0 %v9648
      %v9650 = vand.u32 %v966, 4294901760
      %9651 = vmatmul.mubr.f32.gmra.mrb[0].mxu0 %v9650
      %v9652 = vpop.f32.mrb[0].mxu0
      %v9653 = vadd.f32 %v9108, %v9652
      %v9654 = vpop.f32.mrb[0].mxu0
      %v9655 = vand.u32 %v971, 4294901760
      %9656 = vmatprep.mubr.f32.mxu0 %v9655
      %v9657 = vand.u32 %v970, 4294901760
      %9658 = vmatmul.mubr.f32.gmra.mrb[0].mxu0 %v9657
      %v9659 = vpop.f32.mrb[0].mxu0
      %v9660 = vadd.f32 %v9115, %v9659
      %v9661 = vpop.f32.mrb[0].mxu0
      %v9662 = vand.u32 %v975, 4294901760
      %9663 = vmatprep.mubr.f32.mxu0 %v9662
      %v9664 = vand.u32 %v974, 4294901760
      %9665 = vmatmul.mubr.f32.gmra.mrb[0].mxu0 %v9664
      %v9666 = vpop.f32.mrb[0].mxu0
      %v9667 = vadd.f32 %v9122, %v9666
      %v9668 = vpop.f32.mrb[0].mxu0
      %v9669 = vand.u32 %v979, 4294901760
      %9670 = vmatprep.mubr.f32.mxu0 %v9669
      %v9671 = vand.u32 %v978, 4294901760
      %9672 = vmatmul.mubr.f32.gmra.mrb[0].mxu0 %v9671
      %v9673 = vpop.f32.mrb[0].mxu0
      %v9674 = vadd.f32 %v9129, %v9673
      %v9675 = vpop.f32.mrb[0].mxu0
      %v9676 = vand.u32 %v983, 4294901760
      %9677 = vmatprep.mubr.f32.mxu0 %v9676
      %v9678 = vand.u32 %v982, 4294901760
      %9679 = vmatmul.mubr.f32.gmra.mrb[0].mxu0 %v9678
      %v9680 = vpop.f32.mrb[0].mxu0
      %v9681 = vadd.f32 %v9136, %v9680
      %v9682 = vpop.f32.mrb[0].mxu0
      %v9683 = vand.u32 %v987, 4294901760
      %9684 = vmatprep.mubr.f32.mxu0 %v9683
      %v9685 = vand.u32 %v986, 4294901760
      %9686 = vmatmul.mubr.f32.gmra.mrb[0].mxu0 %v9685
      %v9687 = vpop.f32.mrb[0].mxu0
      %v9688 = vadd.f32 %v9143, %v9687
      %v9689 = vpop.f32.mrb[0].mxu0
      %v9690 = vand.u32 %v991, 4294901760
      %9691 = vmatprep.mubr.f32.mxu0 %v9690
      %v9692 = vand.u32 %v990, 4294901760
      %9693 = vmatmul.mubr.f32.gmra.mrb[0].mxu0 %v9692
      %v9694 = vpop.f32.mrb[0].mxu0
      %v9695 = vadd.f32 %v9150, %v9694
      %v9696 = vpop.f32.mrb[0].mxu0
      %v9697 = vand.u32 %v995, 4294901760
      %9698 = vmatprep.mubr.f32.mxu0 %v9697
      %v9699 = vand.u32 %v994, 4294901760
      %9700 = vmatmul.mubr.f32.gmra.mrb[0].mxu0 %v9699
      %v9701 = vpop.f32.mrb[0].mxu0
      %v9702 = vadd.f32 %v9157, %v9701
      %v9703 = vpop.f32.mrb[0].mxu0
      %v9704 = vand.u32 %v999, 4294901760
      %9705 = vmatprep.mubr.f32.mxu0 %v9704
      %v9706 = vand.u32 %v998, 4294901760
      %9707 = vmatmul.mubr.f32.gmra.mrb[0].mxu0 %v9706
      %v9708 = vpop.f32.mrb[0].mxu0
      %v9709 = vadd.f32 %v9164, %v9708
      %v9710 = vpop.f32.mrb[0].mxu0
      %v9711 = vand.u32 %v1003, 4294901760
      %9712 = vmatprep.mubr.f32.mxu0 %v9711
      %v9713 = vand.u32 %v1002, 4294901760
      %9714 = vmatmul.mubr.f32.gmra.mrb[0].mxu0 %v9713
      %v9715 = vpop.f32.mrb[0].mxu0
      %v9716 = vadd.f32 %v9171, %v9715
      %v9717 = vpop.f32.mrb[0].mxu0
      %v9718 = vand.u32 %v1007, 4294901760
      %9719 = vmatprep.mubr.f32.mxu0 %v9718
      %v9720 = vand.u32 %v1006, 4294901760
      %9721 = vmatmul.mubr.f32.gmra.mrb[0].mxu0 %v9720
      %v9722 = vpop.f32.mrb[0].mxu0
      %v9723 = vadd.f32 %v9178, %v9722
      %v9724 = vpop.f32.mrb[0].mxu0
      %v9725 = vand.u32 %v1011, 4294901760
      %9726 = vmatprep.mubr.f32.mxu0 %v9725
      %v9727 = vand.u32 %v1010, 4294901760
      %9728 = vmatmul.mubr.f32.gmra.mrb[0].mxu0 %v9727
      %v9729 = vpop.f32.mrb[0].mxu0
      %v9730 = vadd.f32 %v9185, %v9729
      %v9731 = vpop.f32.mrb[0].mxu0
      %v9732 = vand.u32 %v1015, 4294901760
      %9733 = vmatprep.mubr.f32.mxu0 %v9732
      %v9734 = vand.u32 %v1014, 4294901760
      %9735 = vmatmul.mubr.f32.gmra.mrb[0].mxu0 %v9734
      %v9736 = vpop.f32.mrb[0].mxu0
      %v9737 = vadd.f32 %v9192, %v9736
      %v9738 = vpop.f32.mrb[0].mxu0
      %v9739 = vand.u32 %v1019, 4294901760
      %9740 = vmatprep.mubr.f32.mxu0 %v9739
      %v9741 = vand.u32 %v1018, 4294901760
      %9742 = vmatmul.mubr.f32.gmra.mrb[0].mxu0 %v9741
      %v9743 = vpop.f32.mrb[0].mxu0
      %v9744 = vadd.f32 %v9199, %v9743
      %v9745 = vpop.f32.mrb[0].mxu0
      %v9746 = vand.u32 %v1023, 4294901760
      %9747 = vmatprep.mubr.f32.mxu0 %v9746
      %v9748 = vand.u32 %v1022, 4294901760
      %9749 = vmatmul.mubr.f32.gmra.mrb[0].mxu0 %v9748
      %v9750 = vpop.f32.mrb[0].mxu0
      %v9751 = vadd.f32 %v9206, %v9750
      %v9752 = vpop.f32.mrb[0].mxu0
      %v9753 = vand.u32 %v1027, 4294901760
      %9754 = vmatprep.mubr.f32.mxu0 %v9753
      %v9755 = vand.u32 %v1026, 4294901760
      %9756 = vmatmul.mubr.f32.gmra.mrb[0].mxu0 %v9755
      %v9757 = vpop.f32.mrb[0].mxu0
      %v9758 = vadd.f32 %v9213, %v9757
      %v9759 = vpop.f32.mrb[0].mxu0
      %v9760 = vand.u32 %v1031, 4294901760
      %9761 = vmatprep.mubr.f32.mxu0 %v9760
      %v9762 = vand.u32 %v1030, 4294901760
      %9763 = vmatmul.mubr.f32.gmra.mrb[0].mxu0 %v9762
      %v9764 = vpop.f32.mrb[0].mxu0
      %v9765 = vadd.f32 %v9220, %v9764
      %v9766 = vpop.f32.mrb[0].mxu0
      %v9767 = vand.u32 %v1035, 4294901760
      %9768 = vmatprep.mubr.f32.mxu0 %v9767
      %v9769 = vand.u32 %v1034, 4294901760
      %9770 = vmatmul.mubr.f32.gmra.mrb[0].mxu0 %v9769
      %v9771 = vpop.f32.mrb[0].mxu0
      %v9772 = vadd.f32 %v9227, %v9771
      %v9773 = vpop.f32.mrb[0].mxu0
      %v9774 = vand.u32 %v1039, 4294901760
      %9775 = vmatprep.mubr.f32.mxu0 %v9774
      %v9776 = vand.u32 %v1038, 4294901760
      %9777 = vmatmul.mubr.f32.gmra.mrb[0].mxu0 %v9776
      %v9778 = vpop.f32.mrb[0].mxu0
      %v9779 = vadd.f32 %v9234, %v9778
      %v9780 = vpop.f32.mrb[0].mxu0
      %v9781 = vand.u32 %v1043, 4294901760
      %9782 = vmatprep.mubr.f32.mxu0 %v9781
      %v9783 = vand.u32 %v1042, 4294901760
      %9784 = vmatmul.mubr.f32.gmra.mrb[0].mxu0 %v9783
      %v9785 = vpop.f32.mrb[0].mxu0
      %v9786 = vadd.f32 %v9241, %v9785
      %v9787 = vpop.f32.mrb[0].mxu0
      %v9788 = vand.u32 %v1047, 4294901760
      %9789 = vmatprep.mubr.f32.mxu0 %v9788
      %v9790 = vand.u32 %v1046, 4294901760
      %9791 = vmatmul.mubr.f32.gmra.mrb[0].mxu0 %v9790
      %v9792 = vpop.f32.mrb[0].mxu0
      %v9793 = vadd.f32 %v9248, %v9792
      %v9794 = vpop.f32.mrb[0].mxu0
      %v9795 = vand.u32 %v1051, 4294901760
      %9796 = vmatprep.mubr.f32.mxu0 %v9795
      %v9797 = vand.u32 %v1050, 4294901760
      %9798 = vmatmul.mubr.f32.gmra.mrb[0].mxu0 %v9797
      %v9799 = vpop.f32.mrb[0].mxu0
      %v9800 = vadd.f32 %v9255, %v9799
      %v9801 = vpop.f32.mrb[0].mxu0
      %v9802 = vand.u32 %v1055, 4294901760
      %9803 = vmatprep.mubr.f32.mxu0 %v9802
      %v9804 = vand.u32 %v1054, 4294901760
      %9805 = vmatmul.mubr.f32.gmra.mrb[0].mxu0 %v9804
      %v9806 = vpop.f32.mrb[0].mxu0
      %v9807 = vadd.f32 %v9262, %v9806
      %v9808 = vpop.f32.mrb[0].mxu0
      %v9809 = vand.u32 %v1059, 4294901760
      %9810 = vmatprep.mubr.f32.mxu0 %v9809
      %v9811 = vand.u32 %v1058, 4294901760
      %9812 = vmatmul.mubr.f32.gmra.mrb[0].mxu0 %v9811
      %v9813 = vpop.f32.mrb[0].mxu0
      %v9814 = vadd.f32 %v9269, %v9813
      %v9815 = vpop.f32.mrb[0].mxu0
      %v9816 = vand.u32 %v1063, 4294901760
      %9817 = vmatprep.mubr.f32.mxu0 %v9816
      %v9818 = vand.u32 %v1062, 4294901760
      %9819 = vmatmul.mubr.f32.gmra.mrb[0].mxu0 %v9818
      %v9820 = vpop.f32.mrb[0].mxu0
      %v9821 = vadd.f32 %v9276, %v9820
      %v9822 = vpop.f32.mrb[0].mxu0
      %v9823 = vand.u32 %v1067, 4294901760
      %9824 = vmatprep.mubr.f32.mxu0 %v9823
      %v9825 = vand.u32 %v1066, 4294901760
      %9826 = vmatmul.mubr.f32.gmra.mrb[0].mxu0 %v9825
      %v9827 = vpop.f32.mrb[0].mxu0
      %v9828 = vadd.f32 %v9283, %v9827
      %v9829 = vpop.f32.mrb[0].mxu0
      %v9830 = vand.u32 %v1071, 4294901760
      %9831 = vmatprep.mubr.f32.mxu0 %v9830
      %v9832 = vand.u32 %v1070, 4294901760
      %9833 = vmatmul.mubr.f32.gmra.mrb[0].mxu0 %v9832
      %v9834 = vpop.f32.mrb[0].mxu0
      %v9835 = vadd.f32 %v9290, %v9834
      %v9836 = vpop.f32.mrb[0].mxu0
      %v9837 = vand.u32 %v1075, 4294901760
      %9838 = vmatprep.mubr.f32.mxu0 %v9837
      %v9839 = vand.u32 %v1074, 4294901760
      %9840 = vmatmul.mubr.f32.gmra.mrb[0].mxu0 %v9839
      %v9841 = vpop.f32.mrb[0].mxu0
      %v9842 = vadd.f32 %v9297, %v9841
      %v9843 = vpop.f32.mrb[0].mxu0
      %v9844 = vand.u32 %v1079, 4294901760
      %9845 = vmatprep.mubr.f32.mxu0 %v9844
      %v9846 = vand.u32 %v1078, 4294901760
      %9847 = vmatmul.mubr.f32.gmra.mrb[0].mxu0 %v9846
      %v9848 = vpop.f32.mrb[0].mxu0
      %v9849 = vadd.f32 %v9304, %v9848
      %v9850 = vpop.f32.mrb[0].mxu0
      %v9851 = vand.u32 %v1083, 4294901760
      %9852 = vmatprep.mubr.f32.mxu0 %v9851
      %v9853 = vand.u32 %v1082, 4294901760
      %9854 = vmatmul.mubr.f32.gmra.mrb[0].mxu0 %v9853
      %v9855 = vpop.f32.mrb[0].mxu0
      %v9856 = vadd.f32 %v9311, %v9855
      %v9857 = vpop.f32.mrb[0].mxu0
      %v9858 = vand.u32 %v1087, 4294901760
      %9859 = vmatprep.mubr.f32.mxu0 %v9858
      %v9860 = vand.u32 %v1086, 4294901760
      %9861 = vmatmul.mubr.f32.gmra.mrb[0].mxu0 %v9860
      %v9862 = vpop.f32.mrb[0].mxu0
      %v9863 = vadd.f32 %v9318, %v9862
      %v9864 = vpop.f32.mrb[0].mxu0
      %v9865 = vand.u32 %v1091, 4294901760
      %9866 = vmatprep.mubr.f32.mxu0 %v9865
      %v9867 = vand.u32 %v1090, 4294901760
      %9868 = vmatmul.mubr.f32.gmra.mrb[0].mxu0 %v9867
      %v9869 = vpop.f32.mrb[0].mxu0
      %v9870 = vadd.f32 %v9325, %v9869
      %v9871 = vpop.f32.mrb[0].mxu0
      %v9872 = vand.u32 %v1095, 4294901760
      %9873 = vmatprep.mubr.f32.mxu0 %v9872
      %v9874 = vand.u32 %v1094, 4294901760
      %9875 = vmatmul.mubr.f32.gmra.mrb[0].mxu0 %v9874
      %v9876 = vpop.f32.mrb[0].mxu0
      %v9877 = vadd.f32 %v9332, %v9876
      %v9878 = vpop.f32.mrb[0].mxu0
      %v9879 = vand.u32 %v1099, 4294901760
      %9880 = vmatprep.mubr.f32.mxu0 %v9879
      %v9881 = vand.u32 %v1098, 4294901760
      %9882 = vmatmul.mubr.f32.gmra.mrb[0].mxu0 %v9881
      %v9883 = vpop.f32.mrb[0].mxu0
      %v9884 = vadd.f32 %v9339, %v9883
      %v9885 = vpop.f32.mrb[0].mxu0
      %v9886 = vand.u32 %v1103, 4294901760
      %9887 = vmatprep.mubr.f32.mxu0 %v9886
      %v9888 = vand.u32 %v1102, 4294901760
      %9889 = vmatmul.mubr.f32.gmra.mrb[0].mxu0 %v9888
      %v9890 = vpop.f32.mrb[0].mxu0
      %v9891 = vadd.f32 %v9346, %v9890
      %v9892 = vpop.f32.mrb[0].mxu0
      %v9893 = vand.u32 %v1107, 4294901760
      %9894 = vmatprep.mubr.f32.mxu0 %v9893
      %v9895 = vand.u32 %v1106, 4294901760
      %9896 = vmatmul.mubr.f32.gmra.mrb[0].mxu0 %v9895
      %v9897 = vpop.f32.mrb[0].mxu0
      %v9898 = vadd.f32 %v9353, %v9897
      %v9899 = vpop.f32.mrb[0].mxu0
      %v9900 = vand.u32 %v1111, 4294901760
      %9901 = vmatprep.mubr.f32.mxu0 %v9900
      %v9902 = vand.u32 %v1110, 4294901760
      %9903 = vmatmul.mubr.f32.gmra.mrb[0].mxu0 %v9902
      %v9904 = vpop.f32.mrb[0].mxu0
      %v9905 = vadd.f32 %v9360, %v9904
      %v9906 = vpop.f32.mrb[0].mxu0
      %v9907 = vand.u32 %v1115, 4294901760
      %9908 = vmatprep.mubr.f32.mxu0 %v9907
      %v9909 = vand.u32 %v1114, 4294901760
      %9910 = vmatmul.mubr.f32.gmra.mrb[0].mxu0 %v9909
      %v9911 = vpop.f32.mrb[0].mxu0
      %v9912 = vadd.f32 %v9367, %v9911
      %v9913 = vpop.f32.mrb[0].mxu0
      %v9914 = vand.u32 %v1119, 4294901760
      %9915 = vmatprep.mubr.f32.mxu0 %v9914
      %v9916 = vand.u32 %v1118, 4294901760
      %9917 = vmatmul.mubr.f32.gmra.mrb[0].mxu0 %v9916
      %v9918 = vpop.f32.mrb[0].mxu0
      %v9919 = vadd.f32 %v9374, %v9918
      %v9920 = vpop.f32.mrb[0].mxu0
      %v9921 = vand.u32 %v1123, 4294901760
      %9922 = vmatprep.mubr.f32.mxu0 %v9921
      %v9923 = vand.u32 %v1122, 4294901760
      %9924 = vmatmul.mubr.f32.gmra.mrb[0].mxu0 %v9923
      %v9925 = vpop.f32.mrb[0].mxu0
      %v9926 = vadd.f32 %v9381, %v9925
      %v9927 = vpop.f32.mrb[0].mxu0
      %v9928 = vand.u32 %v1127, 4294901760
      %9929 = vmatprep.mubr.f32.mxu0 %v9928
      %v9930 = vand.u32 %v1126, 4294901760
      %9931 = vmatmul.mubr.f32.gmra.mrb[0].mxu0 %v9930
      %v9932 = vpop.f32.mrb[0].mxu0
      %v9933 = vadd.f32 %v9388, %v9932
      %v9934 = vpop.f32.mrb[0].mxu0
      %v9935 = vand.u32 %v1131, 4294901760
      %9936 = vmatprep.mubr.f32.mxu0 %v9935
      %v9937 = vand.u32 %v1130, 4294901760
      %9938 = vmatmul.mubr.f32.gmra.mrb[0].mxu0 %v9937
      %v9939 = vpop.f32.mrb[0].mxu0
      %v9940 = vadd.f32 %v9395, %v9939
      %v9941 = vpop.f32.mrb[0].mxu0
      %v9942 = vand.u32 %v1135, 4294901760
      %9943 = vmatprep.mubr.f32.mxu0 %v9942
      %v9944 = vand.u32 %v1134, 4294901760
      %9945 = vmatmul.mubr.f32.gmra.mrb[0].mxu0 %v9944
      %v9946 = vpop.f32.mrb[0].mxu0
      %v9947 = vadd.f32 %v9402, %v9946
      %v9948 = vpop.f32.mrb[0].mxu0
      %v9949 = vand.u32 %v1139, 4294901760
      %9950 = vmatprep.mubr.f32.mxu0 %v9949
      %v9951 = vand.u32 %v1138, 4294901760
      %9952 = vmatmul.mubr.f32.gmra.mrb[0].mxu0 %v9951
      %v9953 = vpop.f32.mrb[0].mxu0
      %v9954 = vadd.f32 %v9409, %v9953
      %v9955 = vpop.f32.mrb[0].mxu0
      %v9956 = vand.u32 %v1143, 4294901760
      %9957 = vmatprep.mubr.f32.mxu0 %v9956
      %v9958 = vand.u32 %v1142, 4294901760
      %9959 = vmatmul.mubr.f32.gmra.mrb[0].mxu0 %v9958
      %v9960 = vpop.f32.mrb[0].mxu0
      %v9961 = vadd.f32 %v9416, %v9960
      %v9962 = vpop.f32.mrb[0].mxu0
      %v9963 = vand.u32 %v1147, 4294901760
      %9964 = vmatprep.mubr.f32.mxu0 %v9963
      %v9965 = vand.u32 %v1146, 4294901760
      %9966 = vmatmul.mubr.f32.gmra.mrb[0].mxu0 %v9965
      %v9967 = vpop.f32.mrb[0].mxu0
      %v9968 = vadd.f32 %v9423, %v9967
      %v9969 = vpop.f32.mrb[0].mxu0
      %v9970 = vand.u32 %v1151, 4294901760
      %9971 = vmatprep.mubr.f32.mxu0 %v9970
      %v9972 = vand.u32 %v1150, 4294901760
      %9973 = vmatmul.mubr.f32.gmra.mrb[0].mxu0 %v9972
      %v9974 = vpop.f32.mrb[0].mxu0
      %v9975 = vadd.f32 %v9430, %v9974
      %v9976 = vpop.f32.mrb[0].mxu0
      %v9977 = vand.u32 %v1155, 4294901760
      %9978 = vmatprep.mubr.f32.mxu0 %v9977
      %v9979 = vand.u32 %v1154, 4294901760
      %9980 = vmatmul.mubr.f32.gmra.mrb[0].mxu0 %v9979
      %v9981 = vpop.f32.mrb[0].mxu0
      %v9982 = vadd.f32 %v9437, %v9981
      %v9983 = vpop.f32.mrb[0].mxu0
      %v9984 = vand.u32 %v1159, 4294901760
      %9985 = vmatprep.mubr.f32.mxu0 %v9984
      %v9986 = vand.u32 %v1158, 4294901760
      %9987 = vmatmul.mubr.f32.gmra.mrb[0].mxu0 %v9986
      %v9988 = vpop.f32.mrb[0].mxu0
      %v9989 = vadd.f32 %v9444, %v9988
      %v9990 = vpop.f32.mrb[0].mxu0
      %v9991 = vand.u32 %v1163, 4294901760
      %9992 = vmatprep.mubr.f32.mxu0 %v9991
      %v9993 = vand.u32 %v1162, 4294901760
      %9994 = vmatmul.mubr.f32.gmra.mrb[0].mxu0 %v9993
      %v9995 = vpop.f32.mrb[0].mxu0
      %v9996 = vadd.f32 %v9451, %v9995
      %v9997 = vpop.f32.mrb[0].mxu0
      %v9998 = vand.u32 %v1167, 4294901760
      %9999 = vmatprep.mubr.f32.mxu0 %v9998
      %v10000 = vand.u32 %v1166, 4294901760
      %10001 = vmatmul.mubr.f32.gmra.mrb[0].mxu0 %v10000
      %v10002 = vpop.f32.mrb[0].mxu0
      %v10003 = vadd.f32 %v9458, %v10002
      %v10004 = vpop.f32.mrb[0].mxu0
      %v10005 = vand.u32 %v1171, 4294901760
      %10006 = vmatprep.mubr.f32.mxu0 %v10005
      %v10007 = vand.u32 %v1170, 4294901760
      %10008 = vmatmul.mubr.f32.gmra.mrb[0].mxu0 %v10007
      %v10009 = vpop.f32.mrb[0].mxu0
      %v10010 = vadd.f32 %v9465, %v10009
      %v10011 = vpop.f32.mrb[0].mxu0
      %v10012 = vand.u32 %v1175, 4294901760
      %10013 = vmatprep.mubr.f32.mxu0 %v10012
      %v10014 = vand.u32 %v1174, 4294901760
      %10015 = vmatmul.mubr.f32.gmra.mrb[0].mxu0 %v10014
      %v10016 = vpop.f32.mrb[0].mxu0
      %v10017 = vadd.f32 %v9472, %v10016
      %v10018 = vpop.f32.mrb[0].mxu0
      %10019 = vdwg.mxu0
      %10020 = vst [vmem:[%s145] sm:$0xff] %v9576
      %10021 = vst [vmem:[%s145 + $0x8] sm:$0xff] %v9583
      %10022 = vst [vmem:[%s145 + $0x10] sm:$0xff] %v9590
      %10023 = vst [vmem:[%s145 + $0x18] sm:$0xff] %v9597
      %10024 = vst [vmem:[%s145 + $0x20] sm:$0xff] %v9604
      %10025 = vst [vmem:[%s145 + $0x28] sm:$0xff] %v9611
      %10026 = vst [vmem:[%s145 + $0x30] sm:$0xff] %v9618
      %10027 = vst [vmem:[%s145 + $0x38] sm:$0xff] %v9625
      %10028 = vst [vmem:[%s145 + $0x40] sm:$0xff] %v9632
      %10029 = vst [vmem:[%s145 + $0x48] sm:$0xff] %v9639
      %10030 = vst [vmem:[%s145 + $0x50] sm:$0xff] %v9646
      %10031 = vst [vmem:[%s145 + $0x58] sm:$0xff] %v9653
      %10032 = vst [vmem:[%s145 + $0x60] sm:$0xff] %v9660
      %10033 = vst [vmem:[%s145 + $0x68] sm:$0xff] %v9667
      %10034 = vst [vmem:[%s145 + $0x70] sm:$0xff] %v9674
      %10035 = vst [vmem:[%s145 + $0x78] sm:$0xff] %v9681
      %10036 = vst [vmem:[%s145 + $0x80] sm:$0xff] %v9688
      %10037 = vst [vmem:[%s145 + $0x88] sm:$0xff] %v9695
      %10038 = vst [vmem:[%s145 + $0x90] sm:$0xff] %v9702
      %10039 = vst [vmem:[%s145 + $0x98] sm:$0xff] %v9709
      %10040 = vst [vmem:[%s145 + $0xa0] sm:$0xff] %v9716
      %10041 = vst [vmem:[%s145 + $0xa8] sm:$0xff] %v9723
      %10042 = vst [vmem:[%s145 + $0xb0] sm:$0xff] %v9730
      %10043 = vst [vmem:[%s145 + $0xb8] sm:$0xff] %v9737
      %10044 = vst [vmem:[%s145 + $0xc0] sm:$0xff] %v9744
      %10045 = vst [vmem:[%s145 + $0xc8] sm:$0xff] %v9751
      %10046 = vst [vmem:[%s145 + $0xd0] sm:$0xff] %v9758
      %10047 = vst [vmem:[%s145 + $0xd8] sm:$0xff] %v9765
      %10048 = vst [vmem:[%s145 + $0xe0] sm:$0xff] %v9772
      %10049 = vst [vmem:[%s145 + $0xe8] sm:$0xff] %v9779
      %10050 = vst [vmem:[%s145 + $0xf0] sm:$0xff] %v9786
      %10051 = vst [vmem:[%s145 + $0xf8] sm:$0xff] %v9793
      %10052 = vst [vmem:[%s145 + $0x100] sm:$0xff] %v9800
      %10053 = vst [vmem:[%s145 + $0x108] sm:$0xff] %v9807
      %10054 = vst [vmem:[%s145 + $0x110] sm:$0xff] %v9814
      %10055 = vst [vmem:[%s145 + $0x118] sm:$0xff] %v9821
      %10056 = vst [vmem:[%s145 + $0x120] sm:$0xff] %v9828
      %10057 = vst [vmem:[%s145 + $0x128] sm:$0xff] %v9835
      %10058 = vst [vmem:[%s145 + $0x130] sm:$0xff] %v9842
      %10059 = vst [vmem:[%s145 + $0x138] sm:$0xff] %v9849
      %10060 = vst [vmem:[%s145 + $0x140] sm:$0xff] %v9856
      %10061 = vst [vmem:[%s145 + $0x148] sm:$0xff] %v9863
      %10062 = vst [vmem:[%s145 + $0x150] sm:$0xff] %v9870
      %10063 = vst [vmem:[%s145 + $0x158] sm:$0xff] %v9877
      %10064 = vst [vmem:[%s145 + $0x160] sm:$0xff] %v9884
      %10065 = vst [vmem:[%s145 + $0x168] sm:$0xff] %v9891
      %10066 = vst [vmem:[%s145 + $0x170] sm:$0xff] %v9898
      %10067 = vst [vmem:[%s145 + $0x178] sm:$0xff] %v9905
      %10068 = vst [vmem:[%s145 + $0x180] sm:$0xff] %v9912
      %10069 = vst [vmem:[%s145 + $0x188] sm:$0xff] %v9919
      %10070 = vst [vmem:[%s145 + $0x190] sm:$0xff] %v9926
      %10071 = vst [vmem:[%s145 + $0x198] sm:$0xff] %v9933
      %10072 = vst [vmem:[%s145 + $0x1a0] sm:$0xff] %v9940
      %10073 = vst [vmem:[%s145 + $0x1a8] sm:$0xff] %v9947
      %10074 = vst [vmem:[%s145 + $0x1b0] sm:$0xff] %v9954
      %10075 = vst [vmem:[%s145 + $0x1b8] sm:$0xff] %v9961
      %10076 = vst [vmem:[%s145 + $0x1c0] sm:$0xff] %v9968
      %10077 = vst [vmem:[%s145 + $0x1c8] sm:$0xff] %v9975
      %10078 = vst [vmem:[%s145 + $0x1d0] sm:$0xff] %v9982
      %10079 = vst [vmem:[%s145 + $0x1d8] sm:$0xff] %v9989
      %10080 = vst [vmem:[%s145 + $0x1e0] sm:$0xff] %v9996
      %10081 = vst [vmem:[%s145 + $0x1e8] sm:$0xff] %v10003
      %10082 = vst [vmem:[%s145 + $0x1f0] sm:$0xff] %v10010
      %10083 = vst [vmem:[%s145 + $0x1f8] sm:$0xff] %v10017
      %s10084 = smul.u32 64, %s13
      %p10085 = scmp.lt.s32.totalorder %s10084, 127
      %s10086 = scalar_select %p10085, %s10084, 127
      %s10087 = smul.addr %s10086, 8
      %s10088 = scalar_lea.vmem %s2, %s10087
      // Predicated region
      $region29: #{embedding_gather.1} parent=27 // pred_check
        %p10089 = pneg %p78
      $region30: #{embedding_gather.1} parent=27 // pred_check_branch
        %10091 = sbr.rel (%p10089) target = $region32
      $region31: #{embedding_gather.1} parent=27 // pred_region
        %s10092 = smul.u32 64, %s13
      $region32: #{embedding_gather.1} parent=27 // pred_fallthru
        _
    $region28: #{embedding_gather.1} parent=5 // pred_fallthru
      _
    %p10093 = scmp.le.s32.totalorder 2, %s8
    // Predicated region
    $region33: #{embedding_gather.1} parent=5 // pred_check
      %p10094 = pneg %p10093
    $region34: #{embedding_gather.1} parent=5 // pred_check_branch
      %10096 = sbr.rel (%p10094) target = $region36
    $region35: #{embedding_gather.1} parent=5 // pred_region
      %s10097 = ssub.s32 %s8, 2
      // Predicated region
      $region37: #{embedding_gather.1} parent=35 // pred_check
        %p10098 = pneg %p84
      $region38: #{embedding_gather.1} parent=35 // pred_check_branch
        %10100 = sbr.rel (%p10098) target = $region40
      $region39: #{embedding_gather.1} parent=35 // pred_region
        %s10101 = smul.u32 64, %s14
        %p10102 = scmp.lt.s32.totalorder %s10101, 127
        %s10103 = scalar_select %p10102, %s10101, 127
        %s10104 = smul.addr %s10103, 8
        %s10105 = scalar_lea.vmem %s2, %s10104
      $region40: #{embedding_gather.1} parent=35 // pred_fallthru
        _
    $region36: #{embedding_gather.1} parent=5 // pred_fallthru
      _
  $region6: #{embedding_gather.1} parent=0 // loop_footer
    %s12 = sadd.s32 1, %s8
  $region7: #{embedding_gather.1} parent=0 // loop_footer_branch
    %7 = sbr.rel target = $region3
  $region8: #{embedding_gather.1} parent=0 // loop_exit
    _

</llo_original>
